<compile_context>
chip_gen: v5e
topology: v5e:2x2
jax: 0.10.0
libtpu: 0.0.40
codegen_flags: <defaults>
</compile_context>

<pallas_src>
import math
import jax
import jax.numpy as jnp
from jax.experimental import pallas as pl
from jax.experimental.pallas import tpu as pltpu

N_EMBD = 64
N_HEAD = 8
HEAD_SIZE = N_EMBD // N_HEAD          # 8
BLOCK_SIZE = 128
HIDDEN = 4 * N_EMBD                   # 256
EPS = 1e-5                            # PyTorch LayerNorm default


def _layernorm(x, w, b):
    mu = jnp.mean(x, axis=-1, keepdims=True)
    xc = x - mu
    var = jnp.mean(xc * xc, axis=-1, keepdims=True)
    return xc * jax.lax.rsqrt(var + EPS) * w + b


def block_kernel(x_ref,
                 ln1_w_ref, ln1_b_ref,
                 wqkv_ref, wproj_ref, bproj_ref,
                 ln2_w_ref, ln2_b_ref,
                 w1_ref, b1_ref, lnf_w_ref, lnf_b_ref, w2_ref, b2_ref,
                 o_ref):
    x = x_ref[...]                                     # (BB, T, C) f32
    BB, T, C = x.shape
    M = BB * T
    x2 = x.reshape(M, C)

    # ---- ln1 + fused QKV projection: one bf16 MXU pass, (M,64)@(64,192) ----
    xn = _layernorm(x2, ln1_w_ref[...], ln1_b_ref[...])
    qkv = jnp.dot(xn.astype(jnp.bfloat16), wqkv_ref[...],
                  preferred_element_type=jnp.float32)           # (M, 3C) f32
    q, k, v = qkv[:, :C], qkv[:, C:2 * C], qkv[:, 2 * C:]

    # causal mask, built once (hoisted; JAX does not CSE broadcasts)
    row = jax.lax.broadcasted_iota(jnp.int32, (T, T), 0)
    col = jax.lax.broadcasted_iota(jnp.int32, (T, T), 1)
    causal = (row >= col)[None, :, :]                           # (1, T, T)

    scale = 1.0 / math.sqrt(HEAD_SIZE)

    def heads(a):        # (T, C) -> (H, T, hs) bf16 for the MXU
        return jnp.stack(
            [a[:, h * HEAD_SIZE:(h + 1) * HEAD_SIZE] for h in range(N_HEAD)],
            axis=0).astype(jnp.bfloat16)

    # Attention: all heads batched into one einsum; loop only over the small
    # number of batch elements folded into this grid step.
    # NOTE: flash-style causal tiling of the (T,T) scores was considered and
    # skipped: at T=128 any sub-128 key tile still occupies full 128-lane
    # vregs, so it would not reduce per-vreg VPU/EUP work at this seq length.
    sa_rows = []
    for bb in range(BB):                               # static unroll, BB small
        sl = slice(bb * T, (bb + 1) * T)
        qh, kh, vh = heads(q[sl]), heads(k[sl]), heads(v[sl])   # (H, T, hs)
        s = jnp.einsum('hqd,hkd->hqk', qh, kh,
                       preferred_element_type=jnp.float32) * scale   # (H,T,T)
        s = jnp.where(causal, s, -jnp.inf)
        m = jnp.max(s, axis=-1, keepdims=True)
        p = jnp.exp(s - m)
        p = p * pl.reciprocal(jnp.sum(p, axis=-1, keepdims=True), approx=True)
        oh = jnp.einsum('hqk,hkd->hqd', p.astype(jnp.bfloat16), vh,
                        preferred_element_type=jnp.float32)           # (H,T,hs)
        sa_rows.append(jnp.concatenate([oh[h] for h in range(N_HEAD)], axis=-1))
    cat = sa_rows[0] if BB == 1 else jnp.concatenate(sa_rows, axis=0)  # (M, C)

    # fused output projection: (M,64) @ (64,64) bf16
    sa = jnp.dot(cat.astype(jnp.bfloat16), wproj_ref[...],
                 preferred_element_type=jnp.float32) + bproj_ref[...]
    x1 = x2 + sa                                        # residual 1

    # ---- ln2 + feed-forward (Linear -> LayerNorm -> ReLU -> Linear) -------
    xn2 = _layernorm(x1, ln2_w_ref[...], ln2_b_ref[...])
    hdn = jnp.dot(xn2.astype(jnp.bfloat16), w1_ref[...],
                  preferred_element_type=jnp.float32) + b1_ref[...]
    hdn = _layernorm(hdn, lnf_w_ref[...], lnf_b_ref[...])
    hdn = jnp.maximum(hdn, 0.0)
    ff = jnp.dot(hdn.astype(jnp.bfloat16), w2_ref[...],
                 preferred_element_type=jnp.float32) + b2_ref[...]

    o_ref[...] = (x1 + ff).reshape(BB, T, C)            # residual 2


def _fuse_params(params):
    """Pack PyTorch-style per-head weights into fused, bf16 MXU-friendly slabs."""
    (ln1_w, ln1_b, wq, wk, wv, wproj, bproj,
     ln2_w, ln2_b, w1, b1, lnf_w, lnf_b, w2, b2) = params

    # (H, C, hs) -> (C, H*hs): columns h*hs:(h+1)*hs hold head h's weight.
    def fuse_cols(w):
        return jnp.transpose(w, (1, 0, 2)).reshape(N_EMBD, N_EMBD)

    wqkv = jnp.concatenate([fuse_cols(wq), fuse_cols(wk), fuse_cols(wv)],
                           axis=1).astype(jnp.bfloat16)              # (C, 3C)
    wproj_full = wproj.reshape(N_EMBD, N_EMBD).astype(jnp.bfloat16)  # (H*hs, C)

    return (ln1_w, ln1_b, wqkv, wproj_full, bproj,
            ln2_w, ln2_b,
            w1.astype(jnp.bfloat16), b1, lnf_w, lnf_b,
            w2.astype(jnp.bfloat16), b2)


def _pick_bb(B):
    # Fold batch elements per grid step (amortizes ~0.35us/step pipeline
    # overhead and grows matmul M), but keep >= 2 grid steps whenever B >= 2
    # so both v7x TensorCores get work.
    if B >= 4 and B % 2 == 0:
        return B // 2
    return 1


def block_forward(x, params):
    B, T, C = x.shape
    assert C == N_EMBD and T <= BLOCK_SIZE and T % 8 == 0
    fused = _fuse_params(params)
    BB = _pick_bb(B)
    assert B % BB == 0

    def rep_spec(p):
        n = p.ndim
        return pl.BlockSpec(p.shape, lambda b, n=n: (0,) * n)

    param_specs = [rep_spec(p) for p in fused]

    return pl.pallas_call(
        block_kernel,
        out_shape=jax.ShapeDtypeStruct((B, T, C), jnp.float32),
        grid_spec=pltpu.PrefetchScalarGridSpec(
            num_scalar_prefetch=0,
            grid=(B // BB,),
            in_specs=[pl.BlockSpec((BB, T, C), lambda b: (b, 0, 0))] + param_specs,
            out_specs=pl.BlockSpec((BB, T, C), lambda b: (b, 0, 0)),
        ),
        compiler_params=pltpu.CompilerParams(
            dimension_semantics=("parallel",),
            # No vmem_limit override: footprint is ~2 MiB; 64 MiB would equal
            # v7x's entire per-core VMEM.
        ),
    )(x, *fused)


# ---------------- pure-JAX reference (mirrors the PyTorch module) ------------
def block_ref(x, params):
    (ln1_w, ln1_b, wq, wk, wv, wproj, bproj,
     ln2_w, ln2_b, w1, b1, lnf_w, lnf_b, w2, b2) = params

    def ln(v, w, b):
        mu = jnp.mean(v, axis=-1, keepdims=True)
        var = jnp.mean((v - mu) ** 2, axis=-1, keepdims=True)
        return (v - mu) / jnp.sqrt(var + EPS) * w + b

    B, T, C = x.shape
    xn = ln(x, ln1_w, ln1_b)
    causal = jnp.tril(jnp.ones((T, T), bool))
    scale = 1.0 / math.sqrt(HEAD_SIZE)
    heads = []
    for h in range(N_HEAD):
        q = xn @ wq[h]
        k = xn @ wk[h]
        v = xn @ wv[h]
        s = jnp.einsum("btd,bsd->bts", q, k) * scale
        s = jnp.where(causal, s, -jnp.inf)
        p = jax.nn.softmax(s, axis=-1)
        heads.append(jnp.einsum("bts,bsd->btd", p, v))
    cat = jnp.concatenate(heads, axis=-1)
    wproj_full = jnp.concatenate([wproj[h] for h in range(N_HEAD)], axis=0)
    x1 = x + cat @ wproj_full + bproj

    xn2 = ln(x1, ln2_w, ln2_b)
    hdn = jnp.maximum(ln(xn2 @ w1 + b1, lnf_w, lnf_b), 0.0)
    return x1 + hdn @ w2 + b2


def init_params(key):
    ks = jax.random.split(key, 16)
    s = 0.05
    ln1_w = jnp.ones((1, N_EMBD), jnp.float32)
    ln1_b = jnp.zeros((1, N_EMBD), jnp.float32)
    wq = jax.random.normal(ks[0], (N_HEAD, N_EMBD, HEAD_SIZE), jnp.float32) * s
    wk = jax.random.normal(ks[1], (N_HEAD, N_EMBD, HEAD_SIZE), jnp.float32) * s
    wv = jax.random.normal(ks[2], (N_HEAD, N_EMBD, HEAD_SIZE), jnp.float32) * s
    wproj = jax.random.normal(ks[3], (N_HEAD, HEAD_SIZE, N_EMBD), jnp.float32) * s
    bproj = jax.random.normal(ks[4], (1, N_EMBD), jnp.float32) * s
    ln2_w = jnp.ones((1, N_EMBD), jnp.float32)
    ln2_b = jnp.zeros((1, N_EMBD), jnp.float32)
    w1 = jax.random.normal(ks[5], (N_EMBD, HIDDEN), jnp.float32) * s
    b1 = jax.random.normal(ks[6], (1, HIDDEN), jnp.float32) * s
    lnf_w = jnp.ones((1, HIDDEN), jnp.float32)
    lnf_b = jnp.zeros((1, HIDDEN), jnp.float32)
    w2 = jax.random.normal(ks[7], (HIDDEN, N_EMBD), jnp.float32) * s
    b2 = jax.random.normal(ks[8], (1, N_EMBD), jnp.float32) * s
    return (ln1_w, ln1_b, wq, wk, wv, wproj, bproj,
            ln2_w, ln2_b, w1, b1, lnf_w, lnf_b, w2, b2)


if __name__ == "__main__":
    key = jax.random.PRNGKey(0)
    k_x, k_p = jax.random.split(key)
    B, T = 2, BLOCK_SIZE                      # (2, 128, 64)
    x = jax.random.normal(k_x, (B, T, N_EMBD), jnp.float32)
    params = init_params(k_p)

    out = jax.block_until_ready(block_forward(x, params))
    ref = jax.block_until_ready(block_ref(x, params))

    assert out.shape == (B, T, N_EMBD)
    assert jnp.all(jnp.isfinite(out))
    # bf16 matmul operands (f32 accumulation) -> slightly looser tolerance
    assert jnp.allclose(out, ref, atol=2e-2, rtol=2e-2), \
        f"max abs err {jnp.max(jnp.abs(out - ref))}"

    print("KERNEL_OK")
</pallas_src>

<mosaic_0001>
module attributes {stable_mosaic.version = 11 : i64} {
  func.func @block_kernel(%arg0: i32, %arg1: memref<1x128x64xf32, #tpu.memory_space<vmem>>, %arg2: memref<1x64xf32, #tpu.memory_space<vmem>>, %arg3: memref<1x64xf32, #tpu.memory_space<vmem>>, %arg4: memref<64x192xbf16, #tpu.memory_space<vmem>>, %arg5: memref<64x64xbf16, #tpu.memory_space<vmem>>, %arg6: memref<1x64xf32, #tpu.memory_space<vmem>>, %arg7: memref<1x64xf32, #tpu.memory_space<vmem>>, %arg8: memref<1x64xf32, #tpu.memory_space<vmem>>, %arg9: memref<64x256xbf16, #tpu.memory_space<vmem>>, %arg10: memref<1x256xf32, #tpu.memory_space<vmem>>, %arg11: memref<1x256xf32, #tpu.memory_space<vmem>>, %arg12: memref<1x256xf32, #tpu.memory_space<vmem>>, %arg13: memref<256x64xbf16, #tpu.memory_space<vmem>>, %arg14: memref<1x64xf32, #tpu.memory_space<vmem>>, %arg15: memref<1x128x64xf32, #tpu.memory_space<vmem>>) attributes {dimension_semantics = [#tpu.dimension_semantics<parallel>], iteration_bounds = array<i64: 2>, scalar_prefetch = 0 : i64, scratch_operands = 0 : i64, tpu.core_type = #tpu.core_type<tc>, window_params = [{transform_indices = @transform_0, window_bounds = array<i64: 1, 128, 64>}, {pipeline_mode = #tpu.pipeline_mode<synchronous>, transform_indices = @transform_1, window_bounds = array<i64: 1, 64>}, {pipeline_mode = #tpu.pipeline_mode<synchronous>, transform_indices = @transform_2, window_bounds = array<i64: 1, 64>}, {pipeline_mode = #tpu.pipeline_mode<synchronous>, transform_indices = @transform_3, window_bounds = array<i64: 64, 192>}, {pipeline_mode = #tpu.pipeline_mode<synchronous>, transform_indices = @transform_4, window_bounds = array<i64: 64, 64>}, {pipeline_mode = #tpu.pipeline_mode<synchronous>, transform_indices = @transform_5, window_bounds = array<i64: 1, 64>}, {pipeline_mode = #tpu.pipeline_mode<synchronous>, transform_indices = @transform_6, window_bounds = array<i64: 1, 64>}, {pipeline_mode = #tpu.pipeline_mode<synchronous>, transform_indices = @transform_7, window_bounds = array<i64: 1, 64>}, {pipeline_mode = #tpu.pipeline_mode<synchronous>, transform_indices = @transform_8, window_bounds = array<i64: 64, 256>}, {pipeline_mode = #tpu.pipeline_mode<synchronous>, transform_indices = @transform_9, window_bounds = array<i64: 1, 256>}, {pipeline_mode = #tpu.pipeline_mode<synchronous>, transform_indices = @transform_10, window_bounds = array<i64: 1, 256>}, {pipeline_mode = #tpu.pipeline_mode<synchronous>, transform_indices = @transform_11, window_bounds = array<i64: 1, 256>}, {pipeline_mode = #tpu.pipeline_mode<synchronous>, transform_indices = @transform_12, window_bounds = array<i64: 256, 64>}, {pipeline_mode = #tpu.pipeline_mode<synchronous>, transform_indices = @transform_13, window_bounds = array<i64: 1, 64>}, {transform_indices = @transform_14, window_bounds = array<i64: 1, 128, 64>}]} {
    %c0 = arith.constant 0 : index
    %c0_0 = arith.constant 0 : index
    %c0_1 = arith.constant 0 : index
    %0 = vector.load %arg1[%c0, %c0_0, %c0_1] : memref<1x128x64xf32, #tpu.memory_space<vmem>>, vector<1x128x64xf32>
    %1 = vector.shape_cast %0 : vector<1x128x64xf32> to vector<128x64xf32>
    %c0_2 = arith.constant 0 : index
    %c0_3 = arith.constant 0 : index
    %2 = vector.load %arg2[%c0_2, %c0_3] : memref<1x64xf32, #tpu.memory_space<vmem>>, vector<1x64xf32>
    %c0_4 = arith.constant 0 : index
    %c0_5 = arith.constant 0 : index
    %3 = vector.load %arg3[%c0_4, %c0_5] : memref<1x64xf32, #tpu.memory_space<vmem>>, vector<1x64xf32>
    %cst = arith.constant dense<0.000000e+00> : vector<128xf32>
    %4 = vector.multi_reduction <add>, %1, %cst [1] : vector<128x64xf32> to vector<128xf32>
    %5 = vector.shape_cast %4 : vector<128xf32> to vector<128x1xf32>
    %cst_6 = arith.constant 6.400000e+01 : f32
    %6 = vector.broadcast %cst_6 : f32 to vector<128x1xf32>
    %7 = arith.divf %5, %6 : vector<128x1xf32>
    %8 = vector.broadcast %7 : vector<128x1xf32> to vector<128x64xf32>
    %9 = arith.subf %1, %8 : vector<128x64xf32>
    %10 = arith.mulf %9, %9 : vector<128x64xf32>
    %cst_7 = arith.constant dense<0.000000e+00> : vector<128xf32>
    %11 = vector.multi_reduction <add>, %10, %cst_7 [1] : vector<128x64xf32> to vector<128xf32>
    %12 = vector.shape_cast %11 : vector<128xf32> to vector<128x1xf32>
    %cst_8 = arith.constant 6.400000e+01 : f32
    %13 = vector.broadcast %cst_8 : f32 to vector<128x1xf32>
    %14 = arith.divf %12, %13 : vector<128x1xf32>
    %cst_9 = arith.constant 9.99999974E-6 : f32
    %15 = vector.broadcast %cst_9 : f32 to vector<128x1xf32>
    %16 = arith.addf %14, %15 : vector<128x1xf32>
    %17 = math.rsqrt %16 : vector<128x1xf32>
    %18 = vector.broadcast %17 : vector<128x1xf32> to vector<128x64xf32>
    %19 = arith.mulf %9, %18 : vector<128x64xf32>
    %20 = vector.broadcast %2 : vector<1x64xf32> to vector<128x64xf32>
    %21 = arith.mulf %19, %20 : vector<128x64xf32>
    %22 = vector.broadcast %3 : vector<1x64xf32> to vector<128x64xf32>
    %23 = arith.addf %21, %22 : vector<128x64xf32>
    %24 = arith.truncf %23 : vector<128x64xf32> to vector<128x64xbf16>
    %c0_10 = arith.constant 0 : index
    %c0_11 = arith.constant 0 : index
    %25 = vector.load %arg4[%c0_10, %c0_11] : memref<64x192xbf16, #tpu.memory_space<vmem>>, vector<64x192xbf16>
    %cst_12 = arith.constant dense<0.000000e+00> : vector<128x192xf32>
    %26 = tpu.matmul %24, %25, %cst_12 {dimension_numbers = #tpu.dot_dimension_numbers<[1], [0], [0], [1], [0, 0, 1, 1], [], []>} : vector<128x64xbf16>, vector<64x192xbf16>, vector<128x192xf32> -> vector<128x192xf32>
    %27 = vector.extract_strided_slice %26 {offsets = [0, 0], sizes = [128, 64], strides = [1, 1]} : vector<128x192xf32> to vector<128x64xf32>
    %28 = vector.extract_strided_slice %26 {offsets = [0, 64], sizes = [128, 64], strides = [1, 1]} : vector<128x192xf32> to vector<128x64xf32>
    %29 = vector.extract_strided_slice %26 {offsets = [0, 128], sizes = [128, 64], strides = [1, 1]} : vector<128x192xf32> to vector<128x64xf32>
    %30 = tpu.iota {dimensions = array<i32: 0>} : vector<128x128xi32>
    %31 = tpu.iota {dimensions = array<i32: 1>} : vector<128x128xi32>
    %32 = arith.cmpi sge, %30, %31 : vector<128x128xi32>
    %33 = vector.shape_cast %32 : vector<128x128xi1> to vector<1x128x128xi1>
    %34 = vector.extract_strided_slice %27 {offsets = [0, 0], sizes = [128, 8], strides = [1, 1]} : vector<128x64xf32> to vector<128x8xf32>
    %35 = vector.extract_strided_slice %27 {offsets = [0, 8], sizes = [128, 8], strides = [1, 1]} : vector<128x64xf32> to vector<128x8xf32>
    %36 = vector.extract_strided_slice %27 {offsets = [0, 16], sizes = [128, 8], strides = [1, 1]} : vector<128x64xf32> to vector<128x8xf32>
    %37 = vector.extract_strided_slice %27 {offsets = [0, 24], sizes = [128, 8], strides = [1, 1]} : vector<128x64xf32> to vector<128x8xf32>
    %38 = vector.extract_strided_slice %27 {offsets = [0, 32], sizes = [128, 8], strides = [1, 1]} : vector<128x64xf32> to vector<128x8xf32>
    %39 = vector.extract_strided_slice %27 {offsets = [0, 40], sizes = [128, 8], strides = [1, 1]} : vector<128x64xf32> to vector<128x8xf32>
    %40 = vector.extract_strided_slice %27 {offsets = [0, 48], sizes = [128, 8], strides = [1, 1]} : vector<128x64xf32> to vector<128x8xf32>
    %41 = vector.extract_strided_slice %27 {offsets = [0, 56], sizes = [128, 8], strides = [1, 1]} : vector<128x64xf32> to vector<128x8xf32>
    %42 = vector.shape_cast %34 : vector<128x8xf32> to vector<1x128x8xf32>
    %43 = vector.shape_cast %35 : vector<128x8xf32> to vector<1x128x8xf32>
    %44 = vector.shape_cast %36 : vector<128x8xf32> to vector<1x128x8xf32>
    %45 = vector.shape_cast %37 : vector<128x8xf32> to vector<1x128x8xf32>
    %46 = vector.shape_cast %38 : vector<128x8xf32> to vector<1x128x8xf32>
    %47 = vector.shape_cast %39 : vector<128x8xf32> to vector<1x128x8xf32>
    %48 = vector.shape_cast %40 : vector<128x8xf32> to vector<1x128x8xf32>
    %49 = vector.shape_cast %41 : vector<128x8xf32> to vector<1x128x8xf32>
    %50 = tpu.concatenate %42, %43, %44, %45, %46, %47, %48, %49 in 0 : vector<1x128x8xf32>, vector<1x128x8xf32>, vector<1x128x8xf32>, vector<1x128x8xf32>, vector<1x128x8xf32>, vector<1x128x8xf32>, vector<1x128x8xf32>, vector<1x128x8xf32> -> vector<8x128x8xf32>
    %51 = arith.truncf %50 : vector<8x128x8xf32> to vector<8x128x8xbf16>
    %52 = vector.extract_strided_slice %28 {offsets = [0, 0], sizes = [128, 8], strides = [1, 1]} : vector<128x64xf32> to vector<128x8xf32>
    %53 = vector.extract_strided_slice %28 {offsets = [0, 8], sizes = [128, 8], strides = [1, 1]} : vector<128x64xf32> to vector<128x8xf32>
    %54 = vector.extract_strided_slice %28 {offsets = [0, 16], sizes = [128, 8], strides = [1, 1]} : vector<128x64xf32> to vector<128x8xf32>
    %55 = vector.extract_strided_slice %28 {offsets = [0, 24], sizes = [128, 8], strides = [1, 1]} : vector<128x64xf32> to vector<128x8xf32>
    %56 = vector.extract_strided_slice %28 {offsets = [0, 32], sizes = [128, 8], strides = [1, 1]} : vector<128x64xf32> to vector<128x8xf32>
    %57 = vector.extract_strided_slice %28 {offsets = [0, 40], sizes = [128, 8], strides = [1, 1]} : vector<128x64xf32> to vector<128x8xf32>
    %58 = vector.extract_strided_slice %28 {offsets = [0, 48], sizes = [128, 8], strides = [1, 1]} : vector<128x64xf32> to vector<128x8xf32>
    %59 = vector.extract_strided_slice %28 {offsets = [0, 56], sizes = [128, 8], strides = [1, 1]} : vector<128x64xf32> to vector<128x8xf32>
    %60 = vector.shape_cast %52 : vector<128x8xf32> to vector<1x128x8xf32>
    %61 = vector.shape_cast %53 : vector<128x8xf32> to vector<1x128x8xf32>
    %62 = vector.shape_cast %54 : vector<128x8xf32> to vector<1x128x8xf32>
    %63 = vector.shape_cast %55 : vector<128x8xf32> to vector<1x128x8xf32>
    %64 = vector.shape_cast %56 : vector<128x8xf32> to vector<1x128x8xf32>
    %65 = vector.shape_cast %57 : vector<128x8xf32> to vector<1x128x8xf32>
    %66 = vector.shape_cast %58 : vector<128x8xf32> to vector<1x128x8xf32>
    %67 = vector.shape_cast %59 : vector<128x8xf32> to vector<1x128x8xf32>
    %68 = tpu.concatenate %60, %61, %62, %63, %64, %65, %66, %67 in 0 : vector<1x128x8xf32>, vector<1x128x8xf32>, vector<1x128x8xf32>, vector<1x128x8xf32>, vector<1x128x8xf32>, vector<1x128x8xf32>, vector<1x128x8xf32>, vector<1x128x8xf32> -> vector<8x128x8xf32>
    %69 = arith.truncf %68 : vector<8x128x8xf32> to vector<8x128x8xbf16>
    %70 = vector.extract_strided_slice %29 {offsets = [0, 0], sizes = [128, 8], strides = [1, 1]} : vector<128x64xf32> to vector<128x8xf32>
    %71 = vector.extract_strided_slice %29 {offsets = [0, 8], sizes = [128, 8], strides = [1, 1]} : vector<128x64xf32> to vector<128x8xf32>
    %72 = vector.extract_strided_slice %29 {offsets = [0, 16], sizes = [128, 8], strides = [1, 1]} : vector<128x64xf32> to vector<128x8xf32>
    %73 = vector.extract_strided_slice %29 {offsets = [0, 24], sizes = [128, 8], strides = [1, 1]} : vector<128x64xf32> to vector<128x8xf32>
    %74 = vector.extract_strided_slice %29 {offsets = [0, 32], sizes = [128, 8], strides = [1, 1]} : vector<128x64xf32> to vector<128x8xf32>
    %75 = vector.extract_strided_slice %29 {offsets = [0, 40], sizes = [128, 8], strides = [1, 1]} : vector<128x64xf32> to vector<128x8xf32>
    %76 = vector.extract_strided_slice %29 {offsets = [0, 48], sizes = [128, 8], strides = [1, 1]} : vector<128x64xf32> to vector<128x8xf32>
    %77 = vector.extract_strided_slice %29 {offsets = [0, 56], sizes = [128, 8], strides = [1, 1]} : vector<128x64xf32> to vector<128x8xf32>
    %78 = vector.shape_cast %70 : vector<128x8xf32> to vector<1x128x8xf32>
    %79 = vector.shape_cast %71 : vector<128x8xf32> to vector<1x128x8xf32>
    %80 = vector.shape_cast %72 : vector<128x8xf32> to vector<1x128x8xf32>
    %81 = vector.shape_cast %73 : vector<128x8xf32> to vector<1x128x8xf32>
    %82 = vector.shape_cast %74 : vector<128x8xf32> to vector<1x128x8xf32>
    %83 = vector.shape_cast %75 : vector<128x8xf32> to vector<1x128x8xf32>
    %84 = vector.shape_cast %76 : vector<128x8xf32> to vector<1x128x8xf32>
    %85 = vector.shape_cast %77 : vector<128x8xf32> to vector<1x128x8xf32>
    %86 = tpu.concatenate %78, %79, %80, %81, %82, %83, %84, %85 in 0 : vector<1x128x8xf32>, vector<1x128x8xf32>, vector<1x128x8xf32>, vector<1x128x8xf32>, vector<1x128x8xf32>, vector<1x128x8xf32>, vector<1x128x8xf32>, vector<1x128x8xf32> -> vector<8x128x8xf32>
    %87 = arith.truncf %86 : vector<8x128x8xf32> to vector<8x128x8xbf16>
    "tpu.trace_start"() <{level = 10 : i32, message = "hqd,hkd->hqk"}> : () -> ()
    %cst_13 = arith.constant dense<0.000000e+00> : vector<8x128x128xf32>
    %88 = tpu.matmul %51, %69, %cst_13 {dimension_numbers = #tpu.dot_dimension_numbers<[2], [2], [1], [1], [0, 0, 0, 1, 1, 1], [0], [0]>} : vector<8x128x8xbf16>, vector<8x128x8xbf16>, vector<8x128x128xf32> -> vector<8x128x128xf32>
    "tpu.trace_stop"() : () -> ()
    %cst_14 = arith.constant 0.353553385 : f32
    %89 = vector.broadcast %cst_14 : f32 to vector<8x128x128xf32>
    %90 = arith.mulf %88, %89 : vector<8x128x128xf32>
    %cst_15 = arith.constant 0xFF800000 : f32
    %91 = vector.shape_cast %33 : vector<1x128x128xi1> to vector<1x128x128xi1>
    %92 = vector.broadcast %91 : vector<1x128x128xi1> to vector<8x128x128xi1>
    %93 = vector.broadcast %cst_15 : f32 to vector<8x128x128xf32>
    %94 = arith.select %92, %90, %93 : vector<8x128x128xi1>, vector<8x128x128xf32>
    %cst_16 = arith.constant dense<0xFF800000> : vector<8x128xf32>
    %95 = vector.multi_reduction <maximumf>, %94, %cst_16 [2] : vector<8x128x128xf32> to vector<8x128xf32>
    %96 = vector.shape_cast %95 : vector<8x128xf32> to vector<8x128x1xf32>
    %97 = vector.broadcast %96 : vector<8x128x1xf32> to vector<8x128x128xf32>
    %98 = arith.subf %94, %97 : vector<8x128x128xf32>
    %99 = math.exp %98 : vector<8x128x128xf32>
    %cst_17 = arith.constant dense<0.000000e+00> : vector<8x128xf32>
    %100 = vector.multi_reduction <add>, %99, %cst_17 [2] : vector<8x128x128xf32> to vector<8x128xf32>
    %101 = vector.shape_cast %100 : vector<8x128xf32> to vector<8x128x1xf32>
    %102 = tpu.reciprocal %101 {approx = true} : vector<8x128x1xf32> -> vector<8x128x1xf32>
    %103 = vector.broadcast %102 : vector<8x128x1xf32> to vector<8x128x128xf32>
    %104 = arith.mulf %99, %103 : vector<8x128x128xf32>
    %105 = arith.truncf %104 : vector<8x128x128xf32> to vector<8x128x128xbf16>
    "tpu.trace_start"() <{level = 10 : i32, message = "hqk,hkd->hqd"}> : () -> ()
    %cst_18 = arith.constant dense<0.000000e+00> : vector<8x128x8xf32>
    %106 = tpu.matmul %105, %87, %cst_18 {dimension_numbers = #tpu.dot_dimension_numbers<[2], [1], [1], [2], [0, 0, 0, 1, 1, 2], [0], [0]>} : vector<8x128x128xbf16>, vector<8x128x8xbf16>, vector<8x128x8xf32> -> vector<8x128x8xf32>
    "tpu.trace_stop"() : () -> ()
    %107 = vector.extract_strided_slice %106 {offsets = [0, 0, 0], sizes = [1, 128, 8], strides = [1, 1, 1]} : vector<8x128x8xf32> to vector<1x128x8xf32>
    %108 = vector.shape_cast %107 : vector<1x128x8xf32> to vector<128x8xf32>
    %109 = vector.extract_strided_slice %106 {offsets = [1, 0, 0], sizes = [1, 128, 8], strides = [1, 1, 1]} : vector<8x128x8xf32> to vector<1x128x8xf32>
    %110 = vector.shape_cast %109 : vector<1x128x8xf32> to vector<128x8xf32>
    %111 = vector.extract_strided_slice %106 {offsets = [2, 0, 0], sizes = [1, 128, 8], strides = [1, 1, 1]} : vector<8x128x8xf32> to vector<1x128x8xf32>
    %112 = vector.shape_cast %111 : vector<1x128x8xf32> to vector<128x8xf32>
    %113 = vector.extract_strided_slice %106 {offsets = [3, 0, 0], sizes = [1, 128, 8], strides = [1, 1, 1]} : vector<8x128x8xf32> to vector<1x128x8xf32>
    %114 = vector.shape_cast %113 : vector<1x128x8xf32> to vector<128x8xf32>
    %115 = vector.extract_strided_slice %106 {offsets = [4, 0, 0], sizes = [1, 128, 8], strides = [1, 1, 1]} : vector<8x128x8xf32> to vector<1x128x8xf32>
    %116 = vector.shape_cast %115 : vector<1x128x8xf32> to vector<128x8xf32>
    %117 = vector.extract_strided_slice %106 {offsets = [5, 0, 0], sizes = [1, 128, 8], strides = [1, 1, 1]} : vector<8x128x8xf32> to vector<1x128x8xf32>
    %118 = vector.shape_cast %117 : vector<1x128x8xf32> to vector<128x8xf32>
    %119 = vector.extract_strided_slice %106 {offsets = [6, 0, 0], sizes = [1, 128, 8], strides = [1, 1, 1]} : vector<8x128x8xf32> to vector<1x128x8xf32>
    %120 = vector.shape_cast %119 : vector<1x128x8xf32> to vector<128x8xf32>
    %121 = vector.extract_strided_slice %106 {offsets = [7, 0, 0], sizes = [1, 128, 8], strides = [1, 1, 1]} : vector<8x128x8xf32> to vector<1x128x8xf32>
    %122 = vector.shape_cast %121 : vector<1x128x8xf32> to vector<128x8xf32>
    %123 = tpu.concatenate %108, %110, %112, %114, %116, %118, %120, %122 in 1 : vector<128x8xf32>, vector<128x8xf32>, vector<128x8xf32>, vector<128x8xf32>, vector<128x8xf32>, vector<128x8xf32>, vector<128x8xf32>, vector<128x8xf32> -> vector<128x64xf32>
    %124 = arith.truncf %123 : vector<128x64xf32> to vector<128x64xbf16>
    %c0_19 = arith.constant 0 : index
    %c0_20 = arith.constant 0 : index
    %125 = vector.load %arg5[%c0_19, %c0_20] : memref<64x64xbf16, #tpu.memory_space<vmem>>, vector<64x64xbf16>
    %cst_21 = arith.constant dense<0.000000e+00> : vector<128x64xf32>
    %126 = tpu.matmul %124, %125, %cst_21 {dimension_numbers = #tpu.dot_dimension_numbers<[1], [0], [0], [1], [0, 0, 1, 1], [], []>} : vector<128x64xbf16>, vector<64x64xbf16>, vector<128x64xf32> -> vector<128x64xf32>
    %c0_22 = arith.constant 0 : index
    %c0_23 = arith.constant 0 : index
    %127 = vector.load %arg6[%c0_22, %c0_23] : memref<1x64xf32, #tpu.memory_space<vmem>>, vector<1x64xf32>
    %128 = vector.broadcast %127 : vector<1x64xf32> to vector<128x64xf32>
    %129 = arith.addf %126, %128 : vector<128x64xf32>
    %130 = arith.addf %1, %129 : vector<128x64xf32>
    %c0_24 = arith.constant 0 : index
    %c0_25 = arith.constant 0 : index
    %131 = vector.load %arg7[%c0_24, %c0_25] : memref<1x64xf32, #tpu.memory_space<vmem>>, vector<1x64xf32>
    %c0_26 = arith.constant 0 : index
    %c0_27 = arith.constant 0 : index
    %132 = vector.load %arg8[%c0_26, %c0_27] : memref<1x64xf32, #tpu.memory_space<vmem>>, vector<1x64xf32>
    %cst_28 = arith.constant dense<0.000000e+00> : vector<128xf32>
    %133 = vector.multi_reduction <add>, %130, %cst_28 [1] : vector<128x64xf32> to vector<128xf32>
    %134 = vector.shape_cast %133 : vector<128xf32> to vector<128x1xf32>
    %cst_29 = arith.constant 6.400000e+01 : f32
    %135 = vector.broadcast %cst_29 : f32 to vector<128x1xf32>
    %136 = arith.divf %134, %135 : vector<128x1xf32>
    %137 = vector.broadcast %136 : vector<128x1xf32> to vector<128x64xf32>
    %138 = arith.subf %130, %137 : vector<128x64xf32>
    %139 = arith.mulf %138, %138 : vector<128x64xf32>
    %cst_30 = arith.constant dense<0.000000e+00> : vector<128xf32>
    %140 = vector.multi_reduction <add>, %139, %cst_30 [1] : vector<128x64xf32> to vector<128xf32>
    %141 = vector.shape_cast %140 : vector<128xf32> to vector<128x1xf32>
    %cst_31 = arith.constant 6.400000e+01 : f32
    %142 = vector.broadcast %cst_31 : f32 to vector<128x1xf32>
    %143 = arith.divf %141, %142 : vector<128x1xf32>
    %cst_32 = arith.constant 9.99999974E-6 : f32
    %144 = vector.broadcast %cst_32 : f32 to vector<128x1xf32>
    %145 = arith.addf %143, %144 : vector<128x1xf32>
    %146 = math.rsqrt %145 : vector<128x1xf32>
    %147 = vector.broadcast %146 : vector<128x1xf32> to vector<128x64xf32>
    %148 = arith.mulf %138, %147 : vector<128x64xf32>
    %149 = vector.broadcast %131 : vector<1x64xf32> to vector<128x64xf32>
    %150 = arith.mulf %148, %149 : vector<128x64xf32>
    %151 = vector.broadcast %132 : vector<1x64xf32> to vector<128x64xf32>
    %152 = arith.addf %150, %151 : vector<128x64xf32>
    %153 = arith.truncf %152 : vector<128x64xf32> to vector<128x64xbf16>
    %c0_33 = arith.constant 0 : index
    %c0_34 = arith.constant 0 : index
    %154 = vector.load %arg9[%c0_33, %c0_34] : memref<64x256xbf16, #tpu.memory_space<vmem>>, vector<64x256xbf16>
    %cst_35 = arith.constant dense<0.000000e+00> : vector<128x256xf32>
    %155 = tpu.matmul %153, %154, %cst_35 {dimension_numbers = #tpu.dot_dimension_numbers<[1], [0], [0], [1], [0, 0, 1, 1], [], []>} : vector<128x64xbf16>, vector<64x256xbf16>, vector<128x256xf32> -> vector<128x256xf32>
    %c0_36 = arith.constant 0 : index
    %c0_37 = arith.constant 0 : index
    %156 = vector.load %arg10[%c0_36, %c0_37] : memref<1x256xf32, #tpu.memory_space<vmem>>, vector<1x256xf32>
    %157 = vector.broadcast %156 : vector<1x256xf32> to vector<128x256xf32>
    %158 = arith.addf %155, %157 : vector<128x256xf32>
    %c0_38 = arith.constant 0 : index
    %c0_39 = arith.constant 0 : index
    %159 = vector.load %arg11[%c0_38, %c0_39] : memref<1x256xf32, #tpu.memory_space<vmem>>, vector<1x256xf32>
    %c0_40 = arith.constant 0 : index
    %c0_41 = arith.constant 0 : index
    %160 = vector.load %arg12[%c0_40, %c0_41] : memref<1x256xf32, #tpu.memory_space<vmem>>, vector<1x256xf32>
    %cst_42 = arith.constant dense<0.000000e+00> : vector<128xf32>
    %161 = vector.multi_reduction <add>, %158, %cst_42 [1] : vector<128x256xf32> to vector<128xf32>
    %162 = vector.shape_cast %161 : vector<128xf32> to vector<128x1xf32>
    %cst_43 = arith.constant 2.560000e+02 : f32
    %163 = vector.broadcast %cst_43 : f32 to vector<128x1xf32>
    %164 = arith.divf %162, %163 : vector<128x1xf32>
    %165 = vector.broadcast %164 : vector<128x1xf32> to vector<128x256xf32>
    %166 = arith.subf %158, %165 : vector<128x256xf32>
    %167 = arith.mulf %166, %166 : vector<128x256xf32>
    %cst_44 = arith.constant dense<0.000000e+00> : vector<128xf32>
    %168 = vector.multi_reduction <add>, %167, %cst_44 [1] : vector<128x256xf32> to vector<128xf32>
    %169 = vector.shape_cast %168 : vector<128xf32> to vector<128x1xf32>
    %cst_45 = arith.constant 2.560000e+02 : f32
    %170 = vector.broadcast %cst_45 : f32 to vector<128x1xf32>
    %171 = arith.divf %169, %170 : vector<128x1xf32>
    %cst_46 = arith.constant 9.99999974E-6 : f32
    %172 = vector.broadcast %cst_46 : f32 to vector<128x1xf32>
    %173 = arith.addf %171, %172 : vector<128x1xf32>
    %174 = math.rsqrt %173 : vector<128x1xf32>
    %175 = vector.broadcast %174 : vector<128x1xf32> to vector<128x256xf32>
    %176 = arith.mulf %166, %175 : vector<128x256xf32>
    %177 = vector.broadcast %159 : vector<1x256xf32> to vector<128x256xf32>
    %178 = arith.mulf %176, %177 : vector<128x256xf32>
    %179 = vector.broadcast %160 : vector<1x256xf32> to vector<128x256xf32>
    %180 = arith.addf %178, %179 : vector<128x256xf32>
    %cst_47 = arith.constant 0.000000e+00 : f32
    %181 = vector.broadcast %cst_47 : f32 to vector<128x256xf32>
    %182 = arith.maximumf %180, %181 : vector<128x256xf32>
    %183 = arith.truncf %182 : vector<128x256xf32> to vector<128x256xbf16>
    %c0_48 = arith.constant 0 : index
    %c0_49 = arith.constant 0 : index
    %184 = vector.load %arg13[%c0_48, %c0_49] : memref<256x64xbf16, #tpu.memory_space<vmem>>, vector<256x64xbf16>
    %cst_50 = arith.constant dense<0.000000e+00> : vector<128x64xf32>
    %185 = tpu.matmul %183, %184, %cst_50 {dimension_numbers = #tpu.dot_dimension_numbers<[1], [0], [0], [1], [0, 0, 1, 1], [], []>} : vector<128x256xbf16>, vector<256x64xbf16>, vector<128x64xf32> -> vector<128x64xf32>
    %c0_51 = arith.constant 0 : index
    %c0_52 = arith.constant 0 : index
    %186 = vector.load %arg14[%c0_51, %c0_52] : memref<1x64xf32, #tpu.memory_space<vmem>>, vector<1x64xf32>
    %187 = vector.broadcast %186 : vector<1x64xf32> to vector<128x64xf32>
    %188 = arith.addf %185, %187 : vector<128x64xf32>
    %189 = arith.addf %130, %188 : vector<128x64xf32>
    %190 = vector.shape_cast %189 : vector<128x64xf32> to vector<1x128x64xf32>
    %c0_53 = arith.constant 0 : index
    %c0_54 = arith.constant 0 : index
    %c0_55 = arith.constant 0 : index
    %191 = vector.load %arg15[%c0_53, %c0_54, %c0_55] : memref<1x128x64xf32, #tpu.memory_space<vmem>>, vector<1x128x64xf32>
    tpu.vector_store %arg15[%c0_53, %c0_54, %c0_55], %190 {strides = array<i32>} : memref<1x128x64xf32, #tpu.memory_space<vmem>>, vector<1x128x64xf32>,
    return
  }
  func.func @transform_0(%arg0: i32) -> (i32, i32, i32) {
    %c0_i32 = arith.constant 0 : i32
    %c0_i32_0 = arith.constant 0 : i32
    %c0_i32_1 = arith.constant 0 : i32
    return %arg0, %c0_i32, %c0_i32_0 : i32, i32, i32
  }
  func.func @transform_1(%arg0: i32) -> (i32, i32) {
    %c0_i32 = arith.constant 0 : i32
    %c0_i32_0 = arith.constant 0 : i32
    %c0_i32_1 = arith.constant 0 : i32
    return %c0_i32, %c0_i32_0 : i32, i32
  }
  func.func @transform_2(%arg0: i32) -> (i32, i32) {
    %c0_i32 = arith.constant 0 : i32
    %c0_i32_0 = arith.constant 0 : i32
    %c0_i32_1 = arith.constant 0 : i32
    return %c0_i32, %c0_i32_0 : i32, i32
  }
  func.func @transform_3(%arg0: i32) -> (i32, i32) {
    %c0_i32 = arith.constant 0 : i32
    %c0_i32_0 = arith.constant 0 : i32
    %c0_i32_1 = arith.constant 0 : i32
    return %c0_i32, %c0_i32_0 : i32, i32
  }
  func.func @transform_4(%arg0: i32) -> (i32, i32) {
    %c0_i32 = arith.constant 0 : i32
    %c0_i32_0 = arith.constant 0 : i32
    %c0_i32_1 = arith.constant 0 : i32
    return %c0_i32, %c0_i32_0 : i32, i32
  }
  func.func @transform_5(%arg0: i32) -> (i32, i32) {
    %c0_i32 = arith.constant 0 : i32
    %c0_i32_0 = arith.constant 0 : i32
    %c0_i32_1 = arith.constant 0 : i32
    return %c0_i32, %c0_i32_0 : i32, i32
  }
  func.func @transform_6(%arg0: i32) -> (i32, i32) {
    %c0_i32 = arith.constant 0 : i32
    %c0_i32_0 = arith.constant 0 : i32
    %c0_i32_1 = arith.constant 0 : i32
    return %c0_i32, %c0_i32_0 : i32, i32
  }
  func.func @transform_7(%arg0: i32) -> (i32, i32) {
    %c0_i32 = arith.constant 0 : i32
    %c0_i32_0 = arith.constant 0 : i32
    %c0_i32_1 = arith.constant 0 : i32
    return %c0_i32, %c0_i32_0 : i32, i32
  }
  func.func @transform_8(%arg0: i32) -> (i32, i32) {
    %c0_i32 = arith.constant 0 : i32
    %c0_i32_0 = arith.constant 0 : i32
    %c0_i32_1 = arith.constant 0 : i32
    return %c0_i32, %c0_i32_0 : i32, i32
  }
  func.func @transform_9(%arg0: i32) -> (i32, i32) {
    %c0_i32 = arith.constant 0 : i32
    %c0_i32_0 = arith.constant 0 : i32
    %c0_i32_1 = arith.constant 0 : i32
    return %c0_i32, %c0_i32_0 : i32, i32
  }
  func.func @transform_10(%arg0: i32) -> (i32, i32) {
    %c0_i32 = arith.constant 0 : i32
    %c0_i32_0 = arith.constant 0 : i32
    %c0_i32_1 = arith.constant 0 : i32
    return %c0_i32, %c0_i32_0 : i32, i32
  }
  func.func @transform_11(%arg0: i32) -> (i32, i32) {
    %c0_i32 = arith.constant 0 : i32
    %c0_i32_0 = arith.constant 0 : i32
    %c0_i32_1 = arith.constant 0 : i32
    return %c0_i32, %c0_i32_0 : i32, i32
  }
  func.func @transform_12(%arg0: i32) -> (i32, i32) {
    %c0_i32 = arith.constant 0 : i32
    %c0_i32_0 = arith.constant 0 : i32
    %c0_i32_1 = arith.constant 0 : i32
    return %c0_i32, %c0_i32_0 : i32, i32
  }
  func.func @transform_13(%arg0: i32) -> (i32, i32) {
    %c0_i32 = arith.constant 0 : i32
    %c0_i32_0 = arith.constant 0 : i32
    %c0_i32_1 = arith.constant 0 : i32
    return %c0_i32, %c0_i32_0 : i32, i32
  }
  func.func @transform_14(%arg0: i32) -> (i32, i32, i32) {
    %c0_i32 = arith.constant 0 : i32
    %c0_i32_0 = arith.constant 0 : i32
    %c0_i32_1 = arith.constant 0 : i32
    return %arg0, %c0_i32, %c0_i32_0 : i32, i32, i32
  }
}

</mosaic_0001>

<llo_original>
// kernel: tpu_custom_call.1
$region0: #{tpu_custom_call.1}
  #allocation0 [shape = 'u32[]', space=smem, size = 0x4, offset = 0x4, fixed_abs, tag = 'smem constant byte address 0x4 - core index']
  #allocation1 [shape = 'u32[72,128]{1,0:T(1,128)}', space=vmem, size = 0x9000, scoped, tag = 'internal scratch']
  %s0 = inlined_call_operand.vmem [shape: f32[2,128,64], index: 0, kind: input, shape index: {}]
  %s1 = inlined_call_operand.vmem [shape: f32[1,64], index: 1, kind: input, shape index: {}]
  %s2 = inlined_call_operand.vmem [shape: f32[1,64], index: 2, kind: input, shape index: {}]
  %s3 = inlined_call_operand.vmem [shape: bf16[64,192], index: 3, kind: input, shape index: {}]
  %s4 = inlined_call_operand.vmem [shape: bf16[64,64], index: 4, kind: input, shape index: {}]
  %s5 = inlined_call_operand.vmem [shape: f32[1,64], index: 5, kind: input, shape index: {}]
  %s6 = inlined_call_operand.vmem [shape: f32[1,64], index: 6, kind: input, shape index: {}]
  %s7 = inlined_call_operand.vmem [shape: f32[1,64], index: 7, kind: input, shape index: {}]
  %s8 = inlined_call_operand.vmem [shape: bf16[64,256], index: 8, kind: input, shape index: {}]
  %s9 = inlined_call_operand.vmem [shape: f32[1,256], index: 9, kind: input, shape index: {}]
  %s10 = inlined_call_operand.vmem [shape: f32[1,256], index: 10, kind: input, shape index: {}]
  %s11 = inlined_call_operand.vmem [shape: f32[1,256], index: 11, kind: input, shape index: {}]
  %s12 = inlined_call_operand.vmem [shape: bf16[256,64], index: 12, kind: input, shape index: {}]
  %s13 = inlined_call_operand.vmem [shape: f32[1,64], index: 13, kind: input, shape index: {}]
  %s14 = inlined_call_operand.vmem [shape: f32[2,128,64], index: 14, kind: output, shape index: {}]
  %s15 = sld [smem:[#allocation0]]
  $region89: #{tpu_custom_call.1} parent=0
    _
  %s17 = ssub.s32 1, %s15
  %s18 = scalar_select 0, %s17, %s15
  loop: start=0, step=1, limit=4
  $region2: #{tpu_custom_call.1} parent=0 // loop_pre_header
    _
  $region3: #{tpu_custom_call.1} parent=0 // loop_header
    %s20 = sphi 0, %s24
    %p21 = scmp.ge.s32.totalorder %s20, 4
    %s30 = sphi 0, %s32
    %s33 = sphi 0, %s30
    %s34 = sphi 0, %s33
    %s50 = sphi 0, %s34
    %s54 = sphi 0, %s54
    %s56 = sphi 0, %s54
    %s57 = sphi 0, %s56
    %s71 = sphi 0, %s57
    %s75 = sphi 0, %s75
    %s77 = sphi 0, %s75
    %s78 = sphi 0, %s77
    %s92 = sphi 0, %s78
    %s96 = sphi 0, %s96
    %s98 = sphi 0, %s96
    %s99 = sphi 0, %s98
    %s113 = sphi 0, %s99
    %s117 = sphi 0, %s117
    %s119 = sphi 0, %s117
    %s120 = sphi 0, %s119
    %s134 = sphi 0, %s120
    %s138 = sphi 0, %s138
    %s140 = sphi 0, %s138
    %s141 = sphi 0, %s140
    %s155 = sphi 0, %s141
    %s159 = sphi 0, %s159
    %s161 = sphi 0, %s159
    %s162 = sphi 0, %s161
    %s176 = sphi 0, %s162
    %s180 = sphi 0, %s180
    %s182 = sphi 0, %s180
    %s183 = sphi 0, %s182
    %s197 = sphi 0, %s183
    %s201 = sphi 0, %s201
    %s203 = sphi 0, %s201
    %s204 = sphi 0, %s203
    %s218 = sphi 0, %s204
    %s222 = sphi 0, %s222
    %s224 = sphi 0, %s222
    %s225 = sphi 0, %s224
    %s239 = sphi 0, %s225
    %s243 = sphi 0, %s243
    %s245 = sphi 0, %s243
    %s246 = sphi 0, %s245
    %s260 = sphi 0, %s246
    %s264 = sphi 0, %s264
    %s266 = sphi 0, %s264
    %s267 = sphi 0, %s266
    %s281 = sphi 0, %s267
    %s285 = sphi 0, %s285
    %s287 = sphi 0, %s285
    %s288 = sphi 0, %s287
    %s302 = sphi 0, %s288
    %s306 = sphi 0, %s306
    %s308 = sphi 0, %s306
    %s309 = sphi 0, %s308
    %s323 = sphi 0, %s309
    %s329 = sphi 0, %s331
    %s332 = sphi 0, %s329
    %s333 = sphi 0, %s332
    %s349 = sphi 0, %s333
  $region4: #{tpu_custom_call.1} parent=0 // loop_header_branch
    %23 = sbr.rel (%p21) target = $region8
  $region5: #{tpu_custom_call.1} parent=0 // loop_body
    %s25 = ssub.s32 %s20, 1
    %s26 = ssub.s32 %s20, 2
    %s27 = sadd.s32 %s20, 1
    %s28 = ssub.s32 %s20, %s27
    %p29 = scmp.eq.s32.totalorder %s28, 0
    %s31 = sadd.s32 %s30, 1
    %s32 = scalar_select %p29, %s30, %s31
    %p35 = pneg %p29
    %p36 = scmp.eq.s32.totalorder %s20, 1
    %p37 = por %p35, %p36
    %p38 = scmp.ne.s32.totalorder %s30, %s33
    %p39 = scmp.eq.s32.totalorder %s20, 0
    %p40 = por %p38, %p39
    %p41 = scmp.ne.s32.totalorder %s30, %s33
    %p42 = scmp.eq.s32.totalorder %s25, 1
    %p43 = por %p41, %p42
    %p44 = scmp.ne.s32.totalorder %s33, %s34
    %p45 = scmp.eq.s32.totalorder %s25, 0
    %p46 = por %p44, %p45
    %p47 = scmp.ne.s32.totalorder %s33, %s34
    %p48 = scmp.eq.s32.totalorder %s26, 1
    %p49 = por %p47, %p48
    %p51 = scmp.ne.s32.totalorder %s34, %s50
    %p52 = scmp.eq.s32.totalorder %s26, 0
    %p53 = por %p51, %p52
    %s55 = sadd.s32 %s54, 1
    %p58 = scmp.eq.s32.totalorder %s20, 1
    %p59 = scmp.ne.s32.totalorder %s54, %s56
    %p60 = scmp.eq.s32.totalorder %s20, 0
    %p61 = por %p59, %p60
    %p62 = scmp.ne.s32.totalorder %s54, %s56
    %p63 = scmp.eq.s32.totalorder %s25, 1
    %p64 = por %p62, %p63
    %p65 = scmp.ne.s32.totalorder %s56, %s57
    %p66 = scmp.eq.s32.totalorder %s25, 0
    %p67 = por %p65, %p66
    %p68 = scmp.ne.s32.totalorder %s56, %s57
    %p69 = scmp.eq.s32.totalorder %s26, 1
    %p70 = por %p68, %p69
    %p72 = scmp.ne.s32.totalorder %s57, %s71
    %p73 = scmp.eq.s32.totalorder %s26, 0
    %p74 = por %p72, %p73
    %s76 = sadd.s32 %s75, 1
    %p79 = scmp.eq.s32.totalorder %s20, 1
    %p80 = scmp.ne.s32.totalorder %s75, %s77
    %p81 = scmp.eq.s32.totalorder %s20, 0
    %p82 = por %p80, %p81
    %p83 = scmp.ne.s32.totalorder %s75, %s77
    %p84 = scmp.eq.s32.totalorder %s25, 1
    %p85 = por %p83, %p84
    %p86 = scmp.ne.s32.totalorder %s77, %s78
    %p87 = scmp.eq.s32.totalorder %s25, 0
    %p88 = por %p86, %p87
    %p89 = scmp.ne.s32.totalorder %s77, %s78
    %p90 = scmp.eq.s32.totalorder %s26, 1
    %p91 = por %p89, %p90
    %p93 = scmp.ne.s32.totalorder %s78, %s92
    %p94 = scmp.eq.s32.totalorder %s26, 0
    %p95 = por %p93, %p94
    %s97 = sadd.s32 %s96, 1
    %p100 = scmp.eq.s32.totalorder %s20, 1
    %p101 = scmp.ne.s32.totalorder %s96, %s98
    %p102 = scmp.eq.s32.totalorder %s20, 0
    %p103 = por %p101, %p102
    %p104 = scmp.ne.s32.totalorder %s96, %s98
    %p105 = scmp.eq.s32.totalorder %s25, 1
    %p106 = por %p104, %p105
    %p107 = scmp.ne.s32.totalorder %s98, %s99
    %p108 = scmp.eq.s32.totalorder %s25, 0
    %p109 = por %p107, %p108
    %p110 = scmp.ne.s32.totalorder %s98, %s99
    %p111 = scmp.eq.s32.totalorder %s26, 1
    %p112 = por %p110, %p111
    %p114 = scmp.ne.s32.totalorder %s99, %s113
    %p115 = scmp.eq.s32.totalorder %s26, 0
    %p116 = por %p114, %p115
    %s118 = sadd.s32 %s117, 1
    %p121 = scmp.eq.s32.totalorder %s20, 1
    %p122 = scmp.ne.s32.totalorder %s117, %s119
    %p123 = scmp.eq.s32.totalorder %s20, 0
    %p124 = por %p122, %p123
    %p125 = scmp.ne.s32.totalorder %s117, %s119
    %p126 = scmp.eq.s32.totalorder %s25, 1
    %p127 = por %p125, %p126
    %p128 = scmp.ne.s32.totalorder %s119, %s120
    %p129 = scmp.eq.s32.totalorder %s25, 0
    %p130 = por %p128, %p129
    %p131 = scmp.ne.s32.totalorder %s119, %s120
    %p132 = scmp.eq.s32.totalorder %s26, 1
    %p133 = por %p131, %p132
    %p135 = scmp.ne.s32.totalorder %s120, %s134
    %p136 = scmp.eq.s32.totalorder %s26, 0
    %p137 = por %p135, %p136
    %s139 = sadd.s32 %s138, 1
    %p142 = scmp.eq.s32.totalorder %s20, 1
    %p143 = scmp.ne.s32.totalorder %s138, %s140
    %p144 = scmp.eq.s32.totalorder %s20, 0
    %p145 = por %p143, %p144
    %p146 = scmp.ne.s32.totalorder %s138, %s140
    %p147 = scmp.eq.s32.totalorder %s25, 1
    %p148 = por %p146, %p147
    %p149 = scmp.ne.s32.totalorder %s140, %s141
    %p150 = scmp.eq.s32.totalorder %s25, 0
    %p151 = por %p149, %p150
    %p152 = scmp.ne.s32.totalorder %s140, %s141
    %p153 = scmp.eq.s32.totalorder %s26, 1
    %p154 = por %p152, %p153
    %p156 = scmp.ne.s32.totalorder %s141, %s155
    %p157 = scmp.eq.s32.totalorder %s26, 0
    %p158 = por %p156, %p157
    %s160 = sadd.s32 %s159, 1
    %p163 = scmp.eq.s32.totalorder %s20, 1
    %p164 = scmp.ne.s32.totalorder %s159, %s161
    %p165 = scmp.eq.s32.totalorder %s20, 0
    %p166 = por %p164, %p165
    %p167 = scmp.ne.s32.totalorder %s159, %s161
    %p168 = scmp.eq.s32.totalorder %s25, 1
    %p169 = por %p167, %p168
    %p170 = scmp.ne.s32.totalorder %s161, %s162
    %p171 = scmp.eq.s32.totalorder %s25, 0
    %p172 = por %p170, %p171
    %p173 = scmp.ne.s32.totalorder %s161, %s162
    %p174 = scmp.eq.s32.totalorder %s26, 1
    %p175 = por %p173, %p174
    %p177 = scmp.ne.s32.totalorder %s162, %s176
    %p178 = scmp.eq.s32.totalorder %s26, 0
    %p179 = por %p177, %p178
    %s181 = sadd.s32 %s180, 1
    %p184 = scmp.eq.s32.totalorder %s20, 1
    %p185 = scmp.ne.s32.totalorder %s180, %s182
    %p186 = scmp.eq.s32.totalorder %s20, 0
    %p187 = por %p185, %p186
    %p188 = scmp.ne.s32.totalorder %s180, %s182
    %p189 = scmp.eq.s32.totalorder %s25, 1
    %p190 = por %p188, %p189
    %p191 = scmp.ne.s32.totalorder %s182, %s183
    %p192 = scmp.eq.s32.totalorder %s25, 0
    %p193 = por %p191, %p192
    %p194 = scmp.ne.s32.totalorder %s182, %s183
    %p195 = scmp.eq.s32.totalorder %s26, 1
    %p196 = por %p194, %p195
    %p198 = scmp.ne.s32.totalorder %s183, %s197
    %p199 = scmp.eq.s32.totalorder %s26, 0
    %p200 = por %p198, %p199
    %s202 = sadd.s32 %s201, 1
    %p205 = scmp.eq.s32.totalorder %s20, 1
    %p206 = scmp.ne.s32.totalorder %s201, %s203
    %p207 = scmp.eq.s32.totalorder %s20, 0
    %p208 = por %p206, %p207
    %p209 = scmp.ne.s32.totalorder %s201, %s203
    %p210 = scmp.eq.s32.totalorder %s25, 1
    %p211 = por %p209, %p210
    %p212 = scmp.ne.s32.totalorder %s203, %s204
    %p213 = scmp.eq.s32.totalorder %s25, 0
    %p214 = por %p212, %p213
    %p215 = scmp.ne.s32.totalorder %s203, %s204
    %p216 = scmp.eq.s32.totalorder %s26, 1
    %p217 = por %p215, %p216
    %p219 = scmp.ne.s32.totalorder %s204, %s218
    %p220 = scmp.eq.s32.totalorder %s26, 0
    %p221 = por %p219, %p220
    %s223 = sadd.s32 %s222, 1
    %p226 = scmp.eq.s32.totalorder %s20, 1
    %p227 = scmp.ne.s32.totalorder %s222, %s224
    %p228 = scmp.eq.s32.totalorder %s20, 0
    %p229 = por %p227, %p228
    %p230 = scmp.ne.s32.totalorder %s222, %s224
    %p231 = scmp.eq.s32.totalorder %s25, 1
    %p232 = por %p230, %p231
    %p233 = scmp.ne.s32.totalorder %s224, %s225
    %p234 = scmp.eq.s32.totalorder %s25, 0
    %p235 = por %p233, %p234
    %p236 = scmp.ne.s32.totalorder %s224, %s225
    %p237 = scmp.eq.s32.totalorder %s26, 1
    %p238 = por %p236, %p237
    %p240 = scmp.ne.s32.totalorder %s225, %s239
    %p241 = scmp.eq.s32.totalorder %s26, 0
    %p242 = por %p240, %p241
    %s244 = sadd.s32 %s243, 1
    %p247 = scmp.eq.s32.totalorder %s20, 1
    %p248 = scmp.ne.s32.totalorder %s243, %s245
    %p249 = scmp.eq.s32.totalorder %s20, 0
    %p250 = por %p248, %p249
    %p251 = scmp.ne.s32.totalorder %s243, %s245
    %p252 = scmp.eq.s32.totalorder %s25, 1
    %p253 = por %p251, %p252
    %p254 = scmp.ne.s32.totalorder %s245, %s246
    %p255 = scmp.eq.s32.totalorder %s25, 0
    %p256 = por %p254, %p255
    %p257 = scmp.ne.s32.totalorder %s245, %s246
    %p258 = scmp.eq.s32.totalorder %s26, 1
    %p259 = por %p257, %p258
    %p261 = scmp.ne.s32.totalorder %s246, %s260
    %p262 = scmp.eq.s32.totalorder %s26, 0
    %p263 = por %p261, %p262
    %s265 = sadd.s32 %s264, 1
    %p268 = scmp.eq.s32.totalorder %s20, 1
    %p269 = scmp.ne.s32.totalorder %s264, %s266
    %p270 = scmp.eq.s32.totalorder %s20, 0
    %p271 = por %p269, %p270
    %p272 = scmp.ne.s32.totalorder %s264, %s266
    %p273 = scmp.eq.s32.totalorder %s25, 1
    %p274 = por %p272, %p273
    %p275 = scmp.ne.s32.totalorder %s266, %s267
    %p276 = scmp.eq.s32.totalorder %s25, 0
    %p277 = por %p275, %p276
    %p278 = scmp.ne.s32.totalorder %s266, %s267
    %p279 = scmp.eq.s32.totalorder %s26, 1
    %p280 = por %p278, %p279
    %p282 = scmp.ne.s32.totalorder %s267, %s281
    %p283 = scmp.eq.s32.totalorder %s26, 0
    %p284 = por %p282, %p283
    %s286 = sadd.s32 %s285, 1
    %p289 = scmp.eq.s32.totalorder %s20, 1
    %p290 = scmp.ne.s32.totalorder %s285, %s287
    %p291 = scmp.eq.s32.totalorder %s20, 0
    %p292 = por %p290, %p291
    %p293 = scmp.ne.s32.totalorder %s285, %s287
    %p294 = scmp.eq.s32.totalorder %s25, 1
    %p295 = por %p293, %p294
    %p296 = scmp.ne.s32.totalorder %s287, %s288
    %p297 = scmp.eq.s32.totalorder %s25, 0
    %p298 = por %p296, %p297
    %p299 = scmp.ne.s32.totalorder %s287, %s288
    %p300 = scmp.eq.s32.totalorder %s26, 1
    %p301 = por %p299, %p300
    %p303 = scmp.ne.s32.totalorder %s288, %s302
    %p304 = scmp.eq.s32.totalorder %s26, 0
    %p305 = por %p303, %p304
    %s307 = sadd.s32 %s306, 1
    %p310 = scmp.eq.s32.totalorder %s20, 1
    %p311 = scmp.ne.s32.totalorder %s306, %s308
    %p312 = scmp.eq.s32.totalorder %s20, 0
    %p313 = por %p311, %p312
    %p314 = scmp.ne.s32.totalorder %s306, %s308
    %p315 = scmp.eq.s32.totalorder %s25, 1
    %p316 = por %p314, %p315
    %p317 = scmp.ne.s32.totalorder %s308, %s309
    %p318 = scmp.eq.s32.totalorder %s25, 0
    %p319 = por %p317, %p318
    %p320 = scmp.ne.s32.totalorder %s308, %s309
    %p321 = scmp.eq.s32.totalorder %s26, 1
    %p322 = por %p320, %p321
    %p324 = scmp.ne.s32.totalorder %s309, %s323
    %p325 = scmp.eq.s32.totalorder %s26, 0
    %p326 = por %p324, %p325
    %s327 = ssub.s32 %s20, %s27
    %p328 = scmp.eq.s32.totalorder %s327, 0
    %s330 = sadd.s32 %s329, 1
    %s331 = scalar_select %p328, %s329, %s330
    %p334 = pneg %p328
    %p335 = scmp.eq.s32.totalorder %s20, 1
    %p336 = por %p334, %p335
    %p337 = scmp.ne.s32.totalorder %s329, %s332
    %p338 = scmp.eq.s32.totalorder %s20, 0
    %p339 = por %p337, %p338
    %p340 = scmp.ne.s32.totalorder %s329, %s332
    %p341 = scmp.eq.s32.totalorder %s25, 1
    %p342 = por %p340, %p341
    %p343 = scmp.ne.s32.totalorder %s332, %s333
    %p344 = scmp.eq.s32.totalorder %s25, 0
    %p345 = por %p343, %p344
    %p346 = scmp.ne.s32.totalorder %s332, %s333
    %p347 = scmp.eq.s32.totalorder %s26, 1
    %p348 = por %p346, %p347
    %p350 = scmp.ne.s32.totalorder %s333, %s349
    %p351 = scmp.eq.s32.totalorder %s26, 0
    %p352 = por %p350, %p351
    %p353 = scmp.le.s32.totalorder 1, %s20
    %p354 = scmp.lt.s32.totalorder %s20, 3
    %p355 = pnand %p353, %p354
    %p356 = pneg %p355
    // Predicated region
    $region9: #{tpu_custom_call.1} parent=5 // pred_check
      _
    $region10: #{tpu_custom_call.1} parent=5 // pred_check_branch
      %358 = sbr.rel (%p355) target = $region12
    $region11: #{tpu_custom_call.1} parent=5 // pred_region
      %s359 = ssub.s32 %s20, 1
      // Predicated region
      $region13: #{tpu_custom_call.1} parent=11 // pred_check
        %p360 = pneg %p67
      $region14: #{tpu_custom_call.1} parent=11 // pred_check_branch
        %362 = sbr.rel (%p360) target = $region16
      $region15: #{tpu_custom_call.1} parent=11 // pred_region
        _
      $region16: #{tpu_custom_call.1} parent=11 // pred_fallthru
        _
      // Predicated region
      $region17: #{tpu_custom_call.1} parent=11 // pred_check
        %p363 = pneg %p88
      $region18: #{tpu_custom_call.1} parent=11 // pred_check_branch
        %365 = sbr.rel (%p363) target = $region20
      $region19: #{tpu_custom_call.1} parent=11 // pred_region
        _
      $region20: #{tpu_custom_call.1} parent=11 // pred_fallthru
        _
      // Predicated region
      $region21: #{tpu_custom_call.1} parent=11 // pred_check
        %p366 = pneg %p109
      $region22: #{tpu_custom_call.1} parent=11 // pred_check_branch
        %368 = sbr.rel (%p366) target = $region24
      $region23: #{tpu_custom_call.1} parent=11 // pred_region
        _
      $region24: #{tpu_custom_call.1} parent=11 // pred_fallthru
        _
      // Predicated region
      $region25: #{tpu_custom_call.1} parent=11 // pred_check
        %p369 = pneg %p130
      $region26: #{tpu_custom_call.1} parent=11 // pred_check_branch
        %371 = sbr.rel (%p369) target = $region28
      $region27: #{tpu_custom_call.1} parent=11 // pred_region
        _
      $region28: #{tpu_custom_call.1} parent=11 // pred_fallthru
        _
      // Predicated region
      $region29: #{tpu_custom_call.1} parent=11 // pred_check
        %p372 = pneg %p151
      $region30: #{tpu_custom_call.1} parent=11 // pred_check_branch
        %374 = sbr.rel (%p372) target = $region32
      $region31: #{tpu_custom_call.1} parent=11 // pred_region
        _
      $region32: #{tpu_custom_call.1} parent=11 // pred_fallthru
        _
      // Predicated region
      $region33: #{tpu_custom_call.1} parent=11 // pred_check
        %p375 = pneg %p172
      $region34: #{tpu_custom_call.1} parent=11 // pred_check_branch
        %377 = sbr.rel (%p375) target = $region36
      $region35: #{tpu_custom_call.1} parent=11 // pred_region
        _
      $region36: #{tpu_custom_call.1} parent=11 // pred_fallthru
        _
      // Predicated region
      $region37: #{tpu_custom_call.1} parent=11 // pred_check
        %p378 = pneg %p193
      $region38: #{tpu_custom_call.1} parent=11 // pred_check_branch
        %380 = sbr.rel (%p378) target = $region40
      $region39: #{tpu_custom_call.1} parent=11 // pred_region
        _
      $region40: #{tpu_custom_call.1} parent=11 // pred_fallthru
        _
      // Predicated region
      $region41: #{tpu_custom_call.1} parent=11 // pred_check
        %p381 = pneg %p214
      $region42: #{tpu_custom_call.1} parent=11 // pred_check_branch
        %383 = sbr.rel (%p381) target = $region44
      $region43: #{tpu_custom_call.1} parent=11 // pred_region
        _
      $region44: #{tpu_custom_call.1} parent=11 // pred_fallthru
        _
      // Predicated region
      $region45: #{tpu_custom_call.1} parent=11 // pred_check
        %p384 = pneg %p235
      $region46: #{tpu_custom_call.1} parent=11 // pred_check_branch
        %386 = sbr.rel (%p384) target = $region48
      $region47: #{tpu_custom_call.1} parent=11 // pred_region
        _
      $region48: #{tpu_custom_call.1} parent=11 // pred_fallthru
        _
      // Predicated region
      $region49: #{tpu_custom_call.1} parent=11 // pred_check
        %p387 = pneg %p256
      $region50: #{tpu_custom_call.1} parent=11 // pred_check_branch
        %389 = sbr.rel (%p387) target = $region52
      $region51: #{tpu_custom_call.1} parent=11 // pred_region
        _
      $region52: #{tpu_custom_call.1} parent=11 // pred_fallthru
        _
      // Predicated region
      $region53: #{tpu_custom_call.1} parent=11 // pred_check
        %p390 = pneg %p277
      $region54: #{tpu_custom_call.1} parent=11 // pred_check_branch
        %392 = sbr.rel (%p390) target = $region56
      $region55: #{tpu_custom_call.1} parent=11 // pred_region
        _
      $region56: #{tpu_custom_call.1} parent=11 // pred_fallthru
        _
      // Predicated region
      $region57: #{tpu_custom_call.1} parent=11 // pred_check
        %p393 = pneg %p298
      $region58: #{tpu_custom_call.1} parent=11 // pred_check_branch
        %395 = sbr.rel (%p393) target = $region60
      $region59: #{tpu_custom_call.1} parent=11 // pred_region
        _
      $region60: #{tpu_custom_call.1} parent=11 // pred_fallthru
        _
      // Predicated region
      $region61: #{tpu_custom_call.1} parent=11 // pred_check
        %p396 = pneg %p319
      $region62: #{tpu_custom_call.1} parent=11 // pred_check_branch
        %398 = sbr.rel (%p396) target = $region64
      $region63: #{tpu_custom_call.1} parent=11 // pred_region
        _
      $region64: #{tpu_custom_call.1} parent=11 // pred_fallthru
        _
    $region12: #{tpu_custom_call.1} parent=5 // pred_fallthru
      _
    %p399 = scmp.lt.s32.totalorder %s20, 2
    // Predicated region
    $region65: #{tpu_custom_call.1} parent=5 // pred_check
      %p400 = pneg %p399
    $region66: #{tpu_custom_call.1} parent=5 // pred_check_branch
      %402 = sbr.rel (%p400) target = $region68
    $region67: #{tpu_custom_call.1} parent=5 // pred_region
      // Predicated region
      $region69: #{tpu_custom_call.1} parent=67 // pred_check
        %p403 = pneg %p40
      $region70: #{tpu_custom_call.1} parent=67 // pred_check_branch
        %405 = sbr.rel (%p403) target = $region72
      $region71: #{tpu_custom_call.1} parent=67 // pred_region
        %p406 = scmp.lt.s32.totalorder %s20, 1
        %s407 = scalar_select %p406, %s20, 1
        %s408 = smul.addr %s407, 16
        %s409 = smul.addr %s408, 8
        %s410 = scalar_lea.vmem %s0, %s409
      $region72: #{tpu_custom_call.1} parent=67 // pred_fallthru
        _
    $region68: #{tpu_custom_call.1} parent=5 // pred_fallthru
      _
    %p411 = scmp.le.s32.totalorder 1, %s20
    %p412 = scmp.lt.s32.totalorder %s20, 3
    %p413 = pnand %p411, %p412
    %p414 = pneg %p413
    // Predicated region
    $region73: #{tpu_custom_call.1} parent=5 // pred_check
      _
    $region74: #{tpu_custom_call.1} parent=5 // pred_check_branch
      %416 = sbr.rel (%p413) target = $region76
    $region75: #{tpu_custom_call.1} parent=5 // pred_region
      %s417 = ssub.s32 %s20, 1
      %p418 = scmp.lt.s32.totalorder %s25, 1
      %s419 = scalar_select %p418, %s25, 1
      %s420 = smul.addr %s419, 16
      %s421 = smul.addr %s420, 8
      %s422 = scalar_lea.vmem %s0, %s421
      %p423 = pneg %p46
      %p424 = pneg %p43
      %p425 = pneg %p67
      %p426 = pneg %p64
      %p427 = pneg %p88
      %p428 = pneg %p85
      %p429 = pneg %p109
      %p430 = pneg %p106
      %p431 = pneg %p130
      %p432 = pneg %p127
      %p433 = pneg %p151
      %p434 = pneg %p148
      %p435 = pneg %p172
      %p436 = pneg %p169
      %p437 = pneg %p193
      %p438 = pneg %p190
      %p439 = pneg %p214
      %p440 = pneg %p211
      %p441 = pneg %p235
      %p442 = pneg %p232
      %p443 = pneg %p256
      %p444 = pneg %p253
      %p445 = pneg %p277
      %p446 = pneg %p274
      %p447 = pneg %p298
      %p448 = pneg %p295
      %p449 = pneg %p319
      %p450 = pneg %p316
      %p451 = pneg %p345
      %p452 = pneg %p342
      %p453 = scmp.lt.s32.totalorder %s25, 1
      %s454 = scalar_select %p453, %s25, 1
      %s455 = smul.addr %s454, 16
      %s456 = smul.addr %s455, 8
      %s457 = scalar_lea.vmem %s14, %s456
      %p458 = scmp.lt.s32.totalorder %s25, 1
      %s459 = scalar_select %p458, %s25, 1
      %s460 = smul.addr %s459, 16
      %s461 = smul.addr %s460, 8
      %s462 = scalar_lea.vmem %s0, %s461
      %p463 = scmp.lt.s32.totalorder %s25, 1
      %s464 = scalar_select %p463, %s25, 1
      %s465 = smul.addr %s464, 16
      %s466 = smul.addr %s465, 8
      %s467 = scalar_lea.vmem %s14, %s466
      %v469 = vld [vmem:[%s462] sm:$0xff]
      %v470 = vld [vmem:[%s462 + $0x8] sm:$0xff]
      %v471 = vld [vmem:[%s462 + $0x10] sm:$0xff]
      %v472 = vld [vmem:[%s462 + $0x18] sm:$0xff]
      %v473 = vld [vmem:[%s462 + $0x20] sm:$0xff]
      %v474 = vld [vmem:[%s462 + $0x28] sm:$0xff]
      %v475 = vld [vmem:[%s462 + $0x30] sm:$0xff]
      %v476 = vld [vmem:[%s462 + $0x38] sm:$0xff]
      %v477 = vld [vmem:[%s462 + $0x40] sm:$0xff]
      %v478 = vld [vmem:[%s462 + $0x48] sm:$0xff]
      %v479 = vld [vmem:[%s462 + $0x50] sm:$0xff]
      %v480 = vld [vmem:[%s462 + $0x58] sm:$0xff]
      %v481 = vld [vmem:[%s462 + $0x60] sm:$0xff]
      %v482 = vld [vmem:[%s462 + $0x68] sm:$0xff]
      %v483 = vld [vmem:[%s462 + $0x70] sm:$0xff]
      %v484 = vld [vmem:[%s462 + $0x78] sm:$0xff]
      %v485 = vld [vmem:[%s1] sm:$0x1]
      %v486 = vld [vmem:[%s2] sm:$0x1]
      %vm487 = vcmask 523264
      %v488 = vsel %vm487, %v469, 0.0
      %489 = vadd.xlane.f32.xlu0 %v488
      %v490 = vpop.xlane.xlu0 %489
      %v491 = vsel %vm487, %v470, 0.0
      %492 = vadd.xlane.f32.xlu0 %v491
      %v493 = vpop.xlane.xlu0 %492
      %v494 = vsel %vm487, %v471, 0.0
      %495 = vadd.xlane.f32.xlu0 %v494
      %v496 = vpop.xlane.xlu0 %495
      %v497 = vsel %vm487, %v472, 0.0
      %498 = vadd.xlane.f32.xlu0 %v497
      %v499 = vpop.xlane.xlu0 %498
      %v500 = vsel %vm487, %v473, 0.0
      %501 = vadd.xlane.f32.xlu0 %v500
      %v502 = vpop.xlane.xlu0 %501
      %v503 = vsel %vm487, %v474, 0.0
      %504 = vadd.xlane.f32.xlu0 %v503
      %v505 = vpop.xlane.xlu0 %504
      %v506 = vsel %vm487, %v475, 0.0
      %507 = vadd.xlane.f32.xlu0 %v506
      %v508 = vpop.xlane.xlu0 %507
      %v509 = vsel %vm487, %v476, 0.0
      %510 = vadd.xlane.f32.xlu0 %v509
      %v511 = vpop.xlane.xlu0 %510
      %v512 = vsel %vm487, %v477, 0.0
      %513 = vadd.xlane.f32.xlu0 %v512
      %v514 = vpop.xlane.xlu0 %513
      %v515 = vsel %vm487, %v478, 0.0
      %516 = vadd.xlane.f32.xlu0 %v515
      %v517 = vpop.xlane.xlu0 %516
      %v518 = vsel %vm487, %v479, 0.0
      %519 = vadd.xlane.f32.xlu0 %v518
      %v520 = vpop.xlane.xlu0 %519
      %v521 = vsel %vm487, %v480, 0.0
      %522 = vadd.xlane.f32.xlu0 %v521
      %v523 = vpop.xlane.xlu0 %522
      %v524 = vsel %vm487, %v481, 0.0
      %525 = vadd.xlane.f32.xlu0 %v524
      %v526 = vpop.xlane.xlu0 %525
      %v527 = vsel %vm487, %v482, 0.0
      %528 = vadd.xlane.f32.xlu0 %v527
      %v529 = vpop.xlane.xlu0 %528
      %v530 = vsel %vm487, %v483, 0.0
      %531 = vadd.xlane.f32.xlu0 %v530
      %v532 = vpop.xlane.xlu0 %531
      %v533 = vsel %vm487, %v484, 0.0
      %534 = vadd.xlane.f32.xlu0 %v533
      %v535 = vpop.xlane.xlu0 %534
      %v536 = vrcp.pop 64.0
      %v537 = vmul.f32 64.0, %v536
      %v538 = vsub.f32 1.0, %v537
      %v539 = vmul.f32 %v536, %v538
      %v540 = vadd.f32 %v536, %v539
      %vm541 = vweird.f32 %v536
      %v542 = vsel %vm541, %v536, %v540
      %v543 = vmul.f32 %v490, %v542
      %v544 = vmul.f32 %v493, %v542
      %v545 = vmul.f32 %v496, %v542
      %v546 = vmul.f32 %v499, %v542
      %v547 = vmul.f32 %v502, %v542
      %v548 = vmul.f32 %v505, %v542
      %v549 = vmul.f32 %v508, %v542
      %v550 = vmul.f32 %v511, %v542
      %v551 = vmul.f32 %v514, %v542
      %v552 = vmul.f32 %v517, %v542
      %v553 = vmul.f32 %v520, %v542
      %v554 = vmul.f32 %v523, %v542
      %v555 = vmul.f32 %v526, %v542
      %v556 = vmul.f32 %v529, %v542
      %v557 = vmul.f32 %v532, %v542
      %v558 = vmul.f32 %v535, %v542
      %v559 = vsub.f32 %v469, %v543
      %v560 = vsub.f32 %v470, %v544
      %v561 = vsub.f32 %v471, %v545
      %v562 = vsub.f32 %v472, %v546
      %v563 = vsub.f32 %v473, %v547
      %v564 = vsub.f32 %v474, %v548
      %v565 = vsub.f32 %v475, %v549
      %v566 = vsub.f32 %v476, %v550
      %v567 = vsub.f32 %v477, %v551
      %v568 = vsub.f32 %v478, %v552
      %v569 = vsub.f32 %v479, %v553
      %v570 = vsub.f32 %v480, %v554
      %v571 = vsub.f32 %v481, %v555
      %v572 = vsub.f32 %v482, %v556
      %v573 = vsub.f32 %v483, %v557
      %v574 = vsub.f32 %v484, %v558
      %v575 = vmul.f32 %v559, %v559
      %v576 = vmul.f32 %v560, %v560
      %v577 = vmul.f32 %v561, %v561
      %v578 = vmul.f32 %v562, %v562
      %v579 = vmul.f32 %v563, %v563
      %v580 = vmul.f32 %v564, %v564
      %v581 = vmul.f32 %v565, %v565
      %v582 = vmul.f32 %v566, %v566
      %v583 = vmul.f32 %v567, %v567
      %v584 = vmul.f32 %v568, %v568
      %v585 = vmul.f32 %v569, %v569
      %v586 = vmul.f32 %v570, %v570
      %v587 = vmul.f32 %v571, %v571
      %v588 = vmul.f32 %v572, %v572
      %v589 = vmul.f32 %v573, %v573
      %v590 = vmul.f32 %v574, %v574
      %v591 = vsel %vm487, %v575, 0.0
      %592 = vadd.xlane.f32.xlu0 %v591
      %v593 = vpop.xlane.xlu0 %592
      %v594 = vsel %vm487, %v576, 0.0
      %595 = vadd.xlane.f32.xlu0 %v594
      %v596 = vpop.xlane.xlu0 %595
      %v597 = vsel %vm487, %v577, 0.0
      %598 = vadd.xlane.f32.xlu0 %v597
      %v599 = vpop.xlane.xlu0 %598
      %v600 = vsel %vm487, %v578, 0.0
      %601 = vadd.xlane.f32.xlu0 %v600
      %v602 = vpop.xlane.xlu0 %601
      %v603 = vsel %vm487, %v579, 0.0
      %604 = vadd.xlane.f32.xlu0 %v603
      %v605 = vpop.xlane.xlu0 %604
      %v606 = vsel %vm487, %v580, 0.0
      %607 = vadd.xlane.f32.xlu0 %v606
      %v608 = vpop.xlane.xlu0 %607
      %v609 = vsel %vm487, %v581, 0.0
      %610 = vadd.xlane.f32.xlu0 %v609
      %v611 = vpop.xlane.xlu0 %610
      %v612 = vsel %vm487, %v582, 0.0
      %613 = vadd.xlane.f32.xlu0 %v612
      %v614 = vpop.xlane.xlu0 %613
      %v615 = vsel %vm487, %v583, 0.0
      %616 = vadd.xlane.f32.xlu0 %v615
      %v617 = vpop.xlane.xlu0 %616
      %v618 = vsel %vm487, %v584, 0.0
      %619 = vadd.xlane.f32.xlu0 %v618
      %v620 = vpop.xlane.xlu0 %619
      %v621 = vsel %vm487, %v585, 0.0
      %622 = vadd.xlane.f32.xlu0 %v621
      %v623 = vpop.xlane.xlu0 %622
      %v624 = vsel %vm487, %v586, 0.0
      %625 = vadd.xlane.f32.xlu0 %v624
      %v626 = vpop.xlane.xlu0 %625
      %v627 = vsel %vm487, %v587, 0.0
      %628 = vadd.xlane.f32.xlu0 %v627
      %v629 = vpop.xlane.xlu0 %628
      %v630 = vsel %vm487, %v588, 0.0
      %631 = vadd.xlane.f32.xlu0 %v630
      %v632 = vpop.xlane.xlu0 %631
      %v633 = vsel %vm487, %v589, 0.0
      %634 = vadd.xlane.f32.xlu0 %v633
      %v635 = vpop.xlane.xlu0 %634
      %v636 = vsel %vm487, %v590, 0.0
      %637 = vadd.xlane.f32.xlu0 %v636
      %v638 = vpop.xlane.xlu0 %637
      %v639 = vmul.f32 %v593, %v542
      %v640 = vmul.f32 %v596, %v542
      %v641 = vmul.f32 %v599, %v542
      %v642 = vmul.f32 %v602, %v542
      %v643 = vmul.f32 %v605, %v542
      %v644 = vmul.f32 %v608, %v542
      %v645 = vmul.f32 %v611, %v542
      %v646 = vmul.f32 %v614, %v542
      %v647 = vmul.f32 %v617, %v542
      %v648 = vmul.f32 %v620, %v542
      %v649 = vmul.f32 %v623, %v542
      %v650 = vmul.f32 %v626, %v542
      %v651 = vmul.f32 %v629, %v542
      %v652 = vmul.f32 %v632, %v542
      %v653 = vmul.f32 %v635, %v542
      %v654 = vmul.f32 %v638, %v542
      %v655 = vadd.f32 %v639, 1e-05
      %v656 = vadd.f32 %v640, 1e-05
      %v657 = vadd.f32 %v641, 1e-05
      %v658 = vadd.f32 %v642, 1e-05
      %v659 = vadd.f32 %v643, 1e-05
      %v660 = vadd.f32 %v644, 1e-05
      %v661 = vadd.f32 %v645, 1e-05
      %v662 = vadd.f32 %v646, 1e-05
      %v663 = vadd.f32 %v647, 1e-05
      %v664 = vadd.f32 %v648, 1e-05
      %v665 = vadd.f32 %v649, 1e-05
      %v666 = vadd.f32 %v650, 1e-05
      %v667 = vadd.f32 %v651, 1e-05
      %v668 = vadd.f32 %v652, 1e-05
      %v669 = vadd.f32 %v653, 1e-05
      %v670 = vadd.f32 %v654, 1e-05
      %v671 = vrsqrt.pop %v655
      %v672 = vmul.f32 %v671, %v655
      %v673 = vmul.f32 %v672, %v671
      %v674 = vmul.f32 0.5, %v673
      %v675 = vsub.f32 1.5, %v674
      %v676 = vmul.f32 %v671, %v675
      %vm677 = vweird.f32 %v655
      %vm678 = vweird.f32 %v671
      %vm679 = vmor %vm677, %vm678
      %v680 = vsel %vm679, %v671, %v676
      %v681 = vrsqrt.pop %v656
      %v682 = vmul.f32 %v681, %v656
      %v683 = vmul.f32 %v682, %v681
      %v684 = vmul.f32 0.5, %v683
      %v685 = vsub.f32 1.5, %v684
      %v686 = vmul.f32 %v681, %v685
      %vm687 = vweird.f32 %v656
      %vm688 = vweird.f32 %v681
      %vm689 = vmor %vm687, %vm688
      %v690 = vsel %vm689, %v681, %v686
      %v691 = vrsqrt.pop %v657
      %v692 = vmul.f32 %v691, %v657
      %v693 = vmul.f32 %v692, %v691
      %v694 = vmul.f32 0.5, %v693
      %v695 = vsub.f32 1.5, %v694
      %v696 = vmul.f32 %v691, %v695
      %vm697 = vweird.f32 %v657
      %vm698 = vweird.f32 %v691
      %vm699 = vmor %vm697, %vm698
      %v700 = vsel %vm699, %v691, %v696
      %v701 = vrsqrt.pop %v658
      %v702 = vmul.f32 %v701, %v658
      %v703 = vmul.f32 %v702, %v701
      %v704 = vmul.f32 0.5, %v703
      %v705 = vsub.f32 1.5, %v704
      %v706 = vmul.f32 %v701, %v705
      %vm707 = vweird.f32 %v658
      %vm708 = vweird.f32 %v701
      %vm709 = vmor %vm707, %vm708
      %v710 = vsel %vm709, %v701, %v706
      %v711 = vrsqrt.pop %v659
      %v712 = vmul.f32 %v711, %v659
      %v713 = vmul.f32 %v712, %v711
      %v714 = vmul.f32 0.5, %v713
      %v715 = vsub.f32 1.5, %v714
      %v716 = vmul.f32 %v711, %v715
      %vm717 = vweird.f32 %v659
      %vm718 = vweird.f32 %v711
      %vm719 = vmor %vm717, %vm718
      %v720 = vsel %vm719, %v711, %v716
      %v721 = vrsqrt.pop %v660
      %v722 = vmul.f32 %v721, %v660
      %v723 = vmul.f32 %v722, %v721
      %v724 = vmul.f32 0.5, %v723
      %v725 = vsub.f32 1.5, %v724
      %v726 = vmul.f32 %v721, %v725
      %vm727 = vweird.f32 %v660
      %vm728 = vweird.f32 %v721
      %vm729 = vmor %vm727, %vm728
      %v730 = vsel %vm729, %v721, %v726
      %v731 = vrsqrt.pop %v661
      %v732 = vmul.f32 %v731, %v661
      %v733 = vmul.f32 %v732, %v731
      %v734 = vmul.f32 0.5, %v733
      %v735 = vsub.f32 1.5, %v734
      %v736 = vmul.f32 %v731, %v735
      %vm737 = vweird.f32 %v661
      %vm738 = vweird.f32 %v731
      %vm739 = vmor %vm737, %vm738
      %v740 = vsel %vm739, %v731, %v736
      %v741 = vrsqrt.pop %v662
      %v742 = vmul.f32 %v741, %v662
      %v743 = vmul.f32 %v742, %v741
      %v744 = vmul.f32 0.5, %v743
      %v745 = vsub.f32 1.5, %v744
      %v746 = vmul.f32 %v741, %v745
      %vm747 = vweird.f32 %v662
      %vm748 = vweird.f32 %v741
      %vm749 = vmor %vm747, %vm748
      %v750 = vsel %vm749, %v741, %v746
      %v751 = vrsqrt.pop %v663
      %v752 = vmul.f32 %v751, %v663
      %v753 = vmul.f32 %v752, %v751
      %v754 = vmul.f32 0.5, %v753
      %v755 = vsub.f32 1.5, %v754
      %v756 = vmul.f32 %v751, %v755
      %vm757 = vweird.f32 %v663
      %vm758 = vweird.f32 %v751
      %vm759 = vmor %vm757, %vm758
      %v760 = vsel %vm759, %v751, %v756
      %v761 = vrsqrt.pop %v664
      %v762 = vmul.f32 %v761, %v664
      %v763 = vmul.f32 %v762, %v761
      %v764 = vmul.f32 0.5, %v763
      %v765 = vsub.f32 1.5, %v764
      %v766 = vmul.f32 %v761, %v765
      %vm767 = vweird.f32 %v664
      %vm768 = vweird.f32 %v761
      %vm769 = vmor %vm767, %vm768
      %v770 = vsel %vm769, %v761, %v766
      %v771 = vrsqrt.pop %v665
      %v772 = vmul.f32 %v771, %v665
      %v773 = vmul.f32 %v772, %v771
      %v774 = vmul.f32 0.5, %v773
      %v775 = vsub.f32 1.5, %v774
      %v776 = vmul.f32 %v771, %v775
      %vm777 = vweird.f32 %v665
      %vm778 = vweird.f32 %v771
      %vm779 = vmor %vm777, %vm778
      %v780 = vsel %vm779, %v771, %v776
      %v781 = vrsqrt.pop %v666
      %v782 = vmul.f32 %v781, %v666
      %v783 = vmul.f32 %v782, %v781
      %v784 = vmul.f32 0.5, %v783
      %v785 = vsub.f32 1.5, %v784
      %v786 = vmul.f32 %v781, %v785
      %vm787 = vweird.f32 %v666
      %vm788 = vweird.f32 %v781
      %vm789 = vmor %vm787, %vm788
      %v790 = vsel %vm789, %v781, %v786
      %v791 = vrsqrt.pop %v667
      %v792 = vmul.f32 %v791, %v667
      %v793 = vmul.f32 %v792, %v791
      %v794 = vmul.f32 0.5, %v793
      %v795 = vsub.f32 1.5, %v794
      %v796 = vmul.f32 %v791, %v795
      %vm797 = vweird.f32 %v667
      %vm798 = vweird.f32 %v791
      %vm799 = vmor %vm797, %vm798
      %v800 = vsel %vm799, %v791, %v796
      %v801 = vrsqrt.pop %v668
      %v802 = vmul.f32 %v801, %v668
      %v803 = vmul.f32 %v802, %v801
      %v804 = vmul.f32 0.5, %v803
      %v805 = vsub.f32 1.5, %v804
      %v806 = vmul.f32 %v801, %v805
      %vm807 = vweird.f32 %v668
      %vm808 = vweird.f32 %v801
      %vm809 = vmor %vm807, %vm808
      %v810 = vsel %vm809, %v801, %v806
      %v811 = vrsqrt.pop %v669
      %v812 = vmul.f32 %v811, %v669
      %v813 = vmul.f32 %v812, %v811
      %v814 = vmul.f32 0.5, %v813
      %v815 = vsub.f32 1.5, %v814
      %v816 = vmul.f32 %v811, %v815
      %vm817 = vweird.f32 %v669
      %vm818 = vweird.f32 %v811
      %vm819 = vmor %vm817, %vm818
      %v820 = vsel %vm819, %v811, %v816
      %v821 = vrsqrt.pop %v670
      %v822 = vmul.f32 %v821, %v670
      %v823 = vmul.f32 %v822, %v821
      %v824 = vmul.f32 0.5, %v823
      %v825 = vsub.f32 1.5, %v824
      %v826 = vmul.f32 %v821, %v825
      %vm827 = vweird.f32 %v670
      %vm828 = vweird.f32 %v821
      %vm829 = vmor %vm827, %vm828
      %v830 = vsel %vm829, %v821, %v826
      %v831 = vmul.f32 %v559, %v680
      %v832 = vmul.f32 %v560, %v690
      %v833 = vmul.f32 %v561, %v700
      %v834 = vmul.f32 %v562, %v710
      %v835 = vmul.f32 %v563, %v720
      %v836 = vmul.f32 %v564, %v730
      %v837 = vmul.f32 %v565, %v740
      %v838 = vmul.f32 %v566, %v750
      %v839 = vmul.f32 %v567, %v760
      %v840 = vmul.f32 %v568, %v770
      %v841 = vmul.f32 %v569, %v780
      %v842 = vmul.f32 %v570, %v790
      %v843 = vmul.f32 %v571, %v800
      %v844 = vmul.f32 %v572, %v810
      %v845 = vmul.f32 %v573, %v820
      %v846 = vmul.f32 %v574, %v830
      %v848 = vperm.slane %v485, 0
      %v850 = vmul.f32 %v831, %v848
      %v851 = vmul.f32 %v832, %v848
      %v852 = vmul.f32 %v833, %v848
      %v853 = vmul.f32 %v834, %v848
      %v854 = vmul.f32 %v835, %v848
      %v855 = vmul.f32 %v836, %v848
      %v856 = vmul.f32 %v837, %v848
      %v857 = vmul.f32 %v838, %v848
      %v858 = vmul.f32 %v839, %v848
      %v859 = vmul.f32 %v840, %v848
      %v860 = vmul.f32 %v841, %v848
      %v861 = vmul.f32 %v842, %v848
      %v862 = vmul.f32 %v843, %v848
      %v863 = vmul.f32 %v844, %v848
      %v864 = vmul.f32 %v845, %v848
      %v865 = vmul.f32 %v846, %v848
      %v867 = vperm.slane %v486, 0
      %v869 = vadd.f32 %v850, %v867
      %v870 = vadd.f32 %v851, %v867
      %v871 = vadd.f32 %v852, %v867
      %v872 = vadd.f32 %v853, %v867
      %v873 = vadd.f32 %v854, %v867
      %v874 = vadd.f32 %v855, %v867
      %v875 = vadd.f32 %v856, %v867
      %v876 = vadd.f32 %v857, %v867
      %v877 = vadd.f32 %v858, %v867
      %v878 = vadd.f32 %v859, %v867
      %v879 = vadd.f32 %v860, %v867
      %v880 = vadd.f32 %v861, %v867
      %v881 = vadd.f32 %v862, %v867
      %v882 = vadd.f32 %v863, %v867
      %v883 = vadd.f32 %v864, %v867
      %v884 = vadd.f32 %v865, %v867
      %v885 = vpack.c.bf16 %v870, %v869
      %v886 = vpack.c.bf16 %v872, %v871
      %v887 = vpack.c.bf16 %v874, %v873
      %v888 = vpack.c.bf16 %v876, %v875
      %v889 = vpack.c.bf16 %v878, %v877
      %v890 = vpack.c.bf16 %v880, %v879
      %v891 = vpack.c.bf16 %v882, %v881
      %v892 = vpack.c.bf16 %v884, %v883
      %v893 = vld [vmem:[%s3] sm:$0xff]
      %v894 = vld [vmem:[%s3 + $0x8] sm:$0xff]
      %v895 = vld [vmem:[%s3 + $0x10] sm:$0xff]
      %v896 = vld [vmem:[%s3 + $0x18] sm:$0xff]
      %v897 = vld [vmem:[%s3 + $0x20] sm:$0xff]
      %v898 = vld [vmem:[%s3 + $0x28] sm:$0xff]
      %v899 = vld [vmem:[%s3 + $0x30] sm:$0xff]
      %v900 = vld [vmem:[%s3 + $0x38] sm:$0xff]
      %v909 = vunpack.c.l.b16 %v893
      %v910 = vunpack.c.h.b16 %v893
      %v911 = vunpack.c.l.b16 %v894
      %v912 = vunpack.c.h.b16 %v894
      %v913 = vunpack.c.l.b16 %v895
      %v914 = vunpack.c.h.b16 %v895
      %v915 = vunpack.c.l.b16 %v896
      %v916 = vunpack.c.h.b16 %v896
      %v917 = vunpack.c.l.b16 %v897
      %v918 = vunpack.c.h.b16 %v897
      %v919 = vunpack.c.l.b16 %v898
      %v920 = vunpack.c.h.b16 %v898
      %v921 = vunpack.c.l.b16 %v899
      %v922 = vunpack.c.h.b16 %v899
      %v923 = vunpack.c.l.b16 %v900
      %v924 = vunpack.c.h.b16 %v900
      %v925 = vpack.c.b16 %v911, %v909
      %v926 = vpack.c.b16 %v912, %v910
      %v927 = vpack.c.b16 %v915, %v913
      %v928 = vpack.c.b16 %v916, %v914
      %v929 = vpack.c.b16 %v919, %v917
      %v930 = vpack.c.b16 %v920, %v918
      %v931 = vpack.c.b16 %v923, %v921
      %v932 = vpack.c.b16 %v924, %v922
      %v942 = vsel %vm487, %v885, 0
      %v945 = vsel %vm487, %v886, 0
      %v948 = vsel %vm487, %v887, 0
      %v951 = vsel %vm487, %v888, 0
      %v954 = vsel %vm487, %v889, 0
      %v957 = vsel %vm487, %v890, 0
      %v960 = vsel %vm487, %v891, 0
      %v963 = vsel %vm487, %v892, 0
      %965 = vmatpush.bf16.msra.mxu0 0
      %966 = vmatpush.bf16.msra.mxu0 0
      %967 = vmatpush.bf16.msra.mxu0 0
      %968 = vmatpush.bf16.msra.mxu0 0
      %969 = vmatpush.bf16.msra.mxu0 %v931
      %970 = vmatpush.bf16.msra.mxu0 %v929
      %971 = vmatpush.bf16.msra.mxu0 %v927
      %972 = vmatpush.bf16.msra.mxu0 %v925
      %973 = vmatmul.bf16.gmra.mxu0 %v942
      %v974 = vpop.f32.mrf.mxu0
      %v975 = vadd.f32 0.0, %v974
      %v976 = vpop.f32.mrf.mxu0
      %v977 = vadd.f32 0.0, %v976
      %978 = vmatmul.bf16.gmra.mxu0 %v945
      %v979 = vpop.f32.mrf.mxu0
      %v980 = vadd.f32 0.0, %v979
      %v981 = vpop.f32.mrf.mxu0
      %v982 = vadd.f32 0.0, %v981
      %983 = vmatmul.bf16.gmra.mxu0 %v948
      %v984 = vpop.f32.mrf.mxu0
      %v985 = vadd.f32 0.0, %v984
      %v986 = vpop.f32.mrf.mxu0
      %v987 = vadd.f32 0.0, %v986
      %988 = vmatmul.bf16.gmra.mxu0 %v951
      %v989 = vpop.f32.mrf.mxu0
      %v990 = vadd.f32 0.0, %v989
      %v991 = vpop.f32.mrf.mxu0
      %v992 = vadd.f32 0.0, %v991
      %993 = vmatmul.bf16.gmra.mxu0 %v954
      %v994 = vpop.f32.mrf.mxu0
      %v995 = vadd.f32 0.0, %v994
      %v996 = vpop.f32.mrf.mxu0
      %v997 = vadd.f32 0.0, %v996
      %998 = vmatmul.bf16.gmra.mxu0 %v957
      %v999 = vpop.f32.mrf.mxu0
      %v1000 = vadd.f32 0.0, %v999
      %v1001 = vpop.f32.mrf.mxu0
      %v1002 = vadd.f32 0.0, %v1001
      %1003 = vmatmul.bf16.gmra.mxu0 %v960
      %v1004 = vpop.f32.mrf.mxu0
      %v1005 = vadd.f32 0.0, %v1004
      %v1006 = vpop.f32.mrf.mxu0
      %v1007 = vadd.f32 0.0, %v1006
      %1008 = vmatmul.bf16.gmra.mxu0 %v963
      %v1009 = vpop.f32.mrf.mxu0
      %v1010 = vadd.f32 0.0, %v1009
      %v1011 = vpop.f32.mrf.mxu0
      %v1012 = vadd.f32 0.0, %v1011
      %1013 = vdwg.mxu0
      %1014 = vmatpush.bf16.msra.mxu0 0
      %1015 = vmatpush.bf16.msra.mxu0 0
      %1016 = vmatpush.bf16.msra.mxu0 0
      %1017 = vmatpush.bf16.msra.mxu0 0
      %1018 = vmatpush.bf16.msra.mxu0 %v932
      %1019 = vmatpush.bf16.msra.mxu0 %v930
      %1020 = vmatpush.bf16.msra.mxu0 %v928
      %1021 = vmatpush.bf16.msra.mxu0 %v926
      %1022 = vmatmul.bf16.gmra.mxu0 %v942
      %v1023 = vpop.f32.mrf.mxu0
      %v1024 = vadd.f32 0.0, %v1023
      %v1025 = vpop.f32.mrf.mxu0
      %v1026 = vadd.f32 0.0, %v1025
      %1027 = vmatmul.bf16.gmra.mxu0 %v945
      %v1028 = vpop.f32.mrf.mxu0
      %v1029 = vadd.f32 0.0, %v1028
      %v1030 = vpop.f32.mrf.mxu0
      %v1031 = vadd.f32 0.0, %v1030
      %1032 = vmatmul.bf16.gmra.mxu0 %v948
      %v1033 = vpop.f32.mrf.mxu0
      %v1034 = vadd.f32 0.0, %v1033
      %v1035 = vpop.f32.mrf.mxu0
      %v1036 = vadd.f32 0.0, %v1035
      %1037 = vmatmul.bf16.gmra.mxu0 %v951
      %v1038 = vpop.f32.mrf.mxu0
      %v1039 = vadd.f32 0.0, %v1038
      %v1040 = vpop.f32.mrf.mxu0
      %v1041 = vadd.f32 0.0, %v1040
      %1042 = vmatmul.bf16.gmra.mxu0 %v954
      %v1043 = vpop.f32.mrf.mxu0
      %v1044 = vadd.f32 0.0, %v1043
      %v1045 = vpop.f32.mrf.mxu0
      %v1046 = vadd.f32 0.0, %v1045
      %1047 = vmatmul.bf16.gmra.mxu0 %v957
      %v1048 = vpop.f32.mrf.mxu0
      %v1049 = vadd.f32 0.0, %v1048
      %v1050 = vpop.f32.mrf.mxu0
      %v1051 = vadd.f32 0.0, %v1050
      %1052 = vmatmul.bf16.gmra.mxu0 %v960
      %v1053 = vpop.f32.mrf.mxu0
      %v1054 = vadd.f32 0.0, %v1053
      %v1055 = vpop.f32.mrf.mxu0
      %v1056 = vadd.f32 0.0, %v1055
      %1057 = vmatmul.bf16.gmra.mxu0 %v963
      %v1058 = vpop.f32.mrf.mxu0
      %v1059 = vadd.f32 0.0, %v1058
      %v1060 = vpop.f32.mrf.mxu0
      %v1061 = vadd.f32 0.0, %v1060
      %1062 = vdwg.mxu0
      %v1063 = vlaneseq
      %v1064 = vshrl.u32 %v1063, 7
      %v1065 = vadd.s32 %v1064, 8
      %v1066 = vadd.s32 %v1064, 16
      %v1067 = vadd.s32 %v1064, 24
      %v1068 = vadd.s32 %v1064, 32
      %v1069 = vadd.s32 %v1064, 40
      %v1070 = vadd.s32 %v1064, 48
      %v1071 = vadd.s32 %v1064, 56
      %v1072 = vadd.s32 %v1064, 64
      %v1073 = vadd.s32 %v1064, 72
      %v1074 = vadd.s32 %v1064, 80
      %v1075 = vadd.s32 %v1064, 88
      %v1076 = vadd.s32 %v1064, 96
      %v1077 = vadd.s32 %v1064, 104
      %v1078 = vadd.s32 %v1064, 112
      %v1079 = vadd.s32 %v1064, 120
      %v1080 = vlaneseq
      %v1081 = vand.u32 %v1080, 127
      %vm1082 = vcmp.ge.s32.totalorder %v1064, %v1081
      %vm1083 = vcmp.ge.s32.totalorder %v1065, %v1081
      %vm1084 = vcmp.ge.s32.totalorder %v1066, %v1081
      %vm1085 = vcmp.ge.s32.totalorder %v1067, %v1081
      %vm1086 = vcmp.ge.s32.totalorder %v1068, %v1081
      %vm1087 = vcmp.ge.s32.totalorder %v1069, %v1081
      %vm1088 = vcmp.ge.s32.totalorder %v1070, %v1081
      %vm1089 = vcmp.ge.s32.totalorder %v1071, %v1081
      %vm1090 = vcmp.ge.s32.totalorder %v1072, %v1081
      %vm1091 = vcmp.ge.s32.totalorder %v1073, %v1081
      %vm1092 = vcmp.ge.s32.totalorder %v1074, %v1081
      %vm1093 = vcmp.ge.s32.totalorder %v1075, %v1081
      %vm1094 = vcmp.ge.s32.totalorder %v1076, %v1081
      %vm1095 = vcmp.ge.s32.totalorder %v1077, %v1081
      %vm1096 = vcmp.ge.s32.totalorder %v1078, %v1081
      %vm1097 = vcmp.ge.s32.totalorder %v1079, %v1081
      %1114 = vrot.lane.b32.xlu0 %v975, 120
      %v1115 = vpop.permute.xlu0 %1114
      %1116 = vrot.lane.b32.xlu0 %v977, 120
      %v1117 = vpop.permute.xlu0 %1116
      %1118 = vrot.lane.b32.xlu0 %v980, 120
      %v1119 = vpop.permute.xlu0 %1118
      %1120 = vrot.lane.b32.xlu0 %v982, 120
      %v1121 = vpop.permute.xlu0 %1120
      %1122 = vrot.lane.b32.xlu0 %v985, 120
      %v1123 = vpop.permute.xlu0 %1122
      %1124 = vrot.lane.b32.xlu0 %v987, 120
      %v1125 = vpop.permute.xlu0 %1124
      %1126 = vrot.lane.b32.xlu0 %v990, 120
      %v1127 = vpop.permute.xlu0 %1126
      %1128 = vrot.lane.b32.xlu0 %v992, 120
      %v1129 = vpop.permute.xlu0 %1128
      %1130 = vrot.lane.b32.xlu0 %v995, 120
      %v1131 = vpop.permute.xlu0 %1130
      %1132 = vrot.lane.b32.xlu0 %v997, 120
      %v1133 = vpop.permute.xlu0 %1132
      %1134 = vrot.lane.b32.xlu0 %v1000, 120
      %v1135 = vpop.permute.xlu0 %1134
      %1136 = vrot.lane.b32.xlu0 %v1002, 120
      %v1137 = vpop.permute.xlu0 %1136
      %1138 = vrot.lane.b32.xlu0 %v1005, 120
      %v1139 = vpop.permute.xlu0 %1138
      %1140 = vrot.lane.b32.xlu0 %v1007, 120
      %v1141 = vpop.permute.xlu0 %1140
      %1142 = vrot.lane.b32.xlu0 %v1010, 120
      %v1143 = vpop.permute.xlu0 %1142
      %1144 = vrot.lane.b32.xlu0 %v1012, 120
      %v1145 = vpop.permute.xlu0 %1144
      %1162 = vrot.lane.b32.xlu0 %v975, 112
      %v1163 = vpop.permute.xlu0 %1162
      %1164 = vrot.lane.b32.xlu0 %v977, 112
      %v1165 = vpop.permute.xlu0 %1164
      %1166 = vrot.lane.b32.xlu0 %v980, 112
      %v1167 = vpop.permute.xlu0 %1166
      %1168 = vrot.lane.b32.xlu0 %v982, 112
      %v1169 = vpop.permute.xlu0 %1168
      %1170 = vrot.lane.b32.xlu0 %v985, 112
      %v1171 = vpop.permute.xlu0 %1170
      %1172 = vrot.lane.b32.xlu0 %v987, 112
      %v1173 = vpop.permute.xlu0 %1172
      %1174 = vrot.lane.b32.xlu0 %v990, 112
      %v1175 = vpop.permute.xlu0 %1174
      %1176 = vrot.lane.b32.xlu0 %v992, 112
      %v1177 = vpop.permute.xlu0 %1176
      %1178 = vrot.lane.b32.xlu0 %v995, 112
      %v1179 = vpop.permute.xlu0 %1178
      %1180 = vrot.lane.b32.xlu0 %v997, 112
      %v1181 = vpop.permute.xlu0 %1180
      %1182 = vrot.lane.b32.xlu0 %v1000, 112
      %v1183 = vpop.permute.xlu0 %1182
      %1184 = vrot.lane.b32.xlu0 %v1002, 112
      %v1185 = vpop.permute.xlu0 %1184
      %1186 = vrot.lane.b32.xlu0 %v1005, 112
      %v1187 = vpop.permute.xlu0 %1186
      %1188 = vrot.lane.b32.xlu0 %v1007, 112
      %v1189 = vpop.permute.xlu0 %1188
      %1190 = vrot.lane.b32.xlu0 %v1010, 112
      %v1191 = vpop.permute.xlu0 %1190
      %1192 = vrot.lane.b32.xlu0 %v1012, 112
      %v1193 = vpop.permute.xlu0 %1192
      %1210 = vrot.lane.b32.xlu0 %v975, 104
      %v1211 = vpop.permute.xlu0 %1210
      %1212 = vrot.lane.b32.xlu0 %v977, 104
      %v1213 = vpop.permute.xlu0 %1212
      %1214 = vrot.lane.b32.xlu0 %v980, 104
      %v1215 = vpop.permute.xlu0 %1214
      %1216 = vrot.lane.b32.xlu0 %v982, 104
      %v1217 = vpop.permute.xlu0 %1216
      %1218 = vrot.lane.b32.xlu0 %v985, 104
      %v1219 = vpop.permute.xlu0 %1218
      %1220 = vrot.lane.b32.xlu0 %v987, 104
      %v1221 = vpop.permute.xlu0 %1220
      %1222 = vrot.lane.b32.xlu0 %v990, 104
      %v1223 = vpop.permute.xlu0 %1222
      %1224 = vrot.lane.b32.xlu0 %v992, 104
      %v1225 = vpop.permute.xlu0 %1224
      %1226 = vrot.lane.b32.xlu0 %v995, 104
      %v1227 = vpop.permute.xlu0 %1226
      %1228 = vrot.lane.b32.xlu0 %v997, 104
      %v1229 = vpop.permute.xlu0 %1228
      %1230 = vrot.lane.b32.xlu0 %v1000, 104
      %v1231 = vpop.permute.xlu0 %1230
      %1232 = vrot.lane.b32.xlu0 %v1002, 104
      %v1233 = vpop.permute.xlu0 %1232
      %1234 = vrot.lane.b32.xlu0 %v1005, 104
      %v1235 = vpop.permute.xlu0 %1234
      %1236 = vrot.lane.b32.xlu0 %v1007, 104
      %v1237 = vpop.permute.xlu0 %1236
      %1238 = vrot.lane.b32.xlu0 %v1010, 104
      %v1239 = vpop.permute.xlu0 %1238
      %1240 = vrot.lane.b32.xlu0 %v1012, 104
      %v1241 = vpop.permute.xlu0 %1240
      %1258 = vrot.lane.b32.xlu0 %v975, 96
      %v1259 = vpop.permute.xlu0 %1258
      %1260 = vrot.lane.b32.xlu0 %v977, 96
      %v1261 = vpop.permute.xlu0 %1260
      %1262 = vrot.lane.b32.xlu0 %v980, 96
      %v1263 = vpop.permute.xlu0 %1262
      %1264 = vrot.lane.b32.xlu0 %v982, 96
      %v1265 = vpop.permute.xlu0 %1264
      %1266 = vrot.lane.b32.xlu0 %v985, 96
      %v1267 = vpop.permute.xlu0 %1266
      %1268 = vrot.lane.b32.xlu0 %v987, 96
      %v1269 = vpop.permute.xlu0 %1268
      %1270 = vrot.lane.b32.xlu0 %v990, 96
      %v1271 = vpop.permute.xlu0 %1270
      %1272 = vrot.lane.b32.xlu0 %v992, 96
      %v1273 = vpop.permute.xlu0 %1272
      %1274 = vrot.lane.b32.xlu0 %v995, 96
      %v1275 = vpop.permute.xlu0 %1274
      %1276 = vrot.lane.b32.xlu0 %v997, 96
      %v1277 = vpop.permute.xlu0 %1276
      %1278 = vrot.lane.b32.xlu0 %v1000, 96
      %v1279 = vpop.permute.xlu0 %1278
      %1280 = vrot.lane.b32.xlu0 %v1002, 96
      %v1281 = vpop.permute.xlu0 %1280
      %1282 = vrot.lane.b32.xlu0 %v1005, 96
      %v1283 = vpop.permute.xlu0 %1282
      %1284 = vrot.lane.b32.xlu0 %v1007, 96
      %v1285 = vpop.permute.xlu0 %1284
      %1286 = vrot.lane.b32.xlu0 %v1010, 96
      %v1287 = vpop.permute.xlu0 %1286
      %1288 = vrot.lane.b32.xlu0 %v1012, 96
      %v1289 = vpop.permute.xlu0 %1288
      %1306 = vrot.lane.b32.xlu0 %v975, 88
      %v1307 = vpop.permute.xlu0 %1306
      %1308 = vrot.lane.b32.xlu0 %v977, 88
      %v1309 = vpop.permute.xlu0 %1308
      %1310 = vrot.lane.b32.xlu0 %v980, 88
      %v1311 = vpop.permute.xlu0 %1310
      %1312 = vrot.lane.b32.xlu0 %v982, 88
      %v1313 = vpop.permute.xlu0 %1312
      %1314 = vrot.lane.b32.xlu0 %v985, 88
      %v1315 = vpop.permute.xlu0 %1314
      %1316 = vrot.lane.b32.xlu0 %v987, 88
      %v1317 = vpop.permute.xlu0 %1316
      %1318 = vrot.lane.b32.xlu0 %v990, 88
      %v1319 = vpop.permute.xlu0 %1318
      %1320 = vrot.lane.b32.xlu0 %v992, 88
      %v1321 = vpop.permute.xlu0 %1320
      %1322 = vrot.lane.b32.xlu0 %v995, 88
      %v1323 = vpop.permute.xlu0 %1322
      %1324 = vrot.lane.b32.xlu0 %v997, 88
      %v1325 = vpop.permute.xlu0 %1324
      %1326 = vrot.lane.b32.xlu0 %v1000, 88
      %v1327 = vpop.permute.xlu0 %1326
      %1328 = vrot.lane.b32.xlu0 %v1002, 88
      %v1329 = vpop.permute.xlu0 %1328
      %1330 = vrot.lane.b32.xlu0 %v1005, 88
      %v1331 = vpop.permute.xlu0 %1330
      %1332 = vrot.lane.b32.xlu0 %v1007, 88
      %v1333 = vpop.permute.xlu0 %1332
      %1334 = vrot.lane.b32.xlu0 %v1010, 88
      %v1335 = vpop.permute.xlu0 %1334
      %1336 = vrot.lane.b32.xlu0 %v1012, 88
      %v1337 = vpop.permute.xlu0 %1336
      %1354 = vrot.lane.b32.xlu0 %v975, 80
      %v1355 = vpop.permute.xlu0 %1354
      %1356 = vrot.lane.b32.xlu0 %v977, 80
      %v1357 = vpop.permute.xlu0 %1356
      %1358 = vrot.lane.b32.xlu0 %v980, 80
      %v1359 = vpop.permute.xlu0 %1358
      %1360 = vrot.lane.b32.xlu0 %v982, 80
      %v1361 = vpop.permute.xlu0 %1360
      %1362 = vrot.lane.b32.xlu0 %v985, 80
      %v1363 = vpop.permute.xlu0 %1362
      %1364 = vrot.lane.b32.xlu0 %v987, 80
      %v1365 = vpop.permute.xlu0 %1364
      %1366 = vrot.lane.b32.xlu0 %v990, 80
      %v1367 = vpop.permute.xlu0 %1366
      %1368 = vrot.lane.b32.xlu0 %v992, 80
      %v1369 = vpop.permute.xlu0 %1368
      %1370 = vrot.lane.b32.xlu0 %v995, 80
      %v1371 = vpop.permute.xlu0 %1370
      %1372 = vrot.lane.b32.xlu0 %v997, 80
      %v1373 = vpop.permute.xlu0 %1372
      %1374 = vrot.lane.b32.xlu0 %v1000, 80
      %v1375 = vpop.permute.xlu0 %1374
      %1376 = vrot.lane.b32.xlu0 %v1002, 80
      %v1377 = vpop.permute.xlu0 %1376
      %1378 = vrot.lane.b32.xlu0 %v1005, 80
      %v1379 = vpop.permute.xlu0 %1378
      %1380 = vrot.lane.b32.xlu0 %v1007, 80
      %v1381 = vpop.permute.xlu0 %1380
      %1382 = vrot.lane.b32.xlu0 %v1010, 80
      %v1383 = vpop.permute.xlu0 %1382
      %1384 = vrot.lane.b32.xlu0 %v1012, 80
      %v1385 = vpop.permute.xlu0 %1384
      %1402 = vrot.lane.b32.xlu0 %v975, 72
      %v1403 = vpop.permute.xlu0 %1402
      %1404 = vrot.lane.b32.xlu0 %v977, 72
      %v1405 = vpop.permute.xlu0 %1404
      %1406 = vrot.lane.b32.xlu0 %v980, 72
      %v1407 = vpop.permute.xlu0 %1406
      %1408 = vrot.lane.b32.xlu0 %v982, 72
      %v1409 = vpop.permute.xlu0 %1408
      %1410 = vrot.lane.b32.xlu0 %v985, 72
      %v1411 = vpop.permute.xlu0 %1410
      %1412 = vrot.lane.b32.xlu0 %v987, 72
      %v1413 = vpop.permute.xlu0 %1412
      %1414 = vrot.lane.b32.xlu0 %v990, 72
      %v1415 = vpop.permute.xlu0 %1414
      %1416 = vrot.lane.b32.xlu0 %v992, 72
      %v1417 = vpop.permute.xlu0 %1416
      %1418 = vrot.lane.b32.xlu0 %v995, 72
      %v1419 = vpop.permute.xlu0 %1418
      %1420 = vrot.lane.b32.xlu0 %v997, 72
      %v1421 = vpop.permute.xlu0 %1420
      %1422 = vrot.lane.b32.xlu0 %v1000, 72
      %v1423 = vpop.permute.xlu0 %1422
      %1424 = vrot.lane.b32.xlu0 %v1002, 72
      %v1425 = vpop.permute.xlu0 %1424
      %1426 = vrot.lane.b32.xlu0 %v1005, 72
      %v1427 = vpop.permute.xlu0 %1426
      %1428 = vrot.lane.b32.xlu0 %v1007, 72
      %v1429 = vpop.permute.xlu0 %1428
      %1430 = vrot.lane.b32.xlu0 %v1010, 72
      %v1431 = vpop.permute.xlu0 %1430
      %1432 = vrot.lane.b32.xlu0 %v1012, 72
      %v1433 = vpop.permute.xlu0 %1432
      %v1450 = vpack.c.bf16 %v975, %v975
      %v1451 = vpack.c.bf16 %v977, %v977
      %v1452 = vpack.c.bf16 %v980, %v980
      %v1453 = vpack.c.bf16 %v982, %v982
      %v1454 = vpack.c.bf16 %v985, %v985
      %v1455 = vpack.c.bf16 %v987, %v987
      %v1456 = vpack.c.bf16 %v990, %v990
      %v1457 = vpack.c.bf16 %v992, %v992
      %v1458 = vpack.c.bf16 %v995, %v995
      %v1459 = vpack.c.bf16 %v997, %v997
      %v1460 = vpack.c.bf16 %v1000, %v1000
      %v1461 = vpack.c.bf16 %v1002, %v1002
      %v1462 = vpack.c.bf16 %v1005, %v1005
      %v1463 = vpack.c.bf16 %v1007, %v1007
      %v1464 = vpack.c.bf16 %v1010, %v1010
      %v1465 = vpack.c.bf16 %v1012, %v1012
      %v1466 = vpack.c.bf16 %v1115, %v1115
      %v1467 = vpack.c.bf16 %v1117, %v1117
      %v1468 = vpack.c.bf16 %v1119, %v1119
      %v1469 = vpack.c.bf16 %v1121, %v1121
      %v1470 = vpack.c.bf16 %v1123, %v1123
      %v1471 = vpack.c.bf16 %v1125, %v1125
      %v1472 = vpack.c.bf16 %v1127, %v1127
      %v1473 = vpack.c.bf16 %v1129, %v1129
      %v1474 = vpack.c.bf16 %v1131, %v1131
      %v1475 = vpack.c.bf16 %v1133, %v1133
      %v1476 = vpack.c.bf16 %v1135, %v1135
      %v1477 = vpack.c.bf16 %v1137, %v1137
      %v1478 = vpack.c.bf16 %v1139, %v1139
      %v1479 = vpack.c.bf16 %v1141, %v1141
      %v1480 = vpack.c.bf16 %v1143, %v1143
      %v1481 = vpack.c.bf16 %v1145, %v1145
      %v1482 = vpack.c.bf16 %v1163, %v1163
      %v1483 = vpack.c.bf16 %v1165, %v1165
      %v1484 = vpack.c.bf16 %v1167, %v1167
      %v1485 = vpack.c.bf16 %v1169, %v1169
      %v1486 = vpack.c.bf16 %v1171, %v1171
      %v1487 = vpack.c.bf16 %v1173, %v1173
      %v1488 = vpack.c.bf16 %v1175, %v1175
      %v1489 = vpack.c.bf16 %v1177, %v1177
      %v1490 = vpack.c.bf16 %v1179, %v1179
      %v1491 = vpack.c.bf16 %v1181, %v1181
      %v1492 = vpack.c.bf16 %v1183, %v1183
      %v1493 = vpack.c.bf16 %v1185, %v1185
      %v1494 = vpack.c.bf16 %v1187, %v1187
      %v1495 = vpack.c.bf16 %v1189, %v1189
      %v1496 = vpack.c.bf16 %v1191, %v1191
      %v1497 = vpack.c.bf16 %v1193, %v1193
      %v1498 = vpack.c.bf16 %v1211, %v1211
      %v1499 = vpack.c.bf16 %v1213, %v1213
      %v1500 = vpack.c.bf16 %v1215, %v1215
      %v1501 = vpack.c.bf16 %v1217, %v1217
      %v1502 = vpack.c.bf16 %v1219, %v1219
      %v1503 = vpack.c.bf16 %v1221, %v1221
      %v1504 = vpack.c.bf16 %v1223, %v1223
      %v1505 = vpack.c.bf16 %v1225, %v1225
      %v1506 = vpack.c.bf16 %v1227, %v1227
      %v1507 = vpack.c.bf16 %v1229, %v1229
      %v1508 = vpack.c.bf16 %v1231, %v1231
      %v1509 = vpack.c.bf16 %v1233, %v1233
      %v1510 = vpack.c.bf16 %v1235, %v1235
      %v1511 = vpack.c.bf16 %v1237, %v1237
      %v1512 = vpack.c.bf16 %v1239, %v1239
      %v1513 = vpack.c.bf16 %v1241, %v1241
      %v1514 = vpack.c.bf16 %v1259, %v1259
      %v1515 = vpack.c.bf16 %v1261, %v1261
      %v1516 = vpack.c.bf16 %v1263, %v1263
      %v1517 = vpack.c.bf16 %v1265, %v1265
      %v1518 = vpack.c.bf16 %v1267, %v1267
      %v1519 = vpack.c.bf16 %v1269, %v1269
      %v1520 = vpack.c.bf16 %v1271, %v1271
      %v1521 = vpack.c.bf16 %v1273, %v1273
      %v1522 = vpack.c.bf16 %v1275, %v1275
      %v1523 = vpack.c.bf16 %v1277, %v1277
      %v1524 = vpack.c.bf16 %v1279, %v1279
      %v1525 = vpack.c.bf16 %v1281, %v1281
      %v1526 = vpack.c.bf16 %v1283, %v1283
      %v1527 = vpack.c.bf16 %v1285, %v1285
      %v1528 = vpack.c.bf16 %v1287, %v1287
      %v1529 = vpack.c.bf16 %v1289, %v1289
      %v1530 = vpack.c.bf16 %v1307, %v1307
      %v1531 = vpack.c.bf16 %v1309, %v1309
      %v1532 = vpack.c.bf16 %v1311, %v1311
      %v1533 = vpack.c.bf16 %v1313, %v1313
      %v1534 = vpack.c.bf16 %v1315, %v1315
      %v1535 = vpack.c.bf16 %v1317, %v1317
      %v1536 = vpack.c.bf16 %v1319, %v1319
      %v1537 = vpack.c.bf16 %v1321, %v1321
      %v1538 = vpack.c.bf16 %v1323, %v1323
      %v1539 = vpack.c.bf16 %v1325, %v1325
      %v1540 = vpack.c.bf16 %v1327, %v1327
      %v1541 = vpack.c.bf16 %v1329, %v1329
      %v1542 = vpack.c.bf16 %v1331, %v1331
      %v1543 = vpack.c.bf16 %v1333, %v1333
      %v1544 = vpack.c.bf16 %v1335, %v1335
      %v1545 = vpack.c.bf16 %v1337, %v1337
      %v1546 = vpack.c.bf16 %v1355, %v1355
      %v1547 = vpack.c.bf16 %v1357, %v1357
      %v1548 = vpack.c.bf16 %v1359, %v1359
      %v1549 = vpack.c.bf16 %v1361, %v1361
      %v1550 = vpack.c.bf16 %v1363, %v1363
      %v1551 = vpack.c.bf16 %v1365, %v1365
      %v1552 = vpack.c.bf16 %v1367, %v1367
      %v1553 = vpack.c.bf16 %v1369, %v1369
      %v1554 = vpack.c.bf16 %v1371, %v1371
      %v1555 = vpack.c.bf16 %v1373, %v1373
      %v1556 = vpack.c.bf16 %v1375, %v1375
      %v1557 = vpack.c.bf16 %v1377, %v1377
      %v1558 = vpack.c.bf16 %v1379, %v1379
      %v1559 = vpack.c.bf16 %v1381, %v1381
      %v1560 = vpack.c.bf16 %v1383, %v1383
      %v1561 = vpack.c.bf16 %v1385, %v1385
      %v1562 = vpack.c.bf16 %v1403, %v1403
      %v1563 = vpack.c.bf16 %v1405, %v1405
      %v1564 = vpack.c.bf16 %v1407, %v1407
      %v1565 = vpack.c.bf16 %v1409, %v1409
      %v1566 = vpack.c.bf16 %v1411, %v1411
      %v1567 = vpack.c.bf16 %v1413, %v1413
      %v1568 = vpack.c.bf16 %v1415, %v1415
      %v1569 = vpack.c.bf16 %v1417, %v1417
      %v1570 = vpack.c.bf16 %v1419, %v1419
      %v1571 = vpack.c.bf16 %v1421, %v1421
      %v1572 = vpack.c.bf16 %v1423, %v1423
      %v1573 = vpack.c.bf16 %v1425, %v1425
      %v1574 = vpack.c.bf16 %v1427, %v1427
      %v1575 = vpack.c.bf16 %v1429, %v1429
      %v1576 = vpack.c.bf16 %v1431, %v1431
      %v1577 = vpack.c.bf16 %v1433, %v1433
      %1594 = vrot.lane.b32.xlu0 %v1024, 120
      %v1595 = vpop.permute.xlu0 %1594
      %1596 = vrot.lane.b32.xlu0 %v1026, 120
      %v1597 = vpop.permute.xlu0 %1596
      %1598 = vrot.lane.b32.xlu0 %v1029, 120
      %v1599 = vpop.permute.xlu0 %1598
      %1600 = vrot.lane.b32.xlu0 %v1031, 120
      %v1601 = vpop.permute.xlu0 %1600
      %1602 = vrot.lane.b32.xlu0 %v1034, 120
      %v1603 = vpop.permute.xlu0 %1602
      %1604 = vrot.lane.b32.xlu0 %v1036, 120
      %v1605 = vpop.permute.xlu0 %1604
      %1606 = vrot.lane.b32.xlu0 %v1039, 120
      %v1607 = vpop.permute.xlu0 %1606
      %1608 = vrot.lane.b32.xlu0 %v1041, 120
      %v1609 = vpop.permute.xlu0 %1608
      %1610 = vrot.lane.b32.xlu0 %v1044, 120
      %v1611 = vpop.permute.xlu0 %1610
      %1612 = vrot.lane.b32.xlu0 %v1046, 120
      %v1613 = vpop.permute.xlu0 %1612
      %1614 = vrot.lane.b32.xlu0 %v1049, 120
      %v1615 = vpop.permute.xlu0 %1614
      %1616 = vrot.lane.b32.xlu0 %v1051, 120
      %v1617 = vpop.permute.xlu0 %1616
      %1618 = vrot.lane.b32.xlu0 %v1054, 120
      %v1619 = vpop.permute.xlu0 %1618
      %1620 = vrot.lane.b32.xlu0 %v1056, 120
      %v1621 = vpop.permute.xlu0 %1620
      %1622 = vrot.lane.b32.xlu0 %v1059, 120
      %v1623 = vpop.permute.xlu0 %1622
      %1624 = vrot.lane.b32.xlu0 %v1061, 120
      %v1625 = vpop.permute.xlu0 %1624
      %1642 = vrot.lane.b32.xlu0 %v1024, 112
      %v1643 = vpop.permute.xlu0 %1642
      %1644 = vrot.lane.b32.xlu0 %v1026, 112
      %v1645 = vpop.permute.xlu0 %1644
      %1646 = vrot.lane.b32.xlu0 %v1029, 112
      %v1647 = vpop.permute.xlu0 %1646
      %1648 = vrot.lane.b32.xlu0 %v1031, 112
      %v1649 = vpop.permute.xlu0 %1648
      %1650 = vrot.lane.b32.xlu0 %v1034, 112
      %v1651 = vpop.permute.xlu0 %1650
      %1652 = vrot.lane.b32.xlu0 %v1036, 112
      %v1653 = vpop.permute.xlu0 %1652
      %1654 = vrot.lane.b32.xlu0 %v1039, 112
      %v1655 = vpop.permute.xlu0 %1654
      %1656 = vrot.lane.b32.xlu0 %v1041, 112
      %v1657 = vpop.permute.xlu0 %1656
      %1658 = vrot.lane.b32.xlu0 %v1044, 112
      %v1659 = vpop.permute.xlu0 %1658
      %1660 = vrot.lane.b32.xlu0 %v1046, 112
      %v1661 = vpop.permute.xlu0 %1660
      %1662 = vrot.lane.b32.xlu0 %v1049, 112
      %v1663 = vpop.permute.xlu0 %1662
      %1664 = vrot.lane.b32.xlu0 %v1051, 112
      %v1665 = vpop.permute.xlu0 %1664
      %1666 = vrot.lane.b32.xlu0 %v1054, 112
      %v1667 = vpop.permute.xlu0 %1666
      %1668 = vrot.lane.b32.xlu0 %v1056, 112
      %v1669 = vpop.permute.xlu0 %1668
      %1670 = vrot.lane.b32.xlu0 %v1059, 112
      %v1671 = vpop.permute.xlu0 %1670
      %1672 = vrot.lane.b32.xlu0 %v1061, 112
      %v1673 = vpop.permute.xlu0 %1672
      %1690 = vrot.lane.b32.xlu0 %v1024, 104
      %v1691 = vpop.permute.xlu0 %1690
      %1692 = vrot.lane.b32.xlu0 %v1026, 104
      %v1693 = vpop.permute.xlu0 %1692
      %1694 = vrot.lane.b32.xlu0 %v1029, 104
      %v1695 = vpop.permute.xlu0 %1694
      %1696 = vrot.lane.b32.xlu0 %v1031, 104
      %v1697 = vpop.permute.xlu0 %1696
      %1698 = vrot.lane.b32.xlu0 %v1034, 104
      %v1699 = vpop.permute.xlu0 %1698
      %1700 = vrot.lane.b32.xlu0 %v1036, 104
      %v1701 = vpop.permute.xlu0 %1700
      %1702 = vrot.lane.b32.xlu0 %v1039, 104
      %v1703 = vpop.permute.xlu0 %1702
      %1704 = vrot.lane.b32.xlu0 %v1041, 104
      %v1705 = vpop.permute.xlu0 %1704
      %1706 = vrot.lane.b32.xlu0 %v1044, 104
      %v1707 = vpop.permute.xlu0 %1706
      %1708 = vrot.lane.b32.xlu0 %v1046, 104
      %v1709 = vpop.permute.xlu0 %1708
      %1710 = vrot.lane.b32.xlu0 %v1049, 104
      %v1711 = vpop.permute.xlu0 %1710
      %1712 = vrot.lane.b32.xlu0 %v1051, 104
      %v1713 = vpop.permute.xlu0 %1712
      %1714 = vrot.lane.b32.xlu0 %v1054, 104
      %v1715 = vpop.permute.xlu0 %1714
      %1716 = vrot.lane.b32.xlu0 %v1056, 104
      %v1717 = vpop.permute.xlu0 %1716
      %1718 = vrot.lane.b32.xlu0 %v1059, 104
      %v1719 = vpop.permute.xlu0 %1718
      %1720 = vrot.lane.b32.xlu0 %v1061, 104
      %v1721 = vpop.permute.xlu0 %1720
      %1738 = vrot.lane.b32.xlu0 %v1024, 96
      %v1739 = vpop.permute.xlu0 %1738
      %1740 = vrot.lane.b32.xlu0 %v1026, 96
      %v1741 = vpop.permute.xlu0 %1740
      %1742 = vrot.lane.b32.xlu0 %v1029, 96
      %v1743 = vpop.permute.xlu0 %1742
      %1744 = vrot.lane.b32.xlu0 %v1031, 96
      %v1745 = vpop.permute.xlu0 %1744
      %1746 = vrot.lane.b32.xlu0 %v1034, 96
      %v1747 = vpop.permute.xlu0 %1746
      %1748 = vrot.lane.b32.xlu0 %v1036, 96
      %v1749 = vpop.permute.xlu0 %1748
      %1750 = vrot.lane.b32.xlu0 %v1039, 96
      %v1751 = vpop.permute.xlu0 %1750
      %1752 = vrot.lane.b32.xlu0 %v1041, 96
      %v1753 = vpop.permute.xlu0 %1752
      %1754 = vrot.lane.b32.xlu0 %v1044, 96
      %v1755 = vpop.permute.xlu0 %1754
      %1756 = vrot.lane.b32.xlu0 %v1046, 96
      %v1757 = vpop.permute.xlu0 %1756
      %1758 = vrot.lane.b32.xlu0 %v1049, 96
      %v1759 = vpop.permute.xlu0 %1758
      %1760 = vrot.lane.b32.xlu0 %v1051, 96
      %v1761 = vpop.permute.xlu0 %1760
      %1762 = vrot.lane.b32.xlu0 %v1054, 96
      %v1763 = vpop.permute.xlu0 %1762
      %1764 = vrot.lane.b32.xlu0 %v1056, 96
      %v1765 = vpop.permute.xlu0 %1764
      %1766 = vrot.lane.b32.xlu0 %v1059, 96
      %v1767 = vpop.permute.xlu0 %1766
      %1768 = vrot.lane.b32.xlu0 %v1061, 96
      %v1769 = vpop.permute.xlu0 %1768
      %1786 = vrot.lane.b32.xlu0 %v1024, 88
      %v1787 = vpop.permute.xlu0 %1786
      %1788 = vrot.lane.b32.xlu0 %v1026, 88
      %v1789 = vpop.permute.xlu0 %1788
      %1790 = vrot.lane.b32.xlu0 %v1029, 88
      %v1791 = vpop.permute.xlu0 %1790
      %1792 = vrot.lane.b32.xlu0 %v1031, 88
      %v1793 = vpop.permute.xlu0 %1792
      %1794 = vrot.lane.b32.xlu0 %v1034, 88
      %v1795 = vpop.permute.xlu0 %1794
      %1796 = vrot.lane.b32.xlu0 %v1036, 88
      %v1797 = vpop.permute.xlu0 %1796
      %1798 = vrot.lane.b32.xlu0 %v1039, 88
      %v1799 = vpop.permute.xlu0 %1798
      %1800 = vrot.lane.b32.xlu0 %v1041, 88
      %v1801 = vpop.permute.xlu0 %1800
      %1802 = vrot.lane.b32.xlu0 %v1044, 88
      %v1803 = vpop.permute.xlu0 %1802
      %1804 = vrot.lane.b32.xlu0 %v1046, 88
      %v1805 = vpop.permute.xlu0 %1804
      %1806 = vrot.lane.b32.xlu0 %v1049, 88
      %v1807 = vpop.permute.xlu0 %1806
      %1808 = vrot.lane.b32.xlu0 %v1051, 88
      %v1809 = vpop.permute.xlu0 %1808
      %1810 = vrot.lane.b32.xlu0 %v1054, 88
      %v1811 = vpop.permute.xlu0 %1810
      %1812 = vrot.lane.b32.xlu0 %v1056, 88
      %v1813 = vpop.permute.xlu0 %1812
      %1814 = vrot.lane.b32.xlu0 %v1059, 88
      %v1815 = vpop.permute.xlu0 %1814
      %1816 = vrot.lane.b32.xlu0 %v1061, 88
      %v1817 = vpop.permute.xlu0 %1816
      %1834 = vrot.lane.b32.xlu0 %v1024, 80
      %v1835 = vpop.permute.xlu0 %1834
      %1836 = vrot.lane.b32.xlu0 %v1026, 80
      %v1837 = vpop.permute.xlu0 %1836
      %1838 = vrot.lane.b32.xlu0 %v1029, 80
      %v1839 = vpop.permute.xlu0 %1838
      %1840 = vrot.lane.b32.xlu0 %v1031, 80
      %v1841 = vpop.permute.xlu0 %1840
      %1842 = vrot.lane.b32.xlu0 %v1034, 80
      %v1843 = vpop.permute.xlu0 %1842
      %1844 = vrot.lane.b32.xlu0 %v1036, 80
      %v1845 = vpop.permute.xlu0 %1844
      %1846 = vrot.lane.b32.xlu0 %v1039, 80
      %v1847 = vpop.permute.xlu0 %1846
      %1848 = vrot.lane.b32.xlu0 %v1041, 80
      %v1849 = vpop.permute.xlu0 %1848
      %1850 = vrot.lane.b32.xlu0 %v1044, 80
      %v1851 = vpop.permute.xlu0 %1850
      %1852 = vrot.lane.b32.xlu0 %v1046, 80
      %v1853 = vpop.permute.xlu0 %1852
      %1854 = vrot.lane.b32.xlu0 %v1049, 80
      %v1855 = vpop.permute.xlu0 %1854
      %1856 = vrot.lane.b32.xlu0 %v1051, 80
      %v1857 = vpop.permute.xlu0 %1856
      %1858 = vrot.lane.b32.xlu0 %v1054, 80
      %v1859 = vpop.permute.xlu0 %1858
      %1860 = vrot.lane.b32.xlu0 %v1056, 80
      %v1861 = vpop.permute.xlu0 %1860
      %1862 = vrot.lane.b32.xlu0 %v1059, 80
      %v1863 = vpop.permute.xlu0 %1862
      %1864 = vrot.lane.b32.xlu0 %v1061, 80
      %v1865 = vpop.permute.xlu0 %1864
      %1882 = vrot.lane.b32.xlu0 %v1024, 72
      %v1883 = vpop.permute.xlu0 %1882
      %1884 = vrot.lane.b32.xlu0 %v1026, 72
      %v1885 = vpop.permute.xlu0 %1884
      %1886 = vrot.lane.b32.xlu0 %v1029, 72
      %v1887 = vpop.permute.xlu0 %1886
      %1888 = vrot.lane.b32.xlu0 %v1031, 72
      %v1889 = vpop.permute.xlu0 %1888
      %1890 = vrot.lane.b32.xlu0 %v1034, 72
      %v1891 = vpop.permute.xlu0 %1890
      %1892 = vrot.lane.b32.xlu0 %v1036, 72
      %v1893 = vpop.permute.xlu0 %1892
      %1894 = vrot.lane.b32.xlu0 %v1039, 72
      %v1895 = vpop.permute.xlu0 %1894
      %1896 = vrot.lane.b32.xlu0 %v1041, 72
      %v1897 = vpop.permute.xlu0 %1896
      %1898 = vrot.lane.b32.xlu0 %v1044, 72
      %v1899 = vpop.permute.xlu0 %1898
      %1900 = vrot.lane.b32.xlu0 %v1046, 72
      %v1901 = vpop.permute.xlu0 %1900
      %1902 = vrot.lane.b32.xlu0 %v1049, 72
      %v1903 = vpop.permute.xlu0 %1902
      %1904 = vrot.lane.b32.xlu0 %v1051, 72
      %v1905 = vpop.permute.xlu0 %1904
      %1906 = vrot.lane.b32.xlu0 %v1054, 72
      %v1907 = vpop.permute.xlu0 %1906
      %1908 = vrot.lane.b32.xlu0 %v1056, 72
      %v1909 = vpop.permute.xlu0 %1908
      %1910 = vrot.lane.b32.xlu0 %v1059, 72
      %v1911 = vpop.permute.xlu0 %1910
      %1912 = vrot.lane.b32.xlu0 %v1061, 72
      %v1913 = vpop.permute.xlu0 %1912
      %v1930 = vpack.c.bf16 %v1024, %v1024
      %v1931 = vpack.c.bf16 %v1026, %v1026
      %v1932 = vpack.c.bf16 %v1029, %v1029
      %v1933 = vpack.c.bf16 %v1031, %v1031
      %v1934 = vpack.c.bf16 %v1034, %v1034
      %v1935 = vpack.c.bf16 %v1036, %v1036
      %v1936 = vpack.c.bf16 %v1039, %v1039
      %v1937 = vpack.c.bf16 %v1041, %v1041
      %v1938 = vpack.c.bf16 %v1044, %v1044
      %v1939 = vpack.c.bf16 %v1046, %v1046
      %v1940 = vpack.c.bf16 %v1049, %v1049
      %v1941 = vpack.c.bf16 %v1051, %v1051
      %v1942 = vpack.c.bf16 %v1054, %v1054
      %v1943 = vpack.c.bf16 %v1056, %v1056
      %v1944 = vpack.c.bf16 %v1059, %v1059
      %v1945 = vpack.c.bf16 %v1061, %v1061
      %v1946 = vpack.c.bf16 %v1595, %v1595
      %v1947 = vpack.c.bf16 %v1597, %v1597
      %v1948 = vpack.c.bf16 %v1599, %v1599
      %v1949 = vpack.c.bf16 %v1601, %v1601
      %v1950 = vpack.c.bf16 %v1603, %v1603
      %v1951 = vpack.c.bf16 %v1605, %v1605
      %v1952 = vpack.c.bf16 %v1607, %v1607
      %v1953 = vpack.c.bf16 %v1609, %v1609
      %v1954 = vpack.c.bf16 %v1611, %v1611
      %v1955 = vpack.c.bf16 %v1613, %v1613
      %v1956 = vpack.c.bf16 %v1615, %v1615
      %v1957 = vpack.c.bf16 %v1617, %v1617
      %v1958 = vpack.c.bf16 %v1619, %v1619
      %v1959 = vpack.c.bf16 %v1621, %v1621
      %v1960 = vpack.c.bf16 %v1623, %v1623
      %v1961 = vpack.c.bf16 %v1625, %v1625
      %v1962 = vpack.c.bf16 %v1643, %v1643
      %v1963 = vpack.c.bf16 %v1645, %v1645
      %v1964 = vpack.c.bf16 %v1647, %v1647
      %v1965 = vpack.c.bf16 %v1649, %v1649
      %v1966 = vpack.c.bf16 %v1651, %v1651
      %v1967 = vpack.c.bf16 %v1653, %v1653
      %v1968 = vpack.c.bf16 %v1655, %v1655
      %v1969 = vpack.c.bf16 %v1657, %v1657
      %v1970 = vpack.c.bf16 %v1659, %v1659
      %v1971 = vpack.c.bf16 %v1661, %v1661
      %v1972 = vpack.c.bf16 %v1663, %v1663
      %v1973 = vpack.c.bf16 %v1665, %v1665
      %v1974 = vpack.c.bf16 %v1667, %v1667
      %v1975 = vpack.c.bf16 %v1669, %v1669
      %v1976 = vpack.c.bf16 %v1671, %v1671
      %v1977 = vpack.c.bf16 %v1673, %v1673
      %v1978 = vpack.c.bf16 %v1691, %v1691
      %v1979 = vpack.c.bf16 %v1693, %v1693
      %v1980 = vpack.c.bf16 %v1695, %v1695
      %v1981 = vpack.c.bf16 %v1697, %v1697
      %v1982 = vpack.c.bf16 %v1699, %v1699
      %v1983 = vpack.c.bf16 %v1701, %v1701
      %v1984 = vpack.c.bf16 %v1703, %v1703
      %v1985 = vpack.c.bf16 %v1705, %v1705
      %v1986 = vpack.c.bf16 %v1707, %v1707
      %v1987 = vpack.c.bf16 %v1709, %v1709
      %v1988 = vpack.c.bf16 %v1711, %v1711
      %v1989 = vpack.c.bf16 %v1713, %v1713
      %v1990 = vpack.c.bf16 %v1715, %v1715
      %v1991 = vpack.c.bf16 %v1717, %v1717
      %v1992 = vpack.c.bf16 %v1719, %v1719
      %v1993 = vpack.c.bf16 %v1721, %v1721
      %v1994 = vpack.c.bf16 %v1739, %v1739
      %v1995 = vpack.c.bf16 %v1741, %v1741
      %v1996 = vpack.c.bf16 %v1743, %v1743
      %v1997 = vpack.c.bf16 %v1745, %v1745
      %v1998 = vpack.c.bf16 %v1747, %v1747
      %v1999 = vpack.c.bf16 %v1749, %v1749
      %v2000 = vpack.c.bf16 %v1751, %v1751
      %v2001 = vpack.c.bf16 %v1753, %v1753
      %v2002 = vpack.c.bf16 %v1755, %v1755
      %v2003 = vpack.c.bf16 %v1757, %v1757
      %v2004 = vpack.c.bf16 %v1759, %v1759
      %v2005 = vpack.c.bf16 %v1761, %v1761
      %v2006 = vpack.c.bf16 %v1763, %v1763
      %v2007 = vpack.c.bf16 %v1765, %v1765
      %v2008 = vpack.c.bf16 %v1767, %v1767
      %v2009 = vpack.c.bf16 %v1769, %v1769
      %v2010 = vpack.c.bf16 %v1787, %v1787
      %v2011 = vpack.c.bf16 %v1789, %v1789
      %v2012 = vpack.c.bf16 %v1791, %v1791
      %v2013 = vpack.c.bf16 %v1793, %v1793
      %v2014 = vpack.c.bf16 %v1795, %v1795
      %v2015 = vpack.c.bf16 %v1797, %v1797
      %v2016 = vpack.c.bf16 %v1799, %v1799
      %v2017 = vpack.c.bf16 %v1801, %v1801
      %v2018 = vpack.c.bf16 %v1803, %v1803
      %v2019 = vpack.c.bf16 %v1805, %v1805
      %v2020 = vpack.c.bf16 %v1807, %v1807
      %v2021 = vpack.c.bf16 %v1809, %v1809
      %v2022 = vpack.c.bf16 %v1811, %v1811
      %v2023 = vpack.c.bf16 %v1813, %v1813
      %v2024 = vpack.c.bf16 %v1815, %v1815
      %v2025 = vpack.c.bf16 %v1817, %v1817
      %v2026 = vpack.c.bf16 %v1835, %v1835
      %v2027 = vpack.c.bf16 %v1837, %v1837
      %v2028 = vpack.c.bf16 %v1839, %v1839
      %v2029 = vpack.c.bf16 %v1841, %v1841
      %v2030 = vpack.c.bf16 %v1843, %v1843
      %v2031 = vpack.c.bf16 %v1845, %v1845
      %v2032 = vpack.c.bf16 %v1847, %v1847
      %v2033 = vpack.c.bf16 %v1849, %v1849
      %v2034 = vpack.c.bf16 %v1851, %v1851
      %v2035 = vpack.c.bf16 %v1853, %v1853
      %v2036 = vpack.c.bf16 %v1855, %v1855
      %v2037 = vpack.c.bf16 %v1857, %v1857
      %v2038 = vpack.c.bf16 %v1859, %v1859
      %v2039 = vpack.c.bf16 %v1861, %v1861
      %v2040 = vpack.c.bf16 %v1863, %v1863
      %v2041 = vpack.c.bf16 %v1865, %v1865
      %v2042 = vpack.c.bf16 %v1883, %v1883
      %v2043 = vpack.c.bf16 %v1885, %v1885
      %v2044 = vpack.c.bf16 %v1887, %v1887
      %v2045 = vpack.c.bf16 %v1889, %v1889
      %v2046 = vpack.c.bf16 %v1891, %v1891
      %v2047 = vpack.c.bf16 %v1893, %v1893
      %v2048 = vpack.c.bf16 %v1895, %v1895
      %v2049 = vpack.c.bf16 %v1897, %v1897
      %v2050 = vpack.c.bf16 %v1899, %v1899
      %v2051 = vpack.c.bf16 %v1901, %v1901
      %v2052 = vpack.c.bf16 %v1903, %v1903
      %v2053 = vpack.c.bf16 %v1905, %v1905
      %v2054 = vpack.c.bf16 %v1907, %v1907
      %v2055 = vpack.c.bf16 %v1909, %v1909
      %v2056 = vpack.c.bf16 %v1911, %v1911
      %v2057 = vpack.c.bf16 %v1913, %v1913
      %v2074 = vunpack.c.l.b16 %v1450
      %v2075 = vunpack.c.l.b16 %v1451
      %v2076 = vunpack.c.l.b16 %v1452
      %v2077 = vunpack.c.l.b16 %v1453
      %v2078 = vunpack.c.l.b16 %v1454
      %v2079 = vunpack.c.l.b16 %v1455
      %v2080 = vunpack.c.l.b16 %v1456
      %v2081 = vunpack.c.l.b16 %v1457
      %v2082 = vunpack.c.l.b16 %v1458
      %v2083 = vunpack.c.l.b16 %v1459
      %v2084 = vunpack.c.l.b16 %v1460
      %v2085 = vunpack.c.l.b16 %v1461
      %v2086 = vunpack.c.l.b16 %v1462
      %v2087 = vunpack.c.l.b16 %v1463
      %v2088 = vunpack.c.l.b16 %v1464
      %v2089 = vunpack.c.l.b16 %v1465
      %v2090 = vpack.c.b16 %v2075, %v2074
      %v2091 = vpack.c.b16 %v2077, %v2076
      %v2092 = vpack.c.b16 %v2079, %v2078
      %v2093 = vpack.c.b16 %v2081, %v2080
      %v2094 = vpack.c.b16 %v2083, %v2082
      %v2095 = vpack.c.b16 %v2085, %v2084
      %v2096 = vpack.c.b16 %v2087, %v2086
      %v2097 = vpack.c.b16 %v2089, %v2088
      %2098 = vrot.lane.b32.xlu0 %v2090, 64
      %v2099 = vpop.permute.xlu0 %2098
      %2100 = vrot.lane.b32.xlu0 %v2091, 64
      %v2101 = vpop.permute.xlu0 %2100
      %2102 = vrot.lane.b32.xlu0 %v2092, 64
      %v2103 = vpop.permute.xlu0 %2102
      %2104 = vrot.lane.b32.xlu0 %v2093, 64
      %v2105 = vpop.permute.xlu0 %2104
      %2106 = vrot.lane.b32.xlu0 %v2094, 64
      %v2107 = vpop.permute.xlu0 %2106
      %2108 = vrot.lane.b32.xlu0 %v2095, 64
      %v2109 = vpop.permute.xlu0 %2108
      %2110 = vrot.lane.b32.xlu0 %v2096, 64
      %v2111 = vpop.permute.xlu0 %2110
      %2112 = vrot.lane.b32.xlu0 %v2097, 64
      %v2113 = vpop.permute.xlu0 %2112
      %vm2114 = vcmask 64512
      %v2116 = vsel %vm2114, %v2090, 0
      %v2119 = vsel %vm2114, %v2091, 0
      %v2122 = vsel %vm2114, %v2092, 0
      %v2125 = vsel %vm2114, %v2093, 0
      %v2128 = vsel %vm2114, %v2094, 0
      %v2131 = vsel %vm2114, %v2095, 0
      %v2134 = vsel %vm2114, %v2096, 0
      %v2137 = vsel %vm2114, %v2097, 0
      %v2140 = vsel %vm2114, %v2099, 0
      %v2143 = vsel %vm2114, %v2101, 0
      %v2146 = vsel %vm2114, %v2103, 0
      %v2149 = vsel %vm2114, %v2105, 0
      %v2152 = vsel %vm2114, %v2107, 0
      %v2155 = vsel %vm2114, %v2109, 0
      %v2158 = vsel %vm2114, %v2111, 0
      %v2161 = vsel %vm2114, %v2113, 0
      %2163 = vmatpush.bf16.xpose.msra.mxu0 %v2161
      %2164 = vmatpush.bf16.xpose.msra.mxu0 %v2158
      %2165 = vmatpush.bf16.xpose.msra.mxu0 %v2155
      %2166 = vmatpush.bf16.xpose.msra.mxu0 %v2152
      %2167 = vmatpush.bf16.xpose.msra.mxu0 %v2149
      %2168 = vmatpush.bf16.xpose.msra.mxu0 %v2146
      %2169 = vmatpush.bf16.xpose.msra.mxu0 %v2143
      %2170 = vmatpush.bf16.xpose.msra.mxu0 %v2140
      %2171 = vmatmul.bf16.gmra.mxu0 %v2116
      %v2172 = vpop.f32.mrf.mxu0
      %v2173 = vadd.f32 0.0, %v2172
      %v2174 = vpop.f32.mrf.mxu0
      %v2175 = vadd.f32 0.0, %v2174
      %2176 = vmatmul.bf16.gmra.mxu0 %v2119
      %v2177 = vpop.f32.mrf.mxu0
      %v2178 = vadd.f32 0.0, %v2177
      %v2179 = vpop.f32.mrf.mxu0
      %v2180 = vadd.f32 0.0, %v2179
      %2181 = vmatmul.bf16.gmra.mxu0 %v2122
      %v2182 = vpop.f32.mrf.mxu0
      %v2183 = vadd.f32 0.0, %v2182
      %v2184 = vpop.f32.mrf.mxu0
      %v2185 = vadd.f32 0.0, %v2184
      %2186 = vmatmul.bf16.gmra.mxu0 %v2125
      %v2187 = vpop.f32.mrf.mxu0
      %v2188 = vadd.f32 0.0, %v2187
      %v2189 = vpop.f32.mrf.mxu0
      %v2190 = vadd.f32 0.0, %v2189
      %2191 = vmatmul.bf16.gmra.mxu0 %v2128
      %v2192 = vpop.f32.mrf.mxu0
      %v2193 = vadd.f32 0.0, %v2192
      %v2194 = vpop.f32.mrf.mxu0
      %v2195 = vadd.f32 0.0, %v2194
      %2196 = vmatmul.bf16.gmra.mxu0 %v2131
      %v2197 = vpop.f32.mrf.mxu0
      %v2198 = vadd.f32 0.0, %v2197
      %v2199 = vpop.f32.mrf.mxu0
      %v2200 = vadd.f32 0.0, %v2199
      %2201 = vmatmul.bf16.gmra.mxu0 %v2134
      %v2202 = vpop.f32.mrf.mxu0
      %v2203 = vadd.f32 0.0, %v2202
      %v2204 = vpop.f32.mrf.mxu0
      %v2205 = vadd.f32 0.0, %v2204
      %2206 = vmatmul.bf16.gmra.mxu0 %v2137
      %v2207 = vpop.f32.mrf.mxu0
      %v2208 = vadd.f32 0.0, %v2207
      %v2209 = vpop.f32.mrf.mxu0
      %v2210 = vadd.f32 0.0, %v2209
      %2211 = vdwg.mxu0
      %v2228 = vunpack.c.l.b16 %v1466
      %v2229 = vunpack.c.l.b16 %v1467
      %v2230 = vunpack.c.l.b16 %v1468
      %v2231 = vunpack.c.l.b16 %v1469
      %v2232 = vunpack.c.l.b16 %v1470
      %v2233 = vunpack.c.l.b16 %v1471
      %v2234 = vunpack.c.l.b16 %v1472
      %v2235 = vunpack.c.l.b16 %v1473
      %v2236 = vunpack.c.l.b16 %v1474
      %v2237 = vunpack.c.l.b16 %v1475
      %v2238 = vunpack.c.l.b16 %v1476
      %v2239 = vunpack.c.l.b16 %v1477
      %v2240 = vunpack.c.l.b16 %v1478
      %v2241 = vunpack.c.l.b16 %v1479
      %v2242 = vunpack.c.l.b16 %v1480
      %v2243 = vunpack.c.l.b16 %v1481
      %v2244 = vpack.c.b16 %v2229, %v2228
      %v2245 = vpack.c.b16 %v2231, %v2230
      %v2246 = vpack.c.b16 %v2233, %v2232
      %v2247 = vpack.c.b16 %v2235, %v2234
      %v2248 = vpack.c.b16 %v2237, %v2236
      %v2249 = vpack.c.b16 %v2239, %v2238
      %v2250 = vpack.c.b16 %v2241, %v2240
      %v2251 = vpack.c.b16 %v2243, %v2242
      %2252 = vrot.lane.b32.xlu0 %v2244, 64
      %v2253 = vpop.permute.xlu0 %2252
      %2254 = vrot.lane.b32.xlu0 %v2245, 64
      %v2255 = vpop.permute.xlu0 %2254
      %2256 = vrot.lane.b32.xlu0 %v2246, 64
      %v2257 = vpop.permute.xlu0 %2256
      %2258 = vrot.lane.b32.xlu0 %v2247, 64
      %v2259 = vpop.permute.xlu0 %2258
      %2260 = vrot.lane.b32.xlu0 %v2248, 64
      %v2261 = vpop.permute.xlu0 %2260
      %2262 = vrot.lane.b32.xlu0 %v2249, 64
      %v2263 = vpop.permute.xlu0 %2262
      %2264 = vrot.lane.b32.xlu0 %v2250, 64
      %v2265 = vpop.permute.xlu0 %2264
      %2266 = vrot.lane.b32.xlu0 %v2251, 64
      %v2267 = vpop.permute.xlu0 %2266
      %v2269 = vsel %vm2114, %v2244, 0
      %v2272 = vsel %vm2114, %v2245, 0
      %v2275 = vsel %vm2114, %v2246, 0
      %v2278 = vsel %vm2114, %v2247, 0
      %v2281 = vsel %vm2114, %v2248, 0
      %v2284 = vsel %vm2114, %v2249, 0
      %v2287 = vsel %vm2114, %v2250, 0
      %v2290 = vsel %vm2114, %v2251, 0
      %v2293 = vsel %vm2114, %v2253, 0
      %v2296 = vsel %vm2114, %v2255, 0
      %v2299 = vsel %vm2114, %v2257, 0
      %v2302 = vsel %vm2114, %v2259, 0
      %v2305 = vsel %vm2114, %v2261, 0
      %v2308 = vsel %vm2114, %v2263, 0
      %v2311 = vsel %vm2114, %v2265, 0
      %v2314 = vsel %vm2114, %v2267, 0
      %2316 = vmatpush.bf16.xpose.msra.mxu0 %v2314
      %2317 = vmatpush.bf16.xpose.msra.mxu0 %v2311
      %2318 = vmatpush.bf16.xpose.msra.mxu0 %v2308
      %2319 = vmatpush.bf16.xpose.msra.mxu0 %v2305
      %2320 = vmatpush.bf16.xpose.msra.mxu0 %v2302
      %2321 = vmatpush.bf16.xpose.msra.mxu0 %v2299
      %2322 = vmatpush.bf16.xpose.msra.mxu0 %v2296
      %2323 = vmatpush.bf16.xpose.msra.mxu0 %v2293
      %2324 = vmatmul.bf16.gmra.mxu0 %v2269
      %v2325 = vpop.f32.mrf.mxu0
      %v2326 = vadd.f32 0.0, %v2325
      %v2327 = vpop.f32.mrf.mxu0
      %v2328 = vadd.f32 0.0, %v2327
      %2329 = vmatmul.bf16.gmra.mxu0 %v2272
      %v2330 = vpop.f32.mrf.mxu0
      %v2331 = vadd.f32 0.0, %v2330
      %v2332 = vpop.f32.mrf.mxu0
      %v2333 = vadd.f32 0.0, %v2332
      %2334 = vmatmul.bf16.gmra.mxu0 %v2275
      %v2335 = vpop.f32.mrf.mxu0
      %v2336 = vadd.f32 0.0, %v2335
      %v2337 = vpop.f32.mrf.mxu0
      %v2338 = vadd.f32 0.0, %v2337
      %2339 = vmatmul.bf16.gmra.mxu0 %v2278
      %v2340 = vpop.f32.mrf.mxu0
      %v2341 = vadd.f32 0.0, %v2340
      %v2342 = vpop.f32.mrf.mxu0
      %v2343 = vadd.f32 0.0, %v2342
      %2344 = vmatmul.bf16.gmra.mxu0 %v2281
      %v2345 = vpop.f32.mrf.mxu0
      %v2346 = vadd.f32 0.0, %v2345
      %v2347 = vpop.f32.mrf.mxu0
      %v2348 = vadd.f32 0.0, %v2347
      %2349 = vmatmul.bf16.gmra.mxu0 %v2284
      %v2350 = vpop.f32.mrf.mxu0
      %v2351 = vadd.f32 0.0, %v2350
      %v2352 = vpop.f32.mrf.mxu0
      %v2353 = vadd.f32 0.0, %v2352
      %2354 = vmatmul.bf16.gmra.mxu0 %v2287
      %v2355 = vpop.f32.mrf.mxu0
      %v2356 = vadd.f32 0.0, %v2355
      %v2357 = vpop.f32.mrf.mxu0
      %v2358 = vadd.f32 0.0, %v2357
      %2359 = vmatmul.bf16.gmra.mxu0 %v2290
      %v2360 = vpop.f32.mrf.mxu0
      %v2361 = vadd.f32 0.0, %v2360
      %v2362 = vpop.f32.mrf.mxu0
      %v2363 = vadd.f32 0.0, %v2362
      %2364 = vdwg.mxu0
      %v2381 = vunpack.c.l.b16 %v1482
      %v2382 = vunpack.c.l.b16 %v1483
      %v2383 = vunpack.c.l.b16 %v1484
      %v2384 = vunpack.c.l.b16 %v1485
      %v2385 = vunpack.c.l.b16 %v1486
      %v2386 = vunpack.c.l.b16 %v1487
      %v2387 = vunpack.c.l.b16 %v1488
      %v2388 = vunpack.c.l.b16 %v1489
      %v2389 = vunpack.c.l.b16 %v1490
      %v2390 = vunpack.c.l.b16 %v1491
      %v2391 = vunpack.c.l.b16 %v1492
      %v2392 = vunpack.c.l.b16 %v1493
      %v2393 = vunpack.c.l.b16 %v1494
      %v2394 = vunpack.c.l.b16 %v1495
      %v2395 = vunpack.c.l.b16 %v1496
      %v2396 = vunpack.c.l.b16 %v1497
      %v2397 = vpack.c.b16 %v2382, %v2381
      %v2398 = vpack.c.b16 %v2384, %v2383
      %v2399 = vpack.c.b16 %v2386, %v2385
      %v2400 = vpack.c.b16 %v2388, %v2387
      %v2401 = vpack.c.b16 %v2390, %v2389
      %v2402 = vpack.c.b16 %v2392, %v2391
      %v2403 = vpack.c.b16 %v2394, %v2393
      %v2404 = vpack.c.b16 %v2396, %v2395
      %2405 = vrot.lane.b32.xlu0 %v2397, 64
      %v2406 = vpop.permute.xlu0 %2405
      %2407 = vrot.lane.b32.xlu0 %v2398, 64
      %v2408 = vpop.permute.xlu0 %2407
      %2409 = vrot.lane.b32.xlu0 %v2399, 64
      %v2410 = vpop.permute.xlu0 %2409
      %2411 = vrot.lane.b32.xlu0 %v2400, 64
      %v2412 = vpop.permute.xlu0 %2411
      %2413 = vrot.lane.b32.xlu0 %v2401, 64
      %v2414 = vpop.permute.xlu0 %2413
      %2415 = vrot.lane.b32.xlu0 %v2402, 64
      %v2416 = vpop.permute.xlu0 %2415
      %2417 = vrot.lane.b32.xlu0 %v2403, 64
      %v2418 = vpop.permute.xlu0 %2417
      %2419 = vrot.lane.b32.xlu0 %v2404, 64
      %v2420 = vpop.permute.xlu0 %2419
      %v2422 = vsel %vm2114, %v2397, 0
      %v2425 = vsel %vm2114, %v2398, 0
      %v2428 = vsel %vm2114, %v2399, 0
      %v2431 = vsel %vm2114, %v2400, 0
      %v2434 = vsel %vm2114, %v2401, 0
      %v2437 = vsel %vm2114, %v2402, 0
      %v2440 = vsel %vm2114, %v2403, 0
      %v2443 = vsel %vm2114, %v2404, 0
      %v2446 = vsel %vm2114, %v2406, 0
      %v2449 = vsel %vm2114, %v2408, 0
      %v2452 = vsel %vm2114, %v2410, 0
      %v2455 = vsel %vm2114, %v2412, 0
      %v2458 = vsel %vm2114, %v2414, 0
      %v2461 = vsel %vm2114, %v2416, 0
      %v2464 = vsel %vm2114, %v2418, 0
      %v2467 = vsel %vm2114, %v2420, 0
      %2469 = vmatpush.bf16.xpose.msra.mxu0 %v2467
      %2470 = vmatpush.bf16.xpose.msra.mxu0 %v2464
      %2471 = vmatpush.bf16.xpose.msra.mxu0 %v2461
      %2472 = vmatpush.bf16.xpose.msra.mxu0 %v2458
      %2473 = vmatpush.bf16.xpose.msra.mxu0 %v2455
      %2474 = vmatpush.bf16.xpose.msra.mxu0 %v2452
      %2475 = vmatpush.bf16.xpose.msra.mxu0 %v2449
      %2476 = vmatpush.bf16.xpose.msra.mxu0 %v2446
      %2477 = vmatmul.bf16.gmra.mxu0 %v2422
      %v2478 = vpop.f32.mrf.mxu0
      %v2479 = vadd.f32 0.0, %v2478
      %v2480 = vpop.f32.mrf.mxu0
      %v2481 = vadd.f32 0.0, %v2480
      %2482 = vmatmul.bf16.gmra.mxu0 %v2425
      %v2483 = vpop.f32.mrf.mxu0
      %v2484 = vadd.f32 0.0, %v2483
      %v2485 = vpop.f32.mrf.mxu0
      %v2486 = vadd.f32 0.0, %v2485
      %2487 = vmatmul.bf16.gmra.mxu0 %v2428
      %v2488 = vpop.f32.mrf.mxu0
      %v2489 = vadd.f32 0.0, %v2488
      %v2490 = vpop.f32.mrf.mxu0
      %v2491 = vadd.f32 0.0, %v2490
      %2492 = vmatmul.bf16.gmra.mxu0 %v2431
      %v2493 = vpop.f32.mrf.mxu0
      %v2494 = vadd.f32 0.0, %v2493
      %v2495 = vpop.f32.mrf.mxu0
      %v2496 = vadd.f32 0.0, %v2495
      %2497 = vmatmul.bf16.gmra.mxu0 %v2434
      %v2498 = vpop.f32.mrf.mxu0
      %v2499 = vadd.f32 0.0, %v2498
      %v2500 = vpop.f32.mrf.mxu0
      %v2501 = vadd.f32 0.0, %v2500
      %2502 = vmatmul.bf16.gmra.mxu0 %v2437
      %v2503 = vpop.f32.mrf.mxu0
      %v2504 = vadd.f32 0.0, %v2503
      %v2505 = vpop.f32.mrf.mxu0
      %v2506 = vadd.f32 0.0, %v2505
      %2507 = vmatmul.bf16.gmra.mxu0 %v2440
      %v2508 = vpop.f32.mrf.mxu0
      %v2509 = vadd.f32 0.0, %v2508
      %v2510 = vpop.f32.mrf.mxu0
      %v2511 = vadd.f32 0.0, %v2510
      %2512 = vmatmul.bf16.gmra.mxu0 %v2443
      %v2513 = vpop.f32.mrf.mxu0
      %v2514 = vadd.f32 0.0, %v2513
      %v2515 = vpop.f32.mrf.mxu0
      %v2516 = vadd.f32 0.0, %v2515
      %2517 = vdwg.mxu0
      %v2534 = vunpack.c.l.b16 %v1498
      %v2535 = vunpack.c.l.b16 %v1499
      %v2536 = vunpack.c.l.b16 %v1500
      %v2537 = vunpack.c.l.b16 %v1501
      %v2538 = vunpack.c.l.b16 %v1502
      %v2539 = vunpack.c.l.b16 %v1503
      %v2540 = vunpack.c.l.b16 %v1504
      %v2541 = vunpack.c.l.b16 %v1505
      %v2542 = vunpack.c.l.b16 %v1506
      %v2543 = vunpack.c.l.b16 %v1507
      %v2544 = vunpack.c.l.b16 %v1508
      %v2545 = vunpack.c.l.b16 %v1509
      %v2546 = vunpack.c.l.b16 %v1510
      %v2547 = vunpack.c.l.b16 %v1511
      %v2548 = vunpack.c.l.b16 %v1512
      %v2549 = vunpack.c.l.b16 %v1513
      %v2550 = vpack.c.b16 %v2535, %v2534
      %v2551 = vpack.c.b16 %v2537, %v2536
      %v2552 = vpack.c.b16 %v2539, %v2538
      %v2553 = vpack.c.b16 %v2541, %v2540
      %v2554 = vpack.c.b16 %v2543, %v2542
      %v2555 = vpack.c.b16 %v2545, %v2544
      %v2556 = vpack.c.b16 %v2547, %v2546
      %v2557 = vpack.c.b16 %v2549, %v2548
      %2558 = vrot.lane.b32.xlu0 %v2550, 64
      %v2559 = vpop.permute.xlu0 %2558
      %2560 = vrot.lane.b32.xlu0 %v2551, 64
      %v2561 = vpop.permute.xlu0 %2560
      %2562 = vrot.lane.b32.xlu0 %v2552, 64
      %v2563 = vpop.permute.xlu0 %2562
      %2564 = vrot.lane.b32.xlu0 %v2553, 64
      %v2565 = vpop.permute.xlu0 %2564
      %2566 = vrot.lane.b32.xlu0 %v2554, 64
      %v2567 = vpop.permute.xlu0 %2566
      %2568 = vrot.lane.b32.xlu0 %v2555, 64
      %v2569 = vpop.permute.xlu0 %2568
      %2570 = vrot.lane.b32.xlu0 %v2556, 64
      %v2571 = vpop.permute.xlu0 %2570
      %2572 = vrot.lane.b32.xlu0 %v2557, 64
      %v2573 = vpop.permute.xlu0 %2572
      %v2575 = vsel %vm2114, %v2550, 0
      %v2578 = vsel %vm2114, %v2551, 0
      %v2581 = vsel %vm2114, %v2552, 0
      %v2584 = vsel %vm2114, %v2553, 0
      %v2587 = vsel %vm2114, %v2554, 0
      %v2590 = vsel %vm2114, %v2555, 0
      %v2593 = vsel %vm2114, %v2556, 0
      %v2596 = vsel %vm2114, %v2557, 0
      %v2599 = vsel %vm2114, %v2559, 0
      %v2602 = vsel %vm2114, %v2561, 0
      %v2605 = vsel %vm2114, %v2563, 0
      %v2608 = vsel %vm2114, %v2565, 0
      %v2611 = vsel %vm2114, %v2567, 0
      %v2614 = vsel %vm2114, %v2569, 0
      %v2617 = vsel %vm2114, %v2571, 0
      %v2620 = vsel %vm2114, %v2573, 0
      %2622 = vmatpush.bf16.xpose.msra.mxu0 %v2620
      %2623 = vmatpush.bf16.xpose.msra.mxu0 %v2617
      %2624 = vmatpush.bf16.xpose.msra.mxu0 %v2614
      %2625 = vmatpush.bf16.xpose.msra.mxu0 %v2611
      %2626 = vmatpush.bf16.xpose.msra.mxu0 %v2608
      %2627 = vmatpush.bf16.xpose.msra.mxu0 %v2605
      %2628 = vmatpush.bf16.xpose.msra.mxu0 %v2602
      %2629 = vmatpush.bf16.xpose.msra.mxu0 %v2599
      %2630 = vmatmul.bf16.gmra.mxu0 %v2575
      %v2631 = vpop.f32.mrf.mxu0
      %v2632 = vadd.f32 0.0, %v2631
      %v2633 = vpop.f32.mrf.mxu0
      %v2634 = vadd.f32 0.0, %v2633
      %2635 = vmatmul.bf16.gmra.mxu0 %v2578
      %v2636 = vpop.f32.mrf.mxu0
      %v2637 = vadd.f32 0.0, %v2636
      %v2638 = vpop.f32.mrf.mxu0
      %v2639 = vadd.f32 0.0, %v2638
      %2640 = vmatmul.bf16.gmra.mxu0 %v2581
      %v2641 = vpop.f32.mrf.mxu0
      %v2642 = vadd.f32 0.0, %v2641
      %v2643 = vpop.f32.mrf.mxu0
      %v2644 = vadd.f32 0.0, %v2643
      %2645 = vmatmul.bf16.gmra.mxu0 %v2584
      %v2646 = vpop.f32.mrf.mxu0
      %v2647 = vadd.f32 0.0, %v2646
      %v2648 = vpop.f32.mrf.mxu0
      %v2649 = vadd.f32 0.0, %v2648
      %2650 = vmatmul.bf16.gmra.mxu0 %v2587
      %v2651 = vpop.f32.mrf.mxu0
      %v2652 = vadd.f32 0.0, %v2651
      %v2653 = vpop.f32.mrf.mxu0
      %v2654 = vadd.f32 0.0, %v2653
      %2655 = vmatmul.bf16.gmra.mxu0 %v2590
      %v2656 = vpop.f32.mrf.mxu0
      %v2657 = vadd.f32 0.0, %v2656
      %v2658 = vpop.f32.mrf.mxu0
      %v2659 = vadd.f32 0.0, %v2658
      %2660 = vmatmul.bf16.gmra.mxu0 %v2593
      %v2661 = vpop.f32.mrf.mxu0
      %v2662 = vadd.f32 0.0, %v2661
      %v2663 = vpop.f32.mrf.mxu0
      %v2664 = vadd.f32 0.0, %v2663
      %2665 = vmatmul.bf16.gmra.mxu0 %v2596
      %v2666 = vpop.f32.mrf.mxu0
      %v2667 = vadd.f32 0.0, %v2666
      %v2668 = vpop.f32.mrf.mxu0
      %v2669 = vadd.f32 0.0, %v2668
      %2670 = vdwg.mxu0
      %v2687 = vunpack.c.l.b16 %v1514
      %v2688 = vunpack.c.l.b16 %v1515
      %v2689 = vunpack.c.l.b16 %v1516
      %v2690 = vunpack.c.l.b16 %v1517
      %v2691 = vunpack.c.l.b16 %v1518
      %v2692 = vunpack.c.l.b16 %v1519
      %v2693 = vunpack.c.l.b16 %v1520
      %v2694 = vunpack.c.l.b16 %v1521
      %v2695 = vunpack.c.l.b16 %v1522
      %v2696 = vunpack.c.l.b16 %v1523
      %v2697 = vunpack.c.l.b16 %v1524
      %v2698 = vunpack.c.l.b16 %v1525
      %v2699 = vunpack.c.l.b16 %v1526
      %v2700 = vunpack.c.l.b16 %v1527
      %v2701 = vunpack.c.l.b16 %v1528
      %v2702 = vunpack.c.l.b16 %v1529
      %v2703 = vpack.c.b16 %v2688, %v2687
      %v2704 = vpack.c.b16 %v2690, %v2689
      %v2705 = vpack.c.b16 %v2692, %v2691
      %v2706 = vpack.c.b16 %v2694, %v2693
      %v2707 = vpack.c.b16 %v2696, %v2695
      %v2708 = vpack.c.b16 %v2698, %v2697
      %v2709 = vpack.c.b16 %v2700, %v2699
      %v2710 = vpack.c.b16 %v2702, %v2701
      %2711 = vrot.lane.b32.xlu0 %v2703, 64
      %v2712 = vpop.permute.xlu0 %2711
      %2713 = vrot.lane.b32.xlu0 %v2704, 64
      %v2714 = vpop.permute.xlu0 %2713
      %2715 = vrot.lane.b32.xlu0 %v2705, 64
      %v2716 = vpop.permute.xlu0 %2715
      %2717 = vrot.lane.b32.xlu0 %v2706, 64
      %v2718 = vpop.permute.xlu0 %2717
      %2719 = vrot.lane.b32.xlu0 %v2707, 64
      %v2720 = vpop.permute.xlu0 %2719
      %2721 = vrot.lane.b32.xlu0 %v2708, 64
      %v2722 = vpop.permute.xlu0 %2721
      %2723 = vrot.lane.b32.xlu0 %v2709, 64
      %v2724 = vpop.permute.xlu0 %2723
      %2725 = vrot.lane.b32.xlu0 %v2710, 64
      %v2726 = vpop.permute.xlu0 %2725
      %v2728 = vsel %vm2114, %v2703, 0
      %v2731 = vsel %vm2114, %v2704, 0
      %v2734 = vsel %vm2114, %v2705, 0
      %v2737 = vsel %vm2114, %v2706, 0
      %v2740 = vsel %vm2114, %v2707, 0
      %v2743 = vsel %vm2114, %v2708, 0
      %v2746 = vsel %vm2114, %v2709, 0
      %v2749 = vsel %vm2114, %v2710, 0
      %v2752 = vsel %vm2114, %v2712, 0
      %v2755 = vsel %vm2114, %v2714, 0
      %v2758 = vsel %vm2114, %v2716, 0
      %v2761 = vsel %vm2114, %v2718, 0
      %v2764 = vsel %vm2114, %v2720, 0
      %v2767 = vsel %vm2114, %v2722, 0
      %v2770 = vsel %vm2114, %v2724, 0
      %v2773 = vsel %vm2114, %v2726, 0
      %2775 = vmatpush.bf16.xpose.msra.mxu0 %v2773
      %2776 = vmatpush.bf16.xpose.msra.mxu0 %v2770
      %2777 = vmatpush.bf16.xpose.msra.mxu0 %v2767
      %2778 = vmatpush.bf16.xpose.msra.mxu0 %v2764
      %2779 = vmatpush.bf16.xpose.msra.mxu0 %v2761
      %2780 = vmatpush.bf16.xpose.msra.mxu0 %v2758
      %2781 = vmatpush.bf16.xpose.msra.mxu0 %v2755
      %2782 = vmatpush.bf16.xpose.msra.mxu0 %v2752
      %2783 = vmatmul.bf16.gmra.mxu0 %v2728
      %v2784 = vpop.f32.mrf.mxu0
      %v2785 = vadd.f32 0.0, %v2784
      %v2786 = vpop.f32.mrf.mxu0
      %v2787 = vadd.f32 0.0, %v2786
      %2788 = vmatmul.bf16.gmra.mxu0 %v2731
      %v2789 = vpop.f32.mrf.mxu0
      %v2790 = vadd.f32 0.0, %v2789
      %v2791 = vpop.f32.mrf.mxu0
      %v2792 = vadd.f32 0.0, %v2791
      %2793 = vmatmul.bf16.gmra.mxu0 %v2734
      %v2794 = vpop.f32.mrf.mxu0
      %v2795 = vadd.f32 0.0, %v2794
      %v2796 = vpop.f32.mrf.mxu0
      %v2797 = vadd.f32 0.0, %v2796
      %2798 = vmatmul.bf16.gmra.mxu0 %v2737
      %v2799 = vpop.f32.mrf.mxu0
      %v2800 = vadd.f32 0.0, %v2799
      %v2801 = vpop.f32.mrf.mxu0
      %v2802 = vadd.f32 0.0, %v2801
      %2803 = vmatmul.bf16.gmra.mxu0 %v2740
      %v2804 = vpop.f32.mrf.mxu0
      %v2805 = vadd.f32 0.0, %v2804
      %v2806 = vpop.f32.mrf.mxu0
      %v2807 = vadd.f32 0.0, %v2806
      %2808 = vmatmul.bf16.gmra.mxu0 %v2743
      %v2809 = vpop.f32.mrf.mxu0
      %v2810 = vadd.f32 0.0, %v2809
      %v2811 = vpop.f32.mrf.mxu0
      %v2812 = vadd.f32 0.0, %v2811
      %2813 = vmatmul.bf16.gmra.mxu0 %v2746
      %v2814 = vpop.f32.mrf.mxu0
      %v2815 = vadd.f32 0.0, %v2814
      %v2816 = vpop.f32.mrf.mxu0
      %v2817 = vadd.f32 0.0, %v2816
      %2818 = vmatmul.bf16.gmra.mxu0 %v2749
      %v2819 = vpop.f32.mrf.mxu0
      %v2820 = vadd.f32 0.0, %v2819
      %v2821 = vpop.f32.mrf.mxu0
      %v2822 = vadd.f32 0.0, %v2821
      %2823 = vdwg.mxu0
      %v2840 = vunpack.c.l.b16 %v1530
      %v2841 = vunpack.c.l.b16 %v1531
      %v2842 = vunpack.c.l.b16 %v1532
      %v2843 = vunpack.c.l.b16 %v1533
      %v2844 = vunpack.c.l.b16 %v1534
      %v2845 = vunpack.c.l.b16 %v1535
      %v2846 = vunpack.c.l.b16 %v1536
      %v2847 = vunpack.c.l.b16 %v1537
      %v2848 = vunpack.c.l.b16 %v1538
      %v2849 = vunpack.c.l.b16 %v1539
      %v2850 = vunpack.c.l.b16 %v1540
      %v2851 = vunpack.c.l.b16 %v1541
      %v2852 = vunpack.c.l.b16 %v1542
      %v2853 = vunpack.c.l.b16 %v1543
      %v2854 = vunpack.c.l.b16 %v1544
      %v2855 = vunpack.c.l.b16 %v1545
      %v2856 = vpack.c.b16 %v2841, %v2840
      %v2857 = vpack.c.b16 %v2843, %v2842
      %v2858 = vpack.c.b16 %v2845, %v2844
      %v2859 = vpack.c.b16 %v2847, %v2846
      %v2860 = vpack.c.b16 %v2849, %v2848
      %v2861 = vpack.c.b16 %v2851, %v2850
      %v2862 = vpack.c.b16 %v2853, %v2852
      %v2863 = vpack.c.b16 %v2855, %v2854
      %2864 = vrot.lane.b32.xlu0 %v2856, 64
      %v2865 = vpop.permute.xlu0 %2864
      %2866 = vrot.lane.b32.xlu0 %v2857, 64
      %v2867 = vpop.permute.xlu0 %2866
      %2868 = vrot.lane.b32.xlu0 %v2858, 64
      %v2869 = vpop.permute.xlu0 %2868
      %2870 = vrot.lane.b32.xlu0 %v2859, 64
      %v2871 = vpop.permute.xlu0 %2870
      %2872 = vrot.lane.b32.xlu0 %v2860, 64
      %v2873 = vpop.permute.xlu0 %2872
      %2874 = vrot.lane.b32.xlu0 %v2861, 64
      %v2875 = vpop.permute.xlu0 %2874
      %2876 = vrot.lane.b32.xlu0 %v2862, 64
      %v2877 = vpop.permute.xlu0 %2876
      %2878 = vrot.lane.b32.xlu0 %v2863, 64
      %v2879 = vpop.permute.xlu0 %2878
      %v2881 = vsel %vm2114, %v2856, 0
      %v2884 = vsel %vm2114, %v2857, 0
      %v2887 = vsel %vm2114, %v2858, 0
      %v2890 = vsel %vm2114, %v2859, 0
      %v2893 = vsel %vm2114, %v2860, 0
      %v2896 = vsel %vm2114, %v2861, 0
      %v2899 = vsel %vm2114, %v2862, 0
      %v2902 = vsel %vm2114, %v2863, 0
      %v2905 = vsel %vm2114, %v2865, 0
      %v2908 = vsel %vm2114, %v2867, 0
      %v2911 = vsel %vm2114, %v2869, 0
      %v2914 = vsel %vm2114, %v2871, 0
      %v2917 = vsel %vm2114, %v2873, 0
      %v2920 = vsel %vm2114, %v2875, 0
      %v2923 = vsel %vm2114, %v2877, 0
      %v2926 = vsel %vm2114, %v2879, 0
      %2928 = vmatpush.bf16.xpose.msra.mxu0 %v2926
      %2929 = vmatpush.bf16.xpose.msra.mxu0 %v2923
      %2930 = vmatpush.bf16.xpose.msra.mxu0 %v2920
      %2931 = vmatpush.bf16.xpose.msra.mxu0 %v2917
      %2932 = vmatpush.bf16.xpose.msra.mxu0 %v2914
      %2933 = vmatpush.bf16.xpose.msra.mxu0 %v2911
      %2934 = vmatpush.bf16.xpose.msra.mxu0 %v2908
      %2935 = vmatpush.bf16.xpose.msra.mxu0 %v2905
      %2936 = vmatmul.bf16.gmra.mxu0 %v2881
      %v2937 = vpop.f32.mrf.mxu0
      %v2938 = vadd.f32 0.0, %v2937
      %v2939 = vpop.f32.mrf.mxu0
      %v2940 = vadd.f32 0.0, %v2939
      %2941 = vmatmul.bf16.gmra.mxu0 %v2884
      %v2942 = vpop.f32.mrf.mxu0
      %v2943 = vadd.f32 0.0, %v2942
      %v2944 = vpop.f32.mrf.mxu0
      %v2945 = vadd.f32 0.0, %v2944
      %2946 = vmatmul.bf16.gmra.mxu0 %v2887
      %v2947 = vpop.f32.mrf.mxu0
      %v2948 = vadd.f32 0.0, %v2947
      %v2949 = vpop.f32.mrf.mxu0
      %v2950 = vadd.f32 0.0, %v2949
      %2951 = vmatmul.bf16.gmra.mxu0 %v2890
      %v2952 = vpop.f32.mrf.mxu0
      %v2953 = vadd.f32 0.0, %v2952
      %v2954 = vpop.f32.mrf.mxu0
      %v2955 = vadd.f32 0.0, %v2954
      %2956 = vmatmul.bf16.gmra.mxu0 %v2893
      %v2957 = vpop.f32.mrf.mxu0
      %v2958 = vadd.f32 0.0, %v2957
      %v2959 = vpop.f32.mrf.mxu0
      %v2960 = vadd.f32 0.0, %v2959
      %2961 = vmatmul.bf16.gmra.mxu0 %v2896
      %v2962 = vpop.f32.mrf.mxu0
      %v2963 = vadd.f32 0.0, %v2962
      %v2964 = vpop.f32.mrf.mxu0
      %v2965 = vadd.f32 0.0, %v2964
      %2966 = vmatmul.bf16.gmra.mxu0 %v2899
      %v2967 = vpop.f32.mrf.mxu0
      %v2968 = vadd.f32 0.0, %v2967
      %v2969 = vpop.f32.mrf.mxu0
      %v2970 = vadd.f32 0.0, %v2969
      %2971 = vmatmul.bf16.gmra.mxu0 %v2902
      %v2972 = vpop.f32.mrf.mxu0
      %v2973 = vadd.f32 0.0, %v2972
      %v2974 = vpop.f32.mrf.mxu0
      %v2975 = vadd.f32 0.0, %v2974
      %2976 = vdwg.mxu0
      %v2993 = vunpack.c.l.b16 %v1546
      %v2994 = vunpack.c.l.b16 %v1547
      %v2995 = vunpack.c.l.b16 %v1548
      %v2996 = vunpack.c.l.b16 %v1549
      %v2997 = vunpack.c.l.b16 %v1550
      %v2998 = vunpack.c.l.b16 %v1551
      %v2999 = vunpack.c.l.b16 %v1552
      %v3000 = vunpack.c.l.b16 %v1553
      %v3001 = vunpack.c.l.b16 %v1554
      %v3002 = vunpack.c.l.b16 %v1555
      %v3003 = vunpack.c.l.b16 %v1556
      %v3004 = vunpack.c.l.b16 %v1557
      %v3005 = vunpack.c.l.b16 %v1558
      %v3006 = vunpack.c.l.b16 %v1559
      %v3007 = vunpack.c.l.b16 %v1560
      %v3008 = vunpack.c.l.b16 %v1561
      %v3009 = vpack.c.b16 %v2994, %v2993
      %v3010 = vpack.c.b16 %v2996, %v2995
      %v3011 = vpack.c.b16 %v2998, %v2997
      %v3012 = vpack.c.b16 %v3000, %v2999
      %v3013 = vpack.c.b16 %v3002, %v3001
      %v3014 = vpack.c.b16 %v3004, %v3003
      %v3015 = vpack.c.b16 %v3006, %v3005
      %v3016 = vpack.c.b16 %v3008, %v3007
      %3017 = vrot.lane.b32.xlu0 %v3009, 64
      %v3018 = vpop.permute.xlu0 %3017
      %3019 = vrot.lane.b32.xlu0 %v3010, 64
      %v3020 = vpop.permute.xlu0 %3019
      %3021 = vrot.lane.b32.xlu0 %v3011, 64
      %v3022 = vpop.permute.xlu0 %3021
      %3023 = vrot.lane.b32.xlu0 %v3012, 64
      %v3024 = vpop.permute.xlu0 %3023
      %3025 = vrot.lane.b32.xlu0 %v3013, 64
      %v3026 = vpop.permute.xlu0 %3025
      %3027 = vrot.lane.b32.xlu0 %v3014, 64
      %v3028 = vpop.permute.xlu0 %3027
      %3029 = vrot.lane.b32.xlu0 %v3015, 64
      %v3030 = vpop.permute.xlu0 %3029
      %3031 = vrot.lane.b32.xlu0 %v3016, 64
      %v3032 = vpop.permute.xlu0 %3031
      %v3034 = vsel %vm2114, %v3009, 0
      %v3037 = vsel %vm2114, %v3010, 0
      %v3040 = vsel %vm2114, %v3011, 0
      %v3043 = vsel %vm2114, %v3012, 0
      %v3046 = vsel %vm2114, %v3013, 0
      %v3049 = vsel %vm2114, %v3014, 0
      %v3052 = vsel %vm2114, %v3015, 0
      %v3055 = vsel %vm2114, %v3016, 0
      %v3058 = vsel %vm2114, %v3018, 0
      %v3061 = vsel %vm2114, %v3020, 0
      %v3064 = vsel %vm2114, %v3022, 0
      %v3067 = vsel %vm2114, %v3024, 0
      %v3070 = vsel %vm2114, %v3026, 0
      %v3073 = vsel %vm2114, %v3028, 0
      %v3076 = vsel %vm2114, %v3030, 0
      %v3079 = vsel %vm2114, %v3032, 0
      %3081 = vmatpush.bf16.xpose.msra.mxu0 %v3079
      %3082 = vmatpush.bf16.xpose.msra.mxu0 %v3076
      %3083 = vmatpush.bf16.xpose.msra.mxu0 %v3073
      %3084 = vmatpush.bf16.xpose.msra.mxu0 %v3070
      %3085 = vmatpush.bf16.xpose.msra.mxu0 %v3067
      %3086 = vmatpush.bf16.xpose.msra.mxu0 %v3064
      %3087 = vmatpush.bf16.xpose.msra.mxu0 %v3061
      %3088 = vmatpush.bf16.xpose.msra.mxu0 %v3058
      %3089 = vmatmul.bf16.gmra.mxu0 %v3034
      %v3090 = vpop.f32.mrf.mxu0
      %v3091 = vadd.f32 0.0, %v3090
      %v3092 = vpop.f32.mrf.mxu0
      %v3093 = vadd.f32 0.0, %v3092
      %3094 = vmatmul.bf16.gmra.mxu0 %v3037
      %v3095 = vpop.f32.mrf.mxu0
      %v3096 = vadd.f32 0.0, %v3095
      %v3097 = vpop.f32.mrf.mxu0
      %v3098 = vadd.f32 0.0, %v3097
      %3099 = vmatmul.bf16.gmra.mxu0 %v3040
      %v3100 = vpop.f32.mrf.mxu0
      %v3101 = vadd.f32 0.0, %v3100
      %v3102 = vpop.f32.mrf.mxu0
      %v3103 = vadd.f32 0.0, %v3102
      %3104 = vmatmul.bf16.gmra.mxu0 %v3043
      %v3105 = vpop.f32.mrf.mxu0
      %v3106 = vadd.f32 0.0, %v3105
      %v3107 = vpop.f32.mrf.mxu0
      %v3108 = vadd.f32 0.0, %v3107
      %3109 = vmatmul.bf16.gmra.mxu0 %v3046
      %v3110 = vpop.f32.mrf.mxu0
      %v3111 = vadd.f32 0.0, %v3110
      %v3112 = vpop.f32.mrf.mxu0
      %v3113 = vadd.f32 0.0, %v3112
      %3114 = vmatmul.bf16.gmra.mxu0 %v3049
      %v3115 = vpop.f32.mrf.mxu0
      %v3116 = vadd.f32 0.0, %v3115
      %v3117 = vpop.f32.mrf.mxu0
      %v3118 = vadd.f32 0.0, %v3117
      %3119 = vmatmul.bf16.gmra.mxu0 %v3052
      %v3120 = vpop.f32.mrf.mxu0
      %v3121 = vadd.f32 0.0, %v3120
      %v3122 = vpop.f32.mrf.mxu0
      %v3123 = vadd.f32 0.0, %v3122
      %3124 = vmatmul.bf16.gmra.mxu0 %v3055
      %v3125 = vpop.f32.mrf.mxu0
      %v3126 = vadd.f32 0.0, %v3125
      %v3127 = vpop.f32.mrf.mxu0
      %v3128 = vadd.f32 0.0, %v3127
      %3129 = vdwg.mxu0
      %v3146 = vunpack.c.l.b16 %v1562
      %v3147 = vunpack.c.l.b16 %v1563
      %v3148 = vunpack.c.l.b16 %v1564
      %v3149 = vunpack.c.l.b16 %v1565
      %v3150 = vunpack.c.l.b16 %v1566
      %v3151 = vunpack.c.l.b16 %v1567
      %v3152 = vunpack.c.l.b16 %v1568
      %v3153 = vunpack.c.l.b16 %v1569
      %v3154 = vunpack.c.l.b16 %v1570
      %v3155 = vunpack.c.l.b16 %v1571
      %v3156 = vunpack.c.l.b16 %v1572
      %v3157 = vunpack.c.l.b16 %v1573
      %v3158 = vunpack.c.l.b16 %v1574
      %v3159 = vunpack.c.l.b16 %v1575
      %v3160 = vunpack.c.l.b16 %v1576
      %v3161 = vunpack.c.l.b16 %v1577
      %v3162 = vpack.c.b16 %v3147, %v3146
      %v3163 = vpack.c.b16 %v3149, %v3148
      %v3164 = vpack.c.b16 %v3151, %v3150
      %v3165 = vpack.c.b16 %v3153, %v3152
      %v3166 = vpack.c.b16 %v3155, %v3154
      %v3167 = vpack.c.b16 %v3157, %v3156
      %v3168 = vpack.c.b16 %v3159, %v3158
      %v3169 = vpack.c.b16 %v3161, %v3160
      %3170 = vrot.lane.b32.xlu0 %v3162, 64
      %v3171 = vpop.permute.xlu0 %3170
      %3172 = vrot.lane.b32.xlu0 %v3163, 64
      %v3173 = vpop.permute.xlu0 %3172
      %3174 = vrot.lane.b32.xlu0 %v3164, 64
      %v3175 = vpop.permute.xlu0 %3174
      %3176 = vrot.lane.b32.xlu0 %v3165, 64
      %v3177 = vpop.permute.xlu0 %3176
      %3178 = vrot.lane.b32.xlu0 %v3166, 64
      %v3179 = vpop.permute.xlu0 %3178
      %3180 = vrot.lane.b32.xlu0 %v3167, 64
      %v3181 = vpop.permute.xlu0 %3180
      %3182 = vrot.lane.b32.xlu0 %v3168, 64
      %v3183 = vpop.permute.xlu0 %3182
      %3184 = vrot.lane.b32.xlu0 %v3169, 64
      %v3185 = vpop.permute.xlu0 %3184
      %v3187 = vsel %vm2114, %v3162, 0
      %v3190 = vsel %vm2114, %v3163, 0
      %v3193 = vsel %vm2114, %v3164, 0
      %v3196 = vsel %vm2114, %v3165, 0
      %v3199 = vsel %vm2114, %v3166, 0
      %v3202 = vsel %vm2114, %v3167, 0
      %v3205 = vsel %vm2114, %v3168, 0
      %v3208 = vsel %vm2114, %v3169, 0
      %v3211 = vsel %vm2114, %v3171, 0
      %v3214 = vsel %vm2114, %v3173, 0
      %v3217 = vsel %vm2114, %v3175, 0
      %v3220 = vsel %vm2114, %v3177, 0
      %v3223 = vsel %vm2114, %v3179, 0
      %v3226 = vsel %vm2114, %v3181, 0
      %v3229 = vsel %vm2114, %v3183, 0
      %v3232 = vsel %vm2114, %v3185, 0
      %3234 = vmatpush.bf16.xpose.msra.mxu0 %v3232
      %3235 = vmatpush.bf16.xpose.msra.mxu0 %v3229
      %3236 = vmatpush.bf16.xpose.msra.mxu0 %v3226
      %3237 = vmatpush.bf16.xpose.msra.mxu0 %v3223
      %3238 = vmatpush.bf16.xpose.msra.mxu0 %v3220
      %3239 = vmatpush.bf16.xpose.msra.mxu0 %v3217
      %3240 = vmatpush.bf16.xpose.msra.mxu0 %v3214
      %3241 = vmatpush.bf16.xpose.msra.mxu0 %v3211
      %3242 = vmatmul.bf16.gmra.mxu0 %v3187
      %v3243 = vpop.f32.mrf.mxu0
      %v3244 = vadd.f32 0.0, %v3243
      %v3245 = vpop.f32.mrf.mxu0
      %v3246 = vadd.f32 0.0, %v3245
      %3247 = vmatmul.bf16.gmra.mxu0 %v3190
      %v3248 = vpop.f32.mrf.mxu0
      %v3249 = vadd.f32 0.0, %v3248
      %v3250 = vpop.f32.mrf.mxu0
      %v3251 = vadd.f32 0.0, %v3250
      %3252 = vmatmul.bf16.gmra.mxu0 %v3193
      %v3253 = vpop.f32.mrf.mxu0
      %v3254 = vadd.f32 0.0, %v3253
      %v3255 = vpop.f32.mrf.mxu0
      %v3256 = vadd.f32 0.0, %v3255
      %3257 = vmatmul.bf16.gmra.mxu0 %v3196
      %v3258 = vpop.f32.mrf.mxu0
      %v3259 = vadd.f32 0.0, %v3258
      %v3260 = vpop.f32.mrf.mxu0
      %v3261 = vadd.f32 0.0, %v3260
      %3262 = vmatmul.bf16.gmra.mxu0 %v3199
      %v3263 = vpop.f32.mrf.mxu0
      %v3264 = vadd.f32 0.0, %v3263
      %v3265 = vpop.f32.mrf.mxu0
      %v3266 = vadd.f32 0.0, %v3265
      %3267 = vmatmul.bf16.gmra.mxu0 %v3202
      %v3268 = vpop.f32.mrf.mxu0
      %v3269 = vadd.f32 0.0, %v3268
      %v3270 = vpop.f32.mrf.mxu0
      %v3271 = vadd.f32 0.0, %v3270
      %3272 = vmatmul.bf16.gmra.mxu0 %v3205
      %v3273 = vpop.f32.mrf.mxu0
      %v3274 = vadd.f32 0.0, %v3273
      %v3275 = vpop.f32.mrf.mxu0
      %v3276 = vadd.f32 0.0, %v3275
      %3277 = vmatmul.bf16.gmra.mxu0 %v3208
      %v3278 = vpop.f32.mrf.mxu0
      %v3279 = vadd.f32 0.0, %v3278
      %v3280 = vpop.f32.mrf.mxu0
      %v3281 = vadd.f32 0.0, %v3280
      %3282 = vdwg.mxu0
      %v3283 = vmul.f32 %v2173, 0.35355338
      %v3284 = vmul.f32 %v2175, 0.35355338
      %v3285 = vmul.f32 %v2178, 0.35355338
      %v3286 = vmul.f32 %v2180, 0.35355338
      %v3287 = vmul.f32 %v2183, 0.35355338
      %v3288 = vmul.f32 %v2185, 0.35355338
      %v3289 = vmul.f32 %v2188, 0.35355338
      %v3290 = vmul.f32 %v2190, 0.35355338
      %v3291 = vmul.f32 %v2193, 0.35355338
      %v3292 = vmul.f32 %v2195, 0.35355338
      %v3293 = vmul.f32 %v2198, 0.35355338
      %v3294 = vmul.f32 %v2200, 0.35355338
      %v3295 = vmul.f32 %v2203, 0.35355338
      %v3296 = vmul.f32 %v2205, 0.35355338
      %v3297 = vmul.f32 %v2208, 0.35355338
      %v3298 = vmul.f32 %v2210, 0.35355338
      %v3299 = vmul.f32 %v2326, 0.35355338
      %v3300 = vmul.f32 %v2328, 0.35355338
      %v3301 = vmul.f32 %v2331, 0.35355338
      %v3302 = vmul.f32 %v2333, 0.35355338
      %v3303 = vmul.f32 %v2336, 0.35355338
      %v3304 = vmul.f32 %v2338, 0.35355338
      %v3305 = vmul.f32 %v2341, 0.35355338
      %v3306 = vmul.f32 %v2343, 0.35355338
      %v3307 = vmul.f32 %v2346, 0.35355338
      %v3308 = vmul.f32 %v2348, 0.35355338
      %v3309 = vmul.f32 %v2351, 0.35355338
      %v3310 = vmul.f32 %v2353, 0.35355338
      %v3311 = vmul.f32 %v2356, 0.35355338
      %v3312 = vmul.f32 %v2358, 0.35355338
      %v3313 = vmul.f32 %v2361, 0.35355338
      %v3314 = vmul.f32 %v2363, 0.35355338
      %v3315 = vmul.f32 %v2479, 0.35355338
      %v3316 = vmul.f32 %v2481, 0.35355338
      %v3317 = vmul.f32 %v2484, 0.35355338
      %v3318 = vmul.f32 %v2486, 0.35355338
      %v3319 = vmul.f32 %v2489, 0.35355338
      %v3320 = vmul.f32 %v2491, 0.35355338
      %v3321 = vmul.f32 %v2494, 0.35355338
      %v3322 = vmul.f32 %v2496, 0.35355338
      %v3323 = vmul.f32 %v2499, 0.35355338
      %v3324 = vmul.f32 %v2501, 0.35355338
      %v3325 = vmul.f32 %v2504, 0.35355338
      %v3326 = vmul.f32 %v2506, 0.35355338
      %v3327 = vmul.f32 %v2509, 0.35355338
      %v3328 = vmul.f32 %v2511, 0.35355338
      %v3329 = vmul.f32 %v2514, 0.35355338
      %v3330 = vmul.f32 %v2516, 0.35355338
      %v3331 = vmul.f32 %v2632, 0.35355338
      %v3332 = vmul.f32 %v2634, 0.35355338
      %v3333 = vmul.f32 %v2637, 0.35355338
      %v3334 = vmul.f32 %v2639, 0.35355338
      %v3335 = vmul.f32 %v2642, 0.35355338
      %v3336 = vmul.f32 %v2644, 0.35355338
      %v3337 = vmul.f32 %v2647, 0.35355338
      %v3338 = vmul.f32 %v2649, 0.35355338
      %v3339 = vmul.f32 %v2652, 0.35355338
      %v3340 = vmul.f32 %v2654, 0.35355338
      %v3341 = vmul.f32 %v2657, 0.35355338
      %v3342 = vmul.f32 %v2659, 0.35355338
      %v3343 = vmul.f32 %v2662, 0.35355338
      %v3344 = vmul.f32 %v2664, 0.35355338
      %v3345 = vmul.f32 %v2667, 0.35355338
      %v3346 = vmul.f32 %v2669, 0.35355338
      %v3347 = vmul.f32 %v2785, 0.35355338
      %v3348 = vmul.f32 %v2787, 0.35355338
      %v3349 = vmul.f32 %v2790, 0.35355338
      %v3350 = vmul.f32 %v2792, 0.35355338
      %v3351 = vmul.f32 %v2795, 0.35355338
      %v3352 = vmul.f32 %v2797, 0.35355338
      %v3353 = vmul.f32 %v2800, 0.35355338
      %v3354 = vmul.f32 %v2802, 0.35355338
      %v3355 = vmul.f32 %v2805, 0.35355338
      %v3356 = vmul.f32 %v2807, 0.35355338
      %v3357 = vmul.f32 %v2810, 0.35355338
      %v3358 = vmul.f32 %v2812, 0.35355338
      %v3359 = vmul.f32 %v2815, 0.35355338
      %v3360 = vmul.f32 %v2817, 0.35355338
      %v3361 = vmul.f32 %v2820, 0.35355338
      %v3362 = vmul.f32 %v2822, 0.35355338
      %v3363 = vmul.f32 %v2938, 0.35355338
      %v3364 = vmul.f32 %v2940, 0.35355338
      %v3365 = vmul.f32 %v2943, 0.35355338
      %v3366 = vmul.f32 %v2945, 0.35355338
      %v3367 = vmul.f32 %v2948, 0.35355338
      %v3368 = vmul.f32 %v2950, 0.35355338
      %v3369 = vmul.f32 %v2953, 0.35355338
      %v3370 = vmul.f32 %v2955, 0.35355338
      %v3371 = vmul.f32 %v2958, 0.35355338
      %v3372 = vmul.f32 %v2960, 0.35355338
      %v3373 = vmul.f32 %v2963, 0.35355338
      %v3374 = vmul.f32 %v2965, 0.35355338
      %v3375 = vmul.f32 %v2968, 0.35355338
      %v3376 = vmul.f32 %v2970, 0.35355338
      %v3377 = vmul.f32 %v2973, 0.35355338
      %v3378 = vmul.f32 %v2975, 0.35355338
      %v3379 = vmul.f32 %v3091, 0.35355338
      %v3380 = vmul.f32 %v3093, 0.35355338
      %v3381 = vmul.f32 %v3096, 0.35355338
      %v3382 = vmul.f32 %v3098, 0.35355338
      %v3383 = vmul.f32 %v3101, 0.35355338
      %v3384 = vmul.f32 %v3103, 0.35355338
      %v3385 = vmul.f32 %v3106, 0.35355338
      %v3386 = vmul.f32 %v3108, 0.35355338
      %v3387 = vmul.f32 %v3111, 0.35355338
      %v3388 = vmul.f32 %v3113, 0.35355338
      %v3389 = vmul.f32 %v3116, 0.35355338
      %v3390 = vmul.f32 %v3118, 0.35355338
      %v3391 = vmul.f32 %v3121, 0.35355338
      %v3392 = vmul.f32 %v3123, 0.35355338
      %v3393 = vmul.f32 %v3126, 0.35355338
      %v3394 = vmul.f32 %v3128, 0.35355338
      %v3395 = vmul.f32 %v3244, 0.35355338
      %v3396 = vmul.f32 %v3246, 0.35355338
      %v3397 = vmul.f32 %v3249, 0.35355338
      %v3398 = vmul.f32 %v3251, 0.35355338
      %v3399 = vmul.f32 %v3254, 0.35355338
      %v3400 = vmul.f32 %v3256, 0.35355338
      %v3401 = vmul.f32 %v3259, 0.35355338
      %v3402 = vmul.f32 %v3261, 0.35355338
      %v3403 = vmul.f32 %v3264, 0.35355338
      %v3404 = vmul.f32 %v3266, 0.35355338
      %v3405 = vmul.f32 %v3269, 0.35355338
      %v3406 = vmul.f32 %v3271, 0.35355338
      %v3407 = vmul.f32 %v3274, 0.35355338
      %v3408 = vmul.f32 %v3276, 0.35355338
      %v3409 = vmul.f32 %v3279, 0.35355338
      %v3410 = vmul.f32 %v3281, 0.35355338
      %v3411 = vsel %vm1082, 1, 0
      %v3412 = vsel %vm1083, 1, 0
      %v3413 = vsel %vm1084, 1, 0
      %v3414 = vsel %vm1085, 1, 0
      %v3415 = vsel %vm1086, 1, 0
      %v3416 = vsel %vm1087, 1, 0
      %v3417 = vsel %vm1088, 1, 0
      %v3418 = vsel %vm1089, 1, 0
      %v3419 = vsel %vm1090, 1, 0
      %v3420 = vsel %vm1091, 1, 0
      %v3421 = vsel %vm1092, 1, 0
      %v3422 = vsel %vm1093, 1, 0
      %v3423 = vsel %vm1094, 1, 0
      %v3424 = vsel %vm1095, 1, 0
      %v3425 = vsel %vm1096, 1, 0
      %v3426 = vsel %vm1097, 1, 0
      %vm3427 = vcmp.eq.s32.totalorder %v3411, 1
      %vm3428 = vcmp.eq.s32.totalorder %v3412, 1
      %vm3429 = vcmp.eq.s32.totalorder %v3413, 1
      %vm3430 = vcmp.eq.s32.totalorder %v3414, 1
      %vm3431 = vcmp.eq.s32.totalorder %v3415, 1
      %vm3432 = vcmp.eq.s32.totalorder %v3416, 1
      %vm3433 = vcmp.eq.s32.totalorder %v3417, 1
      %vm3434 = vcmp.eq.s32.totalorder %v3418, 1
      %vm3435 = vcmp.eq.s32.totalorder %v3419, 1
      %vm3436 = vcmp.eq.s32.totalorder %v3420, 1
      %vm3437 = vcmp.eq.s32.totalorder %v3421, 1
      %vm3438 = vcmp.eq.s32.totalorder %v3422, 1
      %vm3439 = vcmp.eq.s32.totalorder %v3423, 1
      %vm3440 = vcmp.eq.s32.totalorder %v3424, 1
      %vm3441 = vcmp.eq.s32.totalorder %v3425, 1
      %vm3442 = vcmp.eq.s32.totalorder %v3426, 1
      %v3443 = vsel %vm3427, %v3283, -inf
      %v3444 = vsel %vm3428, %v3284, -inf
      %v3445 = vsel %vm3429, %v3285, -inf
      %v3446 = vsel %vm3430, %v3286, -inf
      %v3447 = vsel %vm3431, %v3287, -inf
      %v3448 = vsel %vm3432, %v3288, -inf
      %v3449 = vsel %vm3433, %v3289, -inf
      %v3450 = vsel %vm3434, %v3290, -inf
      %v3451 = vsel %vm3435, %v3291, -inf
      %v3452 = vsel %vm3436, %v3292, -inf
      %v3453 = vsel %vm3437, %v3293, -inf
      %v3454 = vsel %vm3438, %v3294, -inf
      %v3455 = vsel %vm3439, %v3295, -inf
      %v3456 = vsel %vm3440, %v3296, -inf
      %v3457 = vsel %vm3441, %v3297, -inf
      %v3458 = vsel %vm3442, %v3298, -inf
      %v3459 = vsel %vm3427, %v3299, -inf
      %v3460 = vsel %vm3428, %v3300, -inf
      %v3461 = vsel %vm3429, %v3301, -inf
      %v3462 = vsel %vm3430, %v3302, -inf
      %v3463 = vsel %vm3431, %v3303, -inf
      %v3464 = vsel %vm3432, %v3304, -inf
      %v3465 = vsel %vm3433, %v3305, -inf
      %v3466 = vsel %vm3434, %v3306, -inf
      %v3467 = vsel %vm3435, %v3307, -inf
      %v3468 = vsel %vm3436, %v3308, -inf
      %v3469 = vsel %vm3437, %v3309, -inf
      %v3470 = vsel %vm3438, %v3310, -inf
      %v3471 = vsel %vm3439, %v3311, -inf
      %v3472 = vsel %vm3440, %v3312, -inf
      %v3473 = vsel %vm3441, %v3313, -inf
      %v3474 = vsel %vm3442, %v3314, -inf
      %v3475 = vsel %vm3427, %v3315, -inf
      %v3476 = vsel %vm3428, %v3316, -inf
      %v3477 = vsel %vm3429, %v3317, -inf
      %v3478 = vsel %vm3430, %v3318, -inf
      %v3479 = vsel %vm3431, %v3319, -inf
      %v3480 = vsel %vm3432, %v3320, -inf
      %v3481 = vsel %vm3433, %v3321, -inf
      %v3482 = vsel %vm3434, %v3322, -inf
      %v3483 = vsel %vm3435, %v3323, -inf
      %v3484 = vsel %vm3436, %v3324, -inf
      %v3485 = vsel %vm3437, %v3325, -inf
      %v3486 = vsel %vm3438, %v3326, -inf
      %v3487 = vsel %vm3439, %v3327, -inf
      %v3488 = vsel %vm3440, %v3328, -inf
      %v3489 = vsel %vm3441, %v3329, -inf
      %v3490 = vsel %vm3442, %v3330, -inf
      %v3491 = vsel %vm3427, %v3331, -inf
      %v3492 = vsel %vm3428, %v3332, -inf
      %v3493 = vsel %vm3429, %v3333, -inf
      %v3494 = vsel %vm3430, %v3334, -inf
      %v3495 = vsel %vm3431, %v3335, -inf
      %v3496 = vsel %vm3432, %v3336, -inf
      %v3497 = vsel %vm3433, %v3337, -inf
      %v3498 = vsel %vm3434, %v3338, -inf
      %v3499 = vsel %vm3435, %v3339, -inf
      %v3500 = vsel %vm3436, %v3340, -inf
      %v3501 = vsel %vm3437, %v3341, -inf
      %v3502 = vsel %vm3438, %v3342, -inf
      %v3503 = vsel %vm3439, %v3343, -inf
      %v3504 = vsel %vm3440, %v3344, -inf
      %v3505 = vsel %vm3441, %v3345, -inf
      %v3506 = vsel %vm3442, %v3346, -inf
      %v3507 = vsel %vm3427, %v3347, -inf
      %v3508 = vsel %vm3428, %v3348, -inf
      %v3509 = vsel %vm3429, %v3349, -inf
      %v3510 = vsel %vm3430, %v3350, -inf
      %v3511 = vsel %vm3431, %v3351, -inf
      %v3512 = vsel %vm3432, %v3352, -inf
      %v3513 = vsel %vm3433, %v3353, -inf
      %v3514 = vsel %vm3434, %v3354, -inf
      %v3515 = vsel %vm3435, %v3355, -inf
      %v3516 = vsel %vm3436, %v3356, -inf
      %v3517 = vsel %vm3437, %v3357, -inf
      %v3518 = vsel %vm3438, %v3358, -inf
      %v3519 = vsel %vm3439, %v3359, -inf
      %v3520 = vsel %vm3440, %v3360, -inf
      %v3521 = vsel %vm3441, %v3361, -inf
      %v3522 = vsel %vm3442, %v3362, -inf
      %v3523 = vsel %vm3427, %v3363, -inf
      %v3524 = vsel %vm3428, %v3364, -inf
      %v3525 = vsel %vm3429, %v3365, -inf
      %v3526 = vsel %vm3430, %v3366, -inf
      %v3527 = vsel %vm3431, %v3367, -inf
      %v3528 = vsel %vm3432, %v3368, -inf
      %v3529 = vsel %vm3433, %v3369, -inf
      %v3530 = vsel %vm3434, %v3370, -inf
      %v3531 = vsel %vm3435, %v3371, -inf
      %v3532 = vsel %vm3436, %v3372, -inf
      %v3533 = vsel %vm3437, %v3373, -inf
      %v3534 = vsel %vm3438, %v3374, -inf
      %v3535 = vsel %vm3439, %v3375, -inf
      %v3536 = vsel %vm3440, %v3376, -inf
      %v3537 = vsel %vm3441, %v3377, -inf
      %v3538 = vsel %vm3442, %v3378, -inf
      %v3539 = vsel %vm3427, %v3379, -inf
      %v3540 = vsel %vm3428, %v3380, -inf
      %v3541 = vsel %vm3429, %v3381, -inf
      %v3542 = vsel %vm3430, %v3382, -inf
      %v3543 = vsel %vm3431, %v3383, -inf
      %v3544 = vsel %vm3432, %v3384, -inf
      %v3545 = vsel %vm3433, %v3385, -inf
      %v3546 = vsel %vm3434, %v3386, -inf
      %v3547 = vsel %vm3435, %v3387, -inf
      %v3548 = vsel %vm3436, %v3388, -inf
      %v3549 = vsel %vm3437, %v3389, -inf
      %v3550 = vsel %vm3438, %v3390, -inf
      %v3551 = vsel %vm3439, %v3391, -inf
      %v3552 = vsel %vm3440, %v3392, -inf
      %v3553 = vsel %vm3441, %v3393, -inf
      %v3554 = vsel %vm3442, %v3394, -inf
      %v3555 = vsel %vm3427, %v3395, -inf
      %v3556 = vsel %vm3428, %v3396, -inf
      %v3557 = vsel %vm3429, %v3397, -inf
      %v3558 = vsel %vm3430, %v3398, -inf
      %v3559 = vsel %vm3431, %v3399, -inf
      %v3560 = vsel %vm3432, %v3400, -inf
      %v3561 = vsel %vm3433, %v3401, -inf
      %v3562 = vsel %vm3434, %v3402, -inf
      %v3563 = vsel %vm3435, %v3403, -inf
      %v3564 = vsel %vm3436, %v3404, -inf
      %v3565 = vsel %vm3437, %v3405, -inf
      %v3566 = vsel %vm3438, %v3406, -inf
      %v3567 = vsel %vm3439, %v3407, -inf
      %v3568 = vsel %vm3440, %v3408, -inf
      %v3569 = vsel %vm3441, %v3409, -inf
      %v3570 = vsel %vm3442, %v3410, -inf
      %3571 = vmax.xlane.f32.xlu0 %v3443
      %v3572 = vpop.xlane.xlu0 %3571
      %3573 = vmax.xlane.f32.xlu0 %v3444
      %v3574 = vpop.xlane.xlu0 %3573
      %3575 = vmax.xlane.f32.xlu0 %v3445
      %v3576 = vpop.xlane.xlu0 %3575
      %3577 = vmax.xlane.f32.xlu0 %v3446
      %v3578 = vpop.xlane.xlu0 %3577
      %3579 = vmax.xlane.f32.xlu0 %v3447
      %v3580 = vpop.xlane.xlu0 %3579
      %3581 = vmax.xlane.f32.xlu0 %v3448
      %v3582 = vpop.xlane.xlu0 %3581
      %3583 = vmax.xlane.f32.xlu0 %v3449
      %v3584 = vpop.xlane.xlu0 %3583
      %3585 = vmax.xlane.f32.xlu0 %v3450
      %v3586 = vpop.xlane.xlu0 %3585
      %3587 = vmax.xlane.f32.xlu0 %v3451
      %v3588 = vpop.xlane.xlu0 %3587
      %3589 = vmax.xlane.f32.xlu0 %v3452
      %v3590 = vpop.xlane.xlu0 %3589
      %3591 = vmax.xlane.f32.xlu0 %v3453
      %v3592 = vpop.xlane.xlu0 %3591
      %3593 = vmax.xlane.f32.xlu0 %v3454
      %v3594 = vpop.xlane.xlu0 %3593
      %3595 = vmax.xlane.f32.xlu0 %v3455
      %v3596 = vpop.xlane.xlu0 %3595
      %3597 = vmax.xlane.f32.xlu0 %v3456
      %v3598 = vpop.xlane.xlu0 %3597
      %3599 = vmax.xlane.f32.xlu0 %v3457
      %v3600 = vpop.xlane.xlu0 %3599
      %3601 = vmax.xlane.f32.xlu0 %v3458
      %v3602 = vpop.xlane.xlu0 %3601
      %3603 = vmax.xlane.f32.xlu0 %v3459
      %v3604 = vpop.xlane.xlu0 %3603
      %3605 = vmax.xlane.f32.xlu0 %v3460
      %v3606 = vpop.xlane.xlu0 %3605
      %3607 = vmax.xlane.f32.xlu0 %v3461
      %v3608 = vpop.xlane.xlu0 %3607
      %3609 = vmax.xlane.f32.xlu0 %v3462
      %v3610 = vpop.xlane.xlu0 %3609
      %3611 = vmax.xlane.f32.xlu0 %v3463
      %v3612 = vpop.xlane.xlu0 %3611
      %3613 = vmax.xlane.f32.xlu0 %v3464
      %v3614 = vpop.xlane.xlu0 %3613
      %3615 = vmax.xlane.f32.xlu0 %v3465
      %v3616 = vpop.xlane.xlu0 %3615
      %3617 = vmax.xlane.f32.xlu0 %v3466
      %v3618 = vpop.xlane.xlu0 %3617
      %3619 = vmax.xlane.f32.xlu0 %v3467
      %v3620 = vpop.xlane.xlu0 %3619
      %3621 = vmax.xlane.f32.xlu0 %v3468
      %v3622 = vpop.xlane.xlu0 %3621
      %3623 = vmax.xlane.f32.xlu0 %v3469
      %v3624 = vpop.xlane.xlu0 %3623
      %3625 = vmax.xlane.f32.xlu0 %v3470
      %v3626 = vpop.xlane.xlu0 %3625
      %3627 = vmax.xlane.f32.xlu0 %v3471
      %v3628 = vpop.xlane.xlu0 %3627
      %3629 = vmax.xlane.f32.xlu0 %v3472
      %v3630 = vpop.xlane.xlu0 %3629
      %3631 = vmax.xlane.f32.xlu0 %v3473
      %v3632 = vpop.xlane.xlu0 %3631
      %3633 = vmax.xlane.f32.xlu0 %v3474
      %v3634 = vpop.xlane.xlu0 %3633
      %3635 = vmax.xlane.f32.xlu0 %v3475
      %v3636 = vpop.xlane.xlu0 %3635
      %3637 = vmax.xlane.f32.xlu0 %v3476
      %v3638 = vpop.xlane.xlu0 %3637
      %3639 = vmax.xlane.f32.xlu0 %v3477
      %v3640 = vpop.xlane.xlu0 %3639
      %3641 = vmax.xlane.f32.xlu0 %v3478
      %v3642 = vpop.xlane.xlu0 %3641
      %3643 = vmax.xlane.f32.xlu0 %v3479
      %v3644 = vpop.xlane.xlu0 %3643
      %3645 = vmax.xlane.f32.xlu0 %v3480
      %v3646 = vpop.xlane.xlu0 %3645
      %3647 = vmax.xlane.f32.xlu0 %v3481
      %v3648 = vpop.xlane.xlu0 %3647
      %3649 = vmax.xlane.f32.xlu0 %v3482
      %v3650 = vpop.xlane.xlu0 %3649
      %3651 = vmax.xlane.f32.xlu0 %v3483
      %v3652 = vpop.xlane.xlu0 %3651
      %3653 = vmax.xlane.f32.xlu0 %v3484
      %v3654 = vpop.xlane.xlu0 %3653
      %3655 = vmax.xlane.f32.xlu0 %v3485
      %v3656 = vpop.xlane.xlu0 %3655
      %3657 = vmax.xlane.f32.xlu0 %v3486
      %v3658 = vpop.xlane.xlu0 %3657
      %3659 = vmax.xlane.f32.xlu0 %v3487
      %v3660 = vpop.xlane.xlu0 %3659
      %3661 = vmax.xlane.f32.xlu0 %v3488
      %v3662 = vpop.xlane.xlu0 %3661
      %3663 = vmax.xlane.f32.xlu0 %v3489
      %v3664 = vpop.xlane.xlu0 %3663
      %3665 = vmax.xlane.f32.xlu0 %v3490
      %v3666 = vpop.xlane.xlu0 %3665
      %3667 = vmax.xlane.f32.xlu0 %v3491
      %v3668 = vpop.xlane.xlu0 %3667
      %3669 = vmax.xlane.f32.xlu0 %v3492
      %v3670 = vpop.xlane.xlu0 %3669
      %3671 = vmax.xlane.f32.xlu0 %v3493
      %v3672 = vpop.xlane.xlu0 %3671
      %3673 = vmax.xlane.f32.xlu0 %v3494
      %v3674 = vpop.xlane.xlu0 %3673
      %3675 = vmax.xlane.f32.xlu0 %v3495
      %v3676 = vpop.xlane.xlu0 %3675
      %3677 = vmax.xlane.f32.xlu0 %v3496
      %v3678 = vpop.xlane.xlu0 %3677
      %3679 = vmax.xlane.f32.xlu0 %v3497
      %v3680 = vpop.xlane.xlu0 %3679
      %3681 = vmax.xlane.f32.xlu0 %v3498
      %v3682 = vpop.xlane.xlu0 %3681
      %3683 = vmax.xlane.f32.xlu0 %v3499
      %v3684 = vpop.xlane.xlu0 %3683
      %3685 = vmax.xlane.f32.xlu0 %v3500
      %v3686 = vpop.xlane.xlu0 %3685
      %3687 = vmax.xlane.f32.xlu0 %v3501
      %v3688 = vpop.xlane.xlu0 %3687
      %3689 = vmax.xlane.f32.xlu0 %v3502
      %v3690 = vpop.xlane.xlu0 %3689
      %3691 = vmax.xlane.f32.xlu0 %v3503
      %v3692 = vpop.xlane.xlu0 %3691
      %3693 = vmax.xlane.f32.xlu0 %v3504
      %v3694 = vpop.xlane.xlu0 %3693
      %3695 = vmax.xlane.f32.xlu0 %v3505
      %v3696 = vpop.xlane.xlu0 %3695
      %3697 = vmax.xlane.f32.xlu0 %v3506
      %v3698 = vpop.xlane.xlu0 %3697
      %3699 = vmax.xlane.f32.xlu0 %v3507
      %v3700 = vpop.xlane.xlu0 %3699
      %3701 = vmax.xlane.f32.xlu0 %v3508
      %v3702 = vpop.xlane.xlu0 %3701
      %3703 = vmax.xlane.f32.xlu0 %v3509
      %v3704 = vpop.xlane.xlu0 %3703
      %3705 = vmax.xlane.f32.xlu0 %v3510
      %v3706 = vpop.xlane.xlu0 %3705
      %3707 = vmax.xlane.f32.xlu0 %v3511
      %v3708 = vpop.xlane.xlu0 %3707
      %3709 = vmax.xlane.f32.xlu0 %v3512
      %v3710 = vpop.xlane.xlu0 %3709
      %3711 = vmax.xlane.f32.xlu0 %v3513
      %v3712 = vpop.xlane.xlu0 %3711
      %3713 = vmax.xlane.f32.xlu0 %v3514
      %v3714 = vpop.xlane.xlu0 %3713
      %3715 = vmax.xlane.f32.xlu0 %v3515
      %v3716 = vpop.xlane.xlu0 %3715
      %3717 = vmax.xlane.f32.xlu0 %v3516
      %v3718 = vpop.xlane.xlu0 %3717
      %3719 = vmax.xlane.f32.xlu0 %v3517
      %v3720 = vpop.xlane.xlu0 %3719
      %3721 = vmax.xlane.f32.xlu0 %v3518
      %v3722 = vpop.xlane.xlu0 %3721
      %3723 = vmax.xlane.f32.xlu0 %v3519
      %v3724 = vpop.xlane.xlu0 %3723
      %3725 = vmax.xlane.f32.xlu0 %v3520
      %v3726 = vpop.xlane.xlu0 %3725
      %3727 = vmax.xlane.f32.xlu0 %v3521
      %v3728 = vpop.xlane.xlu0 %3727
      %3729 = vmax.xlane.f32.xlu0 %v3522
      %v3730 = vpop.xlane.xlu0 %3729
      %3731 = vmax.xlane.f32.xlu0 %v3523
      %v3732 = vpop.xlane.xlu0 %3731
      %3733 = vmax.xlane.f32.xlu0 %v3524
      %v3734 = vpop.xlane.xlu0 %3733
      %3735 = vmax.xlane.f32.xlu0 %v3525
      %v3736 = vpop.xlane.xlu0 %3735
      %3737 = vmax.xlane.f32.xlu0 %v3526
      %v3738 = vpop.xlane.xlu0 %3737
      %3739 = vmax.xlane.f32.xlu0 %v3527
      %v3740 = vpop.xlane.xlu0 %3739
      %3741 = vmax.xlane.f32.xlu0 %v3528
      %v3742 = vpop.xlane.xlu0 %3741
      %3743 = vmax.xlane.f32.xlu0 %v3529
      %v3744 = vpop.xlane.xlu0 %3743
      %3745 = vmax.xlane.f32.xlu0 %v3530
      %v3746 = vpop.xlane.xlu0 %3745
      %3747 = vmax.xlane.f32.xlu0 %v3531
      %v3748 = vpop.xlane.xlu0 %3747
      %3749 = vmax.xlane.f32.xlu0 %v3532
      %v3750 = vpop.xlane.xlu0 %3749
      %3751 = vmax.xlane.f32.xlu0 %v3533
      %v3752 = vpop.xlane.xlu0 %3751
      %3753 = vmax.xlane.f32.xlu0 %v3534
      %v3754 = vpop.xlane.xlu0 %3753
      %3755 = vmax.xlane.f32.xlu0 %v3535
      %v3756 = vpop.xlane.xlu0 %3755
      %3757 = vmax.xlane.f32.xlu0 %v3536
      %v3758 = vpop.xlane.xlu0 %3757
      %3759 = vmax.xlane.f32.xlu0 %v3537
      %v3760 = vpop.xlane.xlu0 %3759
      %3761 = vmax.xlane.f32.xlu0 %v3538
      %v3762 = vpop.xlane.xlu0 %3761
      %3763 = vmax.xlane.f32.xlu0 %v3539
      %v3764 = vpop.xlane.xlu0 %3763
      %3765 = vmax.xlane.f32.xlu0 %v3540
      %v3766 = vpop.xlane.xlu0 %3765
      %3767 = vmax.xlane.f32.xlu0 %v3541
      %v3768 = vpop.xlane.xlu0 %3767
      %3769 = vmax.xlane.f32.xlu0 %v3542
      %v3770 = vpop.xlane.xlu0 %3769
      %3771 = vmax.xlane.f32.xlu0 %v3543
      %v3772 = vpop.xlane.xlu0 %3771
      %3773 = vmax.xlane.f32.xlu0 %v3544
      %v3774 = vpop.xlane.xlu0 %3773
      %3775 = vmax.xlane.f32.xlu0 %v3545
      %v3776 = vpop.xlane.xlu0 %3775
      %3777 = vmax.xlane.f32.xlu0 %v3546
      %v3778 = vpop.xlane.xlu0 %3777
      %3779 = vmax.xlane.f32.xlu0 %v3547
      %v3780 = vpop.xlane.xlu0 %3779
      %3781 = vmax.xlane.f32.xlu0 %v3548
      %v3782 = vpop.xlane.xlu0 %3781
      %3783 = vmax.xlane.f32.xlu0 %v3549
      %v3784 = vpop.xlane.xlu0 %3783
      %3785 = vmax.xlane.f32.xlu0 %v3550
      %v3786 = vpop.xlane.xlu0 %3785
      %3787 = vmax.xlane.f32.xlu0 %v3551
      %v3788 = vpop.xlane.xlu0 %3787
      %3789 = vmax.xlane.f32.xlu0 %v3552
      %v3790 = vpop.xlane.xlu0 %3789
      %3791 = vmax.xlane.f32.xlu0 %v3553
      %v3792 = vpop.xlane.xlu0 %3791
      %3793 = vmax.xlane.f32.xlu0 %v3554
      %v3794 = vpop.xlane.xlu0 %3793
      %3795 = vmax.xlane.f32.xlu0 %v3555
      %v3796 = vpop.xlane.xlu0 %3795
      %3797 = vmax.xlane.f32.xlu0 %v3556
      %v3798 = vpop.xlane.xlu0 %3797
      %3799 = vmax.xlane.f32.xlu0 %v3557
      %v3800 = vpop.xlane.xlu0 %3799
      %3801 = vmax.xlane.f32.xlu0 %v3558
      %v3802 = vpop.xlane.xlu0 %3801
      %3803 = vmax.xlane.f32.xlu0 %v3559
      %v3804 = vpop.xlane.xlu0 %3803
      %3805 = vmax.xlane.f32.xlu0 %v3560
      %v3806 = vpop.xlane.xlu0 %3805
      %3807 = vmax.xlane.f32.xlu0 %v3561
      %v3808 = vpop.xlane.xlu0 %3807
      %3809 = vmax.xlane.f32.xlu0 %v3562
      %v3810 = vpop.xlane.xlu0 %3809
      %3811 = vmax.xlane.f32.xlu0 %v3563
      %v3812 = vpop.xlane.xlu0 %3811
      %3813 = vmax.xlane.f32.xlu0 %v3564
      %v3814 = vpop.xlane.xlu0 %3813
      %3815 = vmax.xlane.f32.xlu0 %v3565
      %v3816 = vpop.xlane.xlu0 %3815
      %3817 = vmax.xlane.f32.xlu0 %v3566
      %v3818 = vpop.xlane.xlu0 %3817
      %3819 = vmax.xlane.f32.xlu0 %v3567
      %v3820 = vpop.xlane.xlu0 %3819
      %3821 = vmax.xlane.f32.xlu0 %v3568
      %v3822 = vpop.xlane.xlu0 %3821
      %3823 = vmax.xlane.f32.xlu0 %v3569
      %v3824 = vpop.xlane.xlu0 %3823
      %3825 = vmax.xlane.f32.xlu0 %v3570
      %v3826 = vpop.xlane.xlu0 %3825
      %v3827 = vsub.f32 %v3443, %v3572
      %v3828 = vsub.f32 %v3444, %v3574
      %v3829 = vsub.f32 %v3445, %v3576
      %v3830 = vsub.f32 %v3446, %v3578
      %v3831 = vsub.f32 %v3447, %v3580
      %v3832 = vsub.f32 %v3448, %v3582
      %v3833 = vsub.f32 %v3449, %v3584
      %v3834 = vsub.f32 %v3450, %v3586
      %v3835 = vsub.f32 %v3451, %v3588
      %v3836 = vsub.f32 %v3452, %v3590
      %v3837 = vsub.f32 %v3453, %v3592
      %v3838 = vsub.f32 %v3454, %v3594
      %v3839 = vsub.f32 %v3455, %v3596
      %v3840 = vsub.f32 %v3456, %v3598
      %v3841 = vsub.f32 %v3457, %v3600
      %v3842 = vsub.f32 %v3458, %v3602
      %v3843 = vsub.f32 %v3459, %v3604
      %v3844 = vsub.f32 %v3460, %v3606
      %v3845 = vsub.f32 %v3461, %v3608
      %v3846 = vsub.f32 %v3462, %v3610
      %v3847 = vsub.f32 %v3463, %v3612
      %v3848 = vsub.f32 %v3464, %v3614
      %v3849 = vsub.f32 %v3465, %v3616
      %v3850 = vsub.f32 %v3466, %v3618
      %v3851 = vsub.f32 %v3467, %v3620
      %v3852 = vsub.f32 %v3468, %v3622
      %v3853 = vsub.f32 %v3469, %v3624
      %v3854 = vsub.f32 %v3470, %v3626
      %v3855 = vsub.f32 %v3471, %v3628
      %v3856 = vsub.f32 %v3472, %v3630
      %v3857 = vsub.f32 %v3473, %v3632
      %v3858 = vsub.f32 %v3474, %v3634
      %v3859 = vsub.f32 %v3475, %v3636
      %v3860 = vsub.f32 %v3476, %v3638
      %v3861 = vsub.f32 %v3477, %v3640
      %v3862 = vsub.f32 %v3478, %v3642
      %v3863 = vsub.f32 %v3479, %v3644
      %v3864 = vsub.f32 %v3480, %v3646
      %v3865 = vsub.f32 %v3481, %v3648
      %v3866 = vsub.f32 %v3482, %v3650
      %v3867 = vsub.f32 %v3483, %v3652
      %v3868 = vsub.f32 %v3484, %v3654
      %v3869 = vsub.f32 %v3485, %v3656
      %v3870 = vsub.f32 %v3486, %v3658
      %v3871 = vsub.f32 %v3487, %v3660
      %v3872 = vsub.f32 %v3488, %v3662
      %v3873 = vsub.f32 %v3489, %v3664
      %v3874 = vsub.f32 %v3490, %v3666
      %v3875 = vsub.f32 %v3491, %v3668
      %v3876 = vsub.f32 %v3492, %v3670
      %v3877 = vsub.f32 %v3493, %v3672
      %v3878 = vsub.f32 %v3494, %v3674
      %v3879 = vsub.f32 %v3495, %v3676
      %v3880 = vsub.f32 %v3496, %v3678
      %v3881 = vsub.f32 %v3497, %v3680
      %v3882 = vsub.f32 %v3498, %v3682
      %v3883 = vsub.f32 %v3499, %v3684
      %v3884 = vsub.f32 %v3500, %v3686
      %v3885 = vsub.f32 %v3501, %v3688
      %v3886 = vsub.f32 %v3502, %v3690
      %v3887 = vsub.f32 %v3503, %v3692
      %v3888 = vsub.f32 %v3504, %v3694
      %v3889 = vsub.f32 %v3505, %v3696
      %v3890 = vsub.f32 %v3506, %v3698
      %v3891 = vsub.f32 %v3507, %v3700
      %v3892 = vsub.f32 %v3508, %v3702
      %v3893 = vsub.f32 %v3509, %v3704
      %v3894 = vsub.f32 %v3510, %v3706
      %v3895 = vsub.f32 %v3511, %v3708
      %v3896 = vsub.f32 %v3512, %v3710
      %v3897 = vsub.f32 %v3513, %v3712
      %v3898 = vsub.f32 %v3514, %v3714
      %v3899 = vsub.f32 %v3515, %v3716
      %v3900 = vsub.f32 %v3516, %v3718
      %v3901 = vsub.f32 %v3517, %v3720
      %v3902 = vsub.f32 %v3518, %v3722
      %v3903 = vsub.f32 %v3519, %v3724
      %v3904 = vsub.f32 %v3520, %v3726
      %v3905 = vsub.f32 %v3521, %v3728
      %v3906 = vsub.f32 %v3522, %v3730
      %v3907 = vsub.f32 %v3523, %v3732
      %v3908 = vsub.f32 %v3524, %v3734
      %v3909 = vsub.f32 %v3525, %v3736
      %v3910 = vsub.f32 %v3526, %v3738
      %v3911 = vsub.f32 %v3527, %v3740
      %v3912 = vsub.f32 %v3528, %v3742
      %v3913 = vsub.f32 %v3529, %v3744
      %v3914 = vsub.f32 %v3530, %v3746
      %v3915 = vsub.f32 %v3531, %v3748
      %v3916 = vsub.f32 %v3532, %v3750
      %v3917 = vsub.f32 %v3533, %v3752
      %v3918 = vsub.f32 %v3534, %v3754
      %v3919 = vsub.f32 %v3535, %v3756
      %v3920 = vsub.f32 %v3536, %v3758
      %v3921 = vsub.f32 %v3537, %v3760
      %v3922 = vsub.f32 %v3538, %v3762
      %v3923 = vsub.f32 %v3539, %v3764
      %v3924 = vsub.f32 %v3540, %v3766
      %v3925 = vsub.f32 %v3541, %v3768
      %v3926 = vsub.f32 %v3542, %v3770
      %v3927 = vsub.f32 %v3543, %v3772
      %v3928 = vsub.f32 %v3544, %v3774
      %v3929 = vsub.f32 %v3545, %v3776
      %v3930 = vsub.f32 %v3546, %v3778
      %v3931 = vsub.f32 %v3547, %v3780
      %v3932 = vsub.f32 %v3548, %v3782
      %v3933 = vsub.f32 %v3549, %v3784
      %v3934 = vsub.f32 %v3550, %v3786
      %v3935 = vsub.f32 %v3551, %v3788
      %v3936 = vsub.f32 %v3552, %v3790
      %v3937 = vsub.f32 %v3553, %v3792
      %v3938 = vsub.f32 %v3554, %v3794
      %v3939 = vsub.f32 %v3555, %v3796
      %v3940 = vsub.f32 %v3556, %v3798
      %v3941 = vsub.f32 %v3557, %v3800
      %v3942 = vsub.f32 %v3558, %v3802
      %v3943 = vsub.f32 %v3559, %v3804
      %v3944 = vsub.f32 %v3560, %v3806
      %v3945 = vsub.f32 %v3561, %v3808
      %v3946 = vsub.f32 %v3562, %v3810
      %v3947 = vsub.f32 %v3563, %v3812
      %v3948 = vsub.f32 %v3564, %v3814
      %v3949 = vsub.f32 %v3565, %v3816
      %v3950 = vsub.f32 %v3566, %v3818
      %v3951 = vsub.f32 %v3567, %v3820
      %v3952 = vsub.f32 %v3568, %v3822
      %v3953 = vsub.f32 %v3569, %v3824
      %v3954 = vsub.f32 %v3570, %v3826
      %v3955 = vmul.f32 %v3827, 1.442695
      %v3956 = vpow.pop %v3955
      %v3957 = vmul.f32 %v3828, 1.442695
      %v3958 = vpow.pop %v3957
      %v3959 = vmul.f32 %v3829, 1.442695
      %v3960 = vpow.pop %v3959
      %v3961 = vmul.f32 %v3830, 1.442695
      %v3962 = vpow.pop %v3961
      %v3963 = vmul.f32 %v3831, 1.442695
      %v3964 = vpow.pop %v3963
      %v3965 = vmul.f32 %v3832, 1.442695
      %v3966 = vpow.pop %v3965
      %v3967 = vmul.f32 %v3833, 1.442695
      %v3968 = vpow.pop %v3967
      %v3969 = vmul.f32 %v3834, 1.442695
      %v3970 = vpow.pop %v3969
      %v3971 = vmul.f32 %v3835, 1.442695
      %v3972 = vpow.pop %v3971
      %v3973 = vmul.f32 %v3836, 1.442695
      %v3974 = vpow.pop %v3973
      %v3975 = vmul.f32 %v3837, 1.442695
      %v3976 = vpow.pop %v3975
      %v3977 = vmul.f32 %v3838, 1.442695
      %v3978 = vpow.pop %v3977
      %v3979 = vmul.f32 %v3839, 1.442695
      %v3980 = vpow.pop %v3979
      %v3981 = vmul.f32 %v3840, 1.442695
      %v3982 = vpow.pop %v3981
      %v3983 = vmul.f32 %v3841, 1.442695
      %v3984 = vpow.pop %v3983
      %v3985 = vmul.f32 %v3842, 1.442695
      %v3986 = vpow.pop %v3985
      %v3987 = vmul.f32 %v3843, 1.442695
      %v3988 = vpow.pop %v3987
      %v3989 = vmul.f32 %v3844, 1.442695
      %v3990 = vpow.pop %v3989
      %v3991 = vmul.f32 %v3845, 1.442695
      %v3992 = vpow.pop %v3991
      %v3993 = vmul.f32 %v3846, 1.442695
      %v3994 = vpow.pop %v3993
      %v3995 = vmul.f32 %v3847, 1.442695
      %v3996 = vpow.pop %v3995
      %v3997 = vmul.f32 %v3848, 1.442695
      %v3998 = vpow.pop %v3997
      %v3999 = vmul.f32 %v3849, 1.442695
      %v4000 = vpow.pop %v3999
      %v4001 = vmul.f32 %v3850, 1.442695
      %v4002 = vpow.pop %v4001
      %v4003 = vmul.f32 %v3851, 1.442695
      %v4004 = vpow.pop %v4003
      %v4005 = vmul.f32 %v3852, 1.442695
      %v4006 = vpow.pop %v4005
      %v4007 = vmul.f32 %v3853, 1.442695
      %v4008 = vpow.pop %v4007
      %v4009 = vmul.f32 %v3854, 1.442695
      %v4010 = vpow.pop %v4009
      %v4011 = vmul.f32 %v3855, 1.442695
      %v4012 = vpow.pop %v4011
      %v4013 = vmul.f32 %v3856, 1.442695
      %v4014 = vpow.pop %v4013
      %v4015 = vmul.f32 %v3857, 1.442695
      %v4016 = vpow.pop %v4015
      %v4017 = vmul.f32 %v3858, 1.442695
      %v4018 = vpow.pop %v4017
      %v4019 = vmul.f32 %v3859, 1.442695
      %v4020 = vpow.pop %v4019
      %v4021 = vmul.f32 %v3860, 1.442695
      %v4022 = vpow.pop %v4021
      %v4023 = vmul.f32 %v3861, 1.442695
      %v4024 = vpow.pop %v4023
      %v4025 = vmul.f32 %v3862, 1.442695
      %v4026 = vpow.pop %v4025
      %v4027 = vmul.f32 %v3863, 1.442695
      %v4028 = vpow.pop %v4027
      %v4029 = vmul.f32 %v3864, 1.442695
      %v4030 = vpow.pop %v4029
      %v4031 = vmul.f32 %v3865, 1.442695
      %v4032 = vpow.pop %v4031
      %v4033 = vmul.f32 %v3866, 1.442695
      %v4034 = vpow.pop %v4033
      %v4035 = vmul.f32 %v3867, 1.442695
      %v4036 = vpow.pop %v4035
      %v4037 = vmul.f32 %v3868, 1.442695
      %v4038 = vpow.pop %v4037
      %v4039 = vmul.f32 %v3869, 1.442695
      %v4040 = vpow.pop %v4039
      %v4041 = vmul.f32 %v3870, 1.442695
      %v4042 = vpow.pop %v4041
      %v4043 = vmul.f32 %v3871, 1.442695
      %v4044 = vpow.pop %v4043
      %v4045 = vmul.f32 %v3872, 1.442695
      %v4046 = vpow.pop %v4045
      %v4047 = vmul.f32 %v3873, 1.442695
      %v4048 = vpow.pop %v4047
      %v4049 = vmul.f32 %v3874, 1.442695
      %v4050 = vpow.pop %v4049
      %v4051 = vmul.f32 %v3875, 1.442695
      %v4052 = vpow.pop %v4051
      %v4053 = vmul.f32 %v3876, 1.442695
      %v4054 = vpow.pop %v4053
      %v4055 = vmul.f32 %v3877, 1.442695
      %v4056 = vpow.pop %v4055
      %v4057 = vmul.f32 %v3878, 1.442695
      %v4058 = vpow.pop %v4057
      %v4059 = vmul.f32 %v3879, 1.442695
      %v4060 = vpow.pop %v4059
      %v4061 = vmul.f32 %v3880, 1.442695
      %v4062 = vpow.pop %v4061
      %v4063 = vmul.f32 %v3881, 1.442695
      %v4064 = vpow.pop %v4063
      %v4065 = vmul.f32 %v3882, 1.442695
      %v4066 = vpow.pop %v4065
      %v4067 = vmul.f32 %v3883, 1.442695
      %v4068 = vpow.pop %v4067
      %v4069 = vmul.f32 %v3884, 1.442695
      %v4070 = vpow.pop %v4069
      %v4071 = vmul.f32 %v3885, 1.442695
      %v4072 = vpow.pop %v4071
      %v4073 = vmul.f32 %v3886, 1.442695
      %v4074 = vpow.pop %v4073
      %v4075 = vmul.f32 %v3887, 1.442695
      %v4076 = vpow.pop %v4075
      %v4077 = vmul.f32 %v3888, 1.442695
      %v4078 = vpow.pop %v4077
      %v4079 = vmul.f32 %v3889, 1.442695
      %v4080 = vpow.pop %v4079
      %v4081 = vmul.f32 %v3890, 1.442695
      %v4082 = vpow.pop %v4081
      %v4083 = vmul.f32 %v3891, 1.442695
      %v4084 = vpow.pop %v4083
      %v4085 = vmul.f32 %v3892, 1.442695
      %v4086 = vpow.pop %v4085
      %v4087 = vmul.f32 %v3893, 1.442695
      %v4088 = vpow.pop %v4087
      %v4089 = vmul.f32 %v3894, 1.442695
      %v4090 = vpow.pop %v4089
      %v4091 = vmul.f32 %v3895, 1.442695
      %v4092 = vpow.pop %v4091
      %v4093 = vmul.f32 %v3896, 1.442695
      %v4094 = vpow.pop %v4093
      %v4095 = vmul.f32 %v3897, 1.442695
      %v4096 = vpow.pop %v4095
      %v4097 = vmul.f32 %v3898, 1.442695
      %v4098 = vpow.pop %v4097
      %v4099 = vmul.f32 %v3899, 1.442695
      %v4100 = vpow.pop %v4099
      %v4101 = vmul.f32 %v3900, 1.442695
      %v4102 = vpow.pop %v4101
      %v4103 = vmul.f32 %v3901, 1.442695
      %v4104 = vpow.pop %v4103
      %v4105 = vmul.f32 %v3902, 1.442695
      %v4106 = vpow.pop %v4105
      %v4107 = vmul.f32 %v3903, 1.442695
      %v4108 = vpow.pop %v4107
      %v4109 = vmul.f32 %v3904, 1.442695
      %v4110 = vpow.pop %v4109
      %v4111 = vmul.f32 %v3905, 1.442695
      %v4112 = vpow.pop %v4111
      %v4113 = vmul.f32 %v3906, 1.442695
      %v4114 = vpow.pop %v4113
      %v4115 = vmul.f32 %v3907, 1.442695
      %v4116 = vpow.pop %v4115
      %v4117 = vmul.f32 %v3908, 1.442695
      %v4118 = vpow.pop %v4117
      %v4119 = vmul.f32 %v3909, 1.442695
      %v4120 = vpow.pop %v4119
      %v4121 = vmul.f32 %v3910, 1.442695
      %v4122 = vpow.pop %v4121
      %v4123 = vmul.f32 %v3911, 1.442695
      %v4124 = vpow.pop %v4123
      %v4125 = vmul.f32 %v3912, 1.442695
      %v4126 = vpow.pop %v4125
      %v4127 = vmul.f32 %v3913, 1.442695
      %v4128 = vpow.pop %v4127
      %v4129 = vmul.f32 %v3914, 1.442695
      %v4130 = vpow.pop %v4129
      %v4131 = vmul.f32 %v3915, 1.442695
      %v4132 = vpow.pop %v4131
      %v4133 = vmul.f32 %v3916, 1.442695
      %v4134 = vpow.pop %v4133
      %v4135 = vmul.f32 %v3917, 1.442695
      %v4136 = vpow.pop %v4135
      %v4137 = vmul.f32 %v3918, 1.442695
      %v4138 = vpow.pop %v4137
      %v4139 = vmul.f32 %v3919, 1.442695
      %v4140 = vpow.pop %v4139
      %v4141 = vmul.f32 %v3920, 1.442695
      %v4142 = vpow.pop %v4141
      %v4143 = vmul.f32 %v3921, 1.442695
      %v4144 = vpow.pop %v4143
      %v4145 = vmul.f32 %v3922, 1.442695
      %v4146 = vpow.pop %v4145
      %v4147 = vmul.f32 %v3923, 1.442695
      %v4148 = vpow.pop %v4147
      %v4149 = vmul.f32 %v3924, 1.442695
      %v4150 = vpow.pop %v4149
      %v4151 = vmul.f32 %v3925, 1.442695
      %v4152 = vpow.pop %v4151
      %v4153 = vmul.f32 %v3926, 1.442695
      %v4154 = vpow.pop %v4153
      %v4155 = vmul.f32 %v3927, 1.442695
      %v4156 = vpow.pop %v4155
      %v4157 = vmul.f32 %v3928, 1.442695
      %v4158 = vpow.pop %v4157
      %v4159 = vmul.f32 %v3929, 1.442695
      %v4160 = vpow.pop %v4159
      %v4161 = vmul.f32 %v3930, 1.442695
      %v4162 = vpow.pop %v4161
      %v4163 = vmul.f32 %v3931, 1.442695
      %v4164 = vpow.pop %v4163
      %v4165 = vmul.f32 %v3932, 1.442695
      %v4166 = vpow.pop %v4165
      %v4167 = vmul.f32 %v3933, 1.442695
      %v4168 = vpow.pop %v4167
      %v4169 = vmul.f32 %v3934, 1.442695
      %v4170 = vpow.pop %v4169
      %v4171 = vmul.f32 %v3935, 1.442695
      %v4172 = vpow.pop %v4171
      %v4173 = vmul.f32 %v3936, 1.442695
      %v4174 = vpow.pop %v4173
      %v4175 = vmul.f32 %v3937, 1.442695
      %v4176 = vpow.pop %v4175
      %v4177 = vmul.f32 %v3938, 1.442695
      %v4178 = vpow.pop %v4177
      %v4179 = vmul.f32 %v3939, 1.442695
      %v4180 = vpow.pop %v4179
      %v4181 = vmul.f32 %v3940, 1.442695
      %v4182 = vpow.pop %v4181
      %v4183 = vmul.f32 %v3941, 1.442695
      %v4184 = vpow.pop %v4183
      %v4185 = vmul.f32 %v3942, 1.442695
      %v4186 = vpow.pop %v4185
      %v4187 = vmul.f32 %v3943, 1.442695
      %v4188 = vpow.pop %v4187
      %v4189 = vmul.f32 %v3944, 1.442695
      %v4190 = vpow.pop %v4189
      %v4191 = vmul.f32 %v3945, 1.442695
      %v4192 = vpow.pop %v4191
      %v4193 = vmul.f32 %v3946, 1.442695
      %v4194 = vpow.pop %v4193
      %v4195 = vmul.f32 %v3947, 1.442695
      %v4196 = vpow.pop %v4195
      %v4197 = vmul.f32 %v3948, 1.442695
      %v4198 = vpow.pop %v4197
      %v4199 = vmul.f32 %v3949, 1.442695
      %v4200 = vpow.pop %v4199
      %v4201 = vmul.f32 %v3950, 1.442695
      %v4202 = vpow.pop %v4201
      %v4203 = vmul.f32 %v3951, 1.442695
      %v4204 = vpow.pop %v4203
      %v4205 = vmul.f32 %v3952, 1.442695
      %v4206 = vpow.pop %v4205
      %v4207 = vmul.f32 %v3953, 1.442695
      %v4208 = vpow.pop %v4207
      %v4209 = vmul.f32 %v3954, 1.442695
      %v4210 = vpow.pop %v4209
      %4211 = vadd.xlane.f32.xlu0 %v3956
      %v4212 = vpop.xlane.xlu0 %4211
      %4213 = vadd.xlane.f32.xlu0 %v3958
      %v4214 = vpop.xlane.xlu0 %4213
      %4215 = vadd.xlane.f32.xlu0 %v3960
      %v4216 = vpop.xlane.xlu0 %4215
      %4217 = vadd.xlane.f32.xlu0 %v3962
      %v4218 = vpop.xlane.xlu0 %4217
      %4219 = vadd.xlane.f32.xlu0 %v3964
      %v4220 = vpop.xlane.xlu0 %4219
      %4221 = vadd.xlane.f32.xlu0 %v3966
      %v4222 = vpop.xlane.xlu0 %4221
      %4223 = vadd.xlane.f32.xlu0 %v3968
      %v4224 = vpop.xlane.xlu0 %4223
      %4225 = vadd.xlane.f32.xlu0 %v3970
      %v4226 = vpop.xlane.xlu0 %4225
      %4227 = vadd.xlane.f32.xlu0 %v3972
      %v4228 = vpop.xlane.xlu0 %4227
      %4229 = vadd.xlane.f32.xlu0 %v3974
      %v4230 = vpop.xlane.xlu0 %4229
      %4231 = vadd.xlane.f32.xlu0 %v3976
      %v4232 = vpop.xlane.xlu0 %4231
      %4233 = vadd.xlane.f32.xlu0 %v3978
      %v4234 = vpop.xlane.xlu0 %4233
      %4235 = vadd.xlane.f32.xlu0 %v3980
      %v4236 = vpop.xlane.xlu0 %4235
      %4237 = vadd.xlane.f32.xlu0 %v3982
      %v4238 = vpop.xlane.xlu0 %4237
      %4239 = vadd.xlane.f32.xlu0 %v3984
      %v4240 = vpop.xlane.xlu0 %4239
      %4241 = vadd.xlane.f32.xlu0 %v3986
      %v4242 = vpop.xlane.xlu0 %4241
      %4243 = vadd.xlane.f32.xlu0 %v3988
      %v4244 = vpop.xlane.xlu0 %4243
      %4245 = vadd.xlane.f32.xlu0 %v3990
      %v4246 = vpop.xlane.xlu0 %4245
      %4247 = vadd.xlane.f32.xlu0 %v3992
      %v4248 = vpop.xlane.xlu0 %4247
      %4249 = vadd.xlane.f32.xlu0 %v3994
      %v4250 = vpop.xlane.xlu0 %4249
      %4251 = vadd.xlane.f32.xlu0 %v3996
      %v4252 = vpop.xlane.xlu0 %4251
      %4253 = vadd.xlane.f32.xlu0 %v3998
      %v4254 = vpop.xlane.xlu0 %4253
      %4255 = vadd.xlane.f32.xlu0 %v4000
      %v4256 = vpop.xlane.xlu0 %4255
      %4257 = vadd.xlane.f32.xlu0 %v4002
      %v4258 = vpop.xlane.xlu0 %4257
      %4259 = vadd.xlane.f32.xlu0 %v4004
      %v4260 = vpop.xlane.xlu0 %4259
      %4261 = vadd.xlane.f32.xlu0 %v4006
      %v4262 = vpop.xlane.xlu0 %4261
      %4263 = vadd.xlane.f32.xlu0 %v4008
      %v4264 = vpop.xlane.xlu0 %4263
      %4265 = vadd.xlane.f32.xlu0 %v4010
      %v4266 = vpop.xlane.xlu0 %4265
      %4267 = vadd.xlane.f32.xlu0 %v4012
      %v4268 = vpop.xlane.xlu0 %4267
      %4269 = vadd.xlane.f32.xlu0 %v4014
      %v4270 = vpop.xlane.xlu0 %4269
      %4271 = vadd.xlane.f32.xlu0 %v4016
      %v4272 = vpop.xlane.xlu0 %4271
      %4273 = vadd.xlane.f32.xlu0 %v4018
      %v4274 = vpop.xlane.xlu0 %4273
      %4275 = vadd.xlane.f32.xlu0 %v4020
      %v4276 = vpop.xlane.xlu0 %4275
      %4277 = vadd.xlane.f32.xlu0 %v4022
      %v4278 = vpop.xlane.xlu0 %4277
      %4279 = vadd.xlane.f32.xlu0 %v4024
      %v4280 = vpop.xlane.xlu0 %4279
      %4281 = vadd.xlane.f32.xlu0 %v4026
      %v4282 = vpop.xlane.xlu0 %4281
      %4283 = vadd.xlane.f32.xlu0 %v4028
      %v4284 = vpop.xlane.xlu0 %4283
      %4285 = vadd.xlane.f32.xlu0 %v4030
      %v4286 = vpop.xlane.xlu0 %4285
      %4287 = vadd.xlane.f32.xlu0 %v4032
      %v4288 = vpop.xlane.xlu0 %4287
      %4289 = vadd.xlane.f32.xlu0 %v4034
      %v4290 = vpop.xlane.xlu0 %4289
      %4291 = vadd.xlane.f32.xlu0 %v4036
      %v4292 = vpop.xlane.xlu0 %4291
      %4293 = vadd.xlane.f32.xlu0 %v4038
      %v4294 = vpop.xlane.xlu0 %4293
      %4295 = vadd.xlane.f32.xlu0 %v4040
      %v4296 = vpop.xlane.xlu0 %4295
      %4297 = vadd.xlane.f32.xlu0 %v4042
      %v4298 = vpop.xlane.xlu0 %4297
      %4299 = vadd.xlane.f32.xlu0 %v4044
      %v4300 = vpop.xlane.xlu0 %4299
      %4301 = vadd.xlane.f32.xlu0 %v4046
      %v4302 = vpop.xlane.xlu0 %4301
      %4303 = vadd.xlane.f32.xlu0 %v4048
      %v4304 = vpop.xlane.xlu0 %4303
      %4305 = vadd.xlane.f32.xlu0 %v4050
      %v4306 = vpop.xlane.xlu0 %4305
      %4307 = vadd.xlane.f32.xlu0 %v4052
      %v4308 = vpop.xlane.xlu0 %4307
      %4309 = vadd.xlane.f32.xlu0 %v4054
      %v4310 = vpop.xlane.xlu0 %4309
      %4311 = vadd.xlane.f32.xlu0 %v4056
      %v4312 = vpop.xlane.xlu0 %4311
      %4313 = vadd.xlane.f32.xlu0 %v4058
      %v4314 = vpop.xlane.xlu0 %4313
      %4315 = vadd.xlane.f32.xlu0 %v4060
      %v4316 = vpop.xlane.xlu0 %4315
      %4317 = vadd.xlane.f32.xlu0 %v4062
      %v4318 = vpop.xlane.xlu0 %4317
      %4319 = vadd.xlane.f32.xlu0 %v4064
      %v4320 = vpop.xlane.xlu0 %4319
      %4321 = vadd.xlane.f32.xlu0 %v4066
      %v4322 = vpop.xlane.xlu0 %4321
      %4323 = vadd.xlane.f32.xlu0 %v4068
      %v4324 = vpop.xlane.xlu0 %4323
      %4325 = vadd.xlane.f32.xlu0 %v4070
      %v4326 = vpop.xlane.xlu0 %4325
      %4327 = vadd.xlane.f32.xlu0 %v4072
      %v4328 = vpop.xlane.xlu0 %4327
      %4329 = vadd.xlane.f32.xlu0 %v4074
      %v4330 = vpop.xlane.xlu0 %4329
      %4331 = vadd.xlane.f32.xlu0 %v4076
      %v4332 = vpop.xlane.xlu0 %4331
      %4333 = vadd.xlane.f32.xlu0 %v4078
      %v4334 = vpop.xlane.xlu0 %4333
      %4335 = vadd.xlane.f32.xlu0 %v4080
      %v4336 = vpop.xlane.xlu0 %4335
      %4337 = vadd.xlane.f32.xlu0 %v4082
      %v4338 = vpop.xlane.xlu0 %4337
      %4339 = vadd.xlane.f32.xlu0 %v4084
      %v4340 = vpop.xlane.xlu0 %4339
      %4341 = vadd.xlane.f32.xlu0 %v4086
      %v4342 = vpop.xlane.xlu0 %4341
      %4343 = vadd.xlane.f32.xlu0 %v4088
      %v4344 = vpop.xlane.xlu0 %4343
      %4345 = vadd.xlane.f32.xlu0 %v4090
      %v4346 = vpop.xlane.xlu0 %4345
      %4347 = vadd.xlane.f32.xlu0 %v4092
      %v4348 = vpop.xlane.xlu0 %4347
      %4349 = vadd.xlane.f32.xlu0 %v4094
      %v4350 = vpop.xlane.xlu0 %4349
      %4351 = vadd.xlane.f32.xlu0 %v4096
      %v4352 = vpop.xlane.xlu0 %4351
      %4353 = vadd.xlane.f32.xlu0 %v4098
      %v4354 = vpop.xlane.xlu0 %4353
      %4355 = vadd.xlane.f32.xlu0 %v4100
      %v4356 = vpop.xlane.xlu0 %4355
      %4357 = vadd.xlane.f32.xlu0 %v4102
      %v4358 = vpop.xlane.xlu0 %4357
      %4359 = vadd.xlane.f32.xlu0 %v4104
      %v4360 = vpop.xlane.xlu0 %4359
      %4361 = vadd.xlane.f32.xlu0 %v4106
      %v4362 = vpop.xlane.xlu0 %4361
      %4363 = vadd.xlane.f32.xlu0 %v4108
      %v4364 = vpop.xlane.xlu0 %4363
      %4365 = vadd.xlane.f32.xlu0 %v4110
      %v4366 = vpop.xlane.xlu0 %4365
      %4367 = vadd.xlane.f32.xlu0 %v4112
      %v4368 = vpop.xlane.xlu0 %4367
      %4369 = vadd.xlane.f32.xlu0 %v4114
      %v4370 = vpop.xlane.xlu0 %4369
      %4371 = vadd.xlane.f32.xlu0 %v4116
      %v4372 = vpop.xlane.xlu0 %4371
      %4373 = vadd.xlane.f32.xlu0 %v4118
      %v4374 = vpop.xlane.xlu0 %4373
      %4375 = vadd.xlane.f32.xlu0 %v4120
      %v4376 = vpop.xlane.xlu0 %4375
      %4377 = vadd.xlane.f32.xlu0 %v4122
      %v4378 = vpop.xlane.xlu0 %4377
      %4379 = vadd.xlane.f32.xlu0 %v4124
      %v4380 = vpop.xlane.xlu0 %4379
      %4381 = vadd.xlane.f32.xlu0 %v4126
      %v4382 = vpop.xlane.xlu0 %4381
      %4383 = vadd.xlane.f32.xlu0 %v4128
      %v4384 = vpop.xlane.xlu0 %4383
      %4385 = vadd.xlane.f32.xlu0 %v4130
      %v4386 = vpop.xlane.xlu0 %4385
      %4387 = vadd.xlane.f32.xlu0 %v4132
      %v4388 = vpop.xlane.xlu0 %4387
      %4389 = vadd.xlane.f32.xlu0 %v4134
      %v4390 = vpop.xlane.xlu0 %4389
      %4391 = vadd.xlane.f32.xlu0 %v4136
      %v4392 = vpop.xlane.xlu0 %4391
      %4393 = vadd.xlane.f32.xlu0 %v4138
      %v4394 = vpop.xlane.xlu0 %4393
      %4395 = vadd.xlane.f32.xlu0 %v4140
      %v4396 = vpop.xlane.xlu0 %4395
      %4397 = vadd.xlane.f32.xlu0 %v4142
      %v4398 = vpop.xlane.xlu0 %4397
      %4399 = vadd.xlane.f32.xlu0 %v4144
      %v4400 = vpop.xlane.xlu0 %4399
      %4401 = vadd.xlane.f32.xlu0 %v4146
      %v4402 = vpop.xlane.xlu0 %4401
      %4403 = vadd.xlane.f32.xlu0 %v4148
      %v4404 = vpop.xlane.xlu0 %4403
      %4405 = vadd.xlane.f32.xlu0 %v4150
      %v4406 = vpop.xlane.xlu0 %4405
      %4407 = vadd.xlane.f32.xlu0 %v4152
      %v4408 = vpop.xlane.xlu0 %4407
      %4409 = vadd.xlane.f32.xlu0 %v4154
      %v4410 = vpop.xlane.xlu0 %4409
      %4411 = vadd.xlane.f32.xlu0 %v4156
      %v4412 = vpop.xlane.xlu0 %4411
      %4413 = vadd.xlane.f32.xlu0 %v4158
      %v4414 = vpop.xlane.xlu0 %4413
      %4415 = vadd.xlane.f32.xlu0 %v4160
      %v4416 = vpop.xlane.xlu0 %4415
      %4417 = vadd.xlane.f32.xlu0 %v4162
      %v4418 = vpop.xlane.xlu0 %4417
      %4419 = vadd.xlane.f32.xlu0 %v4164
      %v4420 = vpop.xlane.xlu0 %4419
      %4421 = vadd.xlane.f32.xlu0 %v4166
      %v4422 = vpop.xlane.xlu0 %4421
      %4423 = vadd.xlane.f32.xlu0 %v4168
      %v4424 = vpop.xlane.xlu0 %4423
      %4425 = vadd.xlane.f32.xlu0 %v4170
      %v4426 = vpop.xlane.xlu0 %4425
      %4427 = vadd.xlane.f32.xlu0 %v4172
      %v4428 = vpop.xlane.xlu0 %4427
      %4429 = vadd.xlane.f32.xlu0 %v4174
      %v4430 = vpop.xlane.xlu0 %4429
      %4431 = vadd.xlane.f32.xlu0 %v4176
      %v4432 = vpop.xlane.xlu0 %4431
      %4433 = vadd.xlane.f32.xlu0 %v4178
      %v4434 = vpop.xlane.xlu0 %4433
      %4435 = vadd.xlane.f32.xlu0 %v4180
      %v4436 = vpop.xlane.xlu0 %4435
      %4437 = vadd.xlane.f32.xlu0 %v4182
      %v4438 = vpop.xlane.xlu0 %4437
      %4439 = vadd.xlane.f32.xlu0 %v4184
      %v4440 = vpop.xlane.xlu0 %4439
      %4441 = vadd.xlane.f32.xlu0 %v4186
      %v4442 = vpop.xlane.xlu0 %4441
      %4443 = vadd.xlane.f32.xlu0 %v4188
      %v4444 = vpop.xlane.xlu0 %4443
      %4445 = vadd.xlane.f32.xlu0 %v4190
      %v4446 = vpop.xlane.xlu0 %4445
      %4447 = vadd.xlane.f32.xlu0 %v4192
      %v4448 = vpop.xlane.xlu0 %4447
      %4449 = vadd.xlane.f32.xlu0 %v4194
      %v4450 = vpop.xlane.xlu0 %4449
      %4451 = vadd.xlane.f32.xlu0 %v4196
      %v4452 = vpop.xlane.xlu0 %4451
      %4453 = vadd.xlane.f32.xlu0 %v4198
      %v4454 = vpop.xlane.xlu0 %4453
      %4455 = vadd.xlane.f32.xlu0 %v4200
      %v4456 = vpop.xlane.xlu0 %4455
      %4457 = vadd.xlane.f32.xlu0 %v4202
      %v4458 = vpop.xlane.xlu0 %4457
      %4459 = vadd.xlane.f32.xlu0 %v4204
      %v4460 = vpop.xlane.xlu0 %4459
      %4461 = vadd.xlane.f32.xlu0 %v4206
      %v4462 = vpop.xlane.xlu0 %4461
      %4463 = vadd.xlane.f32.xlu0 %v4208
      %v4464 = vpop.xlane.xlu0 %4463
      %4465 = vadd.xlane.f32.xlu0 %v4210
      %v4466 = vpop.xlane.xlu0 %4465
      %v4467 = vrcp.pop %v4212
      %v4468 = vrcp.pop %v4214
      %v4469 = vrcp.pop %v4216
      %v4470 = vrcp.pop %v4218
      %v4471 = vrcp.pop %v4220
      %v4472 = vrcp.pop %v4222
      %v4473 = vrcp.pop %v4224
      %v4474 = vrcp.pop %v4226
      %v4475 = vrcp.pop %v4228
      %v4476 = vrcp.pop %v4230
      %v4477 = vrcp.pop %v4232
      %v4478 = vrcp.pop %v4234
      %v4479 = vrcp.pop %v4236
      %v4480 = vrcp.pop %v4238
      %v4481 = vrcp.pop %v4240
      %v4482 = vrcp.pop %v4242
      %v4483 = vrcp.pop %v4244
      %v4484 = vrcp.pop %v4246
      %v4485 = vrcp.pop %v4248
      %v4486 = vrcp.pop %v4250
      %v4487 = vrcp.pop %v4252
      %v4488 = vrcp.pop %v4254
      %v4489 = vrcp.pop %v4256
      %v4490 = vrcp.pop %v4258
      %v4491 = vrcp.pop %v4260
      %v4492 = vrcp.pop %v4262
      %v4493 = vrcp.pop %v4264
      %v4494 = vrcp.pop %v4266
      %v4495 = vrcp.pop %v4268
      %v4496 = vrcp.pop %v4270
      %v4497 = vrcp.pop %v4272
      %v4498 = vrcp.pop %v4274
      %v4499 = vrcp.pop %v4276
      %v4500 = vrcp.pop %v4278
      %v4501 = vrcp.pop %v4280
      %v4502 = vrcp.pop %v4282
      %v4503 = vrcp.pop %v4284
      %v4504 = vrcp.pop %v4286
      %v4505 = vrcp.pop %v4288
      %v4506 = vrcp.pop %v4290
      %v4507 = vrcp.pop %v4292
      %v4508 = vrcp.pop %v4294
      %v4509 = vrcp.pop %v4296
      %v4510 = vrcp.pop %v4298
      %v4511 = vrcp.pop %v4300
      %v4512 = vrcp.pop %v4302
      %v4513 = vrcp.pop %v4304
      %v4514 = vrcp.pop %v4306
      %v4515 = vrcp.pop %v4308
      %v4516 = vrcp.pop %v4310
      %v4517 = vrcp.pop %v4312
      %v4518 = vrcp.pop %v4314
      %v4519 = vrcp.pop %v4316
      %v4520 = vrcp.pop %v4318
      %v4521 = vrcp.pop %v4320
      %v4522 = vrcp.pop %v4322
      %v4523 = vrcp.pop %v4324
      %v4524 = vrcp.pop %v4326
      %v4525 = vrcp.pop %v4328
      %v4526 = vrcp.pop %v4330
      %v4527 = vrcp.pop %v4332
      %v4528 = vrcp.pop %v4334
      %v4529 = vrcp.pop %v4336
      %v4530 = vrcp.pop %v4338
      %v4531 = vrcp.pop %v4340
      %v4532 = vrcp.pop %v4342
      %v4533 = vrcp.pop %v4344
      %v4534 = vrcp.pop %v4346
      %v4535 = vrcp.pop %v4348
      %v4536 = vrcp.pop %v4350
      %v4537 = vrcp.pop %v4352
      %v4538 = vrcp.pop %v4354
      %v4539 = vrcp.pop %v4356
      %v4540 = vrcp.pop %v4358
      %v4541 = vrcp.pop %v4360
      %v4542 = vrcp.pop %v4362
      %v4543 = vrcp.pop %v4364
      %v4544 = vrcp.pop %v4366
      %v4545 = vrcp.pop %v4368
      %v4546 = vrcp.pop %v4370
      %v4547 = vrcp.pop %v4372
      %v4548 = vrcp.pop %v4374
      %v4549 = vrcp.pop %v4376
      %v4550 = vrcp.pop %v4378
      %v4551 = vrcp.pop %v4380
      %v4552 = vrcp.pop %v4382
      %v4553 = vrcp.pop %v4384
      %v4554 = vrcp.pop %v4386
      %v4555 = vrcp.pop %v4388
      %v4556 = vrcp.pop %v4390
      %v4557 = vrcp.pop %v4392
      %v4558 = vrcp.pop %v4394
      %v4559 = vrcp.pop %v4396
      %v4560 = vrcp.pop %v4398
      %v4561 = vrcp.pop %v4400
      %v4562 = vrcp.pop %v4402
      %v4563 = vrcp.pop %v4404
      %v4564 = vrcp.pop %v4406
      %v4565 = vrcp.pop %v4408
      %v4566 = vrcp.pop %v4410
      %v4567 = vrcp.pop %v4412
      %v4568 = vrcp.pop %v4414
      %v4569 = vrcp.pop %v4416
      %v4570 = vrcp.pop %v4418
      %v4571 = vrcp.pop %v4420
      %v4572 = vrcp.pop %v4422
      %v4573 = vrcp.pop %v4424
      %v4574 = vrcp.pop %v4426
      %v4575 = vrcp.pop %v4428
      %v4576 = vrcp.pop %v4430
      %v4577 = vrcp.pop %v4432
      %v4578 = vrcp.pop %v4434
      %v4579 = vrcp.pop %v4436
      %v4580 = vrcp.pop %v4438
      %v4581 = vrcp.pop %v4440
      %v4582 = vrcp.pop %v4442
      %v4583 = vrcp.pop %v4444
      %v4584 = vrcp.pop %v4446
      %v4585 = vrcp.pop %v4448
      %v4586 = vrcp.pop %v4450
      %v4587 = vrcp.pop %v4452
      %v4588 = vrcp.pop %v4454
      %v4589 = vrcp.pop %v4456
      %v4590 = vrcp.pop %v4458
      %v4591 = vrcp.pop %v4460
      %v4592 = vrcp.pop %v4462
      %v4593 = vrcp.pop %v4464
      %v4594 = vrcp.pop %v4466
      %v4595 = vmul.f32 %v3956, %v4467
      %v4596 = vmul.f32 %v3958, %v4468
      %v4597 = vmul.f32 %v3960, %v4469
      %v4598 = vmul.f32 %v3962, %v4470
      %v4599 = vmul.f32 %v3964, %v4471
      %v4600 = vmul.f32 %v3966, %v4472
      %v4601 = vmul.f32 %v3968, %v4473
      %v4602 = vmul.f32 %v3970, %v4474
      %v4603 = vmul.f32 %v3972, %v4475
      %v4604 = vmul.f32 %v3974, %v4476
      %v4605 = vmul.f32 %v3976, %v4477
      %v4606 = vmul.f32 %v3978, %v4478
      %v4607 = vmul.f32 %v3980, %v4479
      %v4608 = vmul.f32 %v3982, %v4480
      %v4609 = vmul.f32 %v3984, %v4481
      %v4610 = vmul.f32 %v3986, %v4482
      %v4611 = vmul.f32 %v3988, %v4483
      %v4612 = vmul.f32 %v3990, %v4484
      %v4613 = vmul.f32 %v3992, %v4485
      %v4614 = vmul.f32 %v3994, %v4486
      %v4615 = vmul.f32 %v3996, %v4487
      %v4616 = vmul.f32 %v3998, %v4488
      %v4617 = vmul.f32 %v4000, %v4489
      %v4618 = vmul.f32 %v4002, %v4490
      %v4619 = vmul.f32 %v4004, %v4491
      %v4620 = vmul.f32 %v4006, %v4492
      %v4621 = vmul.f32 %v4008, %v4493
      %v4622 = vmul.f32 %v4010, %v4494
      %v4623 = vmul.f32 %v4012, %v4495
      %v4624 = vmul.f32 %v4014, %v4496
      %v4625 = vmul.f32 %v4016, %v4497
      %v4626 = vmul.f32 %v4018, %v4498
      %v4627 = vmul.f32 %v4020, %v4499
      %v4628 = vmul.f32 %v4022, %v4500
      %v4629 = vmul.f32 %v4024, %v4501
      %v4630 = vmul.f32 %v4026, %v4502
      %v4631 = vmul.f32 %v4028, %v4503
      %v4632 = vmul.f32 %v4030, %v4504
      %v4633 = vmul.f32 %v4032, %v4505
      %v4634 = vmul.f32 %v4034, %v4506
      %v4635 = vmul.f32 %v4036, %v4507
      %v4636 = vmul.f32 %v4038, %v4508
      %v4637 = vmul.f32 %v4040, %v4509
      %v4638 = vmul.f32 %v4042, %v4510
      %v4639 = vmul.f32 %v4044, %v4511
      %v4640 = vmul.f32 %v4046, %v4512
      %v4641 = vmul.f32 %v4048, %v4513
      %v4642 = vmul.f32 %v4050, %v4514
      %v4643 = vmul.f32 %v4052, %v4515
      %v4644 = vmul.f32 %v4054, %v4516
      %v4645 = vmul.f32 %v4056, %v4517
      %v4646 = vmul.f32 %v4058, %v4518
      %v4647 = vmul.f32 %v4060, %v4519
      %v4648 = vmul.f32 %v4062, %v4520
      %v4649 = vmul.f32 %v4064, %v4521
      %v4650 = vmul.f32 %v4066, %v4522
      %v4651 = vmul.f32 %v4068, %v4523
      %v4652 = vmul.f32 %v4070, %v4524
      %v4653 = vmul.f32 %v4072, %v4525
      %v4654 = vmul.f32 %v4074, %v4526
      %v4655 = vmul.f32 %v4076, %v4527
      %v4656 = vmul.f32 %v4078, %v4528
      %v4657 = vmul.f32 %v4080, %v4529
      %v4658 = vmul.f32 %v4082, %v4530
      %v4659 = vmul.f32 %v4084, %v4531
      %v4660 = vmul.f32 %v4086, %v4532
      %v4661 = vmul.f32 %v4088, %v4533
      %v4662 = vmul.f32 %v4090, %v4534
      %v4663 = vmul.f32 %v4092, %v4535
      %v4664 = vmul.f32 %v4094, %v4536
      %v4665 = vmul.f32 %v4096, %v4537
      %v4666 = vmul.f32 %v4098, %v4538
      %v4667 = vmul.f32 %v4100, %v4539
      %v4668 = vmul.f32 %v4102, %v4540
      %v4669 = vmul.f32 %v4104, %v4541
      %v4670 = vmul.f32 %v4106, %v4542
      %v4671 = vmul.f32 %v4108, %v4543
      %v4672 = vmul.f32 %v4110, %v4544
      %v4673 = vmul.f32 %v4112, %v4545
      %v4674 = vmul.f32 %v4114, %v4546
      %v4675 = vmul.f32 %v4116, %v4547
      %v4676 = vmul.f32 %v4118, %v4548
      %v4677 = vmul.f32 %v4120, %v4549
      %v4678 = vmul.f32 %v4122, %v4550
      %v4679 = vmul.f32 %v4124, %v4551
      %v4680 = vmul.f32 %v4126, %v4552
      %v4681 = vmul.f32 %v4128, %v4553
      %v4682 = vmul.f32 %v4130, %v4554
      %v4683 = vmul.f32 %v4132, %v4555
      %v4684 = vmul.f32 %v4134, %v4556
      %v4685 = vmul.f32 %v4136, %v4557
      %v4686 = vmul.f32 %v4138, %v4558
      %v4687 = vmul.f32 %v4140, %v4559
      %v4688 = vmul.f32 %v4142, %v4560
      %v4689 = vmul.f32 %v4144, %v4561
      %v4690 = vmul.f32 %v4146, %v4562
      %v4691 = vmul.f32 %v4148, %v4563
      %v4692 = vmul.f32 %v4150, %v4564
      %v4693 = vmul.f32 %v4152, %v4565
      %v4694 = vmul.f32 %v4154, %v4566
      %v4695 = vmul.f32 %v4156, %v4567
      %v4696 = vmul.f32 %v4158, %v4568
      %v4697 = vmul.f32 %v4160, %v4569
      %v4698 = vmul.f32 %v4162, %v4570
      %v4699 = vmul.f32 %v4164, %v4571
      %v4700 = vmul.f32 %v4166, %v4572
      %v4701 = vmul.f32 %v4168, %v4573
      %v4702 = vmul.f32 %v4170, %v4574
      %v4703 = vmul.f32 %v4172, %v4575
      %v4704 = vmul.f32 %v4174, %v4576
      %v4705 = vmul.f32 %v4176, %v4577
      %v4706 = vmul.f32 %v4178, %v4578
      %v4707 = vmul.f32 %v4180, %v4579
      %v4708 = vmul.f32 %v4182, %v4580
      %v4709 = vmul.f32 %v4184, %v4581
      %v4710 = vmul.f32 %v4186, %v4582
      %v4711 = vmul.f32 %v4188, %v4583
      %v4712 = vmul.f32 %v4190, %v4584
      %v4713 = vmul.f32 %v4192, %v4585
      %v4714 = vmul.f32 %v4194, %v4586
      %v4715 = vmul.f32 %v4196, %v4587
      %v4716 = vmul.f32 %v4198, %v4588
      %v4717 = vmul.f32 %v4200, %v4589
      %v4718 = vmul.f32 %v4202, %v4590
      %v4719 = vmul.f32 %v4204, %v4591
      %v4720 = vmul.f32 %v4206, %v4592
      %v4721 = vmul.f32 %v4208, %v4593
      %v4722 = vmul.f32 %v4210, %v4594
      %v4723 = vpack.c.bf16 %v4595, %v4595
      %v4724 = vpack.c.bf16 %v4596, %v4596
      %v4725 = vpack.c.bf16 %v4597, %v4597
      %v4726 = vpack.c.bf16 %v4598, %v4598
      %v4727 = vpack.c.bf16 %v4599, %v4599
      %v4728 = vpack.c.bf16 %v4600, %v4600
      %v4729 = vpack.c.bf16 %v4601, %v4601
      %v4730 = vpack.c.bf16 %v4602, %v4602
      %v4731 = vpack.c.bf16 %v4603, %v4603
      %v4732 = vpack.c.bf16 %v4604, %v4604
      %v4733 = vpack.c.bf16 %v4605, %v4605
      %v4734 = vpack.c.bf16 %v4606, %v4606
      %v4735 = vpack.c.bf16 %v4607, %v4607
      %v4736 = vpack.c.bf16 %v4608, %v4608
      %v4737 = vpack.c.bf16 %v4609, %v4609
      %v4738 = vpack.c.bf16 %v4610, %v4610
      %v4739 = vpack.c.bf16 %v4611, %v4611
      %v4740 = vpack.c.bf16 %v4612, %v4612
      %v4741 = vpack.c.bf16 %v4613, %v4613
      %v4742 = vpack.c.bf16 %v4614, %v4614
      %v4743 = vpack.c.bf16 %v4615, %v4615
      %v4744 = vpack.c.bf16 %v4616, %v4616
      %v4745 = vpack.c.bf16 %v4617, %v4617
      %v4746 = vpack.c.bf16 %v4618, %v4618
      %v4747 = vpack.c.bf16 %v4619, %v4619
      %v4748 = vpack.c.bf16 %v4620, %v4620
      %v4749 = vpack.c.bf16 %v4621, %v4621
      %v4750 = vpack.c.bf16 %v4622, %v4622
      %v4751 = vpack.c.bf16 %v4623, %v4623
      %v4752 = vpack.c.bf16 %v4624, %v4624
      %v4753 = vpack.c.bf16 %v4625, %v4625
      %v4754 = vpack.c.bf16 %v4626, %v4626
      %v4755 = vpack.c.bf16 %v4627, %v4627
      %v4756 = vpack.c.bf16 %v4628, %v4628
      %v4757 = vpack.c.bf16 %v4629, %v4629
      %v4758 = vpack.c.bf16 %v4630, %v4630
      %v4759 = vpack.c.bf16 %v4631, %v4631
      %v4760 = vpack.c.bf16 %v4632, %v4632
      %v4761 = vpack.c.bf16 %v4633, %v4633
      %v4762 = vpack.c.bf16 %v4634, %v4634
      %v4763 = vpack.c.bf16 %v4635, %v4635
      %v4764 = vpack.c.bf16 %v4636, %v4636
      %v4765 = vpack.c.bf16 %v4637, %v4637
      %v4766 = vpack.c.bf16 %v4638, %v4638
      %v4767 = vpack.c.bf16 %v4639, %v4639
      %v4768 = vpack.c.bf16 %v4640, %v4640
      %v4769 = vpack.c.bf16 %v4641, %v4641
      %v4770 = vpack.c.bf16 %v4642, %v4642
      %v4771 = vpack.c.bf16 %v4643, %v4643
      %v4772 = vpack.c.bf16 %v4644, %v4644
      %v4773 = vpack.c.bf16 %v4645, %v4645
      %v4774 = vpack.c.bf16 %v4646, %v4646
      %v4775 = vpack.c.bf16 %v4647, %v4647
      %v4776 = vpack.c.bf16 %v4648, %v4648
      %v4777 = vpack.c.bf16 %v4649, %v4649
      %v4778 = vpack.c.bf16 %v4650, %v4650
      %v4779 = vpack.c.bf16 %v4651, %v4651
      %v4780 = vpack.c.bf16 %v4652, %v4652
      %v4781 = vpack.c.bf16 %v4653, %v4653
      %v4782 = vpack.c.bf16 %v4654, %v4654
      %v4783 = vpack.c.bf16 %v4655, %v4655
      %v4784 = vpack.c.bf16 %v4656, %v4656
      %v4785 = vpack.c.bf16 %v4657, %v4657
      %v4786 = vpack.c.bf16 %v4658, %v4658
      %v4787 = vpack.c.bf16 %v4659, %v4659
      %v4788 = vpack.c.bf16 %v4660, %v4660
      %v4789 = vpack.c.bf16 %v4661, %v4661
      %v4790 = vpack.c.bf16 %v4662, %v4662
      %v4791 = vpack.c.bf16 %v4663, %v4663
      %v4792 = vpack.c.bf16 %v4664, %v4664
      %v4793 = vpack.c.bf16 %v4665, %v4665
      %v4794 = vpack.c.bf16 %v4666, %v4666
      %v4795 = vpack.c.bf16 %v4667, %v4667
      %v4796 = vpack.c.bf16 %v4668, %v4668
      %v4797 = vpack.c.bf16 %v4669, %v4669
      %v4798 = vpack.c.bf16 %v4670, %v4670
      %v4799 = vpack.c.bf16 %v4671, %v4671
      %v4800 = vpack.c.bf16 %v4672, %v4672
      %v4801 = vpack.c.bf16 %v4673, %v4673
      %v4802 = vpack.c.bf16 %v4674, %v4674
      %v4803 = vpack.c.bf16 %v4675, %v4675
      %v4804 = vpack.c.bf16 %v4676, %v4676
      %v4805 = vpack.c.bf16 %v4677, %v4677
      %v4806 = vpack.c.bf16 %v4678, %v4678
      %v4807 = vpack.c.bf16 %v4679, %v4679
      %v4808 = vpack.c.bf16 %v4680, %v4680
      %v4809 = vpack.c.bf16 %v4681, %v4681
      %v4810 = vpack.c.bf16 %v4682, %v4682
      %v4811 = vpack.c.bf16 %v4683, %v4683
      %v4812 = vpack.c.bf16 %v4684, %v4684
      %v4813 = vpack.c.bf16 %v4685, %v4685
      %v4814 = vpack.c.bf16 %v4686, %v4686
      %v4815 = vpack.c.bf16 %v4687, %v4687
      %v4816 = vpack.c.bf16 %v4688, %v4688
      %v4817 = vpack.c.bf16 %v4689, %v4689
      %v4818 = vpack.c.bf16 %v4690, %v4690
      %v4819 = vpack.c.bf16 %v4691, %v4691
      %v4820 = vpack.c.bf16 %v4692, %v4692
      %v4821 = vpack.c.bf16 %v4693, %v4693
      %v4822 = vpack.c.bf16 %v4694, %v4694
      %v4823 = vpack.c.bf16 %v4695, %v4695
      %v4824 = vpack.c.bf16 %v4696, %v4696
      %v4825 = vpack.c.bf16 %v4697, %v4697
      %v4826 = vpack.c.bf16 %v4698, %v4698
      %v4827 = vpack.c.bf16 %v4699, %v4699
      %v4828 = vpack.c.bf16 %v4700, %v4700
      %v4829 = vpack.c.bf16 %v4701, %v4701
      %v4830 = vpack.c.bf16 %v4702, %v4702
      %v4831 = vpack.c.bf16 %v4703, %v4703
      %v4832 = vpack.c.bf16 %v4704, %v4704
      %v4833 = vpack.c.bf16 %v4705, %v4705
      %v4834 = vpack.c.bf16 %v4706, %v4706
      %v4835 = vpack.c.bf16 %v4707, %v4707
      %v4836 = vpack.c.bf16 %v4708, %v4708
      %v4837 = vpack.c.bf16 %v4709, %v4709
      %v4838 = vpack.c.bf16 %v4710, %v4710
      %v4839 = vpack.c.bf16 %v4711, %v4711
      %v4840 = vpack.c.bf16 %v4712, %v4712
      %v4841 = vpack.c.bf16 %v4713, %v4713
      %v4842 = vpack.c.bf16 %v4714, %v4714
      %v4843 = vpack.c.bf16 %v4715, %v4715
      %v4844 = vpack.c.bf16 %v4716, %v4716
      %v4845 = vpack.c.bf16 %v4717, %v4717
      %v4846 = vpack.c.bf16 %v4718, %v4718
      %v4847 = vpack.c.bf16 %v4719, %v4719
      %v4848 = vpack.c.bf16 %v4720, %v4720
      %v4849 = vpack.c.bf16 %v4721, %v4721
      %v4850 = vpack.c.bf16 %v4722, %v4722
      %v4867 = vunpack.c.l.b16 %v4723
      %v4868 = vunpack.c.l.b16 %v4724
      %v4869 = vunpack.c.l.b16 %v4725
      %v4870 = vunpack.c.l.b16 %v4726
      %v4871 = vunpack.c.l.b16 %v4727
      %v4872 = vunpack.c.l.b16 %v4728
      %v4873 = vunpack.c.l.b16 %v4729
      %v4874 = vunpack.c.l.b16 %v4730
      %v4875 = vunpack.c.l.b16 %v4731
      %v4876 = vunpack.c.l.b16 %v4732
      %v4877 = vunpack.c.l.b16 %v4733
      %v4878 = vunpack.c.l.b16 %v4734
      %v4879 = vunpack.c.l.b16 %v4735
      %v4880 = vunpack.c.l.b16 %v4736
      %v4881 = vunpack.c.l.b16 %v4737
      %v4882 = vunpack.c.l.b16 %v4738
      %v4883 = vpack.c.b16 %v4868, %v4867
      %v4884 = vpack.c.b16 %v4870, %v4869
      %v4885 = vpack.c.b16 %v4872, %v4871
      %v4886 = vpack.c.b16 %v4874, %v4873
      %v4887 = vpack.c.b16 %v4876, %v4875
      %v4888 = vpack.c.b16 %v4878, %v4877
      %v4889 = vpack.c.b16 %v4880, %v4879
      %v4890 = vpack.c.b16 %v4882, %v4881
      %v4915 = vunpack.c.l.b16 %v1930
      %v4916 = vunpack.c.l.b16 %v1931
      %v4917 = vunpack.c.l.b16 %v1932
      %v4918 = vunpack.c.l.b16 %v1933
      %v4919 = vunpack.c.l.b16 %v1934
      %v4920 = vunpack.c.l.b16 %v1935
      %v4921 = vunpack.c.l.b16 %v1936
      %v4922 = vunpack.c.l.b16 %v1937
      %v4923 = vunpack.c.l.b16 %v1938
      %v4924 = vunpack.c.l.b16 %v1939
      %v4925 = vunpack.c.l.b16 %v1940
      %v4926 = vunpack.c.l.b16 %v1941
      %v4927 = vunpack.c.l.b16 %v1942
      %v4928 = vunpack.c.l.b16 %v1943
      %v4929 = vunpack.c.l.b16 %v1944
      %v4930 = vunpack.c.l.b16 %v1945
      %v4931 = vpack.c.b16 %v4916, %v4915
      %v4932 = vpack.c.b16 %v4918, %v4917
      %v4933 = vpack.c.b16 %v4920, %v4919
      %v4934 = vpack.c.b16 %v4922, %v4921
      %v4935 = vpack.c.b16 %v4924, %v4923
      %v4936 = vpack.c.b16 %v4926, %v4925
      %v4937 = vpack.c.b16 %v4928, %v4927
      %v4938 = vpack.c.b16 %v4930, %v4929
      %4947 = vmatpush.bf16.msra.mxu0 %v4938
      %4948 = vmatpush.bf16.msra.mxu0 %v4937
      %4949 = vmatpush.bf16.msra.mxu0 %v4936
      %4950 = vmatpush.bf16.msra.mxu0 %v4935
      %4951 = vmatpush.bf16.msra.mxu0 %v4934
      %4952 = vmatpush.bf16.msra.mxu0 %v4933
      %4953 = vmatpush.bf16.msra.mxu0 %v4932
      %4954 = vmatpush.bf16.msra.mxu0 %v4931
      %4955 = vmatmul.bf16.gmra.mxu0 %v4883
      %v4956 = vpop.f32.mrf.mxu0
      %v4957 = vadd.f32 0.0, %v4956
      %v4958 = vpop.f32.mrf.mxu0
      %v4959 = vadd.f32 0.0, %v4958
      %4960 = vmatmul.bf16.gmra.mxu0 %v4884
      %v4961 = vpop.f32.mrf.mxu0
      %v4962 = vadd.f32 0.0, %v4961
      %v4963 = vpop.f32.mrf.mxu0
      %v4964 = vadd.f32 0.0, %v4963
      %4965 = vmatmul.bf16.gmra.mxu0 %v4885
      %v4966 = vpop.f32.mrf.mxu0
      %v4967 = vadd.f32 0.0, %v4966
      %v4968 = vpop.f32.mrf.mxu0
      %v4969 = vadd.f32 0.0, %v4968
      %4970 = vmatmul.bf16.gmra.mxu0 %v4886
      %v4971 = vpop.f32.mrf.mxu0
      %v4972 = vadd.f32 0.0, %v4971
      %v4973 = vpop.f32.mrf.mxu0
      %v4974 = vadd.f32 0.0, %v4973
      %4975 = vmatmul.bf16.gmra.mxu0 %v4887
      %v4976 = vpop.f32.mrf.mxu0
      %v4977 = vadd.f32 0.0, %v4976
      %v4978 = vpop.f32.mrf.mxu0
      %v4979 = vadd.f32 0.0, %v4978
      %4980 = vmatmul.bf16.gmra.mxu0 %v4888
      %v4981 = vpop.f32.mrf.mxu0
      %v4982 = vadd.f32 0.0, %v4981
      %v4983 = vpop.f32.mrf.mxu0
      %v4984 = vadd.f32 0.0, %v4983
      %4985 = vmatmul.bf16.gmra.mxu0 %v4889
      %v4986 = vpop.f32.mrf.mxu0
      %v4987 = vadd.f32 0.0, %v4986
      %v4988 = vpop.f32.mrf.mxu0
      %v4989 = vadd.f32 0.0, %v4988
      %4990 = vmatmul.bf16.gmra.mxu0 %v4890
      %v4991 = vpop.f32.mrf.mxu0
      %v4992 = vadd.f32 0.0, %v4991
      %v4993 = vpop.f32.mrf.mxu0
      %v4994 = vadd.f32 0.0, %v4993
      %4995 = vdwg.mxu0
      %v5012 = vunpack.c.l.b16 %v4739
      %v5013 = vunpack.c.l.b16 %v4740
      %v5014 = vunpack.c.l.b16 %v4741
      %v5015 = vunpack.c.l.b16 %v4742
      %v5016 = vunpack.c.l.b16 %v4743
      %v5017 = vunpack.c.l.b16 %v4744
      %v5018 = vunpack.c.l.b16 %v4745
      %v5019 = vunpack.c.l.b16 %v4746
      %v5020 = vunpack.c.l.b16 %v4747
      %v5021 = vunpack.c.l.b16 %v4748
      %v5022 = vunpack.c.l.b16 %v4749
      %v5023 = vunpack.c.l.b16 %v4750
      %v5024 = vunpack.c.l.b16 %v4751
      %v5025 = vunpack.c.l.b16 %v4752
      %v5026 = vunpack.c.l.b16 %v4753
      %v5027 = vunpack.c.l.b16 %v4754
      %v5028 = vpack.c.b16 %v5013, %v5012
      %v5029 = vpack.c.b16 %v5015, %v5014
      %v5030 = vpack.c.b16 %v5017, %v5016
      %v5031 = vpack.c.b16 %v5019, %v5018
      %v5032 = vpack.c.b16 %v5021, %v5020
      %v5033 = vpack.c.b16 %v5023, %v5022
      %v5034 = vpack.c.b16 %v5025, %v5024
      %v5035 = vpack.c.b16 %v5027, %v5026
      %v5060 = vunpack.c.l.b16 %v1946
      %v5061 = vunpack.c.l.b16 %v1947
      %v5062 = vunpack.c.l.b16 %v1948
      %v5063 = vunpack.c.l.b16 %v1949
      %v5064 = vunpack.c.l.b16 %v1950
      %v5065 = vunpack.c.l.b16 %v1951
      %v5066 = vunpack.c.l.b16 %v1952
      %v5067 = vunpack.c.l.b16 %v1953
      %v5068 = vunpack.c.l.b16 %v1954
      %v5069 = vunpack.c.l.b16 %v1955
      %v5070 = vunpack.c.l.b16 %v1956
      %v5071 = vunpack.c.l.b16 %v1957
      %v5072 = vunpack.c.l.b16 %v1958
      %v5073 = vunpack.c.l.b16 %v1959
      %v5074 = vunpack.c.l.b16 %v1960
      %v5075 = vunpack.c.l.b16 %v1961
      %v5076 = vpack.c.b16 %v5061, %v5060
      %v5077 = vpack.c.b16 %v5063, %v5062
      %v5078 = vpack.c.b16 %v5065, %v5064
      %v5079 = vpack.c.b16 %v5067, %v5066
      %v5080 = vpack.c.b16 %v5069, %v5068
      %v5081 = vpack.c.b16 %v5071, %v5070
      %v5082 = vpack.c.b16 %v5073, %v5072
      %v5083 = vpack.c.b16 %v5075, %v5074
      %5092 = vmatpush.bf16.msra.mxu0 %v5083
      %5093 = vmatpush.bf16.msra.mxu0 %v5082
      %5094 = vmatpush.bf16.msra.mxu0 %v5081
      %5095 = vmatpush.bf16.msra.mxu0 %v5080
      %5096 = vmatpush.bf16.msra.mxu0 %v5079
      %5097 = vmatpush.bf16.msra.mxu0 %v5078
      %5098 = vmatpush.bf16.msra.mxu0 %v5077
      %5099 = vmatpush.bf16.msra.mxu0 %v5076
      %5100 = vmatmul.bf16.gmra.mxu0 %v5028
      %v5101 = vpop.f32.mrf.mxu0
      %v5102 = vadd.f32 0.0, %v5101
      %v5103 = vpop.f32.mrf.mxu0
      %v5104 = vadd.f32 0.0, %v5103
      %5105 = vmatmul.bf16.gmra.mxu0 %v5029
      %v5106 = vpop.f32.mrf.mxu0
      %v5107 = vadd.f32 0.0, %v5106
      %v5108 = vpop.f32.mrf.mxu0
      %v5109 = vadd.f32 0.0, %v5108
      %5110 = vmatmul.bf16.gmra.mxu0 %v5030
      %v5111 = vpop.f32.mrf.mxu0
      %v5112 = vadd.f32 0.0, %v5111
      %v5113 = vpop.f32.mrf.mxu0
      %v5114 = vadd.f32 0.0, %v5113
      %5115 = vmatmul.bf16.gmra.mxu0 %v5031
      %v5116 = vpop.f32.mrf.mxu0
      %v5117 = vadd.f32 0.0, %v5116
      %v5118 = vpop.f32.mrf.mxu0
      %v5119 = vadd.f32 0.0, %v5118
      %5120 = vmatmul.bf16.gmra.mxu0 %v5032
      %v5121 = vpop.f32.mrf.mxu0
      %v5122 = vadd.f32 0.0, %v5121
      %v5123 = vpop.f32.mrf.mxu0
      %v5124 = vadd.f32 0.0, %v5123
      %5125 = vmatmul.bf16.gmra.mxu0 %v5033
      %v5126 = vpop.f32.mrf.mxu0
      %v5127 = vadd.f32 0.0, %v5126
      %v5128 = vpop.f32.mrf.mxu0
      %v5129 = vadd.f32 0.0, %v5128
      %5130 = vmatmul.bf16.gmra.mxu0 %v5034
      %v5131 = vpop.f32.mrf.mxu0
      %v5132 = vadd.f32 0.0, %v5131
      %v5133 = vpop.f32.mrf.mxu0
      %v5134 = vadd.f32 0.0, %v5133
      %5135 = vmatmul.bf16.gmra.mxu0 %v5035
      %v5136 = vpop.f32.mrf.mxu0
      %v5137 = vadd.f32 0.0, %v5136
      %v5138 = vpop.f32.mrf.mxu0
      %v5139 = vadd.f32 0.0, %v5138
      %5140 = vdwg.mxu0
      %v5157 = vunpack.c.l.b16 %v4755
      %v5158 = vunpack.c.l.b16 %v4756
      %v5159 = vunpack.c.l.b16 %v4757
      %v5160 = vunpack.c.l.b16 %v4758
      %v5161 = vunpack.c.l.b16 %v4759
      %v5162 = vunpack.c.l.b16 %v4760
      %v5163 = vunpack.c.l.b16 %v4761
      %v5164 = vunpack.c.l.b16 %v4762
      %v5165 = vunpack.c.l.b16 %v4763
      %v5166 = vunpack.c.l.b16 %v4764
      %v5167 = vunpack.c.l.b16 %v4765
      %v5168 = vunpack.c.l.b16 %v4766
      %v5169 = vunpack.c.l.b16 %v4767
      %v5170 = vunpack.c.l.b16 %v4768
      %v5171 = vunpack.c.l.b16 %v4769
      %v5172 = vunpack.c.l.b16 %v4770
      %v5173 = vpack.c.b16 %v5158, %v5157
      %v5174 = vpack.c.b16 %v5160, %v5159
      %v5175 = vpack.c.b16 %v5162, %v5161
      %v5176 = vpack.c.b16 %v5164, %v5163
      %v5177 = vpack.c.b16 %v5166, %v5165
      %v5178 = vpack.c.b16 %v5168, %v5167
      %v5179 = vpack.c.b16 %v5170, %v5169
      %v5180 = vpack.c.b16 %v5172, %v5171
      %v5205 = vunpack.c.l.b16 %v1962
      %v5206 = vunpack.c.l.b16 %v1963
      %v5207 = vunpack.c.l.b16 %v1964
      %v5208 = vunpack.c.l.b16 %v1965
      %v5209 = vunpack.c.l.b16 %v1966
      %v5210 = vunpack.c.l.b16 %v1967
      %v5211 = vunpack.c.l.b16 %v1968
      %v5212 = vunpack.c.l.b16 %v1969
      %v5213 = vunpack.c.l.b16 %v1970
      %v5214 = vunpack.c.l.b16 %v1971
      %v5215 = vunpack.c.l.b16 %v1972
      %v5216 = vunpack.c.l.b16 %v1973
      %v5217 = vunpack.c.l.b16 %v1974
      %v5218 = vunpack.c.l.b16 %v1975
      %v5219 = vunpack.c.l.b16 %v1976
      %v5220 = vunpack.c.l.b16 %v1977
      %v5221 = vpack.c.b16 %v5206, %v5205
      %v5222 = vpack.c.b16 %v5208, %v5207
      %v5223 = vpack.c.b16 %v5210, %v5209
      %v5224 = vpack.c.b16 %v5212, %v5211
      %v5225 = vpack.c.b16 %v5214, %v5213
      %v5226 = vpack.c.b16 %v5216, %v5215
      %v5227 = vpack.c.b16 %v5218, %v5217
      %v5228 = vpack.c.b16 %v5220, %v5219
      %5237 = vmatpush.bf16.msra.mxu0 %v5228
      %5238 = vmatpush.bf16.msra.mxu0 %v5227
      %5239 = vmatpush.bf16.msra.mxu0 %v5226
      %5240 = vmatpush.bf16.msra.mxu0 %v5225
      %5241 = vmatpush.bf16.msra.mxu0 %v5224
      %5242 = vmatpush.bf16.msra.mxu0 %v5223
      %5243 = vmatpush.bf16.msra.mxu0 %v5222
      %5244 = vmatpush.bf16.msra.mxu0 %v5221
      %5245 = vmatmul.bf16.gmra.mxu0 %v5173
      %v5246 = vpop.f32.mrf.mxu0
      %v5247 = vadd.f32 0.0, %v5246
      %v5248 = vpop.f32.mrf.mxu0
      %v5249 = vadd.f32 0.0, %v5248
      %5250 = vmatmul.bf16.gmra.mxu0 %v5174
      %v5251 = vpop.f32.mrf.mxu0
      %v5252 = vadd.f32 0.0, %v5251
      %v5253 = vpop.f32.mrf.mxu0
      %v5254 = vadd.f32 0.0, %v5253
      %5255 = vmatmul.bf16.gmra.mxu0 %v5175
      %v5256 = vpop.f32.mrf.mxu0
      %v5257 = vadd.f32 0.0, %v5256
      %v5258 = vpop.f32.mrf.mxu0
      %v5259 = vadd.f32 0.0, %v5258
      %5260 = vmatmul.bf16.gmra.mxu0 %v5176
      %v5261 = vpop.f32.mrf.mxu0
      %v5262 = vadd.f32 0.0, %v5261
      %v5263 = vpop.f32.mrf.mxu0
      %v5264 = vadd.f32 0.0, %v5263
      %5265 = vmatmul.bf16.gmra.mxu0 %v5177
      %v5266 = vpop.f32.mrf.mxu0
      %v5267 = vadd.f32 0.0, %v5266
      %v5268 = vpop.f32.mrf.mxu0
      %v5269 = vadd.f32 0.0, %v5268
      %5270 = vmatmul.bf16.gmra.mxu0 %v5178
      %v5271 = vpop.f32.mrf.mxu0
      %v5272 = vadd.f32 0.0, %v5271
      %v5273 = vpop.f32.mrf.mxu0
      %v5274 = vadd.f32 0.0, %v5273
      %5275 = vmatmul.bf16.gmra.mxu0 %v5179
      %v5276 = vpop.f32.mrf.mxu0
      %v5277 = vadd.f32 0.0, %v5276
      %v5278 = vpop.f32.mrf.mxu0
      %v5279 = vadd.f32 0.0, %v5278
      %5280 = vmatmul.bf16.gmra.mxu0 %v5180
      %v5281 = vpop.f32.mrf.mxu0
      %v5282 = vadd.f32 0.0, %v5281
      %v5283 = vpop.f32.mrf.mxu0
      %v5284 = vadd.f32 0.0, %v5283
      %5285 = vdwg.mxu0
      %v5302 = vunpack.c.l.b16 %v4771
      %v5303 = vunpack.c.l.b16 %v4772
      %v5304 = vunpack.c.l.b16 %v4773
      %v5305 = vunpack.c.l.b16 %v4774
      %v5306 = vunpack.c.l.b16 %v4775
      %v5307 = vunpack.c.l.b16 %v4776
      %v5308 = vunpack.c.l.b16 %v4777
      %v5309 = vunpack.c.l.b16 %v4778
      %v5310 = vunpack.c.l.b16 %v4779
      %v5311 = vunpack.c.l.b16 %v4780
      %v5312 = vunpack.c.l.b16 %v4781
      %v5313 = vunpack.c.l.b16 %v4782
      %v5314 = vunpack.c.l.b16 %v4783
      %v5315 = vunpack.c.l.b16 %v4784
      %v5316 = vunpack.c.l.b16 %v4785
      %v5317 = vunpack.c.l.b16 %v4786
      %v5318 = vpack.c.b16 %v5303, %v5302
      %v5319 = vpack.c.b16 %v5305, %v5304
      %v5320 = vpack.c.b16 %v5307, %v5306
      %v5321 = vpack.c.b16 %v5309, %v5308
      %v5322 = vpack.c.b16 %v5311, %v5310
      %v5323 = vpack.c.b16 %v5313, %v5312
      %v5324 = vpack.c.b16 %v5315, %v5314
      %v5325 = vpack.c.b16 %v5317, %v5316
      %v5350 = vunpack.c.l.b16 %v1978
      %v5351 = vunpack.c.l.b16 %v1979
      %v5352 = vunpack.c.l.b16 %v1980
      %v5353 = vunpack.c.l.b16 %v1981
      %v5354 = vunpack.c.l.b16 %v1982
      %v5355 = vunpack.c.l.b16 %v1983
      %v5356 = vunpack.c.l.b16 %v1984
      %v5357 = vunpack.c.l.b16 %v1985
      %v5358 = vunpack.c.l.b16 %v1986
      %v5359 = vunpack.c.l.b16 %v1987
      %v5360 = vunpack.c.l.b16 %v1988
      %v5361 = vunpack.c.l.b16 %v1989
      %v5362 = vunpack.c.l.b16 %v1990
      %v5363 = vunpack.c.l.b16 %v1991
      %v5364 = vunpack.c.l.b16 %v1992
      %v5365 = vunpack.c.l.b16 %v1993
      %v5366 = vpack.c.b16 %v5351, %v5350
      %v5367 = vpack.c.b16 %v5353, %v5352
      %v5368 = vpack.c.b16 %v5355, %v5354
      %v5369 = vpack.c.b16 %v5357, %v5356
      %v5370 = vpack.c.b16 %v5359, %v5358
      %v5371 = vpack.c.b16 %v5361, %v5360
      %v5372 = vpack.c.b16 %v5363, %v5362
      %v5373 = vpack.c.b16 %v5365, %v5364
      %5382 = vmatpush.bf16.msra.mxu0 %v5373
      %5383 = vmatpush.bf16.msra.mxu0 %v5372
      %5384 = vmatpush.bf16.msra.mxu0 %v5371
      %5385 = vmatpush.bf16.msra.mxu0 %v5370
      %5386 = vmatpush.bf16.msra.mxu0 %v5369
      %5387 = vmatpush.bf16.msra.mxu0 %v5368
      %5388 = vmatpush.bf16.msra.mxu0 %v5367
      %5389 = vmatpush.bf16.msra.mxu0 %v5366
      %5390 = vmatmul.bf16.gmra.mxu0 %v5318
      %v5391 = vpop.f32.mrf.mxu0
      %v5392 = vadd.f32 0.0, %v5391
      %v5393 = vpop.f32.mrf.mxu0
      %v5394 = vadd.f32 0.0, %v5393
      %5395 = vmatmul.bf16.gmra.mxu0 %v5319
      %v5396 = vpop.f32.mrf.mxu0
      %v5397 = vadd.f32 0.0, %v5396
      %v5398 = vpop.f32.mrf.mxu0
      %v5399 = vadd.f32 0.0, %v5398
      %5400 = vmatmul.bf16.gmra.mxu0 %v5320
      %v5401 = vpop.f32.mrf.mxu0
      %v5402 = vadd.f32 0.0, %v5401
      %v5403 = vpop.f32.mrf.mxu0
      %v5404 = vadd.f32 0.0, %v5403
      %5405 = vmatmul.bf16.gmra.mxu0 %v5321
      %v5406 = vpop.f32.mrf.mxu0
      %v5407 = vadd.f32 0.0, %v5406
      %v5408 = vpop.f32.mrf.mxu0
      %v5409 = vadd.f32 0.0, %v5408
      %5410 = vmatmul.bf16.gmra.mxu0 %v5322
      %v5411 = vpop.f32.mrf.mxu0
      %v5412 = vadd.f32 0.0, %v5411
      %v5413 = vpop.f32.mrf.mxu0
      %v5414 = vadd.f32 0.0, %v5413
      %5415 = vmatmul.bf16.gmra.mxu0 %v5323
      %v5416 = vpop.f32.mrf.mxu0
      %v5417 = vadd.f32 0.0, %v5416
      %v5418 = vpop.f32.mrf.mxu0
      %v5419 = vadd.f32 0.0, %v5418
      %5420 = vmatmul.bf16.gmra.mxu0 %v5324
      %v5421 = vpop.f32.mrf.mxu0
      %v5422 = vadd.f32 0.0, %v5421
      %v5423 = vpop.f32.mrf.mxu0
      %v5424 = vadd.f32 0.0, %v5423
      %5425 = vmatmul.bf16.gmra.mxu0 %v5325
      %v5426 = vpop.f32.mrf.mxu0
      %v5427 = vadd.f32 0.0, %v5426
      %v5428 = vpop.f32.mrf.mxu0
      %v5429 = vadd.f32 0.0, %v5428
      %5430 = vdwg.mxu0
      %v5447 = vunpack.c.l.b16 %v4787
      %v5448 = vunpack.c.l.b16 %v4788
      %v5449 = vunpack.c.l.b16 %v4789
      %v5450 = vunpack.c.l.b16 %v4790
      %v5451 = vunpack.c.l.b16 %v4791
      %v5452 = vunpack.c.l.b16 %v4792
      %v5453 = vunpack.c.l.b16 %v4793
      %v5454 = vunpack.c.l.b16 %v4794
      %v5455 = vunpack.c.l.b16 %v4795
      %v5456 = vunpack.c.l.b16 %v4796
      %v5457 = vunpack.c.l.b16 %v4797
      %v5458 = vunpack.c.l.b16 %v4798
      %v5459 = vunpack.c.l.b16 %v4799
      %v5460 = vunpack.c.l.b16 %v4800
      %v5461 = vunpack.c.l.b16 %v4801
      %v5462 = vunpack.c.l.b16 %v4802
      %v5463 = vpack.c.b16 %v5448, %v5447
      %v5464 = vpack.c.b16 %v5450, %v5449
      %v5465 = vpack.c.b16 %v5452, %v5451
      %v5466 = vpack.c.b16 %v5454, %v5453
      %v5467 = vpack.c.b16 %v5456, %v5455
      %v5468 = vpack.c.b16 %v5458, %v5457
      %v5469 = vpack.c.b16 %v5460, %v5459
      %v5470 = vpack.c.b16 %v5462, %v5461
      %v5495 = vunpack.c.l.b16 %v1994
      %v5496 = vunpack.c.l.b16 %v1995
      %v5497 = vunpack.c.l.b16 %v1996
      %v5498 = vunpack.c.l.b16 %v1997
      %v5499 = vunpack.c.l.b16 %v1998
      %v5500 = vunpack.c.l.b16 %v1999
      %v5501 = vunpack.c.l.b16 %v2000
      %v5502 = vunpack.c.l.b16 %v2001
      %v5503 = vunpack.c.l.b16 %v2002
      %v5504 = vunpack.c.l.b16 %v2003
      %v5505 = vunpack.c.l.b16 %v2004
      %v5506 = vunpack.c.l.b16 %v2005
      %v5507 = vunpack.c.l.b16 %v2006
      %v5508 = vunpack.c.l.b16 %v2007
      %v5509 = vunpack.c.l.b16 %v2008
      %v5510 = vunpack.c.l.b16 %v2009
      %v5511 = vpack.c.b16 %v5496, %v5495
      %v5512 = vpack.c.b16 %v5498, %v5497
      %v5513 = vpack.c.b16 %v5500, %v5499
      %v5514 = vpack.c.b16 %v5502, %v5501
      %v5515 = vpack.c.b16 %v5504, %v5503
      %v5516 = vpack.c.b16 %v5506, %v5505
      %v5517 = vpack.c.b16 %v5508, %v5507
      %v5518 = vpack.c.b16 %v5510, %v5509
      %5527 = vmatpush.bf16.msra.mxu0 %v5518
      %5528 = vmatpush.bf16.msra.mxu0 %v5517
      %5529 = vmatpush.bf16.msra.mxu0 %v5516
      %5530 = vmatpush.bf16.msra.mxu0 %v5515
      %5531 = vmatpush.bf16.msra.mxu0 %v5514
      %5532 = vmatpush.bf16.msra.mxu0 %v5513
      %5533 = vmatpush.bf16.msra.mxu0 %v5512
      %5534 = vmatpush.bf16.msra.mxu0 %v5511
      %5535 = vmatmul.bf16.gmra.mxu0 %v5463
      %v5536 = vpop.f32.mrf.mxu0
      %v5537 = vadd.f32 0.0, %v5536
      %v5538 = vpop.f32.mrf.mxu0
      %v5539 = vadd.f32 0.0, %v5538
      %5540 = vmatmul.bf16.gmra.mxu0 %v5464
      %v5541 = vpop.f32.mrf.mxu0
      %v5542 = vadd.f32 0.0, %v5541
      %v5543 = vpop.f32.mrf.mxu0
      %v5544 = vadd.f32 0.0, %v5543
      %5545 = vmatmul.bf16.gmra.mxu0 %v5465
      %v5546 = vpop.f32.mrf.mxu0
      %v5547 = vadd.f32 0.0, %v5546
      %v5548 = vpop.f32.mrf.mxu0
      %v5549 = vadd.f32 0.0, %v5548
      %5550 = vmatmul.bf16.gmra.mxu0 %v5466
      %v5551 = vpop.f32.mrf.mxu0
      %v5552 = vadd.f32 0.0, %v5551
      %v5553 = vpop.f32.mrf.mxu0
      %v5554 = vadd.f32 0.0, %v5553
      %5555 = vmatmul.bf16.gmra.mxu0 %v5467
      %v5556 = vpop.f32.mrf.mxu0
      %v5557 = vadd.f32 0.0, %v5556
      %v5558 = vpop.f32.mrf.mxu0
      %v5559 = vadd.f32 0.0, %v5558
      %5560 = vmatmul.bf16.gmra.mxu0 %v5468
      %v5561 = vpop.f32.mrf.mxu0
      %v5562 = vadd.f32 0.0, %v5561
      %v5563 = vpop.f32.mrf.mxu0
      %v5564 = vadd.f32 0.0, %v5563
      %5565 = vmatmul.bf16.gmra.mxu0 %v5469
      %v5566 = vpop.f32.mrf.mxu0
      %v5567 = vadd.f32 0.0, %v5566
      %v5568 = vpop.f32.mrf.mxu0
      %v5569 = vadd.f32 0.0, %v5568
      %5570 = vmatmul.bf16.gmra.mxu0 %v5470
      %v5571 = vpop.f32.mrf.mxu0
      %v5572 = vadd.f32 0.0, %v5571
      %v5573 = vpop.f32.mrf.mxu0
      %v5574 = vadd.f32 0.0, %v5573
      %5575 = vdwg.mxu0
      %v5592 = vunpack.c.l.b16 %v4803
      %v5593 = vunpack.c.l.b16 %v4804
      %v5594 = vunpack.c.l.b16 %v4805
      %v5595 = vunpack.c.l.b16 %v4806
      %v5596 = vunpack.c.l.b16 %v4807
      %v5597 = vunpack.c.l.b16 %v4808
      %v5598 = vunpack.c.l.b16 %v4809
      %v5599 = vunpack.c.l.b16 %v4810
      %v5600 = vunpack.c.l.b16 %v4811
      %v5601 = vunpack.c.l.b16 %v4812
      %v5602 = vunpack.c.l.b16 %v4813
      %v5603 = vunpack.c.l.b16 %v4814
      %v5604 = vunpack.c.l.b16 %v4815
      %v5605 = vunpack.c.l.b16 %v4816
      %v5606 = vunpack.c.l.b16 %v4817
      %v5607 = vunpack.c.l.b16 %v4818
      %v5608 = vpack.c.b16 %v5593, %v5592
      %v5609 = vpack.c.b16 %v5595, %v5594
      %v5610 = vpack.c.b16 %v5597, %v5596
      %v5611 = vpack.c.b16 %v5599, %v5598
      %v5612 = vpack.c.b16 %v5601, %v5600
      %v5613 = vpack.c.b16 %v5603, %v5602
      %v5614 = vpack.c.b16 %v5605, %v5604
      %v5615 = vpack.c.b16 %v5607, %v5606
      %v5640 = vunpack.c.l.b16 %v2010
      %v5641 = vunpack.c.l.b16 %v2011
      %v5642 = vunpack.c.l.b16 %v2012
      %v5643 = vunpack.c.l.b16 %v2013
      %v5644 = vunpack.c.l.b16 %v2014
      %v5645 = vunpack.c.l.b16 %v2015
      %v5646 = vunpack.c.l.b16 %v2016
      %v5647 = vunpack.c.l.b16 %v2017
      %v5648 = vunpack.c.l.b16 %v2018
      %v5649 = vunpack.c.l.b16 %v2019
      %v5650 = vunpack.c.l.b16 %v2020
      %v5651 = vunpack.c.l.b16 %v2021
      %v5652 = vunpack.c.l.b16 %v2022
      %v5653 = vunpack.c.l.b16 %v2023
      %v5654 = vunpack.c.l.b16 %v2024
      %v5655 = vunpack.c.l.b16 %v2025
      %v5656 = vpack.c.b16 %v5641, %v5640
      %v5657 = vpack.c.b16 %v5643, %v5642
      %v5658 = vpack.c.b16 %v5645, %v5644
      %v5659 = vpack.c.b16 %v5647, %v5646
      %v5660 = vpack.c.b16 %v5649, %v5648
      %v5661 = vpack.c.b16 %v5651, %v5650
      %v5662 = vpack.c.b16 %v5653, %v5652
      %v5663 = vpack.c.b16 %v5655, %v5654
      %5672 = vmatpush.bf16.msra.mxu0 %v5663
      %5673 = vmatpush.bf16.msra.mxu0 %v5662
      %5674 = vmatpush.bf16.msra.mxu0 %v5661
      %5675 = vmatpush.bf16.msra.mxu0 %v5660
      %5676 = vmatpush.bf16.msra.mxu0 %v5659
      %5677 = vmatpush.bf16.msra.mxu0 %v5658
      %5678 = vmatpush.bf16.msra.mxu0 %v5657
      %5679 = vmatpush.bf16.msra.mxu0 %v5656
      %5680 = vmatmul.bf16.gmra.mxu0 %v5608
      %v5681 = vpop.f32.mrf.mxu0
      %v5682 = vadd.f32 0.0, %v5681
      %v5683 = vpop.f32.mrf.mxu0
      %v5684 = vadd.f32 0.0, %v5683
      %5685 = vmatmul.bf16.gmra.mxu0 %v5609
      %v5686 = vpop.f32.mrf.mxu0
      %v5687 = vadd.f32 0.0, %v5686
      %v5688 = vpop.f32.mrf.mxu0
      %v5689 = vadd.f32 0.0, %v5688
      %5690 = vmatmul.bf16.gmra.mxu0 %v5610
      %v5691 = vpop.f32.mrf.mxu0
      %v5692 = vadd.f32 0.0, %v5691
      %v5693 = vpop.f32.mrf.mxu0
      %v5694 = vadd.f32 0.0, %v5693
      %5695 = vmatmul.bf16.gmra.mxu0 %v5611
      %v5696 = vpop.f32.mrf.mxu0
      %v5697 = vadd.f32 0.0, %v5696
      %v5698 = vpop.f32.mrf.mxu0
      %v5699 = vadd.f32 0.0, %v5698
      %5700 = vmatmul.bf16.gmra.mxu0 %v5612
      %v5701 = vpop.f32.mrf.mxu0
      %v5702 = vadd.f32 0.0, %v5701
      %v5703 = vpop.f32.mrf.mxu0
      %v5704 = vadd.f32 0.0, %v5703
      %5705 = vmatmul.bf16.gmra.mxu0 %v5613
      %v5706 = vpop.f32.mrf.mxu0
      %v5707 = vadd.f32 0.0, %v5706
      %v5708 = vpop.f32.mrf.mxu0
      %v5709 = vadd.f32 0.0, %v5708
      %5710 = vmatmul.bf16.gmra.mxu0 %v5614
      %v5711 = vpop.f32.mrf.mxu0
      %v5712 = vadd.f32 0.0, %v5711
      %v5713 = vpop.f32.mrf.mxu0
      %v5714 = vadd.f32 0.0, %v5713
      %5715 = vmatmul.bf16.gmra.mxu0 %v5615
      %v5716 = vpop.f32.mrf.mxu0
      %v5717 = vadd.f32 0.0, %v5716
      %v5718 = vpop.f32.mrf.mxu0
      %v5719 = vadd.f32 0.0, %v5718
      %5720 = vdwg.mxu0
      %v5737 = vunpack.c.l.b16 %v4819
      %v5738 = vunpack.c.l.b16 %v4820
      %v5739 = vunpack.c.l.b16 %v4821
      %v5740 = vunpack.c.l.b16 %v4822
      %v5741 = vunpack.c.l.b16 %v4823
      %v5742 = vunpack.c.l.b16 %v4824
      %v5743 = vunpack.c.l.b16 %v4825
      %v5744 = vunpack.c.l.b16 %v4826
      %v5745 = vunpack.c.l.b16 %v4827
      %v5746 = vunpack.c.l.b16 %v4828
      %v5747 = vunpack.c.l.b16 %v4829
      %v5748 = vunpack.c.l.b16 %v4830
      %v5749 = vunpack.c.l.b16 %v4831
      %v5750 = vunpack.c.l.b16 %v4832
      %v5751 = vunpack.c.l.b16 %v4833
      %v5752 = vunpack.c.l.b16 %v4834
      %v5753 = vpack.c.b16 %v5738, %v5737
      %v5754 = vpack.c.b16 %v5740, %v5739
      %v5755 = vpack.c.b16 %v5742, %v5741
      %v5756 = vpack.c.b16 %v5744, %v5743
      %v5757 = vpack.c.b16 %v5746, %v5745
      %v5758 = vpack.c.b16 %v5748, %v5747
      %v5759 = vpack.c.b16 %v5750, %v5749
      %v5760 = vpack.c.b16 %v5752, %v5751
      %v5785 = vunpack.c.l.b16 %v2026
      %v5786 = vunpack.c.l.b16 %v2027
      %v5787 = vunpack.c.l.b16 %v2028
      %v5788 = vunpack.c.l.b16 %v2029
      %v5789 = vunpack.c.l.b16 %v2030
      %v5790 = vunpack.c.l.b16 %v2031
      %v5791 = vunpack.c.l.b16 %v2032
      %v5792 = vunpack.c.l.b16 %v2033
      %v5793 = vunpack.c.l.b16 %v2034
      %v5794 = vunpack.c.l.b16 %v2035
      %v5795 = vunpack.c.l.b16 %v2036
      %v5796 = vunpack.c.l.b16 %v2037
      %v5797 = vunpack.c.l.b16 %v2038
      %v5798 = vunpack.c.l.b16 %v2039
      %v5799 = vunpack.c.l.b16 %v2040
      %v5800 = vunpack.c.l.b16 %v2041
      %v5801 = vpack.c.b16 %v5786, %v5785
      %v5802 = vpack.c.b16 %v5788, %v5787
      %v5803 = vpack.c.b16 %v5790, %v5789
      %v5804 = vpack.c.b16 %v5792, %v5791
      %v5805 = vpack.c.b16 %v5794, %v5793
      %v5806 = vpack.c.b16 %v5796, %v5795
      %v5807 = vpack.c.b16 %v5798, %v5797
      %v5808 = vpack.c.b16 %v5800, %v5799
      %5817 = vmatpush.bf16.msra.mxu0 %v5808
      %5818 = vmatpush.bf16.msra.mxu0 %v5807
      %5819 = vmatpush.bf16.msra.mxu0 %v5806
      %5820 = vmatpush.bf16.msra.mxu0 %v5805
      %5821 = vmatpush.bf16.msra.mxu0 %v5804
      %5822 = vmatpush.bf16.msra.mxu0 %v5803
      %5823 = vmatpush.bf16.msra.mxu0 %v5802
      %5824 = vmatpush.bf16.msra.mxu0 %v5801
      %5825 = vmatmul.bf16.gmra.mxu0 %v5753
      %v5826 = vpop.f32.mrf.mxu0
      %v5827 = vadd.f32 0.0, %v5826
      %v5828 = vpop.f32.mrf.mxu0
      %v5829 = vadd.f32 0.0, %v5828
      %5830 = vmatmul.bf16.gmra.mxu0 %v5754
      %v5831 = vpop.f32.mrf.mxu0
      %v5832 = vadd.f32 0.0, %v5831
      %v5833 = vpop.f32.mrf.mxu0
      %v5834 = vadd.f32 0.0, %v5833
      %5835 = vmatmul.bf16.gmra.mxu0 %v5755
      %v5836 = vpop.f32.mrf.mxu0
      %v5837 = vadd.f32 0.0, %v5836
      %v5838 = vpop.f32.mrf.mxu0
      %v5839 = vadd.f32 0.0, %v5838
      %5840 = vmatmul.bf16.gmra.mxu0 %v5756
      %v5841 = vpop.f32.mrf.mxu0
      %v5842 = vadd.f32 0.0, %v5841
      %v5843 = vpop.f32.mrf.mxu0
      %v5844 = vadd.f32 0.0, %v5843
      %5845 = vmatmul.bf16.gmra.mxu0 %v5757
      %v5846 = vpop.f32.mrf.mxu0
      %v5847 = vadd.f32 0.0, %v5846
      %v5848 = vpop.f32.mrf.mxu0
      %v5849 = vadd.f32 0.0, %v5848
      %5850 = vmatmul.bf16.gmra.mxu0 %v5758
      %v5851 = vpop.f32.mrf.mxu0
      %v5852 = vadd.f32 0.0, %v5851
      %v5853 = vpop.f32.mrf.mxu0
      %v5854 = vadd.f32 0.0, %v5853
      %5855 = vmatmul.bf16.gmra.mxu0 %v5759
      %v5856 = vpop.f32.mrf.mxu0
      %v5857 = vadd.f32 0.0, %v5856
      %v5858 = vpop.f32.mrf.mxu0
      %v5859 = vadd.f32 0.0, %v5858
      %5860 = vmatmul.bf16.gmra.mxu0 %v5760
      %v5861 = vpop.f32.mrf.mxu0
      %v5862 = vadd.f32 0.0, %v5861
      %v5863 = vpop.f32.mrf.mxu0
      %v5864 = vadd.f32 0.0, %v5863
      %5865 = vdwg.mxu0
      %v5882 = vunpack.c.l.b16 %v4835
      %v5883 = vunpack.c.l.b16 %v4836
      %v5884 = vunpack.c.l.b16 %v4837
      %v5885 = vunpack.c.l.b16 %v4838
      %v5886 = vunpack.c.l.b16 %v4839
      %v5887 = vunpack.c.l.b16 %v4840
      %v5888 = vunpack.c.l.b16 %v4841
      %v5889 = vunpack.c.l.b16 %v4842
      %v5890 = vunpack.c.l.b16 %v4843
      %v5891 = vunpack.c.l.b16 %v4844
      %v5892 = vunpack.c.l.b16 %v4845
      %v5893 = vunpack.c.l.b16 %v4846
      %v5894 = vunpack.c.l.b16 %v4847
      %v5895 = vunpack.c.l.b16 %v4848
      %v5896 = vunpack.c.l.b16 %v4849
      %v5897 = vunpack.c.l.b16 %v4850
      %v5898 = vpack.c.b16 %v5883, %v5882
      %v5899 = vpack.c.b16 %v5885, %v5884
      %v5900 = vpack.c.b16 %v5887, %v5886
      %v5901 = vpack.c.b16 %v5889, %v5888
      %v5902 = vpack.c.b16 %v5891, %v5890
      %v5903 = vpack.c.b16 %v5893, %v5892
      %v5904 = vpack.c.b16 %v5895, %v5894
      %v5905 = vpack.c.b16 %v5897, %v5896
      %v5930 = vunpack.c.l.b16 %v2042
      %v5931 = vunpack.c.l.b16 %v2043
      %v5932 = vunpack.c.l.b16 %v2044
      %v5933 = vunpack.c.l.b16 %v2045
      %v5934 = vunpack.c.l.b16 %v2046
      %v5935 = vunpack.c.l.b16 %v2047
      %v5936 = vunpack.c.l.b16 %v2048
      %v5937 = vunpack.c.l.b16 %v2049
      %v5938 = vunpack.c.l.b16 %v2050
      %v5939 = vunpack.c.l.b16 %v2051
      %v5940 = vunpack.c.l.b16 %v2052
      %v5941 = vunpack.c.l.b16 %v2053
      %v5942 = vunpack.c.l.b16 %v2054
      %v5943 = vunpack.c.l.b16 %v2055
      %v5944 = vunpack.c.l.b16 %v2056
      %v5945 = vunpack.c.l.b16 %v2057
      %v5946 = vpack.c.b16 %v5931, %v5930
      %v5947 = vpack.c.b16 %v5933, %v5932
      %v5948 = vpack.c.b16 %v5935, %v5934
      %v5949 = vpack.c.b16 %v5937, %v5936
      %v5950 = vpack.c.b16 %v5939, %v5938
      %v5951 = vpack.c.b16 %v5941, %v5940
      %v5952 = vpack.c.b16 %v5943, %v5942
      %v5953 = vpack.c.b16 %v5945, %v5944
      %5962 = vmatpush.bf16.msra.mxu0 %v5953
      %5963 = vmatpush.bf16.msra.mxu0 %v5952
      %5964 = vmatpush.bf16.msra.mxu0 %v5951
      %5965 = vmatpush.bf16.msra.mxu0 %v5950
      %5966 = vmatpush.bf16.msra.mxu0 %v5949
      %5967 = vmatpush.bf16.msra.mxu0 %v5948
      %5968 = vmatpush.bf16.msra.mxu0 %v5947
      %5969 = vmatpush.bf16.msra.mxu0 %v5946
      %5970 = vmatmul.bf16.gmra.mxu0 %v5898
      %v5971 = vpop.f32.mrf.mxu0
      %v5972 = vadd.f32 0.0, %v5971
      %v5973 = vpop.f32.mrf.mxu0
      %v5974 = vadd.f32 0.0, %v5973
      %5975 = vmatmul.bf16.gmra.mxu0 %v5899
      %v5976 = vpop.f32.mrf.mxu0
      %v5977 = vadd.f32 0.0, %v5976
      %v5978 = vpop.f32.mrf.mxu0
      %v5979 = vadd.f32 0.0, %v5978
      %5980 = vmatmul.bf16.gmra.mxu0 %v5900
      %v5981 = vpop.f32.mrf.mxu0
      %v5982 = vadd.f32 0.0, %v5981
      %v5983 = vpop.f32.mrf.mxu0
      %v5984 = vadd.f32 0.0, %v5983
      %5985 = vmatmul.bf16.gmra.mxu0 %v5901
      %v5986 = vpop.f32.mrf.mxu0
      %v5987 = vadd.f32 0.0, %v5986
      %v5988 = vpop.f32.mrf.mxu0
      %v5989 = vadd.f32 0.0, %v5988
      %5990 = vmatmul.bf16.gmra.mxu0 %v5902
      %v5991 = vpop.f32.mrf.mxu0
      %v5992 = vadd.f32 0.0, %v5991
      %v5993 = vpop.f32.mrf.mxu0
      %v5994 = vadd.f32 0.0, %v5993
      %5995 = vmatmul.bf16.gmra.mxu0 %v5903
      %v5996 = vpop.f32.mrf.mxu0
      %v5997 = vadd.f32 0.0, %v5996
      %v5998 = vpop.f32.mrf.mxu0
      %v5999 = vadd.f32 0.0, %v5998
      %6000 = vmatmul.bf16.gmra.mxu0 %v5904
      %v6001 = vpop.f32.mrf.mxu0
      %v6002 = vadd.f32 0.0, %v6001
      %v6003 = vpop.f32.mrf.mxu0
      %v6004 = vadd.f32 0.0, %v6003
      %6005 = vmatmul.bf16.gmra.mxu0 %v5905
      %v6006 = vpop.f32.mrf.mxu0
      %v6007 = vadd.f32 0.0, %v6006
      %v6008 = vpop.f32.mrf.mxu0
      %v6009 = vadd.f32 0.0, %v6008
      %6010 = vdwg.mxu0
      %6027 = vrot.lane.b32.xlu0 %v5102, 8
      %v6028 = vpop.permute.xlu0 %6027
      %6029 = vrot.lane.b32.xlu0 %v5104, 8
      %v6030 = vpop.permute.xlu0 %6029
      %6031 = vrot.lane.b32.xlu0 %v5107, 8
      %v6032 = vpop.permute.xlu0 %6031
      %6033 = vrot.lane.b32.xlu0 %v5109, 8
      %v6034 = vpop.permute.xlu0 %6033
      %6035 = vrot.lane.b32.xlu0 %v5112, 8
      %v6036 = vpop.permute.xlu0 %6035
      %6037 = vrot.lane.b32.xlu0 %v5114, 8
      %v6038 = vpop.permute.xlu0 %6037
      %6039 = vrot.lane.b32.xlu0 %v5117, 8
      %v6040 = vpop.permute.xlu0 %6039
      %6041 = vrot.lane.b32.xlu0 %v5119, 8
      %v6042 = vpop.permute.xlu0 %6041
      %6043 = vrot.lane.b32.xlu0 %v5122, 8
      %v6044 = vpop.permute.xlu0 %6043
      %6045 = vrot.lane.b32.xlu0 %v5124, 8
      %v6046 = vpop.permute.xlu0 %6045
      %6047 = vrot.lane.b32.xlu0 %v5127, 8
      %v6048 = vpop.permute.xlu0 %6047
      %6049 = vrot.lane.b32.xlu0 %v5129, 8
      %v6050 = vpop.permute.xlu0 %6049
      %6051 = vrot.lane.b32.xlu0 %v5132, 8
      %v6052 = vpop.permute.xlu0 %6051
      %6053 = vrot.lane.b32.xlu0 %v5134, 8
      %v6054 = vpop.permute.xlu0 %6053
      %6055 = vrot.lane.b32.xlu0 %v5137, 8
      %v6056 = vpop.permute.xlu0 %6055
      %6057 = vrot.lane.b32.xlu0 %v5139, 8
      %v6058 = vpop.permute.xlu0 %6057
      %6091 = vrot.lane.b32.xlu0 %v5247, 16
      %v6092 = vpop.permute.xlu0 %6091
      %6093 = vrot.lane.b32.xlu0 %v5249, 16
      %v6094 = vpop.permute.xlu0 %6093
      %6095 = vrot.lane.b32.xlu0 %v5252, 16
      %v6096 = vpop.permute.xlu0 %6095
      %6097 = vrot.lane.b32.xlu0 %v5254, 16
      %v6098 = vpop.permute.xlu0 %6097
      %6099 = vrot.lane.b32.xlu0 %v5257, 16
      %v6100 = vpop.permute.xlu0 %6099
      %6101 = vrot.lane.b32.xlu0 %v5259, 16
      %v6102 = vpop.permute.xlu0 %6101
      %6103 = vrot.lane.b32.xlu0 %v5262, 16
      %v6104 = vpop.permute.xlu0 %6103
      %6105 = vrot.lane.b32.xlu0 %v5264, 16
      %v6106 = vpop.permute.xlu0 %6105
      %6107 = vrot.lane.b32.xlu0 %v5267, 16
      %v6108 = vpop.permute.xlu0 %6107
      %6109 = vrot.lane.b32.xlu0 %v5269, 16
      %v6110 = vpop.permute.xlu0 %6109
      %6111 = vrot.lane.b32.xlu0 %v5272, 16
      %v6112 = vpop.permute.xlu0 %6111
      %6113 = vrot.lane.b32.xlu0 %v5274, 16
      %v6114 = vpop.permute.xlu0 %6113
      %6115 = vrot.lane.b32.xlu0 %v5277, 16
      %v6116 = vpop.permute.xlu0 %6115
      %6117 = vrot.lane.b32.xlu0 %v5279, 16
      %v6118 = vpop.permute.xlu0 %6117
      %6119 = vrot.lane.b32.xlu0 %v5282, 16
      %v6120 = vpop.permute.xlu0 %6119
      %6121 = vrot.lane.b32.xlu0 %v5284, 16
      %v6122 = vpop.permute.xlu0 %6121
      %6155 = vrot.lane.b32.xlu0 %v5392, 24
      %v6156 = vpop.permute.xlu0 %6155
      %6157 = vrot.lane.b32.xlu0 %v5394, 24
      %v6158 = vpop.permute.xlu0 %6157
      %6159 = vrot.lane.b32.xlu0 %v5397, 24
      %v6160 = vpop.permute.xlu0 %6159
      %6161 = vrot.lane.b32.xlu0 %v5399, 24
      %v6162 = vpop.permute.xlu0 %6161
      %6163 = vrot.lane.b32.xlu0 %v5402, 24
      %v6164 = vpop.permute.xlu0 %6163
      %6165 = vrot.lane.b32.xlu0 %v5404, 24
      %v6166 = vpop.permute.xlu0 %6165
      %6167 = vrot.lane.b32.xlu0 %v5407, 24
      %v6168 = vpop.permute.xlu0 %6167
      %6169 = vrot.lane.b32.xlu0 %v5409, 24
      %v6170 = vpop.permute.xlu0 %6169
      %6171 = vrot.lane.b32.xlu0 %v5412, 24
      %v6172 = vpop.permute.xlu0 %6171
      %6173 = vrot.lane.b32.xlu0 %v5414, 24
      %v6174 = vpop.permute.xlu0 %6173
      %6175 = vrot.lane.b32.xlu0 %v5417, 24
      %v6176 = vpop.permute.xlu0 %6175
      %6177 = vrot.lane.b32.xlu0 %v5419, 24
      %v6178 = vpop.permute.xlu0 %6177
      %6179 = vrot.lane.b32.xlu0 %v5422, 24
      %v6180 = vpop.permute.xlu0 %6179
      %6181 = vrot.lane.b32.xlu0 %v5424, 24
      %v6182 = vpop.permute.xlu0 %6181
      %6183 = vrot.lane.b32.xlu0 %v5427, 24
      %v6184 = vpop.permute.xlu0 %6183
      %6185 = vrot.lane.b32.xlu0 %v5429, 24
      %v6186 = vpop.permute.xlu0 %6185
      %6219 = vrot.lane.b32.xlu0 %v5537, 32
      %v6220 = vpop.permute.xlu0 %6219
      %6221 = vrot.lane.b32.xlu0 %v5539, 32
      %v6222 = vpop.permute.xlu0 %6221
      %6223 = vrot.lane.b32.xlu0 %v5542, 32
      %v6224 = vpop.permute.xlu0 %6223
      %6225 = vrot.lane.b32.xlu0 %v5544, 32
      %v6226 = vpop.permute.xlu0 %6225
      %6227 = vrot.lane.b32.xlu0 %v5547, 32
      %v6228 = vpop.permute.xlu0 %6227
      %6229 = vrot.lane.b32.xlu0 %v5549, 32
      %v6230 = vpop.permute.xlu0 %6229
      %6231 = vrot.lane.b32.xlu0 %v5552, 32
      %v6232 = vpop.permute.xlu0 %6231
      %6233 = vrot.lane.b32.xlu0 %v5554, 32
      %v6234 = vpop.permute.xlu0 %6233
      %6235 = vrot.lane.b32.xlu0 %v5557, 32
      %v6236 = vpop.permute.xlu0 %6235
      %6237 = vrot.lane.b32.xlu0 %v5559, 32
      %v6238 = vpop.permute.xlu0 %6237
      %6239 = vrot.lane.b32.xlu0 %v5562, 32
      %v6240 = vpop.permute.xlu0 %6239
      %6241 = vrot.lane.b32.xlu0 %v5564, 32
      %v6242 = vpop.permute.xlu0 %6241
      %6243 = vrot.lane.b32.xlu0 %v5567, 32
      %v6244 = vpop.permute.xlu0 %6243
      %6245 = vrot.lane.b32.xlu0 %v5569, 32
      %v6246 = vpop.permute.xlu0 %6245
      %6247 = vrot.lane.b32.xlu0 %v5572, 32
      %v6248 = vpop.permute.xlu0 %6247
      %6249 = vrot.lane.b32.xlu0 %v5574, 32
      %v6250 = vpop.permute.xlu0 %6249
      %6283 = vrot.lane.b32.xlu0 %v5682, 40
      %v6284 = vpop.permute.xlu0 %6283
      %6285 = vrot.lane.b32.xlu0 %v5684, 40
      %v6286 = vpop.permute.xlu0 %6285
      %6287 = vrot.lane.b32.xlu0 %v5687, 40
      %v6288 = vpop.permute.xlu0 %6287
      %6289 = vrot.lane.b32.xlu0 %v5689, 40
      %v6290 = vpop.permute.xlu0 %6289
      %6291 = vrot.lane.b32.xlu0 %v5692, 40
      %v6292 = vpop.permute.xlu0 %6291
      %6293 = vrot.lane.b32.xlu0 %v5694, 40
      %v6294 = vpop.permute.xlu0 %6293
      %6295 = vrot.lane.b32.xlu0 %v5697, 40
      %v6296 = vpop.permute.xlu0 %6295
      %6297 = vrot.lane.b32.xlu0 %v5699, 40
      %v6298 = vpop.permute.xlu0 %6297
      %6299 = vrot.lane.b32.xlu0 %v5702, 40
      %v6300 = vpop.permute.xlu0 %6299
      %6301 = vrot.lane.b32.xlu0 %v5704, 40
      %v6302 = vpop.permute.xlu0 %6301
      %6303 = vrot.lane.b32.xlu0 %v5707, 40
      %v6304 = vpop.permute.xlu0 %6303
      %6305 = vrot.lane.b32.xlu0 %v5709, 40
      %v6306 = vpop.permute.xlu0 %6305
      %6307 = vrot.lane.b32.xlu0 %v5712, 40
      %v6308 = vpop.permute.xlu0 %6307
      %6309 = vrot.lane.b32.xlu0 %v5714, 40
      %v6310 = vpop.permute.xlu0 %6309
      %6311 = vrot.lane.b32.xlu0 %v5717, 40
      %v6312 = vpop.permute.xlu0 %6311
      %6313 = vrot.lane.b32.xlu0 %v5719, 40
      %v6314 = vpop.permute.xlu0 %6313
      %6347 = vrot.lane.b32.xlu0 %v5827, 48
      %v6348 = vpop.permute.xlu0 %6347
      %6349 = vrot.lane.b32.xlu0 %v5829, 48
      %v6350 = vpop.permute.xlu0 %6349
      %6351 = vrot.lane.b32.xlu0 %v5832, 48
      %v6352 = vpop.permute.xlu0 %6351
      %6353 = vrot.lane.b32.xlu0 %v5834, 48
      %v6354 = vpop.permute.xlu0 %6353
      %6355 = vrot.lane.b32.xlu0 %v5837, 48
      %v6356 = vpop.permute.xlu0 %6355
      %6357 = vrot.lane.b32.xlu0 %v5839, 48
      %v6358 = vpop.permute.xlu0 %6357
      %6359 = vrot.lane.b32.xlu0 %v5842, 48
      %v6360 = vpop.permute.xlu0 %6359
      %6361 = vrot.lane.b32.xlu0 %v5844, 48
      %v6362 = vpop.permute.xlu0 %6361
      %6363 = vrot.lane.b32.xlu0 %v5847, 48
      %v6364 = vpop.permute.xlu0 %6363
      %6365 = vrot.lane.b32.xlu0 %v5849, 48
      %v6366 = vpop.permute.xlu0 %6365
      %6367 = vrot.lane.b32.xlu0 %v5852, 48
      %v6368 = vpop.permute.xlu0 %6367
      %6369 = vrot.lane.b32.xlu0 %v5854, 48
      %v6370 = vpop.permute.xlu0 %6369
      %6371 = vrot.lane.b32.xlu0 %v5857, 48
      %v6372 = vpop.permute.xlu0 %6371
      %6373 = vrot.lane.b32.xlu0 %v5859, 48
      %v6374 = vpop.permute.xlu0 %6373
      %6375 = vrot.lane.b32.xlu0 %v5862, 48
      %v6376 = vpop.permute.xlu0 %6375
      %6377 = vrot.lane.b32.xlu0 %v5864, 48
      %v6378 = vpop.permute.xlu0 %6377
      %6411 = vrot.lane.b32.xlu0 %v5972, 56
      %v6412 = vpop.permute.xlu0 %6411
      %6413 = vrot.lane.b32.xlu0 %v5974, 56
      %v6414 = vpop.permute.xlu0 %6413
      %6415 = vrot.lane.b32.xlu0 %v5977, 56
      %v6416 = vpop.permute.xlu0 %6415
      %6417 = vrot.lane.b32.xlu0 %v5979, 56
      %v6418 = vpop.permute.xlu0 %6417
      %6419 = vrot.lane.b32.xlu0 %v5982, 56
      %v6420 = vpop.permute.xlu0 %6419
      %6421 = vrot.lane.b32.xlu0 %v5984, 56
      %v6422 = vpop.permute.xlu0 %6421
      %6423 = vrot.lane.b32.xlu0 %v5987, 56
      %v6424 = vpop.permute.xlu0 %6423
      %6425 = vrot.lane.b32.xlu0 %v5989, 56
      %v6426 = vpop.permute.xlu0 %6425
      %6427 = vrot.lane.b32.xlu0 %v5992, 56
      %v6428 = vpop.permute.xlu0 %6427
      %6429 = vrot.lane.b32.xlu0 %v5994, 56
      %v6430 = vpop.permute.xlu0 %6429
      %6431 = vrot.lane.b32.xlu0 %v5997, 56
      %v6432 = vpop.permute.xlu0 %6431
      %6433 = vrot.lane.b32.xlu0 %v5999, 56
      %v6434 = vpop.permute.xlu0 %6433
      %6435 = vrot.lane.b32.xlu0 %v6002, 56
      %v6436 = vpop.permute.xlu0 %6435
      %6437 = vrot.lane.b32.xlu0 %v6004, 56
      %v6438 = vpop.permute.xlu0 %6437
      %6439 = vrot.lane.b32.xlu0 %v6007, 56
      %v6440 = vpop.permute.xlu0 %6439
      %6441 = vrot.lane.b32.xlu0 %v6009, 56
      %v6442 = vpop.permute.xlu0 %6441
      %v6459 = vsel %vm2114, %v4957, %v6028
      %v6460 = vsel %vm2114, %v4959, %v6030
      %v6461 = vsel %vm2114, %v4962, %v6032
      %v6462 = vsel %vm2114, %v4964, %v6034
      %v6463 = vsel %vm2114, %v4967, %v6036
      %v6464 = vsel %vm2114, %v4969, %v6038
      %v6465 = vsel %vm2114, %v4972, %v6040
      %v6466 = vsel %vm2114, %v4974, %v6042
      %v6467 = vsel %vm2114, %v4977, %v6044
      %v6468 = vsel %vm2114, %v4979, %v6046
      %v6469 = vsel %vm2114, %v4982, %v6048
      %v6470 = vsel %vm2114, %v4984, %v6050
      %v6471 = vsel %vm2114, %v4987, %v6052
      %v6472 = vsel %vm2114, %v4989, %v6054
      %v6473 = vsel %vm2114, %v4992, %v6056
      %v6474 = vsel %vm2114, %v4994, %v6058
      %vm6475 = vcmask 130048
      %v6476 = vsel %vm6475, %v6459, %v6092
      %v6477 = vsel %vm6475, %v6460, %v6094
      %v6478 = vsel %vm6475, %v6461, %v6096
      %v6479 = vsel %vm6475, %v6462, %v6098
      %v6480 = vsel %vm6475, %v6463, %v6100
      %v6481 = vsel %vm6475, %v6464, %v6102
      %v6482 = vsel %vm6475, %v6465, %v6104
      %v6483 = vsel %vm6475, %v6466, %v6106
      %v6484 = vsel %vm6475, %v6467, %v6108
      %v6485 = vsel %vm6475, %v6468, %v6110
      %v6486 = vsel %vm6475, %v6469, %v6112
      %v6487 = vsel %vm6475, %v6470, %v6114
      %v6488 = vsel %vm6475, %v6471, %v6116
      %v6489 = vsel %vm6475, %v6472, %v6118
      %v6490 = vsel %vm6475, %v6473, %v6120
      %v6491 = vsel %vm6475, %v6474, %v6122
      %vm6492 = vcmask 195584
      %v6493 = vsel %vm6492, %v6476, %v6156
      %v6494 = vsel %vm6492, %v6477, %v6158
      %v6495 = vsel %vm6492, %v6478, %v6160
      %v6496 = vsel %vm6492, %v6479, %v6162
      %v6497 = vsel %vm6492, %v6480, %v6164
      %v6498 = vsel %vm6492, %v6481, %v6166
      %v6499 = vsel %vm6492, %v6482, %v6168
      %v6500 = vsel %vm6492, %v6483, %v6170
      %v6501 = vsel %vm6492, %v6484, %v6172
      %v6502 = vsel %vm6492, %v6485, %v6174
      %v6503 = vsel %vm6492, %v6486, %v6176
      %v6504 = vsel %vm6492, %v6487, %v6178
      %v6505 = vsel %vm6492, %v6488, %v6180
      %v6506 = vsel %vm6492, %v6489, %v6182
      %v6507 = vsel %vm6492, %v6490, %v6184
      %v6508 = vsel %vm6492, %v6491, %v6186
      %vm6509 = vcmask 261120
      %v6510 = vsel %vm6509, %v6493, %v6220
      %v6511 = vsel %vm6509, %v6494, %v6222
      %v6512 = vsel %vm6509, %v6495, %v6224
      %v6513 = vsel %vm6509, %v6496, %v6226
      %v6514 = vsel %vm6509, %v6497, %v6228
      %v6515 = vsel %vm6509, %v6498, %v6230
      %v6516 = vsel %vm6509, %v6499, %v6232
      %v6517 = vsel %vm6509, %v6500, %v6234
      %v6518 = vsel %vm6509, %v6501, %v6236
      %v6519 = vsel %vm6509, %v6502, %v6238
      %v6520 = vsel %vm6509, %v6503, %v6240
      %v6521 = vsel %vm6509, %v6504, %v6242
      %v6522 = vsel %vm6509, %v6505, %v6244
      %v6523 = vsel %vm6509, %v6506, %v6246
      %v6524 = vsel %vm6509, %v6507, %v6248
      %v6525 = vsel %vm6509, %v6508, %v6250
      %vm6526 = vcmask 326656
      %v6527 = vsel %vm6526, %v6510, %v6284
      %v6528 = vsel %vm6526, %v6511, %v6286
      %v6529 = vsel %vm6526, %v6512, %v6288
      %v6530 = vsel %vm6526, %v6513, %v6290
      %v6531 = vsel %vm6526, %v6514, %v6292
      %v6532 = vsel %vm6526, %v6515, %v6294
      %v6533 = vsel %vm6526, %v6516, %v6296
      %v6534 = vsel %vm6526, %v6517, %v6298
      %v6535 = vsel %vm6526, %v6518, %v6300
      %v6536 = vsel %vm6526, %v6519, %v6302
      %v6537 = vsel %vm6526, %v6520, %v6304
      %v6538 = vsel %vm6526, %v6521, %v6306
      %v6539 = vsel %vm6526, %v6522, %v6308
      %v6540 = vsel %vm6526, %v6523, %v6310
      %v6541 = vsel %vm6526, %v6524, %v6312
      %v6542 = vsel %vm6526, %v6525, %v6314
      %vm6543 = vcmask 392192
      %v6544 = vsel %vm6543, %v6527, %v6348
      %v6545 = vsel %vm6543, %v6528, %v6350
      %v6546 = vsel %vm6543, %v6529, %v6352
      %v6547 = vsel %vm6543, %v6530, %v6354
      %v6548 = vsel %vm6543, %v6531, %v6356
      %v6549 = vsel %vm6543, %v6532, %v6358
      %v6550 = vsel %vm6543, %v6533, %v6360
      %v6551 = vsel %vm6543, %v6534, %v6362
      %v6552 = vsel %vm6543, %v6535, %v6364
      %v6553 = vsel %vm6543, %v6536, %v6366
      %v6554 = vsel %vm6543, %v6537, %v6368
      %v6555 = vsel %vm6543, %v6538, %v6370
      %v6556 = vsel %vm6543, %v6539, %v6372
      %v6557 = vsel %vm6543, %v6540, %v6374
      %v6558 = vsel %vm6543, %v6541, %v6376
      %v6559 = vsel %vm6543, %v6542, %v6378
      %vm6560 = vcmask 457728
      %v6561 = vsel %vm6560, %v6544, %v6412
      %v6562 = vsel %vm6560, %v6545, %v6414
      %v6563 = vsel %vm6560, %v6546, %v6416
      %v6564 = vsel %vm6560, %v6547, %v6418
      %v6565 = vsel %vm6560, %v6548, %v6420
      %v6566 = vsel %vm6560, %v6549, %v6422
      %v6567 = vsel %vm6560, %v6550, %v6424
      %v6568 = vsel %vm6560, %v6551, %v6426
      %v6569 = vsel %vm6560, %v6552, %v6428
      %v6570 = vsel %vm6560, %v6553, %v6430
      %v6571 = vsel %vm6560, %v6554, %v6432
      %v6572 = vsel %vm6560, %v6555, %v6434
      %v6573 = vsel %vm6560, %v6556, %v6436
      %v6574 = vsel %vm6560, %v6557, %v6438
      %v6575 = vsel %vm6560, %v6558, %v6440
      %v6576 = vsel %vm6560, %v6559, %v6442
      %v6577 = vpack.c.bf16 %v6562, %v6561
      %v6578 = vpack.c.bf16 %v6564, %v6563
      %v6579 = vpack.c.bf16 %v6566, %v6565
      %v6580 = vpack.c.bf16 %v6568, %v6567
      %v6581 = vpack.c.bf16 %v6570, %v6569
      %v6582 = vpack.c.bf16 %v6572, %v6571
      %v6583 = vpack.c.bf16 %v6574, %v6573
      %v6584 = vpack.c.bf16 %v6576, %v6575
      %v6585 = vld [vmem:[%s4] sm:$0xf]
      %v6586 = vld [vmem:[%s4 + $0x4] sm:$0xf]
      %v6587 = vld [vmem:[%s4 + $0x8] sm:$0xf]
      %v6588 = vld [vmem:[%s4 + $0xc] sm:$0xf]
      %v6589 = vld [vmem:[%s4 + $0x10] sm:$0xf]
      %v6590 = vld [vmem:[%s4 + $0x14] sm:$0xf]
      %v6591 = vld [vmem:[%s4 + $0x18] sm:$0xf]
      %v6592 = vld [vmem:[%s4 + $0x1c] sm:$0xf]
      %v6593 = vld [vmem:[%s5] sm:$0x1]
      %v6595 = vperm.slane %v6593, 0
      %v6605 = vunpack.c.l.b16 %v6585
      %v6606 = vunpack.c.l.b16 %v6586
      %v6607 = vunpack.c.l.b16 %v6587
      %v6608 = vunpack.c.l.b16 %v6588
      %v6609 = vunpack.c.l.b16 %v6589
      %v6610 = vunpack.c.l.b16 %v6590
      %v6611 = vunpack.c.l.b16 %v6591
      %v6612 = vunpack.c.l.b16 %v6592
      %v6613 = vpack.c.b16 %v6606, %v6605
      %v6614 = vpack.c.b16 %v6608, %v6607
      %v6615 = vpack.c.b16 %v6610, %v6609
      %v6616 = vpack.c.b16 %v6612, %v6611
      %v6622 = vsel %vm487, %v6577, 0
      %v6625 = vsel %vm487, %v6578, 0
      %v6628 = vsel %vm487, %v6579, 0
      %v6631 = vsel %vm487, %v6580, 0
      %v6634 = vsel %vm487, %v6581, 0
      %v6637 = vsel %vm487, %v6582, 0
      %v6640 = vsel %vm487, %v6583, 0
      %v6643 = vsel %vm487, %v6584, 0
      %6645 = vmatpush.bf16.msra.mxu0 0
      %6646 = vmatpush.bf16.msra.mxu0 0
      %6647 = vmatpush.bf16.msra.mxu0 0
      %6648 = vmatpush.bf16.msra.mxu0 0
      %6649 = vmatpush.bf16.msra.mxu0 %v6616
      %6650 = vmatpush.bf16.msra.mxu0 %v6615
      %6651 = vmatpush.bf16.msra.mxu0 %v6614
      %6652 = vmatpush.bf16.msra.mxu0 %v6613
      %6653 = vmatmul.bf16.gmra.mxu0 %v6622
      %v6654 = vpop.f32.mrf.mxu0
      %v6655 = vadd.f32 %v6595, %v6654
      %v6656 = vpop.f32.mrf.mxu0
      %v6657 = vadd.f32 %v6595, %v6656
      %6658 = vmatmul.bf16.gmra.mxu0 %v6625
      %v6659 = vpop.f32.mrf.mxu0
      %v6660 = vadd.f32 %v6595, %v6659
      %v6661 = vpop.f32.mrf.mxu0
      %v6662 = vadd.f32 %v6595, %v6661
      %6663 = vmatmul.bf16.gmra.mxu0 %v6628
      %v6664 = vpop.f32.mrf.mxu0
      %v6665 = vadd.f32 %v6595, %v6664
      %v6666 = vpop.f32.mrf.mxu0
      %v6667 = vadd.f32 %v6595, %v6666
      %6668 = vmatmul.bf16.gmra.mxu0 %v6631
      %v6669 = vpop.f32.mrf.mxu0
      %v6670 = vadd.f32 %v6595, %v6669
      %v6671 = vpop.f32.mrf.mxu0
      %v6672 = vadd.f32 %v6595, %v6671
      %6673 = vmatmul.bf16.gmra.mxu0 %v6634
      %v6674 = vpop.f32.mrf.mxu0
      %v6675 = vadd.f32 %v6595, %v6674
      %v6676 = vpop.f32.mrf.mxu0
      %v6677 = vadd.f32 %v6595, %v6676
      %6678 = vmatmul.bf16.gmra.mxu0 %v6637
      %v6679 = vpop.f32.mrf.mxu0
      %v6680 = vadd.f32 %v6595, %v6679
      %v6681 = vpop.f32.mrf.mxu0
      %v6682 = vadd.f32 %v6595, %v6681
      %6683 = vmatmul.bf16.gmra.mxu0 %v6640
      %v6684 = vpop.f32.mrf.mxu0
      %v6685 = vadd.f32 %v6595, %v6684
      %v6686 = vpop.f32.mrf.mxu0
      %v6687 = vadd.f32 %v6595, %v6686
      %6688 = vmatmul.bf16.gmra.mxu0 %v6643
      %v6689 = vpop.f32.mrf.mxu0
      %v6690 = vadd.f32 %v6595, %v6689
      %v6691 = vpop.f32.mrf.mxu0
      %v6692 = vadd.f32 %v6595, %v6691
      %6693 = vdwg.mxu0
      %v6694 = vadd.f32 %v469, %v6655
      %v6695 = vadd.f32 %v470, %v6657
      %v6696 = vadd.f32 %v471, %v6660
      %v6697 = vadd.f32 %v472, %v6662
      %v6698 = vadd.f32 %v473, %v6665
      %v6699 = vadd.f32 %v474, %v6667
      %v6700 = vadd.f32 %v475, %v6670
      %v6701 = vadd.f32 %v476, %v6672
      %v6702 = vadd.f32 %v477, %v6675
      %v6703 = vadd.f32 %v478, %v6677
      %v6704 = vadd.f32 %v479, %v6680
      %v6705 = vadd.f32 %v480, %v6682
      %v6706 = vadd.f32 %v481, %v6685
      %v6707 = vadd.f32 %v482, %v6687
      %v6708 = vadd.f32 %v483, %v6690
      %v6709 = vadd.f32 %v484, %v6692
      %v6710 = vld [vmem:[%s6] sm:$0x1]
      %v6711 = vld [vmem:[%s7] sm:$0x1]
      %v6712 = vsel %vm487, %v6694, 0.0
      %6713 = vadd.xlane.f32.xlu0 %v6712
      %v6714 = vpop.xlane.xlu0 %6713
      %v6715 = vsel %vm487, %v6695, 0.0
      %6716 = vadd.xlane.f32.xlu0 %v6715
      %v6717 = vpop.xlane.xlu0 %6716
      %v6718 = vsel %vm487, %v6696, 0.0
      %6719 = vadd.xlane.f32.xlu0 %v6718
      %v6720 = vpop.xlane.xlu0 %6719
      %v6721 = vsel %vm487, %v6697, 0.0
      %6722 = vadd.xlane.f32.xlu0 %v6721
      %v6723 = vpop.xlane.xlu0 %6722
      %v6724 = vsel %vm487, %v6698, 0.0
      %6725 = vadd.xlane.f32.xlu0 %v6724
      %v6726 = vpop.xlane.xlu0 %6725
      %v6727 = vsel %vm487, %v6699, 0.0
      %6728 = vadd.xlane.f32.xlu0 %v6727
      %v6729 = vpop.xlane.xlu0 %6728
      %v6730 = vsel %vm487, %v6700, 0.0
      %6731 = vadd.xlane.f32.xlu0 %v6730
      %v6732 = vpop.xlane.xlu0 %6731
      %v6733 = vsel %vm487, %v6701, 0.0
      %6734 = vadd.xlane.f32.xlu0 %v6733
      %v6735 = vpop.xlane.xlu0 %6734
      %v6736 = vsel %vm487, %v6702, 0.0
      %6737 = vadd.xlane.f32.xlu0 %v6736
      %v6738 = vpop.xlane.xlu0 %6737
      %v6739 = vsel %vm487, %v6703, 0.0
      %6740 = vadd.xlane.f32.xlu0 %v6739
      %v6741 = vpop.xlane.xlu0 %6740
      %v6742 = vsel %vm487, %v6704, 0.0
      %6743 = vadd.xlane.f32.xlu0 %v6742
      %v6744 = vpop.xlane.xlu0 %6743
      %v6745 = vsel %vm487, %v6705, 0.0
      %6746 = vadd.xlane.f32.xlu0 %v6745
      %v6747 = vpop.xlane.xlu0 %6746
      %v6748 = vsel %vm487, %v6706, 0.0
      %6749 = vadd.xlane.f32.xlu0 %v6748
      %v6750 = vpop.xlane.xlu0 %6749
      %v6751 = vsel %vm487, %v6707, 0.0
      %6752 = vadd.xlane.f32.xlu0 %v6751
      %v6753 = vpop.xlane.xlu0 %6752
      %v6754 = vsel %vm487, %v6708, 0.0
      %6755 = vadd.xlane.f32.xlu0 %v6754
      %v6756 = vpop.xlane.xlu0 %6755
      %v6757 = vsel %vm487, %v6709, 0.0
      %6758 = vadd.xlane.f32.xlu0 %v6757
      %v6759 = vpop.xlane.xlu0 %6758
      %v6760 = vmul.f32 %v6714, %v542
      %v6761 = vmul.f32 %v6717, %v542
      %v6762 = vmul.f32 %v6720, %v542
      %v6763 = vmul.f32 %v6723, %v542
      %v6764 = vmul.f32 %v6726, %v542
      %v6765 = vmul.f32 %v6729, %v542
      %v6766 = vmul.f32 %v6732, %v542
      %v6767 = vmul.f32 %v6735, %v542
      %v6768 = vmul.f32 %v6738, %v542
      %v6769 = vmul.f32 %v6741, %v542
      %v6770 = vmul.f32 %v6744, %v542
      %v6771 = vmul.f32 %v6747, %v542
      %v6772 = vmul.f32 %v6750, %v542
      %v6773 = vmul.f32 %v6753, %v542
      %v6774 = vmul.f32 %v6756, %v542
      %v6775 = vmul.f32 %v6759, %v542
      %v6776 = vsub.f32 %v6694, %v6760
      %v6777 = vsub.f32 %v6695, %v6761
      %v6778 = vsub.f32 %v6696, %v6762
      %v6779 = vsub.f32 %v6697, %v6763
      %v6780 = vsub.f32 %v6698, %v6764
      %v6781 = vsub.f32 %v6699, %v6765
      %v6782 = vsub.f32 %v6700, %v6766
      %v6783 = vsub.f32 %v6701, %v6767
      %v6784 = vsub.f32 %v6702, %v6768
      %v6785 = vsub.f32 %v6703, %v6769
      %v6786 = vsub.f32 %v6704, %v6770
      %v6787 = vsub.f32 %v6705, %v6771
      %v6788 = vsub.f32 %v6706, %v6772
      %v6789 = vsub.f32 %v6707, %v6773
      %v6790 = vsub.f32 %v6708, %v6774
      %v6791 = vsub.f32 %v6709, %v6775
      %v6792 = vmul.f32 %v6776, %v6776
      %v6793 = vmul.f32 %v6777, %v6777
      %v6794 = vmul.f32 %v6778, %v6778
      %v6795 = vmul.f32 %v6779, %v6779
      %v6796 = vmul.f32 %v6780, %v6780
      %v6797 = vmul.f32 %v6781, %v6781
      %v6798 = vmul.f32 %v6782, %v6782
      %v6799 = vmul.f32 %v6783, %v6783
      %v6800 = vmul.f32 %v6784, %v6784
      %v6801 = vmul.f32 %v6785, %v6785
      %v6802 = vmul.f32 %v6786, %v6786
      %v6803 = vmul.f32 %v6787, %v6787
      %v6804 = vmul.f32 %v6788, %v6788
      %v6805 = vmul.f32 %v6789, %v6789
      %v6806 = vmul.f32 %v6790, %v6790
      %v6807 = vmul.f32 %v6791, %v6791
      %v6808 = vsel %vm487, %v6792, 0.0
      %6809 = vadd.xlane.f32.xlu0 %v6808
      %v6810 = vpop.xlane.xlu0 %6809
      %v6811 = vsel %vm487, %v6793, 0.0
      %6812 = vadd.xlane.f32.xlu0 %v6811
      %v6813 = vpop.xlane.xlu0 %6812
      %v6814 = vsel %vm487, %v6794, 0.0
      %6815 = vadd.xlane.f32.xlu0 %v6814
      %v6816 = vpop.xlane.xlu0 %6815
      %v6817 = vsel %vm487, %v6795, 0.0
      %6818 = vadd.xlane.f32.xlu0 %v6817
      %v6819 = vpop.xlane.xlu0 %6818
      %v6820 = vsel %vm487, %v6796, 0.0
      %6821 = vadd.xlane.f32.xlu0 %v6820
      %v6822 = vpop.xlane.xlu0 %6821
      %v6823 = vsel %vm487, %v6797, 0.0
      %6824 = vadd.xlane.f32.xlu0 %v6823
      %v6825 = vpop.xlane.xlu0 %6824
      %v6826 = vsel %vm487, %v6798, 0.0
      %6827 = vadd.xlane.f32.xlu0 %v6826
      %v6828 = vpop.xlane.xlu0 %6827
      %v6829 = vsel %vm487, %v6799, 0.0
      %6830 = vadd.xlane.f32.xlu0 %v6829
      %v6831 = vpop.xlane.xlu0 %6830
      %v6832 = vsel %vm487, %v6800, 0.0
      %6833 = vadd.xlane.f32.xlu0 %v6832
      %v6834 = vpop.xlane.xlu0 %6833
      %v6835 = vsel %vm487, %v6801, 0.0
      %6836 = vadd.xlane.f32.xlu0 %v6835
      %v6837 = vpop.xlane.xlu0 %6836
      %v6838 = vsel %vm487, %v6802, 0.0
      %6839 = vadd.xlane.f32.xlu0 %v6838
      %v6840 = vpop.xlane.xlu0 %6839
      %v6841 = vsel %vm487, %v6803, 0.0
      %6842 = vadd.xlane.f32.xlu0 %v6841
      %v6843 = vpop.xlane.xlu0 %6842
      %v6844 = vsel %vm487, %v6804, 0.0
      %6845 = vadd.xlane.f32.xlu0 %v6844
      %v6846 = vpop.xlane.xlu0 %6845
      %v6847 = vsel %vm487, %v6805, 0.0
      %6848 = vadd.xlane.f32.xlu0 %v6847
      %v6849 = vpop.xlane.xlu0 %6848
      %v6850 = vsel %vm487, %v6806, 0.0
      %6851 = vadd.xlane.f32.xlu0 %v6850
      %v6852 = vpop.xlane.xlu0 %6851
      %v6853 = vsel %vm487, %v6807, 0.0
      %6854 = vadd.xlane.f32.xlu0 %v6853
      %v6855 = vpop.xlane.xlu0 %6854
      %v6856 = vmul.f32 %v6810, %v542
      %v6857 = vmul.f32 %v6813, %v542
      %v6858 = vmul.f32 %v6816, %v542
      %v6859 = vmul.f32 %v6819, %v542
      %v6860 = vmul.f32 %v6822, %v542
      %v6861 = vmul.f32 %v6825, %v542
      %v6862 = vmul.f32 %v6828, %v542
      %v6863 = vmul.f32 %v6831, %v542
      %v6864 = vmul.f32 %v6834, %v542
      %v6865 = vmul.f32 %v6837, %v542
      %v6866 = vmul.f32 %v6840, %v542
      %v6867 = vmul.f32 %v6843, %v542
      %v6868 = vmul.f32 %v6846, %v542
      %v6869 = vmul.f32 %v6849, %v542
      %v6870 = vmul.f32 %v6852, %v542
      %v6871 = vmul.f32 %v6855, %v542
      %v6872 = vadd.f32 %v6856, 1e-05
      %v6873 = vadd.f32 %v6857, 1e-05
      %v6874 = vadd.f32 %v6858, 1e-05
      %v6875 = vadd.f32 %v6859, 1e-05
      %v6876 = vadd.f32 %v6860, 1e-05
      %v6877 = vadd.f32 %v6861, 1e-05
      %v6878 = vadd.f32 %v6862, 1e-05
      %v6879 = vadd.f32 %v6863, 1e-05
      %v6880 = vadd.f32 %v6864, 1e-05
      %v6881 = vadd.f32 %v6865, 1e-05
      %v6882 = vadd.f32 %v6866, 1e-05
      %v6883 = vadd.f32 %v6867, 1e-05
      %v6884 = vadd.f32 %v6868, 1e-05
      %v6885 = vadd.f32 %v6869, 1e-05
      %v6886 = vadd.f32 %v6870, 1e-05
      %v6887 = vadd.f32 %v6871, 1e-05
      %v6888 = vrsqrt.pop %v6872
      %v6889 = vmul.f32 %v6888, %v6872
      %v6890 = vmul.f32 %v6889, %v6888
      %v6891 = vmul.f32 0.5, %v6890
      %v6892 = vsub.f32 1.5, %v6891
      %v6893 = vmul.f32 %v6888, %v6892
      %vm6894 = vweird.f32 %v6872
      %vm6895 = vweird.f32 %v6888
      %vm6896 = vmor %vm6894, %vm6895
      %v6897 = vsel %vm6896, %v6888, %v6893
      %v6898 = vrsqrt.pop %v6873
      %v6899 = vmul.f32 %v6898, %v6873
      %v6900 = vmul.f32 %v6899, %v6898
      %v6901 = vmul.f32 0.5, %v6900
      %v6902 = vsub.f32 1.5, %v6901
      %v6903 = vmul.f32 %v6898, %v6902
      %vm6904 = vweird.f32 %v6873
      %vm6905 = vweird.f32 %v6898
      %vm6906 = vmor %vm6904, %vm6905
      %v6907 = vsel %vm6906, %v6898, %v6903
      %v6908 = vrsqrt.pop %v6874
      %v6909 = vmul.f32 %v6908, %v6874
      %v6910 = vmul.f32 %v6909, %v6908
      %v6911 = vmul.f32 0.5, %v6910
      %v6912 = vsub.f32 1.5, %v6911
      %v6913 = vmul.f32 %v6908, %v6912
      %vm6914 = vweird.f32 %v6874
      %vm6915 = vweird.f32 %v6908
      %vm6916 = vmor %vm6914, %vm6915
      %v6917 = vsel %vm6916, %v6908, %v6913
      %v6918 = vrsqrt.pop %v6875
      %v6919 = vmul.f32 %v6918, %v6875
      %v6920 = vmul.f32 %v6919, %v6918
      %v6921 = vmul.f32 0.5, %v6920
      %v6922 = vsub.f32 1.5, %v6921
      %v6923 = vmul.f32 %v6918, %v6922
      %vm6924 = vweird.f32 %v6875
      %vm6925 = vweird.f32 %v6918
      %vm6926 = vmor %vm6924, %vm6925
      %v6927 = vsel %vm6926, %v6918, %v6923
      %v6928 = vrsqrt.pop %v6876
      %v6929 = vmul.f32 %v6928, %v6876
      %v6930 = vmul.f32 %v6929, %v6928
      %v6931 = vmul.f32 0.5, %v6930
      %v6932 = vsub.f32 1.5, %v6931
      %v6933 = vmul.f32 %v6928, %v6932
      %vm6934 = vweird.f32 %v6876
      %vm6935 = vweird.f32 %v6928
      %vm6936 = vmor %vm6934, %vm6935
      %v6937 = vsel %vm6936, %v6928, %v6933
      %v6938 = vrsqrt.pop %v6877
      %v6939 = vmul.f32 %v6938, %v6877
      %v6940 = vmul.f32 %v6939, %v6938
      %v6941 = vmul.f32 0.5, %v6940
      %v6942 = vsub.f32 1.5, %v6941
      %v6943 = vmul.f32 %v6938, %v6942
      %vm6944 = vweird.f32 %v6877
      %vm6945 = vweird.f32 %v6938
      %vm6946 = vmor %vm6944, %vm6945
      %v6947 = vsel %vm6946, %v6938, %v6943
      %v6948 = vrsqrt.pop %v6878
      %v6949 = vmul.f32 %v6948, %v6878
      %v6950 = vmul.f32 %v6949, %v6948
      %v6951 = vmul.f32 0.5, %v6950
      %v6952 = vsub.f32 1.5, %v6951
      %v6953 = vmul.f32 %v6948, %v6952
      %vm6954 = vweird.f32 %v6878
      %vm6955 = vweird.f32 %v6948
      %vm6956 = vmor %vm6954, %vm6955
      %v6957 = vsel %vm6956, %v6948, %v6953
      %v6958 = vrsqrt.pop %v6879
      %v6959 = vmul.f32 %v6958, %v6879
      %v6960 = vmul.f32 %v6959, %v6958
      %v6961 = vmul.f32 0.5, %v6960
      %v6962 = vsub.f32 1.5, %v6961
      %v6963 = vmul.f32 %v6958, %v6962
      %vm6964 = vweird.f32 %v6879
      %vm6965 = vweird.f32 %v6958
      %vm6966 = vmor %vm6964, %vm6965
      %v6967 = vsel %vm6966, %v6958, %v6963
      %v6968 = vrsqrt.pop %v6880
      %v6969 = vmul.f32 %v6968, %v6880
      %v6970 = vmul.f32 %v6969, %v6968
      %v6971 = vmul.f32 0.5, %v6970
      %v6972 = vsub.f32 1.5, %v6971
      %v6973 = vmul.f32 %v6968, %v6972
      %vm6974 = vweird.f32 %v6880
      %vm6975 = vweird.f32 %v6968
      %vm6976 = vmor %vm6974, %vm6975
      %v6977 = vsel %vm6976, %v6968, %v6973
      %v6978 = vrsqrt.pop %v6881
      %v6979 = vmul.f32 %v6978, %v6881
      %v6980 = vmul.f32 %v6979, %v6978
      %v6981 = vmul.f32 0.5, %v6980
      %v6982 = vsub.f32 1.5, %v6981
      %v6983 = vmul.f32 %v6978, %v6982
      %vm6984 = vweird.f32 %v6881
      %vm6985 = vweird.f32 %v6978
      %vm6986 = vmor %vm6984, %vm6985
      %v6987 = vsel %vm6986, %v6978, %v6983
      %v6988 = vrsqrt.pop %v6882
      %v6989 = vmul.f32 %v6988, %v6882
      %v6990 = vmul.f32 %v6989, %v6988
      %v6991 = vmul.f32 0.5, %v6990
      %v6992 = vsub.f32 1.5, %v6991
      %v6993 = vmul.f32 %v6988, %v6992
      %vm6994 = vweird.f32 %v6882
      %vm6995 = vweird.f32 %v6988
      %vm6996 = vmor %vm6994, %vm6995
      %v6997 = vsel %vm6996, %v6988, %v6993
      %v6998 = vrsqrt.pop %v6883
      %v6999 = vmul.f32 %v6998, %v6883
      %v7000 = vmul.f32 %v6999, %v6998
      %v7001 = vmul.f32 0.5, %v7000
      %v7002 = vsub.f32 1.5, %v7001
      %v7003 = vmul.f32 %v6998, %v7002
      %vm7004 = vweird.f32 %v6883
      %vm7005 = vweird.f32 %v6998
      %vm7006 = vmor %vm7004, %vm7005
      %v7007 = vsel %vm7006, %v6998, %v7003
      %v7008 = vrsqrt.pop %v6884
      %v7009 = vmul.f32 %v7008, %v6884
      %v7010 = vmul.f32 %v7009, %v7008
      %v7011 = vmul.f32 0.5, %v7010
      %v7012 = vsub.f32 1.5, %v7011
      %v7013 = vmul.f32 %v7008, %v7012
      %vm7014 = vweird.f32 %v6884
      %vm7015 = vweird.f32 %v7008
      %vm7016 = vmor %vm7014, %vm7015
      %v7017 = vsel %vm7016, %v7008, %v7013
      %v7018 = vrsqrt.pop %v6885
      %v7019 = vmul.f32 %v7018, %v6885
      %v7020 = vmul.f32 %v7019, %v7018
      %v7021 = vmul.f32 0.5, %v7020
      %v7022 = vsub.f32 1.5, %v7021
      %v7023 = vmul.f32 %v7018, %v7022
      %vm7024 = vweird.f32 %v6885
      %vm7025 = vweird.f32 %v7018
      %vm7026 = vmor %vm7024, %vm7025
      %v7027 = vsel %vm7026, %v7018, %v7023
      %v7028 = vrsqrt.pop %v6886
      %v7029 = vmul.f32 %v7028, %v6886
      %v7030 = vmul.f32 %v7029, %v7028
      %v7031 = vmul.f32 0.5, %v7030
      %v7032 = vsub.f32 1.5, %v7031
      %v7033 = vmul.f32 %v7028, %v7032
      %vm7034 = vweird.f32 %v6886
      %vm7035 = vweird.f32 %v7028
      %vm7036 = vmor %vm7034, %vm7035
      %v7037 = vsel %vm7036, %v7028, %v7033
      %v7038 = vrsqrt.pop %v6887
      %v7039 = vmul.f32 %v7038, %v6887
      %v7040 = vmul.f32 %v7039, %v7038
      %v7041 = vmul.f32 0.5, %v7040
      %v7042 = vsub.f32 1.5, %v7041
      %v7043 = vmul.f32 %v7038, %v7042
      %vm7044 = vweird.f32 %v6887
      %vm7045 = vweird.f32 %v7038
      %vm7046 = vmor %vm7044, %vm7045
      %v7047 = vsel %vm7046, %v7038, %v7043
      %v7048 = vmul.f32 %v6776, %v6897
      %v7049 = vmul.f32 %v6777, %v6907
      %v7050 = vmul.f32 %v6778, %v6917
      %v7051 = vmul.f32 %v6779, %v6927
      %v7052 = vmul.f32 %v6780, %v6937
      %v7053 = vmul.f32 %v6781, %v6947
      %v7054 = vmul.f32 %v6782, %v6957
      %v7055 = vmul.f32 %v6783, %v6967
      %v7056 = vmul.f32 %v6784, %v6977
      %v7057 = vmul.f32 %v6785, %v6987
      %v7058 = vmul.f32 %v6786, %v6997
      %v7059 = vmul.f32 %v6787, %v7007
      %v7060 = vmul.f32 %v6788, %v7017
      %v7061 = vmul.f32 %v6789, %v7027
      %v7062 = vmul.f32 %v6790, %v7037
      %v7063 = vmul.f32 %v6791, %v7047
      %v7065 = vperm.slane %v6710, 0
      %v7067 = vmul.f32 %v7048, %v7065
      %v7068 = vmul.f32 %v7049, %v7065
      %v7069 = vmul.f32 %v7050, %v7065
      %v7070 = vmul.f32 %v7051, %v7065
      %v7071 = vmul.f32 %v7052, %v7065
      %v7072 = vmul.f32 %v7053, %v7065
      %v7073 = vmul.f32 %v7054, %v7065
      %v7074 = vmul.f32 %v7055, %v7065
      %v7075 = vmul.f32 %v7056, %v7065
      %v7076 = vmul.f32 %v7057, %v7065
      %v7077 = vmul.f32 %v7058, %v7065
      %v7078 = vmul.f32 %v7059, %v7065
      %v7079 = vmul.f32 %v7060, %v7065
      %v7080 = vmul.f32 %v7061, %v7065
      %v7081 = vmul.f32 %v7062, %v7065
      %v7082 = vmul.f32 %v7063, %v7065
      %v7084 = vperm.slane %v6711, 0
      %v7086 = vadd.f32 %v7067, %v7084
      %v7087 = vadd.f32 %v7068, %v7084
      %v7088 = vadd.f32 %v7069, %v7084
      %v7089 = vadd.f32 %v7070, %v7084
      %v7090 = vadd.f32 %v7071, %v7084
      %v7091 = vadd.f32 %v7072, %v7084
      %v7092 = vadd.f32 %v7073, %v7084
      %v7093 = vadd.f32 %v7074, %v7084
      %v7094 = vadd.f32 %v7075, %v7084
      %v7095 = vadd.f32 %v7076, %v7084
      %v7096 = vadd.f32 %v7077, %v7084
      %v7097 = vadd.f32 %v7078, %v7084
      %v7098 = vadd.f32 %v7079, %v7084
      %v7099 = vadd.f32 %v7080, %v7084
      %v7100 = vadd.f32 %v7081, %v7084
      %v7101 = vadd.f32 %v7082, %v7084
      %v7102 = vpack.c.bf16 %v7087, %v7086
      %v7103 = vpack.c.bf16 %v7089, %v7088
      %v7104 = vpack.c.bf16 %v7091, %v7090
      %v7105 = vpack.c.bf16 %v7093, %v7092
      %v7106 = vpack.c.bf16 %v7095, %v7094
      %v7107 = vpack.c.bf16 %v7097, %v7096
      %v7108 = vpack.c.bf16 %v7099, %v7098
      %v7109 = vpack.c.bf16 %v7101, %v7100
      %v7110 = vld [vmem:[%s8] sm:$0xff]
      %v7111 = vld [vmem:[%s8 + $0x8] sm:$0xff]
      %v7112 = vld [vmem:[%s8 + $0x10] sm:$0xff]
      %v7113 = vld [vmem:[%s8 + $0x18] sm:$0xff]
      %v7114 = vld [vmem:[%s8 + $0x20] sm:$0xff]
      %v7115 = vld [vmem:[%s8 + $0x28] sm:$0xff]
      %v7116 = vld [vmem:[%s8 + $0x30] sm:$0xff]
      %v7117 = vld [vmem:[%s8 + $0x38] sm:$0xff]
      %v7118 = vld [vmem:[%s9] sm:$0x3]
      %v7120 = vperm.slane %v7118, 0
      %v7121 = vperm.slane %v7118, 1
      %v7132 = vunpack.c.l.b16 %v7110
      %v7133 = vunpack.c.h.b16 %v7110
      %v7134 = vunpack.c.l.b16 %v7111
      %v7135 = vunpack.c.h.b16 %v7111
      %v7136 = vunpack.c.l.b16 %v7112
      %v7137 = vunpack.c.h.b16 %v7112
      %v7138 = vunpack.c.l.b16 %v7113
      %v7139 = vunpack.c.h.b16 %v7113
      %v7140 = vunpack.c.l.b16 %v7114
      %v7141 = vunpack.c.h.b16 %v7114
      %v7142 = vunpack.c.l.b16 %v7115
      %v7143 = vunpack.c.h.b16 %v7115
      %v7144 = vunpack.c.l.b16 %v7116
      %v7145 = vunpack.c.h.b16 %v7116
      %v7146 = vunpack.c.l.b16 %v7117
      %v7147 = vunpack.c.h.b16 %v7117
      %v7148 = vpack.c.b16 %v7134, %v7132
      %v7149 = vpack.c.b16 %v7135, %v7133
      %v7150 = vpack.c.b16 %v7138, %v7136
      %v7151 = vpack.c.b16 %v7139, %v7137
      %v7152 = vpack.c.b16 %v7142, %v7140
      %v7153 = vpack.c.b16 %v7143, %v7141
      %v7154 = vpack.c.b16 %v7146, %v7144
      %v7155 = vpack.c.b16 %v7147, %v7145
      %v7165 = vsel %vm487, %v7102, 0
      %v7168 = vsel %vm487, %v7103, 0
      %v7171 = vsel %vm487, %v7104, 0
      %v7174 = vsel %vm487, %v7105, 0
      %v7177 = vsel %vm487, %v7106, 0
      %v7180 = vsel %vm487, %v7107, 0
      %v7183 = vsel %vm487, %v7108, 0
      %v7186 = vsel %vm487, %v7109, 0
      %7188 = vmatpush.bf16.msra.mxu0 0
      %7189 = vmatpush.bf16.msra.mxu0 0
      %7190 = vmatpush.bf16.msra.mxu0 0
      %7191 = vmatpush.bf16.msra.mxu0 0
      %7192 = vmatpush.bf16.msra.mxu0 %v7154
      %7193 = vmatpush.bf16.msra.mxu0 %v7152
      %7194 = vmatpush.bf16.msra.mxu0 %v7150
      %7195 = vmatpush.bf16.msra.mxu0 %v7148
      %7196 = vmatmul.bf16.gmra.mxu0 %v7165
      %v7197 = vpop.f32.mrf.mxu0
      %v7198 = vadd.f32 %v7120, %v7197
      %v7199 = vpop.f32.mrf.mxu0
      %v7200 = vadd.f32 %v7120, %v7199
      %7201 = vmatmul.bf16.gmra.mxu0 %v7168
      %v7202 = vpop.f32.mrf.mxu0
      %v7203 = vadd.f32 %v7120, %v7202
      %v7204 = vpop.f32.mrf.mxu0
      %v7205 = vadd.f32 %v7120, %v7204
      %7206 = vmatmul.bf16.gmra.mxu0 %v7171
      %v7207 = vpop.f32.mrf.mxu0
      %v7208 = vadd.f32 %v7120, %v7207
      %v7209 = vpop.f32.mrf.mxu0
      %v7210 = vadd.f32 %v7120, %v7209
      %7211 = vmatmul.bf16.gmra.mxu0 %v7174
      %v7212 = vpop.f32.mrf.mxu0
      %v7213 = vadd.f32 %v7120, %v7212
      %v7214 = vpop.f32.mrf.mxu0
      %v7215 = vadd.f32 %v7120, %v7214
      %7216 = vmatmul.bf16.gmra.mxu0 %v7177
      %v7217 = vpop.f32.mrf.mxu0
      %v7218 = vadd.f32 %v7120, %v7217
      %v7219 = vpop.f32.mrf.mxu0
      %v7220 = vadd.f32 %v7120, %v7219
      %7221 = vmatmul.bf16.gmra.mxu0 %v7180
      %v7222 = vpop.f32.mrf.mxu0
      %v7223 = vadd.f32 %v7120, %v7222
      %v7224 = vpop.f32.mrf.mxu0
      %v7225 = vadd.f32 %v7120, %v7224
      %7226 = vmatmul.bf16.gmra.mxu0 %v7183
      %v7227 = vpop.f32.mrf.mxu0
      %v7228 = vadd.f32 %v7120, %v7227
      %v7229 = vpop.f32.mrf.mxu0
      %v7230 = vadd.f32 %v7120, %v7229
      %7231 = vmatmul.bf16.gmra.mxu0 %v7186
      %v7232 = vpop.f32.mrf.mxu0
      %v7233 = vadd.f32 %v7120, %v7232
      %v7234 = vpop.f32.mrf.mxu0
      %v7235 = vadd.f32 %v7120, %v7234
      %7236 = vdwg.mxu0
      %7237 = vmatpush.bf16.msra.mxu0 0
      %7238 = vmatpush.bf16.msra.mxu0 0
      %7239 = vmatpush.bf16.msra.mxu0 0
      %7240 = vmatpush.bf16.msra.mxu0 0
      %7241 = vmatpush.bf16.msra.mxu0 %v7155
      %7242 = vmatpush.bf16.msra.mxu0 %v7153
      %7243 = vmatpush.bf16.msra.mxu0 %v7151
      %7244 = vmatpush.bf16.msra.mxu0 %v7149
      %7245 = vmatmul.bf16.gmra.mxu0 %v7165
      %v7246 = vpop.f32.mrf.mxu0
      %v7247 = vadd.f32 %v7121, %v7246
      %v7248 = vpop.f32.mrf.mxu0
      %v7249 = vadd.f32 %v7121, %v7248
      %7250 = vmatmul.bf16.gmra.mxu0 %v7168
      %v7251 = vpop.f32.mrf.mxu0
      %v7252 = vadd.f32 %v7121, %v7251
      %v7253 = vpop.f32.mrf.mxu0
      %v7254 = vadd.f32 %v7121, %v7253
      %7255 = vmatmul.bf16.gmra.mxu0 %v7171
      %v7256 = vpop.f32.mrf.mxu0
      %v7257 = vadd.f32 %v7121, %v7256
      %v7258 = vpop.f32.mrf.mxu0
      %v7259 = vadd.f32 %v7121, %v7258
      %7260 = vmatmul.bf16.gmra.mxu0 %v7174
      %v7261 = vpop.f32.mrf.mxu0
      %v7262 = vadd.f32 %v7121, %v7261
      %v7263 = vpop.f32.mrf.mxu0
      %v7264 = vadd.f32 %v7121, %v7263
      %7265 = vmatmul.bf16.gmra.mxu0 %v7177
      %v7266 = vpop.f32.mrf.mxu0
      %v7267 = vadd.f32 %v7121, %v7266
      %v7268 = vpop.f32.mrf.mxu0
      %v7269 = vadd.f32 %v7121, %v7268
      %7270 = vmatmul.bf16.gmra.mxu0 %v7180
      %v7271 = vpop.f32.mrf.mxu0
      %v7272 = vadd.f32 %v7121, %v7271
      %v7273 = vpop.f32.mrf.mxu0
      %v7274 = vadd.f32 %v7121, %v7273
      %7275 = vmatmul.bf16.gmra.mxu0 %v7183
      %v7276 = vpop.f32.mrf.mxu0
      %v7277 = vadd.f32 %v7121, %v7276
      %v7278 = vpop.f32.mrf.mxu0
      %v7279 = vadd.f32 %v7121, %v7278
      %7280 = vmatmul.bf16.gmra.mxu0 %v7186
      %v7281 = vpop.f32.mrf.mxu0
      %v7282 = vadd.f32 %v7121, %v7281
      %v7283 = vpop.f32.mrf.mxu0
      %v7284 = vadd.f32 %v7121, %v7283
      %7285 = vdwg.mxu0
      %v7286 = vld [vmem:[%s10] sm:$0x3]
      %v7287 = vld [vmem:[%s11] sm:$0x3]
      %v7288 = vadd.f32 %v7198, %v7247
      %7289 = vadd.xlane.f32.xlu0 %v7288
      %v7290 = vpop.xlane.xlu0 %7289
      %v7291 = vadd.f32 %v7200, %v7249
      %7292 = vadd.xlane.f32.xlu0 %v7291
      %v7293 = vpop.xlane.xlu0 %7292
      %v7294 = vadd.f32 %v7203, %v7252
      %7295 = vadd.xlane.f32.xlu0 %v7294
      %v7296 = vpop.xlane.xlu0 %7295
      %v7297 = vadd.f32 %v7205, %v7254
      %7298 = vadd.xlane.f32.xlu0 %v7297
      %v7299 = vpop.xlane.xlu0 %7298
      %v7300 = vadd.f32 %v7208, %v7257
      %7301 = vadd.xlane.f32.xlu0 %v7300
      %v7302 = vpop.xlane.xlu0 %7301
      %v7303 = vadd.f32 %v7210, %v7259
      %7304 = vadd.xlane.f32.xlu0 %v7303
      %v7305 = vpop.xlane.xlu0 %7304
      %v7306 = vadd.f32 %v7213, %v7262
      %7307 = vadd.xlane.f32.xlu0 %v7306
      %v7308 = vpop.xlane.xlu0 %7307
      %v7309 = vadd.f32 %v7215, %v7264
      %7310 = vadd.xlane.f32.xlu0 %v7309
      %v7311 = vpop.xlane.xlu0 %7310
      %v7312 = vadd.f32 %v7218, %v7267
      %7313 = vadd.xlane.f32.xlu0 %v7312
      %v7314 = vpop.xlane.xlu0 %7313
      %v7315 = vadd.f32 %v7220, %v7269
      %7316 = vadd.xlane.f32.xlu0 %v7315
      %v7317 = vpop.xlane.xlu0 %7316
      %v7318 = vadd.f32 %v7223, %v7272
      %7319 = vadd.xlane.f32.xlu0 %v7318
      %v7320 = vpop.xlane.xlu0 %7319
      %v7321 = vadd.f32 %v7225, %v7274
      %7322 = vadd.xlane.f32.xlu0 %v7321
      %v7323 = vpop.xlane.xlu0 %7322
      %v7324 = vadd.f32 %v7228, %v7277
      %7325 = vadd.xlane.f32.xlu0 %v7324
      %v7326 = vpop.xlane.xlu0 %7325
      %v7327 = vadd.f32 %v7230, %v7279
      %7328 = vadd.xlane.f32.xlu0 %v7327
      %v7329 = vpop.xlane.xlu0 %7328
      %v7330 = vadd.f32 %v7233, %v7282
      %7331 = vadd.xlane.f32.xlu0 %v7330
      %v7332 = vpop.xlane.xlu0 %7331
      %v7333 = vadd.f32 %v7235, %v7284
      %7334 = vadd.xlane.f32.xlu0 %v7333
      %v7335 = vpop.xlane.xlu0 %7334
      %v7336 = vrcp.pop 256.0
      %v7337 = vmul.f32 256.0, %v7336
      %v7338 = vsub.f32 1.0, %v7337
      %v7339 = vmul.f32 %v7336, %v7338
      %v7340 = vadd.f32 %v7336, %v7339
      %vm7341 = vweird.f32 %v7336
      %v7342 = vsel %vm7341, %v7336, %v7340
      %v7343 = vmul.f32 %v7290, %v7342
      %v7344 = vmul.f32 %v7293, %v7342
      %v7345 = vmul.f32 %v7296, %v7342
      %v7346 = vmul.f32 %v7299, %v7342
      %v7347 = vmul.f32 %v7302, %v7342
      %v7348 = vmul.f32 %v7305, %v7342
      %v7349 = vmul.f32 %v7308, %v7342
      %v7350 = vmul.f32 %v7311, %v7342
      %v7351 = vmul.f32 %v7314, %v7342
      %v7352 = vmul.f32 %v7317, %v7342
      %v7353 = vmul.f32 %v7320, %v7342
      %v7354 = vmul.f32 %v7323, %v7342
      %v7355 = vmul.f32 %v7326, %v7342
      %v7356 = vmul.f32 %v7329, %v7342
      %v7357 = vmul.f32 %v7332, %v7342
      %v7358 = vmul.f32 %v7335, %v7342
      %v7359 = vsub.f32 %v7198, %v7343
      %v7360 = vsub.f32 %v7247, %v7343
      %v7361 = vsub.f32 %v7200, %v7344
      %v7362 = vsub.f32 %v7249, %v7344
      %v7363 = vsub.f32 %v7203, %v7345
      %v7364 = vsub.f32 %v7252, %v7345
      %v7365 = vsub.f32 %v7205, %v7346
      %v7366 = vsub.f32 %v7254, %v7346
      %v7367 = vsub.f32 %v7208, %v7347
      %v7368 = vsub.f32 %v7257, %v7347
      %v7369 = vsub.f32 %v7210, %v7348
      %v7370 = vsub.f32 %v7259, %v7348
      %v7371 = vsub.f32 %v7213, %v7349
      %v7372 = vsub.f32 %v7262, %v7349
      %v7373 = vsub.f32 %v7215, %v7350
      %v7374 = vsub.f32 %v7264, %v7350
      %v7375 = vsub.f32 %v7218, %v7351
      %v7376 = vsub.f32 %v7267, %v7351
      %v7377 = vsub.f32 %v7220, %v7352
      %v7378 = vsub.f32 %v7269, %v7352
      %v7379 = vsub.f32 %v7223, %v7353
      %v7380 = vsub.f32 %v7272, %v7353
      %v7381 = vsub.f32 %v7225, %v7354
      %v7382 = vsub.f32 %v7274, %v7354
      %v7383 = vsub.f32 %v7228, %v7355
      %v7384 = vsub.f32 %v7277, %v7355
      %v7385 = vsub.f32 %v7230, %v7356
      %v7386 = vsub.f32 %v7279, %v7356
      %v7387 = vsub.f32 %v7233, %v7357
      %v7388 = vsub.f32 %v7282, %v7357
      %v7389 = vsub.f32 %v7235, %v7358
      %v7390 = vsub.f32 %v7284, %v7358
      %v7391 = vmul.f32 %v7359, %v7359
      %v7392 = vmul.f32 %v7360, %v7360
      %v7393 = vmul.f32 %v7361, %v7361
      %v7394 = vmul.f32 %v7362, %v7362
      %v7395 = vmul.f32 %v7363, %v7363
      %v7396 = vmul.f32 %v7364, %v7364
      %v7397 = vmul.f32 %v7365, %v7365
      %v7398 = vmul.f32 %v7366, %v7366
      %v7399 = vmul.f32 %v7367, %v7367
      %v7400 = vmul.f32 %v7368, %v7368
      %v7401 = vmul.f32 %v7369, %v7369
      %v7402 = vmul.f32 %v7370, %v7370
      %v7403 = vmul.f32 %v7371, %v7371
      %v7404 = vmul.f32 %v7372, %v7372
      %v7405 = vmul.f32 %v7373, %v7373
      %v7406 = vmul.f32 %v7374, %v7374
      %v7407 = vmul.f32 %v7375, %v7375
      %v7408 = vmul.f32 %v7376, %v7376
      %v7409 = vmul.f32 %v7377, %v7377
      %v7410 = vmul.f32 %v7378, %v7378
      %v7411 = vmul.f32 %v7379, %v7379
      %v7412 = vmul.f32 %v7380, %v7380
      %v7413 = vmul.f32 %v7381, %v7381
      %v7414 = vmul.f32 %v7382, %v7382
      %v7415 = vmul.f32 %v7383, %v7383
      %v7416 = vmul.f32 %v7384, %v7384
      %v7417 = vmul.f32 %v7385, %v7385
      %v7418 = vmul.f32 %v7386, %v7386
      %v7419 = vmul.f32 %v7387, %v7387
      %v7420 = vmul.f32 %v7388, %v7388
      %v7421 = vmul.f32 %v7389, %v7389
      %v7422 = vmul.f32 %v7390, %v7390
      %v7423 = vadd.f32 %v7391, %v7392
      %7424 = vadd.xlane.f32.xlu0 %v7423
      %v7425 = vpop.xlane.xlu0 %7424
      %v7426 = vadd.f32 %v7393, %v7394
      %7427 = vadd.xlane.f32.xlu0 %v7426
      %v7428 = vpop.xlane.xlu0 %7427
      %v7429 = vadd.f32 %v7395, %v7396
      %7430 = vadd.xlane.f32.xlu0 %v7429
      %v7431 = vpop.xlane.xlu0 %7430
      %v7432 = vadd.f32 %v7397, %v7398
      %7433 = vadd.xlane.f32.xlu0 %v7432
      %v7434 = vpop.xlane.xlu0 %7433
      %v7435 = vadd.f32 %v7399, %v7400
      %7436 = vadd.xlane.f32.xlu0 %v7435
      %v7437 = vpop.xlane.xlu0 %7436
      %v7438 = vadd.f32 %v7401, %v7402
      %7439 = vadd.xlane.f32.xlu0 %v7438
      %v7440 = vpop.xlane.xlu0 %7439
      %v7441 = vadd.f32 %v7403, %v7404
      %7442 = vadd.xlane.f32.xlu0 %v7441
      %v7443 = vpop.xlane.xlu0 %7442
      %v7444 = vadd.f32 %v7405, %v7406
      %7445 = vadd.xlane.f32.xlu0 %v7444
      %v7446 = vpop.xlane.xlu0 %7445
      %v7447 = vadd.f32 %v7407, %v7408
      %7448 = vadd.xlane.f32.xlu0 %v7447
      %v7449 = vpop.xlane.xlu0 %7448
      %v7450 = vadd.f32 %v7409, %v7410
      %7451 = vadd.xlane.f32.xlu0 %v7450
      %v7452 = vpop.xlane.xlu0 %7451
      %v7453 = vadd.f32 %v7411, %v7412
      %7454 = vadd.xlane.f32.xlu0 %v7453
      %v7455 = vpop.xlane.xlu0 %7454
      %v7456 = vadd.f32 %v7413, %v7414
      %7457 = vadd.xlane.f32.xlu0 %v7456
      %v7458 = vpop.xlane.xlu0 %7457
      %v7459 = vadd.f32 %v7415, %v7416
      %7460 = vadd.xlane.f32.xlu0 %v7459
      %v7461 = vpop.xlane.xlu0 %7460
      %v7462 = vadd.f32 %v7417, %v7418
      %7463 = vadd.xlane.f32.xlu0 %v7462
      %v7464 = vpop.xlane.xlu0 %7463
      %v7465 = vadd.f32 %v7419, %v7420
      %7466 = vadd.xlane.f32.xlu0 %v7465
      %v7467 = vpop.xlane.xlu0 %7466
      %v7468 = vadd.f32 %v7421, %v7422
      %7469 = vadd.xlane.f32.xlu0 %v7468
      %v7470 = vpop.xlane.xlu0 %7469
      %v7471 = vmul.f32 %v7425, %v7342
      %v7472 = vmul.f32 %v7428, %v7342
      %v7473 = vmul.f32 %v7431, %v7342
      %v7474 = vmul.f32 %v7434, %v7342
      %v7475 = vmul.f32 %v7437, %v7342
      %v7476 = vmul.f32 %v7440, %v7342
      %v7477 = vmul.f32 %v7443, %v7342
      %v7478 = vmul.f32 %v7446, %v7342
      %v7479 = vmul.f32 %v7449, %v7342
      %v7480 = vmul.f32 %v7452, %v7342
      %v7481 = vmul.f32 %v7455, %v7342
      %v7482 = vmul.f32 %v7458, %v7342
      %v7483 = vmul.f32 %v7461, %v7342
      %v7484 = vmul.f32 %v7464, %v7342
      %v7485 = vmul.f32 %v7467, %v7342
      %v7486 = vmul.f32 %v7470, %v7342
      %v7487 = vadd.f32 %v7471, 1e-05
      %v7488 = vadd.f32 %v7472, 1e-05
      %v7489 = vadd.f32 %v7473, 1e-05
      %v7490 = vadd.f32 %v7474, 1e-05
      %v7491 = vadd.f32 %v7475, 1e-05
      %v7492 = vadd.f32 %v7476, 1e-05
      %v7493 = vadd.f32 %v7477, 1e-05
      %v7494 = vadd.f32 %v7478, 1e-05
      %v7495 = vadd.f32 %v7479, 1e-05
      %v7496 = vadd.f32 %v7480, 1e-05
      %v7497 = vadd.f32 %v7481, 1e-05
      %v7498 = vadd.f32 %v7482, 1e-05
      %v7499 = vadd.f32 %v7483, 1e-05
      %v7500 = vadd.f32 %v7484, 1e-05
      %v7501 = vadd.f32 %v7485, 1e-05
      %v7502 = vadd.f32 %v7486, 1e-05
      %v7503 = vrsqrt.pop %v7487
      %v7504 = vmul.f32 %v7503, %v7487
      %v7505 = vmul.f32 %v7504, %v7503
      %v7506 = vmul.f32 0.5, %v7505
      %v7507 = vsub.f32 1.5, %v7506
      %v7508 = vmul.f32 %v7503, %v7507
      %vm7509 = vweird.f32 %v7487
      %vm7510 = vweird.f32 %v7503
      %vm7511 = vmor %vm7509, %vm7510
      %v7512 = vsel %vm7511, %v7503, %v7508
      %v7513 = vrsqrt.pop %v7488
      %v7514 = vmul.f32 %v7513, %v7488
      %v7515 = vmul.f32 %v7514, %v7513
      %v7516 = vmul.f32 0.5, %v7515
      %v7517 = vsub.f32 1.5, %v7516
      %v7518 = vmul.f32 %v7513, %v7517
      %vm7519 = vweird.f32 %v7488
      %vm7520 = vweird.f32 %v7513
      %vm7521 = vmor %vm7519, %vm7520
      %v7522 = vsel %vm7521, %v7513, %v7518
      %v7523 = vrsqrt.pop %v7489
      %v7524 = vmul.f32 %v7523, %v7489
      %v7525 = vmul.f32 %v7524, %v7523
      %v7526 = vmul.f32 0.5, %v7525
      %v7527 = vsub.f32 1.5, %v7526
      %v7528 = vmul.f32 %v7523, %v7527
      %vm7529 = vweird.f32 %v7489
      %vm7530 = vweird.f32 %v7523
      %vm7531 = vmor %vm7529, %vm7530
      %v7532 = vsel %vm7531, %v7523, %v7528
      %v7533 = vrsqrt.pop %v7490
      %v7534 = vmul.f32 %v7533, %v7490
      %v7535 = vmul.f32 %v7534, %v7533
      %v7536 = vmul.f32 0.5, %v7535
      %v7537 = vsub.f32 1.5, %v7536
      %v7538 = vmul.f32 %v7533, %v7537
      %vm7539 = vweird.f32 %v7490
      %vm7540 = vweird.f32 %v7533
      %vm7541 = vmor %vm7539, %vm7540
      %v7542 = vsel %vm7541, %v7533, %v7538
      %v7543 = vrsqrt.pop %v7491
      %v7544 = vmul.f32 %v7543, %v7491
      %v7545 = vmul.f32 %v7544, %v7543
      %v7546 = vmul.f32 0.5, %v7545
      %v7547 = vsub.f32 1.5, %v7546
      %v7548 = vmul.f32 %v7543, %v7547
      %vm7549 = vweird.f32 %v7491
      %vm7550 = vweird.f32 %v7543
      %vm7551 = vmor %vm7549, %vm7550
      %v7552 = vsel %vm7551, %v7543, %v7548
      %v7553 = vrsqrt.pop %v7492
      %v7554 = vmul.f32 %v7553, %v7492
      %v7555 = vmul.f32 %v7554, %v7553
      %v7556 = vmul.f32 0.5, %v7555
      %v7557 = vsub.f32 1.5, %v7556
      %v7558 = vmul.f32 %v7553, %v7557
      %vm7559 = vweird.f32 %v7492
      %vm7560 = vweird.f32 %v7553
      %vm7561 = vmor %vm7559, %vm7560
      %v7562 = vsel %vm7561, %v7553, %v7558
      %v7563 = vrsqrt.pop %v7493
      %v7564 = vmul.f32 %v7563, %v7493
      %v7565 = vmul.f32 %v7564, %v7563
      %v7566 = vmul.f32 0.5, %v7565
      %v7567 = vsub.f32 1.5, %v7566
      %v7568 = vmul.f32 %v7563, %v7567
      %vm7569 = vweird.f32 %v7493
      %vm7570 = vweird.f32 %v7563
      %vm7571 = vmor %vm7569, %vm7570
      %v7572 = vsel %vm7571, %v7563, %v7568
      %v7573 = vrsqrt.pop %v7494
      %v7574 = vmul.f32 %v7573, %v7494
      %v7575 = vmul.f32 %v7574, %v7573
      %v7576 = vmul.f32 0.5, %v7575
      %v7577 = vsub.f32 1.5, %v7576
      %v7578 = vmul.f32 %v7573, %v7577
      %vm7579 = vweird.f32 %v7494
      %vm7580 = vweird.f32 %v7573
      %vm7581 = vmor %vm7579, %vm7580
      %v7582 = vsel %vm7581, %v7573, %v7578
      %v7583 = vrsqrt.pop %v7495
      %v7584 = vmul.f32 %v7583, %v7495
      %v7585 = vmul.f32 %v7584, %v7583
      %v7586 = vmul.f32 0.5, %v7585
      %v7587 = vsub.f32 1.5, %v7586
      %v7588 = vmul.f32 %v7583, %v7587
      %vm7589 = vweird.f32 %v7495
      %vm7590 = vweird.f32 %v7583
      %vm7591 = vmor %vm7589, %vm7590
      %v7592 = vsel %vm7591, %v7583, %v7588
      %v7593 = vrsqrt.pop %v7496
      %v7594 = vmul.f32 %v7593, %v7496
      %v7595 = vmul.f32 %v7594, %v7593
      %v7596 = vmul.f32 0.5, %v7595
      %v7597 = vsub.f32 1.5, %v7596
      %v7598 = vmul.f32 %v7593, %v7597
      %vm7599 = vweird.f32 %v7496
      %vm7600 = vweird.f32 %v7593
      %vm7601 = vmor %vm7599, %vm7600
      %v7602 = vsel %vm7601, %v7593, %v7598
      %v7603 = vrsqrt.pop %v7497
      %v7604 = vmul.f32 %v7603, %v7497
      %v7605 = vmul.f32 %v7604, %v7603
      %v7606 = vmul.f32 0.5, %v7605
      %v7607 = vsub.f32 1.5, %v7606
      %v7608 = vmul.f32 %v7603, %v7607
      %vm7609 = vweird.f32 %v7497
      %vm7610 = vweird.f32 %v7603
      %vm7611 = vmor %vm7609, %vm7610
      %v7612 = vsel %vm7611, %v7603, %v7608
      %v7613 = vrsqrt.pop %v7498
      %v7614 = vmul.f32 %v7613, %v7498
      %v7615 = vmul.f32 %v7614, %v7613
      %v7616 = vmul.f32 0.5, %v7615
      %v7617 = vsub.f32 1.5, %v7616
      %v7618 = vmul.f32 %v7613, %v7617
      %vm7619 = vweird.f32 %v7498
      %vm7620 = vweird.f32 %v7613
      %vm7621 = vmor %vm7619, %vm7620
      %v7622 = vsel %vm7621, %v7613, %v7618
      %v7623 = vrsqrt.pop %v7499
      %v7624 = vmul.f32 %v7623, %v7499
      %v7625 = vmul.f32 %v7624, %v7623
      %v7626 = vmul.f32 0.5, %v7625
      %v7627 = vsub.f32 1.5, %v7626
      %v7628 = vmul.f32 %v7623, %v7627
      %vm7629 = vweird.f32 %v7499
      %vm7630 = vweird.f32 %v7623
      %vm7631 = vmor %vm7629, %vm7630
      %v7632 = vsel %vm7631, %v7623, %v7628
      %v7633 = vrsqrt.pop %v7500
      %v7634 = vmul.f32 %v7633, %v7500
      %v7635 = vmul.f32 %v7634, %v7633
      %v7636 = vmul.f32 0.5, %v7635
      %v7637 = vsub.f32 1.5, %v7636
      %v7638 = vmul.f32 %v7633, %v7637
      %vm7639 = vweird.f32 %v7500
      %vm7640 = vweird.f32 %v7633
      %vm7641 = vmor %vm7639, %vm7640
      %v7642 = vsel %vm7641, %v7633, %v7638
      %v7643 = vrsqrt.pop %v7501
      %v7644 = vmul.f32 %v7643, %v7501
      %v7645 = vmul.f32 %v7644, %v7643
      %v7646 = vmul.f32 0.5, %v7645
      %v7647 = vsub.f32 1.5, %v7646
      %v7648 = vmul.f32 %v7643, %v7647
      %vm7649 = vweird.f32 %v7501
      %vm7650 = vweird.f32 %v7643
      %vm7651 = vmor %vm7649, %vm7650
      %v7652 = vsel %vm7651, %v7643, %v7648
      %v7653 = vrsqrt.pop %v7502
      %v7654 = vmul.f32 %v7653, %v7502
      %v7655 = vmul.f32 %v7654, %v7653
      %v7656 = vmul.f32 0.5, %v7655
      %v7657 = vsub.f32 1.5, %v7656
      %v7658 = vmul.f32 %v7653, %v7657
      %vm7659 = vweird.f32 %v7502
      %vm7660 = vweird.f32 %v7653
      %vm7661 = vmor %vm7659, %vm7660
      %v7662 = vsel %vm7661, %v7653, %v7658
      %v7663 = vmul.f32 %v7359, %v7512
      %v7664 = vmul.f32 %v7360, %v7512
      %v7665 = vmul.f32 %v7361, %v7522
      %v7666 = vmul.f32 %v7362, %v7522
      %v7667 = vmul.f32 %v7363, %v7532
      %v7668 = vmul.f32 %v7364, %v7532
      %v7669 = vmul.f32 %v7365, %v7542
      %v7670 = vmul.f32 %v7366, %v7542
      %v7671 = vmul.f32 %v7367, %v7552
      %v7672 = vmul.f32 %v7368, %v7552
      %v7673 = vmul.f32 %v7369, %v7562
      %v7674 = vmul.f32 %v7370, %v7562
      %v7675 = vmul.f32 %v7371, %v7572
      %v7676 = vmul.f32 %v7372, %v7572
      %v7677 = vmul.f32 %v7373, %v7582
      %v7678 = vmul.f32 %v7374, %v7582
      %v7679 = vmul.f32 %v7375, %v7592
      %v7680 = vmul.f32 %v7376, %v7592
      %v7681 = vmul.f32 %v7377, %v7602
      %v7682 = vmul.f32 %v7378, %v7602
      %v7683 = vmul.f32 %v7379, %v7612
      %v7684 = vmul.f32 %v7380, %v7612
      %v7685 = vmul.f32 %v7381, %v7622
      %v7686 = vmul.f32 %v7382, %v7622
      %v7687 = vmul.f32 %v7383, %v7632
      %v7688 = vmul.f32 %v7384, %v7632
      %v7689 = vmul.f32 %v7385, %v7642
      %v7690 = vmul.f32 %v7386, %v7642
      %v7691 = vmul.f32 %v7387, %v7652
      %v7692 = vmul.f32 %v7388, %v7652
      %v7693 = vmul.f32 %v7389, %v7662
      %v7694 = vmul.f32 %v7390, %v7662
      %v7696 = vperm.slane %v7286, 0
      %v7697 = vperm.slane %v7286, 1
      %v7700 = vmul.f32 %v7663, %v7696
      %v7701 = vmul.f32 %v7664, %v7697
      %v7702 = vmul.f32 %v7665, %v7696
      %v7703 = vmul.f32 %v7666, %v7697
      %v7704 = vmul.f32 %v7667, %v7696
      %v7705 = vmul.f32 %v7668, %v7697
      %v7706 = vmul.f32 %v7669, %v7696
      %v7707 = vmul.f32 %v7670, %v7697
      %v7708 = vmul.f32 %v7671, %v7696
      %v7709 = vmul.f32 %v7672, %v7697
      %v7710 = vmul.f32 %v7673, %v7696
      %v7711 = vmul.f32 %v7674, %v7697
      %v7712 = vmul.f32 %v7675, %v7696
      %v7713 = vmul.f32 %v7676, %v7697
      %v7714 = vmul.f32 %v7677, %v7696
      %v7715 = vmul.f32 %v7678, %v7697
      %v7716 = vmul.f32 %v7679, %v7696
      %v7717 = vmul.f32 %v7680, %v7697
      %v7718 = vmul.f32 %v7681, %v7696
      %v7719 = vmul.f32 %v7682, %v7697
      %v7720 = vmul.f32 %v7683, %v7696
      %v7721 = vmul.f32 %v7684, %v7697
      %v7722 = vmul.f32 %v7685, %v7696
      %v7723 = vmul.f32 %v7686, %v7697
      %v7724 = vmul.f32 %v7687, %v7696
      %v7725 = vmul.f32 %v7688, %v7697
      %v7726 = vmul.f32 %v7689, %v7696
      %v7727 = vmul.f32 %v7690, %v7697
      %v7728 = vmul.f32 %v7691, %v7696
      %v7729 = vmul.f32 %v7692, %v7697
      %v7730 = vmul.f32 %v7693, %v7696
      %v7731 = vmul.f32 %v7694, %v7697
      %v7733 = vperm.slane %v7287, 0
      %v7734 = vperm.slane %v7287, 1
      %v7737 = vadd.f32 %v7700, %v7733
      %v7738 = vadd.f32 %v7701, %v7734
      %v7739 = vadd.f32 %v7702, %v7733
      %v7740 = vadd.f32 %v7703, %v7734
      %v7741 = vadd.f32 %v7704, %v7733
      %v7742 = vadd.f32 %v7705, %v7734
      %v7743 = vadd.f32 %v7706, %v7733
      %v7744 = vadd.f32 %v7707, %v7734
      %v7745 = vadd.f32 %v7708, %v7733
      %v7746 = vadd.f32 %v7709, %v7734
      %v7747 = vadd.f32 %v7710, %v7733
      %v7748 = vadd.f32 %v7711, %v7734
      %v7749 = vadd.f32 %v7712, %v7733
      %v7750 = vadd.f32 %v7713, %v7734
      %v7751 = vadd.f32 %v7714, %v7733
      %v7752 = vadd.f32 %v7715, %v7734
      %v7753 = vadd.f32 %v7716, %v7733
      %v7754 = vadd.f32 %v7717, %v7734
      %v7755 = vadd.f32 %v7718, %v7733
      %v7756 = vadd.f32 %v7719, %v7734
      %v7757 = vadd.f32 %v7720, %v7733
      %v7758 = vadd.f32 %v7721, %v7734
      %v7759 = vadd.f32 %v7722, %v7733
      %v7760 = vadd.f32 %v7723, %v7734
      %v7761 = vadd.f32 %v7724, %v7733
      %v7762 = vadd.f32 %v7725, %v7734
      %v7763 = vadd.f32 %v7726, %v7733
      %v7764 = vadd.f32 %v7727, %v7734
      %v7765 = vadd.f32 %v7728, %v7733
      %v7766 = vadd.f32 %v7729, %v7734
      %v7767 = vadd.f32 %v7730, %v7733
      %v7768 = vadd.f32 %v7731, %v7734
      %v7769 = vmax.f32 %v7737, 0.0
      %v7770 = vmax.f32 %v7738, 0.0
      %v7771 = vmax.f32 %v7739, 0.0
      %v7772 = vmax.f32 %v7740, 0.0
      %v7773 = vmax.f32 %v7741, 0.0
      %v7774 = vmax.f32 %v7742, 0.0
      %v7775 = vmax.f32 %v7743, 0.0
      %v7776 = vmax.f32 %v7744, 0.0
      %v7777 = vmax.f32 %v7745, 0.0
      %v7778 = vmax.f32 %v7746, 0.0
      %v7779 = vmax.f32 %v7747, 0.0
      %v7780 = vmax.f32 %v7748, 0.0
      %v7781 = vmax.f32 %v7749, 0.0
      %v7782 = vmax.f32 %v7750, 0.0
      %v7783 = vmax.f32 %v7751, 0.0
      %v7784 = vmax.f32 %v7752, 0.0
      %v7785 = vmax.f32 %v7753, 0.0
      %v7786 = vmax.f32 %v7754, 0.0
      %v7787 = vmax.f32 %v7755, 0.0
      %v7788 = vmax.f32 %v7756, 0.0
      %v7789 = vmax.f32 %v7757, 0.0
      %v7790 = vmax.f32 %v7758, 0.0
      %v7791 = vmax.f32 %v7759, 0.0
      %v7792 = vmax.f32 %v7760, 0.0
      %v7793 = vmax.f32 %v7761, 0.0
      %v7794 = vmax.f32 %v7762, 0.0
      %v7795 = vmax.f32 %v7763, 0.0
      %v7796 = vmax.f32 %v7764, 0.0
      %v7797 = vmax.f32 %v7765, 0.0
      %v7798 = vmax.f32 %v7766, 0.0
      %v7799 = vmax.f32 %v7767, 0.0
      %v7800 = vmax.f32 %v7768, 0.0
      %v7801 = vpack.c.bf16 %v7771, %v7769
      %v7802 = vpack.c.bf16 %v7772, %v7770
      %v7803 = vpack.c.bf16 %v7775, %v7773
      %v7804 = vpack.c.bf16 %v7776, %v7774
      %v7805 = vpack.c.bf16 %v7779, %v7777
      %v7806 = vpack.c.bf16 %v7780, %v7778
      %v7807 = vpack.c.bf16 %v7783, %v7781
      %v7808 = vpack.c.bf16 %v7784, %v7782
      %v7809 = vpack.c.bf16 %v7787, %v7785
      %v7810 = vpack.c.bf16 %v7788, %v7786
      %v7811 = vpack.c.bf16 %v7791, %v7789
      %v7812 = vpack.c.bf16 %v7792, %v7790
      %v7813 = vpack.c.bf16 %v7795, %v7793
      %v7814 = vpack.c.bf16 %v7796, %v7794
      %v7815 = vpack.c.bf16 %v7799, %v7797
      %v7816 = vpack.c.bf16 %v7800, %v7798
      %v7817 = vld [vmem:[%s12] sm:$0xf]
      %v7818 = vld [vmem:[%s12 + $0x4] sm:$0xf]
      %v7819 = vld [vmem:[%s12 + $0x8] sm:$0xf]
      %v7820 = vld [vmem:[%s12 + $0xc] sm:$0xf]
      %v7821 = vld [vmem:[%s12 + $0x10] sm:$0xf]
      %v7822 = vld [vmem:[%s12 + $0x14] sm:$0xf]
      %v7823 = vld [vmem:[%s12 + $0x18] sm:$0xf]
      %v7824 = vld [vmem:[%s12 + $0x1c] sm:$0xf]
      %v7825 = vld [vmem:[%s12 + $0x20] sm:$0xf]
      %v7826 = vld [vmem:[%s12 + $0x24] sm:$0xf]
      %v7827 = vld [vmem:[%s12 + $0x28] sm:$0xf]
      %v7828 = vld [vmem:[%s12 + $0x2c] sm:$0xf]
      %v7829 = vld [vmem:[%s12 + $0x30] sm:$0xf]
      %v7830 = vld [vmem:[%s12 + $0x34] sm:$0xf]
      %v7831 = vld [vmem:[%s12 + $0x38] sm:$0xf]
      %v7832 = vld [vmem:[%s12 + $0x3c] sm:$0xf]
      %v7833 = vld [vmem:[%s12 + $0x40] sm:$0xf]
      %v7834 = vld [vmem:[%s12 + $0x44] sm:$0xf]
      %v7835 = vld [vmem:[%s12 + $0x48] sm:$0xf]
      %v7836 = vld [vmem:[%s12 + $0x4c] sm:$0xf]
      %v7837 = vld [vmem:[%s12 + $0x50] sm:$0xf]
      %v7838 = vld [vmem:[%s12 + $0x54] sm:$0xf]
      %v7839 = vld [vmem:[%s12 + $0x58] sm:$0xf]
      %v7840 = vld [vmem:[%s12 + $0x5c] sm:$0xf]
      %v7841 = vld [vmem:[%s12 + $0x60] sm:$0xf]
      %v7842 = vld [vmem:[%s12 + $0x64] sm:$0xf]
      %v7843 = vld [vmem:[%s12 + $0x68] sm:$0xf]
      %v7844 = vld [vmem:[%s12 + $0x6c] sm:$0xf]
      %v7845 = vld [vmem:[%s12 + $0x70] sm:$0xf]
      %v7846 = vld [vmem:[%s12 + $0x74] sm:$0xf]
      %v7847 = vld [vmem:[%s12 + $0x78] sm:$0xf]
      %v7848 = vld [vmem:[%s12 + $0x7c] sm:$0xf]
      %v7849 = vld [vmem:[%s13] sm:$0x1]
      %v7851 = vperm.slane %v7849, 0
      %v7885 = vunpack.c.l.b16 %v7817
      %v7886 = vunpack.c.l.b16 %v7818
      %v7887 = vunpack.c.l.b16 %v7819
      %v7888 = vunpack.c.l.b16 %v7820
      %v7889 = vunpack.c.l.b16 %v7821
      %v7890 = vunpack.c.l.b16 %v7822
      %v7891 = vunpack.c.l.b16 %v7823
      %v7892 = vunpack.c.l.b16 %v7824
      %v7893 = vunpack.c.l.b16 %v7825
      %v7894 = vunpack.c.l.b16 %v7826
      %v7895 = vunpack.c.l.b16 %v7827
      %v7896 = vunpack.c.l.b16 %v7828
      %v7897 = vunpack.c.l.b16 %v7829
      %v7898 = vunpack.c.l.b16 %v7830
      %v7899 = vunpack.c.l.b16 %v7831
      %v7900 = vunpack.c.l.b16 %v7832
      %v7901 = vunpack.c.l.b16 %v7833
      %v7902 = vunpack.c.l.b16 %v7834
      %v7903 = vunpack.c.l.b16 %v7835
      %v7904 = vunpack.c.l.b16 %v7836
      %v7905 = vunpack.c.l.b16 %v7837
      %v7906 = vunpack.c.l.b16 %v7838
      %v7907 = vunpack.c.l.b16 %v7839
      %v7908 = vunpack.c.l.b16 %v7840
      %v7909 = vunpack.c.l.b16 %v7841
      %v7910 = vunpack.c.l.b16 %v7842
      %v7911 = vunpack.c.l.b16 %v7843
      %v7912 = vunpack.c.l.b16 %v7844
      %v7913 = vunpack.c.l.b16 %v7845
      %v7914 = vunpack.c.l.b16 %v7846
      %v7915 = vunpack.c.l.b16 %v7847
      %v7916 = vunpack.c.l.b16 %v7848
      %v7917 = vpack.c.b16 %v7886, %v7885
      %v7918 = vpack.c.b16 %v7888, %v7887
      %v7919 = vpack.c.b16 %v7890, %v7889
      %v7920 = vpack.c.b16 %v7892, %v7891
      %v7921 = vpack.c.b16 %v7894, %v7893
      %v7922 = vpack.c.b16 %v7896, %v7895
      %v7923 = vpack.c.b16 %v7898, %v7897
      %v7924 = vpack.c.b16 %v7900, %v7899
      %v7925 = vpack.c.b16 %v7902, %v7901
      %v7926 = vpack.c.b16 %v7904, %v7903
      %v7927 = vpack.c.b16 %v7906, %v7905
      %v7928 = vpack.c.b16 %v7908, %v7907
      %v7929 = vpack.c.b16 %v7910, %v7909
      %v7930 = vpack.c.b16 %v7912, %v7911
      %v7931 = vpack.c.b16 %v7914, %v7913
      %v7932 = vpack.c.b16 %v7916, %v7915
      %7949 = vmatpush.bf16.msra.mxu0 %v7924
      %7950 = vmatpush.bf16.msra.mxu0 %v7923
      %7951 = vmatpush.bf16.msra.mxu0 %v7922
      %7952 = vmatpush.bf16.msra.mxu0 %v7921
      %7953 = vmatpush.bf16.msra.mxu0 %v7920
      %7954 = vmatpush.bf16.msra.mxu0 %v7919
      %7955 = vmatpush.bf16.msra.mxu0 %v7918
      %7956 = vmatpush.bf16.msra.mxu0 %v7917
      %7957 = vmatmul.bf16.gmra.mxu0 %v7801
      %v7958 = vpop.f32.mrf.mxu0
      %v7959 = vadd.f32 %v7851, %v7958
      %v7960 = vpop.f32.mrf.mxu0
      %v7961 = vadd.f32 %v7851, %v7960
      %7962 = vmatmul.bf16.gmra.mxu0 %v7803
      %v7963 = vpop.f32.mrf.mxu0
      %v7964 = vadd.f32 %v7851, %v7963
      %v7965 = vpop.f32.mrf.mxu0
      %v7966 = vadd.f32 %v7851, %v7965
      %7967 = vmatmul.bf16.gmra.mxu0 %v7805
      %v7968 = vpop.f32.mrf.mxu0
      %v7969 = vadd.f32 %v7851, %v7968
      %v7970 = vpop.f32.mrf.mxu0
      %v7971 = vadd.f32 %v7851, %v7970
      %7972 = vmatmul.bf16.gmra.mxu0 %v7807
      %v7973 = vpop.f32.mrf.mxu0
      %v7974 = vadd.f32 %v7851, %v7973
      %v7975 = vpop.f32.mrf.mxu0
      %v7976 = vadd.f32 %v7851, %v7975
      %7977 = vmatmul.bf16.gmra.mxu0 %v7809
      %v7978 = vpop.f32.mrf.mxu0
      %v7979 = vadd.f32 %v7851, %v7978
      %v7980 = vpop.f32.mrf.mxu0
      %v7981 = vadd.f32 %v7851, %v7980
      %7982 = vmatmul.bf16.gmra.mxu0 %v7811
      %v7983 = vpop.f32.mrf.mxu0
      %v7984 = vadd.f32 %v7851, %v7983
      %v7985 = vpop.f32.mrf.mxu0
      %v7986 = vadd.f32 %v7851, %v7985
      %7987 = vmatmul.bf16.gmra.mxu0 %v7813
      %v7988 = vpop.f32.mrf.mxu0
      %v7989 = vadd.f32 %v7851, %v7988
      %v7990 = vpop.f32.mrf.mxu0
      %v7991 = vadd.f32 %v7851, %v7990
      %7992 = vmatmul.bf16.gmra.mxu0 %v7815
      %v7993 = vpop.f32.mrf.mxu0
      %v7994 = vadd.f32 %v7851, %v7993
      %v7995 = vpop.f32.mrf.mxu0
      %v7996 = vadd.f32 %v7851, %v7995
      %7997 = vdwg.mxu0
      %7998 = vmatpush.bf16.msra.mxu0 %v7932
      %7999 = vmatpush.bf16.msra.mxu0 %v7931
      %8000 = vmatpush.bf16.msra.mxu0 %v7930
      %8001 = vmatpush.bf16.msra.mxu0 %v7929
      %8002 = vmatpush.bf16.msra.mxu0 %v7928
      %8003 = vmatpush.bf16.msra.mxu0 %v7927
      %8004 = vmatpush.bf16.msra.mxu0 %v7926
      %8005 = vmatpush.bf16.msra.mxu0 %v7925
      %8006 = vmatmul.bf16.gmra.mxu0 %v7802
      %v8007 = vpop.f32.mrf.mxu0
      %v8008 = vadd.f32 %v7959, %v8007
      %v8009 = vpop.f32.mrf.mxu0
      %v8010 = vadd.f32 %v7961, %v8009
      %8011 = vmatmul.bf16.gmra.mxu0 %v7804
      %v8012 = vpop.f32.mrf.mxu0
      %v8013 = vadd.f32 %v7964, %v8012
      %v8014 = vpop.f32.mrf.mxu0
      %v8015 = vadd.f32 %v7966, %v8014
      %8016 = vmatmul.bf16.gmra.mxu0 %v7806
      %v8017 = vpop.f32.mrf.mxu0
      %v8018 = vadd.f32 %v7969, %v8017
      %v8019 = vpop.f32.mrf.mxu0
      %v8020 = vadd.f32 %v7971, %v8019
      %8021 = vmatmul.bf16.gmra.mxu0 %v7808
      %v8022 = vpop.f32.mrf.mxu0
      %v8023 = vadd.f32 %v7974, %v8022
      %v8024 = vpop.f32.mrf.mxu0
      %v8025 = vadd.f32 %v7976, %v8024
      %8026 = vmatmul.bf16.gmra.mxu0 %v7810
      %v8027 = vpop.f32.mrf.mxu0
      %v8028 = vadd.f32 %v7979, %v8027
      %v8029 = vpop.f32.mrf.mxu0
      %v8030 = vadd.f32 %v7981, %v8029
      %8031 = vmatmul.bf16.gmra.mxu0 %v7812
      %v8032 = vpop.f32.mrf.mxu0
      %v8033 = vadd.f32 %v7984, %v8032
      %v8034 = vpop.f32.mrf.mxu0
      %v8035 = vadd.f32 %v7986, %v8034
      %8036 = vmatmul.bf16.gmra.mxu0 %v7814
      %v8037 = vpop.f32.mrf.mxu0
      %v8038 = vadd.f32 %v7989, %v8037
      %v8039 = vpop.f32.mrf.mxu0
      %v8040 = vadd.f32 %v7991, %v8039
      %8041 = vmatmul.bf16.gmra.mxu0 %v7816
      %v8042 = vpop.f32.mrf.mxu0
      %v8043 = vadd.f32 %v7994, %v8042
      %v8044 = vpop.f32.mrf.mxu0
      %v8045 = vadd.f32 %v7996, %v8044
      %8046 = vdwg.mxu0
      %v8047 = vadd.f32 %v6694, %v8008
      %v8048 = vadd.f32 %v6695, %v8010
      %v8049 = vadd.f32 %v6696, %v8013
      %v8050 = vadd.f32 %v6697, %v8015
      %v8051 = vadd.f32 %v6698, %v8018
      %v8052 = vadd.f32 %v6699, %v8020
      %v8053 = vadd.f32 %v6700, %v8023
      %v8054 = vadd.f32 %v6701, %v8025
      %v8055 = vadd.f32 %v6702, %v8028
      %v8056 = vadd.f32 %v6703, %v8030
      %v8057 = vadd.f32 %v6704, %v8033
      %v8058 = vadd.f32 %v6705, %v8035
      %v8059 = vadd.f32 %v6706, %v8038
      %v8060 = vadd.f32 %v6707, %v8040
      %v8061 = vadd.f32 %v6708, %v8043
      %v8062 = vadd.f32 %v6709, %v8045
      %8063 = vst.msk [vmem:[%s467] sm:$0xff] %vm487, %v8047
      %8064 = vst.msk [vmem:[%s467 + $0x8] sm:$0xff] %vm487, %v8048
      %8065 = vst.msk [vmem:[%s467 + $0x10] sm:$0xff] %vm487, %v8049
      %8066 = vst.msk [vmem:[%s467 + $0x18] sm:$0xff] %vm487, %v8050
      %8067 = vst.msk [vmem:[%s467 + $0x20] sm:$0xff] %vm487, %v8051
      %8068 = vst.msk [vmem:[%s467 + $0x28] sm:$0xff] %vm487, %v8052
      %8069 = vst.msk [vmem:[%s467 + $0x30] sm:$0xff] %vm487, %v8053
      %8070 = vst.msk [vmem:[%s467 + $0x38] sm:$0xff] %vm487, %v8054
      %8071 = vst.msk [vmem:[%s467 + $0x40] sm:$0xff] %vm487, %v8055
      %8072 = vst.msk [vmem:[%s467 + $0x48] sm:$0xff] %vm487, %v8056
      %8073 = vst.msk [vmem:[%s467 + $0x50] sm:$0xff] %vm487, %v8057
      %8074 = vst.msk [vmem:[%s467 + $0x58] sm:$0xff] %vm487, %v8058
      %8075 = vst.msk [vmem:[%s467 + $0x60] sm:$0xff] %vm487, %v8059
      %8076 = vst.msk [vmem:[%s467 + $0x68] sm:$0xff] %vm487, %v8060
      %8077 = vst.msk [vmem:[%s467 + $0x70] sm:$0xff] %vm487, %v8061
      %8078 = vst.msk [vmem:[%s467 + $0x78] sm:$0xff] %vm487, %v8062
      %p8079 = scmp.lt.s32.totalorder %s25, 1
      %s8080 = scalar_select %p8079, %s25, 1
      %s8081 = smul.addr %s8080, 16
      %s8082 = smul.addr %s8081, 8
      %s8083 = scalar_lea.vmem %s14, %s8082
      // Predicated region
      $region77: #{tpu_custom_call.1} parent=75 // pred_check
        %p8084 = pneg %p342
      $region78: #{tpu_custom_call.1} parent=75 // pred_check_branch
        %8086 = sbr.rel (%p8084) target = $region80
      $region79: #{tpu_custom_call.1} parent=75 // pred_region
        _
      $region80: #{tpu_custom_call.1} parent=75 // pred_fallthru
        _
    $region76: #{tpu_custom_call.1} parent=5 // pred_fallthru
      _
    %p8087 = scmp.le.s32.totalorder 2, %s20
    // Predicated region
    $region81: #{tpu_custom_call.1} parent=5 // pred_check
      %p8088 = pneg %p8087
    $region82: #{tpu_custom_call.1} parent=5 // pred_check_branch
      %8090 = sbr.rel (%p8088) target = $region84
    $region83: #{tpu_custom_call.1} parent=5 // pred_region
      %s8091 = ssub.s32 %s20, 2
      // Predicated region
      $region85: #{tpu_custom_call.1} parent=83 // pred_check
        %p8092 = pneg %p348
      $region86: #{tpu_custom_call.1} parent=83 // pred_check_branch
        %8094 = sbr.rel (%p8092) target = $region88
      $region87: #{tpu_custom_call.1} parent=83 // pred_region
        %p8095 = scmp.lt.s32.totalorder %s26, 1
        %s8096 = scalar_select %p8095, %s26, 1
        %s8097 = smul.addr %s8096, 16
        %s8098 = smul.addr %s8097, 8
        %s8099 = scalar_lea.vmem %s14, %s8098
      $region88: #{tpu_custom_call.1} parent=83 // pred_fallthru
        _
    $region84: #{tpu_custom_call.1} parent=5 // pred_fallthru
      _
  $region6: #{tpu_custom_call.1} parent=0 // loop_footer
    %s24 = sadd.s32 1, %s20
  $region7: #{tpu_custom_call.1} parent=0 // loop_footer_branch
    %19 = sbr.rel target = $region3
  $region8: #{tpu_custom_call.1} parent=0 // loop_exit
    _

</llo_original>
